<compile_context>
chip_gen: v7x
topology: tpu7x:2x2x1
jax: 0.10.0
libtpu: 0.0.40
codegen_flags: <defaults>
</compile_context>

<pallas_src>
import functools

import jax
import jax.numpy as jnp
from jax import lax
from jax.experimental import pallas as pl
from jax.experimental.pallas import tpu as pltpu

# ----------------------- constants (nm / kJ/mol units) -----------------------
GB_RADIUS = 10.0          # gbneck_radius in the module
GNN_RADIUS = 0.4          # radius for the GNN graph
FRACTION = 0.5            # self._fraction
OFFSET = 0.009            # GB dielectric offset (nm)
ALPHA, BETA, GAMMA = 1.0, 0.8, 4.85   # OBC2-style Born-radius rescaling
KE = 138.935485           # Coulomb constant, kJ mol^-1 nm e^-2
EPSFAC = 1.0 - 1.0 / 78.5 # (1/eps_solute - 1/eps_solvent)
HIDDEN = 128


# ---------------------------------------------------------------------------
# One-hot pair-index matrices for the flattened pair axis p = i*N + j.
# Built with float-exact integer arithmetic (no vector int div/mod, no 3-D
# reshapes, no transposes) so everything lowers cleanly in Mosaic.
# ---------------------------------------------------------------------------
def _pair_onehots(n):
    f32 = jnp.float32
    # column layout: pair index p along sublanes, atom index along lanes -> (N*N, N)
    p_c = lax.broadcasted_iota(jnp.int32, (n * n, n), 0).astype(f32)
    i_c = lax.broadcasted_iota(jnp.int32, (n * n, n), 1).astype(f32)
    pdiv_c = jnp.floor((p_c + 0.5) / n)            # p // n  (destination i)
    pmod_c = p_c - pdiv_c * n                      # p %  n  (source j)
    r = jnp.where(pdiv_c == i_c, 1.0, 0.0).astype(f32)    # r[p, i] = [p//n == i]
    s = jnp.where(pmod_c == i_c, 1.0, 0.0).astype(f32)    # s[p, j] = [p% n == j]
    # row layout: atom index along sublanes, pair index along lanes -> (N, N*N)
    p_r = lax.broadcasted_iota(jnp.int32, (n, n * n), 1).astype(f32)
    i_r = lax.broadcasted_iota(jnp.int32, (n, n * n), 0).astype(f32)
    pdiv_r = jnp.floor((p_r + 0.5) / n)
    pmod_r = p_r - pdiv_r * n
    rt = jnp.where(pdiv_r == i_r, 1.0, 0.0).astype(f32)   # rt[i, p] = [p//n == i]
    st = jnp.where(pmod_r == i_r, 1.0, 0.0).astype(f32)   # st[j, p] = [p% n == j]
    return r, s, rt, st


# ---------------------------------------------------------------------------
# IN_layer_all_swish_2pass (dense, masked, fully vectorized):
#   message  m_p = SiLU(x_i @ Wd + x_j @ Ws + bm),  p = i*N + j
#   aggregate a_i = sum_j mask[i,j] * m_{i*N+j}     (mask pre-folded into rt_masked)
#   update   out_i = a_i @ Wu + bu
# `proj` is the (N, 2H) fused node projection [x@Wd | x@Ws].
# ---------------------------------------------------------------------------
def _in_layer_from_proj(proj, bm, wu, bu, r, s, rt_masked):
    f32 = jnp.float32
    hdim = proj.shape[1] // 2
    ai = proj[:, :hdim] + bm                                    # destination part (+ bias)
    aj = proj[:, hdim:]                                         # source part
    # messages for every ordered pair, flattened: m[p] = ai[p//N] + aj[p%N]
    m = (jnp.dot(r, ai, preferred_element_type=f32)
         + jnp.dot(s, aj, preferred_element_type=f32))          # (N*N, H)
    m = m * jax.nn.sigmoid(m)                                   # SiLU over the whole slab
    agg = jnp.dot(rt_masked, m, preferred_element_type=f32)     # (N, H): masked sum over j
    return jnp.dot(agg, wu, preferred_element_type=f32) + bu


# ---------------------------------------------------------------------------
# Shared math: used verbatim inside the Pallas kernel (forward) and in plain
# JAX for the autodiff backward (forces).  Single source of truth.
# colpack (N,8): [x, y, z, q, rho, s, s*(rho-off), 0] per destination atom.
# rowpack (8,N): [x, y, z, q, s*(rho-off), 0, 0, 0] per source atom.
# params: 12-tuple, 3 layers x (W=[Wd|Ws] (fin,2H), bm (1,H), Wu (H,fout), bu (1,fout)).
# ---------------------------------------------------------------------------
def _energies_core(colpack, rowpack, params):
    f32 = jnp.float32
    n = colpack.shape[0]

    px, py, pz = colpack[:, 0:1], colpack[:, 1:2], colpack[:, 2:3]
    q, rho = colpack[:, 3:4], colpack[:, 4:5]
    pxr, pyr, pzr = rowpack[0:1, :], rowpack[1:2, :], rowpack[2:3, :]
    qr, srr = rowpack[3:4, :], rowpack[4:5, :]

    # -------- pairwise distances & dense radius-graph masks --------
    dx = px - pxr
    dy = py - pyr
    dz = pz - pzr
    d2 = dx * dx + dy * dy + dz * dz                                   # (N,N)
    row = lax.broadcasted_iota(jnp.int32, (n, n), 0)
    col = lax.broadcasted_iota(jnp.int32, (n, n), 1)
    offdiag = row != col
    d = jnp.sqrt(jnp.where(offdiag, d2, 1.0))                          # NaN-safe diagonal
    mask_gb = jnp.where(jnp.logical_and(offdiag, d < GB_RADIUS), 1.0, 0.0).astype(f32)
    mask_gnn = jnp.where(jnp.logical_and(offdiag, d < GNN_RADIUS), 1.0, 0.0).astype(f32)

    # -------- GBNeck_interaction: HCT descreening integral -> Born radii --------
    or_i = rho - OFFSET                                                # (N,1) offset radius (dst)
    or_b = jnp.broadcast_to(or_i, (n, n))                              # hoist the broadcast once
    inv_d = 1.0 / d
    u = d + srr                                                        # srr = scaled radius of src
    l = jnp.maximum(or_b, jnp.abs(d - srr))
    inv_l = 1.0 / l
    inv_u = 1.0 / u
    integ = 0.5 * (inv_l - inv_u
                   + 0.25 * (d - srr * srr * inv_d) * (inv_u * inv_u - inv_l * inv_l)
                   + 0.5 * jnp.log(l * inv_u) * inv_d)
    integ = integ + jnp.where(or_b < srr - d, 2.0 * (1.0 / or_b - inv_l), 0.0)
    integ = jnp.where(or_b < u, integ, 0.0) * mask_gb
    i_sum = jnp.sum(integ, axis=1, keepdims=True)                      # (N,1)
    psi = i_sum * or_i
    born = 1.0 / (1.0 / or_i
                  - jnp.tanh(ALPHA * psi - BETA * psi * psi + GAMMA * psi * psi * psi) / rho)

    # -------- three IN_layer_all_swish_2pass layers + SiLU --------
    r, s_oh, rt, st = _pair_onehots(n)
    # mask folded once into the aggregation one-hot:
    #   rt_masked[i, p] = [p//N == i] * mask_gnn[i, p % N]
    rt_masked = rt * jnp.dot(mask_gnn, st, preferred_element_type=f32)  # (N, N*N)

    # layer 1 node projection via three rank-1 broadcasts (fin = 3: [Bc, q, rho])
    w0 = params[0]
    proj1 = born * w0[0:1, :] + q * w0[1:2, :] + rho * w0[2:3, :]        # (N, 2H)
    h = _in_layer_from_proj(proj1, params[1], params[2], params[3], r, s_oh, rt_masked)
    h = h * jax.nn.sigmoid(h)
    proj2 = jnp.dot(h, params[4], preferred_element_type=f32)
    h = _in_layer_from_proj(proj2, params[5], params[6], params[7], r, s_oh, rt_masked)
    h = h * jax.nn.sigmoid(h)
    proj3 = jnp.dot(h, params[8], preferred_element_type=f32)
    c = _in_layer_from_proj(proj3, params[9], params[10], params[11], r, s_oh, rt_masked)  # (N,1)

    born_c = born * (FRACTION + jax.nn.sigmoid(c) * (1.0 - FRACTION) * 2.0)                # (N,1)

    # -------- GBNeck_energies: generalized-Born polar solvation energy per atom --------
    # row view of born_c without a transpose / MXU outer product: diag-select + sublane reduce
    eye = jnp.where(offdiag, 0.0, 1.0).astype(f32)
    born_c_row = jnp.sum(born_c * eye, axis=0, keepdims=True)          # (1,N)
    bb = born_c * born_c_row                                           # (N,N) = B_i * B_j (VPU)
    fgb = jnp.sqrt(d2 + bb * jnp.exp(-d2 / (4.0 * bb)))
    pair = (q * qr) / fgb * mask_gb                                    # symmetric in (i,j)
    e_pair = jnp.sum(pair, axis=0, keepdims=True)                      # (1,N) lane-dense
    e_self = qr * qr / born_c_row                                      # (1,N)
    return -0.5 * KE * EPSFAC * (e_self + e_pair)                      # (1,N) per-atom energies


def _pack_inputs(pos, q, rho, s):
    """Glue: pack the per-atom scalars into one column block and one row block."""
    sr = s * (rho - OFFSET)
    zero = jnp.zeros_like(q)
    colpack = jnp.concatenate([pos, q, rho, s, sr, zero], axis=1)                # (N,8)
    rowpack = jnp.transpose(jnp.concatenate([pos, q, sr, zero, zero, zero], axis=1))  # (8,N)
    return colpack, rowpack


def _energies_ref(pos, q, rho, s, params):
    """Pure-JAX mirror of the kernel math (used for the custom_vjp backward)."""
    colpack, rowpack = _pack_inputs(pos, q, rho, s)
    return _energies_core(colpack, rowpack, tuple(params))


# ------------------------------- Pallas kernel -------------------------------
def _energy_kernel(*refs):
    col_ref, row_ref = refs[0], refs[1]
    param_refs, out_ref = refs[2:-1], refs[-1]
    params = tuple(p[...] for p in param_refs)
    out_ref[...] = _energies_core(col_ref[...], row_ref[...], params)


def pallas_energies(colpack, rowpack, params):
    n = colpack.shape[0]
    args = (colpack, rowpack) + tuple(params)
    return pl.pallas_call(
        _energy_kernel,
        out_shape=jax.ShapeDtypeStruct((1, n), jnp.float32),
        in_specs=[pl.BlockSpec(memory_space=pltpu.MemorySpace.VMEM)] * len(args),
        out_specs=pl.BlockSpec(memory_space=pltpu.MemorySpace.VMEM),
    )(*args)


# ------------------------- custom_vjp differentiable path -------------------------
def _gb_primal(pos, q, rho, s, params):
    colpack, rowpack = _pack_inputs(pos, q, rho, s)
    return pallas_energies(colpack, rowpack, params)        # (1,N)


@jax.custom_vjp
def gb_energies(pos, q, rho, s, params):
    return _gb_primal(pos, q, rho, s, params)


def _gb_fwd(pos, q, rho, s, params):
    return _gb_primal(pos, q, rho, s, params), (pos, q, rho, s, params)


def _gb_bwd(res, g):
    pos, q, rho, s, params = res
    # Only position gradients (forces) are needed, matching torch.autograd.grad(..., inputs=pos).
    _, vjp = jax.vjp(lambda p: _energies_ref(p, q, rho, s, params), pos)
    (dpos,) = vjp(g)
    zero_params = jax.tree_util.tree_map(jnp.zeros_like, params)
    return (dpos, jnp.zeros_like(q), jnp.zeros_like(rho), jnp.zeros_like(s), zero_params)


gb_energies.defvjp(_gb_fwd, _gb_bwd)


# ------------------------------- module wrapper -------------------------------
@functools.partial(jax.jit, static_argnames=("num_batches",))
def gnn3_forward(pos, atom_features, batch, params, num_batches):
    """Returns (energy (num_batches,1), forces (N,3)) like the PyTorch forward."""
    q = atom_features[:, 0:1]
    rho = atom_features[:, 1:2]
    s = atom_features[:, 2:3]

    def total_energy(p):
        e = gb_energies(p, q, rho, s, params)      # Pallas forward (custom_vjp)
        return jnp.sum(e), e

    (_, e_row), grad_pos = jax.value_and_grad(total_energy, has_aux=True)(pos)
    forces = -grad_pos

    # per-molecule energies (the torch per-batch loop) via scatter-add
    energy = jnp.zeros((num_batches,), jnp.float32).at[batch].add(e_row[0])[:, None]
    return energy, forces


def init_params(key):
    """Deterministic init of the three IN_layer_all_swish_2pass layers (packed layout)."""
    dims = [(3, HIDDEN, HIDDEN), (HIDDEN, HIDDEN, HIDDEN), (HIDDEN, HIDDEN, 1)]
    keys = jax.random.split(key, 9)
    params, k = [], 0

    def lin(kk, fan_in, fan_out):
        return (jax.random.normal(kk, (fan_in, fan_out), jnp.float32)
                / jnp.sqrt(jnp.float32(fan_in)))

    for fin, hid, fout in dims:
        wd = lin(keys[k], fin, hid); k += 1
        ws = lin(keys[k], fin, hid); k += 1
        w = jnp.concatenate([wd, ws], axis=1)            # fused [Wd | Ws] -> one MXU issue
        bm = jnp.zeros((1, hid), jnp.float32)
        wu = lin(keys[k], hid, fout); k += 1
        bu = jnp.zeros((1, fout), jnp.float32)
        params += [w, bm, wu, bu]
    return tuple(params)


if __name__ == "__main__":
    key = jax.random.PRNGKey(0)
    k_pos, k_q, k_r, k_s, k_w = jax.random.split(key, 5)

    N = 24  # two "peptides" of 12 atoms; N <= max_num_neighbors + 1 so dense graphs are exact
    pos = jax.random.uniform(k_pos, (N, 3), jnp.float32, minval=0.0, maxval=0.8)      # nm
    charge = jax.random.uniform(k_q, (N, 1), jnp.float32, minval=-0.5, maxval=0.5)
    radius = jax.random.uniform(k_r, (N, 1), jnp.float32, minval=0.15, maxval=0.21)
    scale = jax.random.uniform(k_s, (N, 1), jnp.float32, minval=0.7, maxval=0.9)
    atom_features = jnp.concatenate([charge, radius, scale], axis=1)                  # (N,3)
    batch = jnp.concatenate([jnp.zeros(N // 2, jnp.int32), jnp.ones(N // 2, jnp.int32)])

    params = init_params(k_w)

    energy, forces = gnn3_forward(pos, atom_features, batch, params, num_batches=2)
    (energy, forces) = jax.block_until_ready((energy, forces))

    # sanity checks: shapes, finiteness, Pallas vs pure-JAX mirror (same math, same order)
    assert energy.shape == (2, 1) and forces.shape == (N, 3)
    assert bool(jnp.all(jnp.isfinite(energy))) and bool(jnp.all(jnp.isfinite(forces)))
    e_pallas = jax.block_until_ready(_gb_primal(pos, charge, radius, scale, params))
    e_ref = jax.block_until_ready(_energies_ref(pos, charge, radius, scale, params))
    assert e_pallas.shape == (1, N)
    assert bool(jnp.allclose(e_pallas, e_ref, rtol=2e-2, atol=1e-1))

    print("KERNEL_OK")
</pallas_src>

<mosaic_0001>
module attributes {stable_mosaic.version = 11 : i64} {
  func.func @_energy_kernel(%arg0: memref<24x8xf32, #tpu.memory_space<vmem>>, %arg1: memref<8x24xf32, #tpu.memory_space<vmem>>, %arg2: memref<3x256xf32, #tpu.memory_space<vmem>>, %arg3: memref<1x128xf32, #tpu.memory_space<vmem>>, %arg4: memref<128x128xf32, #tpu.memory_space<vmem>>, %arg5: memref<1x128xf32, #tpu.memory_space<vmem>>, %arg6: memref<128x256xf32, #tpu.memory_space<vmem>>, %arg7: memref<1x128xf32, #tpu.memory_space<vmem>>, %arg8: memref<128x128xf32, #tpu.memory_space<vmem>>, %arg9: memref<1x128xf32, #tpu.memory_space<vmem>>, %arg10: memref<128x256xf32, #tpu.memory_space<vmem>>, %arg11: memref<1x128xf32, #tpu.memory_space<vmem>>, %arg12: memref<128x1xf32, #tpu.memory_space<vmem>>, %arg13: memref<1x1xf32, #tpu.memory_space<vmem>>, %arg14: memref<1x24xf32, #tpu.memory_space<vmem>>) attributes {dimension_semantics = [], scalar_prefetch = 0 : i64, scratch_operands = 0 : i64, tpu.core_type = #tpu.core_type<tc>} {
    %c0 = arith.constant 0 : index
    %c0_0 = arith.constant 0 : index
    %0 = vector.load %arg2[%c0, %c0_0] : memref<3x256xf32, #tpu.memory_space<vmem>>, vector<3x256xf32>
    %c0_1 = arith.constant 0 : index
    %c0_2 = arith.constant 0 : index
    %1 = vector.load %arg3[%c0_1, %c0_2] : memref<1x128xf32, #tpu.memory_space<vmem>>, vector<1x128xf32>
    %c0_3 = arith.constant 0 : index
    %c0_4 = arith.constant 0 : index
    %2 = vector.load %arg4[%c0_3, %c0_4] : memref<128x128xf32, #tpu.memory_space<vmem>>, vector<128x128xf32>
    %c0_5 = arith.constant 0 : index
    %c0_6 = arith.constant 0 : index
    %3 = vector.load %arg5[%c0_5, %c0_6] : memref<1x128xf32, #tpu.memory_space<vmem>>, vector<1x128xf32>
    %c0_7 = arith.constant 0 : index
    %c0_8 = arith.constant 0 : index
    %4 = vector.load %arg6[%c0_7, %c0_8] : memref<128x256xf32, #tpu.memory_space<vmem>>, vector<128x256xf32>
    %c0_9 = arith.constant 0 : index
    %c0_10 = arith.constant 0 : index
    %5 = vector.load %arg7[%c0_9, %c0_10] : memref<1x128xf32, #tpu.memory_space<vmem>>, vector<1x128xf32>
    %c0_11 = arith.constant 0 : index
    %c0_12 = arith.constant 0 : index
    %6 = vector.load %arg8[%c0_11, %c0_12] : memref<128x128xf32, #tpu.memory_space<vmem>>, vector<128x128xf32>
    %c0_13 = arith.constant 0 : index
    %c0_14 = arith.constant 0 : index
    %7 = vector.load %arg9[%c0_13, %c0_14] : memref<1x128xf32, #tpu.memory_space<vmem>>, vector<1x128xf32>
    %c0_15 = arith.constant 0 : index
    %c0_16 = arith.constant 0 : index
    %8 = vector.load %arg10[%c0_15, %c0_16] : memref<128x256xf32, #tpu.memory_space<vmem>>, vector<128x256xf32>
    %c0_17 = arith.constant 0 : index
    %c0_18 = arith.constant 0 : index
    %9 = vector.load %arg11[%c0_17, %c0_18] : memref<1x128xf32, #tpu.memory_space<vmem>>, vector<1x128xf32>
    %c0_19 = arith.constant 0 : index
    %c0_20 = arith.constant 0 : index
    %10 = vector.load %arg12[%c0_19, %c0_20] : memref<128x1xf32, #tpu.memory_space<vmem>>, vector<128x1xf32>
    %c0_21 = arith.constant 0 : index
    %c0_22 = arith.constant 0 : index
    %11 = vector.load %arg13[%c0_21, %c0_22] : memref<1x1xf32, #tpu.memory_space<vmem>>, vector<1x1xf32>
    %c0_23 = arith.constant 0 : index
    %c0_24 = arith.constant 0 : index
    %12 = vector.load %arg0[%c0_23, %c0_24] : memref<24x8xf32, #tpu.memory_space<vmem>>, vector<24x8xf32>
    %c0_25 = arith.constant 0 : index
    %c0_26 = arith.constant 0 : index
    %13 = vector.load %arg1[%c0_25, %c0_26] : memref<8x24xf32, #tpu.memory_space<vmem>>, vector<8x24xf32>
    %14 = vector.extract_strided_slice %12 {offsets = [0, 0], sizes = [24, 1], strides = [1, 1]} : vector<24x8xf32> to vector<24x1xf32>
    %15 = vector.extract_strided_slice %12 {offsets = [0, 1], sizes = [24, 1], strides = [1, 1]} : vector<24x8xf32> to vector<24x1xf32>
    %16 = vector.extract_strided_slice %12 {offsets = [0, 2], sizes = [24, 1], strides = [1, 1]} : vector<24x8xf32> to vector<24x1xf32>
    %17 = vector.extract_strided_slice %12 {offsets = [0, 3], sizes = [24, 1], strides = [1, 1]} : vector<24x8xf32> to vector<24x1xf32>
    %18 = vector.extract_strided_slice %12 {offsets = [0, 4], sizes = [24, 1], strides = [1, 1]} : vector<24x8xf32> to vector<24x1xf32>
    %19 = vector.extract_strided_slice %13 {offsets = [0, 0], sizes = [1, 24], strides = [1, 1]} : vector<8x24xf32> to vector<1x24xf32>
    %20 = vector.extract_strided_slice %13 {offsets = [1, 0], sizes = [1, 24], strides = [1, 1]} : vector<8x24xf32> to vector<1x24xf32>
    %21 = vector.extract_strided_slice %13 {offsets = [2, 0], sizes = [1, 24], strides = [1, 1]} : vector<8x24xf32> to vector<1x24xf32>
    %22 = vector.extract_strided_slice %13 {offsets = [3, 0], sizes = [1, 24], strides = [1, 1]} : vector<8x24xf32> to vector<1x24xf32>
    %23 = vector.extract_strided_slice %13 {offsets = [4, 0], sizes = [1, 24], strides = [1, 1]} : vector<8x24xf32> to vector<1x24xf32>
    %24 = vector.broadcast %14 : vector<24x1xf32> to vector<24x24xf32>
    %25 = vector.broadcast %19 : vector<1x24xf32> to vector<24x24xf32>
    %26 = arith.subf %24, %25 : vector<24x24xf32>
    %27 = vector.broadcast %15 : vector<24x1xf32> to vector<24x24xf32>
    %28 = vector.broadcast %20 : vector<1x24xf32> to vector<24x24xf32>
    %29 = arith.subf %27, %28 : vector<24x24xf32>
    %30 = vector.broadcast %16 : vector<24x1xf32> to vector<24x24xf32>
    %31 = vector.broadcast %21 : vector<1x24xf32> to vector<24x24xf32>
    %32 = arith.subf %30, %31 : vector<24x24xf32>
    %33 = arith.mulf %26, %26 : vector<24x24xf32>
    %34 = arith.mulf %29, %29 : vector<24x24xf32>
    %35 = arith.addf %33, %34 : vector<24x24xf32>
    %36 = arith.mulf %32, %32 : vector<24x24xf32>
    %37 = arith.addf %35, %36 : vector<24x24xf32>
    %38 = tpu.iota {dimensions = array<i32: 0>} : vector<24x24xi32>
    %39 = tpu.iota {dimensions = array<i32: 1>} : vector<24x24xi32>
    %40 = arith.cmpi ne, %38, %39 : vector<24x24xi32>
    %cst = arith.constant 1.000000e+00 : f32
    %41 = vector.broadcast %cst : f32 to vector<24x24xf32>
    %42 = arith.select %40, %37, %41 : vector<24x24xi1>, vector<24x24xf32>
    %43 = math.sqrt %42 : vector<24x24xf32>
    %cst_27 = arith.constant 1.000000e+01 : f32
    %44 = vector.broadcast %cst_27 : f32 to vector<24x24xf32>
    %45 = arith.cmpf olt, %43, %44 : vector<24x24xf32>
    %46 = arith.andi %40, %45 : vector<24x24xi1>
    %cst_28 = arith.constant 1.000000e+00 : f32
    %cst_29 = arith.constant 0.000000e+00 : f32
    %47 = vector.broadcast %cst_28 : f32 to vector<24x24xf32>
    %48 = vector.broadcast %cst_29 : f32 to vector<24x24xf32>
    %49 = arith.select %46, %47, %48 : vector<24x24xi1>, vector<24x24xf32>
    %cst_30 = arith.constant 4.000000e-01 : f32
    %50 = vector.broadcast %cst_30 : f32 to vector<24x24xf32>
    %51 = arith.cmpf olt, %43, %50 : vector<24x24xf32>
    %52 = arith.andi %40, %51 : vector<24x24xi1>
    %cst_31 = arith.constant 1.000000e+00 : f32
    %cst_32 = arith.constant 0.000000e+00 : f32
    %53 = vector.broadcast %cst_31 : f32 to vector<24x24xf32>
    %54 = vector.broadcast %cst_32 : f32 to vector<24x24xf32>
    %55 = arith.select %52, %53, %54 : vector<24x24xi1>, vector<24x24xf32>
    %cst_33 = arith.constant 0.00899999961 : f32
    %56 = vector.broadcast %cst_33 : f32 to vector<24x1xf32>
    %57 = arith.subf %18, %56 : vector<24x1xf32>
    %58 = vector.shape_cast %57 : vector<24x1xf32> to vector<24x1xf32>
    %59 = vector.broadcast %58 : vector<24x1xf32> to vector<24x24xf32>
    %cst_34 = arith.constant 1.000000e+00 : f32
    %60 = vector.broadcast %cst_34 : f32 to vector<24x24xf32>
    %61 = arith.divf %60, %43 : vector<24x24xf32>
    %62 = vector.broadcast %23 : vector<1x24xf32> to vector<24x24xf32>
    %63 = arith.addf %43, %62 : vector<24x24xf32>
    %64 = vector.broadcast %23 : vector<1x24xf32> to vector<24x24xf32>
    %65 = arith.subf %43, %64 : vector<24x24xf32>
    %66 = math.absf %65 : vector<24x24xf32>
    %67 = arith.maximumf %59, %66 : vector<24x24xf32>
    %cst_35 = arith.constant 1.000000e+00 : f32
    %68 = vector.broadcast %cst_35 : f32 to vector<24x24xf32>
    %69 = arith.divf %68, %67 : vector<24x24xf32>
    %cst_36 = arith.constant 1.000000e+00 : f32
    %70 = vector.broadcast %cst_36 : f32 to vector<24x24xf32>
    %71 = arith.divf %70, %63 : vector<24x24xf32>
    %72 = arith.subf %69, %71 : vector<24x24xf32>
    %73 = arith.mulf %23, %23 : vector<1x24xf32>
    %74 = vector.broadcast %73 : vector<1x24xf32> to vector<24x24xf32>
    %75 = arith.mulf %74, %61 : vector<24x24xf32>
    %76 = arith.subf %43, %75 : vector<24x24xf32>
    %cst_37 = arith.constant 2.500000e-01 : f32
    %77 = vector.broadcast %cst_37 : f32 to vector<24x24xf32>
    %78 = arith.mulf %77, %76 : vector<24x24xf32>
    %79 = arith.mulf %71, %71 : vector<24x24xf32>
    %80 = arith.mulf %69, %69 : vector<24x24xf32>
    %81 = arith.subf %79, %80 : vector<24x24xf32>
    %82 = arith.mulf %78, %81 : vector<24x24xf32>
    %83 = arith.addf %72, %82 : vector<24x24xf32>
    %84 = arith.mulf %67, %71 : vector<24x24xf32>
    %85 = math.log %84 : vector<24x24xf32>
    %cst_38 = arith.constant 5.000000e-01 : f32
    %86 = vector.broadcast %cst_38 : f32 to vector<24x24xf32>
    %87 = arith.mulf %86, %85 : vector<24x24xf32>
    %88 = arith.mulf %87, %61 : vector<24x24xf32>
    %89 = arith.addf %83, %88 : vector<24x24xf32>
    %cst_39 = arith.constant 5.000000e-01 : f32
    %90 = vector.broadcast %cst_39 : f32 to vector<24x24xf32>
    %91 = arith.mulf %90, %89 : vector<24x24xf32>
    %92 = vector.broadcast %23 : vector<1x24xf32> to vector<24x24xf32>
    %93 = arith.subf %92, %43 : vector<24x24xf32>
    %94 = arith.cmpf olt, %59, %93 : vector<24x24xf32>
    %cst_40 = arith.constant 1.000000e+00 : f32
    %95 = vector.broadcast %cst_40 : f32 to vector<24x24xf32>
    %96 = arith.divf %95, %59 : vector<24x24xf32>
    %97 = arith.subf %96, %69 : vector<24x24xf32>
    %cst_41 = arith.constant 2.000000e+00 : f32
    %98 = vector.broadcast %cst_41 : f32 to vector<24x24xf32>
    %99 = arith.mulf %98, %97 : vector<24x24xf32>
    %cst_42 = arith.constant 0.000000e+00 : f32
    %100 = vector.broadcast %cst_42 : f32 to vector<24x24xf32>
    %101 = arith.select %94, %99, %100 : vector<24x24xi1>, vector<24x24xf32>
    %102 = arith.addf %91, %101 : vector<24x24xf32>
    %103 = arith.cmpf olt, %59, %63 : vector<24x24xf32>
    %cst_43 = arith.constant 0.000000e+00 : f32
    %104 = vector.broadcast %cst_43 : f32 to vector<24x24xf32>
    %105 = arith.select %103, %102, %104 : vector<24x24xi1>, vector<24x24xf32>
    %106 = arith.mulf %105, %49 : vector<24x24xf32>
    %cst_44 = arith.constant dense<0.000000e+00> : vector<24xf32>
    %107 = vector.multi_reduction <add>, %106, %cst_44 [1] : vector<24x24xf32> to vector<24xf32>
    %108 = vector.shape_cast %107 : vector<24xf32> to vector<24x1xf32>
    %109 = arith.mulf %108, %57 : vector<24x1xf32>
    %cst_45 = arith.constant 1.000000e+00 : f32
    %110 = vector.broadcast %cst_45 : f32 to vector<24x1xf32>
    %111 = arith.divf %110, %57 : vector<24x1xf32>
    %cst_46 = arith.constant 1.000000e+00 : f32
    %112 = vector.broadcast %cst_46 : f32 to vector<24x1xf32>
    %113 = arith.mulf %112, %109 : vector<24x1xf32>
    %cst_47 = arith.constant 8.000000e-01 : f32
    %114 = vector.broadcast %cst_47 : f32 to vector<24x1xf32>
    %115 = arith.mulf %114, %109 : vector<24x1xf32>
    %116 = arith.mulf %115, %109 : vector<24x1xf32>
    %117 = arith.subf %113, %116 : vector<24x1xf32>
    %cst_48 = arith.constant 4.850000e+00 : f32
    %118 = vector.broadcast %cst_48 : f32 to vector<24x1xf32>
    %119 = arith.mulf %118, %109 : vector<24x1xf32>
    %120 = arith.mulf %119, %109 : vector<24x1xf32>
    %121 = arith.mulf %120, %109 : vector<24x1xf32>
    %122 = arith.addf %117, %121 : vector<24x1xf32>
    %123 = math.tanh %122 : vector<24x1xf32>
    %124 = arith.divf %123, %18 : vector<24x1xf32>
    %125 = arith.subf %111, %124 : vector<24x1xf32>
    %cst_49 = arith.constant 1.000000e+00 : f32
    %126 = vector.broadcast %cst_49 : f32 to vector<24x1xf32>
    %127 = arith.divf %126, %125 : vector<24x1xf32>
    %128 = tpu.iota {dimensions = array<i32: 0>} : vector<576x24xi32>
    %129 = arith.sitofp %128 : vector<576x24xi32> to vector<576x24xf32>
    %130 = tpu.iota {dimensions = array<i32: 1>} : vector<576x24xi32>
    %131 = arith.sitofp %130 : vector<576x24xi32> to vector<576x24xf32>
    %cst_50 = arith.constant 5.000000e-01 : f32
    %132 = vector.broadcast %cst_50 : f32 to vector<576x24xf32>
    %133 = arith.addf %129, %132 : vector<576x24xf32>
    %cst_51 = arith.constant 2.400000e+01 : f32
    %134 = vector.broadcast %cst_51 : f32 to vector<576x24xf32>
    %135 = arith.divf %133, %134 : vector<576x24xf32>
    %136 = math.floor %135 : vector<576x24xf32>
    %cst_52 = arith.constant 2.400000e+01 : f32
    %137 = vector.broadcast %cst_52 : f32 to vector<576x24xf32>
    %138 = arith.mulf %136, %137 : vector<576x24xf32>
    %139 = arith.subf %129, %138 : vector<576x24xf32>
    %140 = arith.cmpf oeq, %136, %131 : vector<576x24xf32>
    %cst_53 = arith.constant 1.000000e+00 : f32
    %cst_54 = arith.constant 0.000000e+00 : f32
    %141 = vector.broadcast %cst_53 : f32 to vector<576x24xf32>
    %142 = vector.broadcast %cst_54 : f32 to vector<576x24xf32>
    %143 = arith.select %140, %141, %142 : vector<576x24xi1>, vector<576x24xf32>
    %144 = arith.cmpf oeq, %139, %131 : vector<576x24xf32>
    %cst_55 = arith.constant 1.000000e+00 : f32
    %cst_56 = arith.constant 0.000000e+00 : f32
    %145 = vector.broadcast %cst_55 : f32 to vector<576x24xf32>
    %146 = vector.broadcast %cst_56 : f32 to vector<576x24xf32>
    %147 = arith.select %144, %145, %146 : vector<576x24xi1>, vector<576x24xf32>
    %148 = tpu.iota {dimensions = array<i32: 1>} : vector<24x576xi32>
    %149 = arith.sitofp %148 : vector<24x576xi32> to vector<24x576xf32>
    %150 = tpu.iota {dimensions = array<i32: 0>} : vector<24x576xi32>
    %151 = arith.sitofp %150 : vector<24x576xi32> to vector<24x576xf32>
    %cst_57 = arith.constant 5.000000e-01 : f32
    %152 = vector.broadcast %cst_57 : f32 to vector<24x576xf32>
    %153 = arith.addf %149, %152 : vector<24x576xf32>
    %cst_58 = arith.constant 2.400000e+01 : f32
    %154 = vector.broadcast %cst_58 : f32 to vector<24x576xf32>
    %155 = arith.divf %153, %154 : vector<24x576xf32>
    %156 = math.floor %155 : vector<24x576xf32>
    %cst_59 = arith.constant 2.400000e+01 : f32
    %157 = vector.broadcast %cst_59 : f32 to vector<24x576xf32>
    %158 = arith.mulf %156, %157 : vector<24x576xf32>
    %159 = arith.subf %149, %158 : vector<24x576xf32>
    %160 = arith.cmpf oeq, %156, %151 : vector<24x576xf32>
    %cst_60 = arith.constant 1.000000e+00 : f32
    %cst_61 = arith.constant 0.000000e+00 : f32
    %161 = vector.broadcast %cst_60 : f32 to vector<24x576xf32>
    %162 = vector.broadcast %cst_61 : f32 to vector<24x576xf32>
    %163 = arith.select %160, %161, %162 : vector<24x576xi1>, vector<24x576xf32>
    %164 = arith.cmpf oeq, %159, %151 : vector<24x576xf32>
    %cst_62 = arith.constant 1.000000e+00 : f32
    %cst_63 = arith.constant 0.000000e+00 : f32
    %165 = vector.broadcast %cst_62 : f32 to vector<24x576xf32>
    %166 = vector.broadcast %cst_63 : f32 to vector<24x576xf32>
    %167 = arith.select %164, %165, %166 : vector<24x576xi1>, vector<24x576xf32>
    %cst_64 = arith.constant dense<0.000000e+00> : vector<24x576xf32>
    %168 = tpu.matmul %55, %167, %cst_64 {dimension_numbers = #tpu.dot_dimension_numbers<[1], [0], [0], [1], [0, 0, 1, 1], [], []>} : vector<24x24xf32>, vector<24x576xf32>, vector<24x576xf32> -> vector<24x576xf32>
    %169 = arith.mulf %163, %168 : vector<24x576xf32>
    %170 = vector.extract_strided_slice %0 {offsets = [0, 0], sizes = [1, 256], strides = [1, 1]} : vector<3x256xf32> to vector<1x256xf32>
    %171 = vector.broadcast %127 : vector<24x1xf32> to vector<24x256xf32>
    %172 = vector.broadcast %170 : vector<1x256xf32> to vector<24x256xf32>
    %173 = arith.mulf %171, %172 : vector<24x256xf32>
    %174 = vector.extract_strided_slice %0 {offsets = [1, 0], sizes = [1, 256], strides = [1, 1]} : vector<3x256xf32> to vector<1x256xf32>
    %175 = vector.broadcast %17 : vector<24x1xf32> to vector<24x256xf32>
    %176 = vector.broadcast %174 : vector<1x256xf32> to vector<24x256xf32>
    %177 = arith.mulf %175, %176 : vector<24x256xf32>
    %178 = arith.addf %173, %177 : vector<24x256xf32>
    %179 = vector.extract_strided_slice %0 {offsets = [2, 0], sizes = [1, 256], strides = [1, 1]} : vector<3x256xf32> to vector<1x256xf32>
    %180 = vector.broadcast %18 : vector<24x1xf32> to vector<24x256xf32>
    %181 = vector.broadcast %179 : vector<1x256xf32> to vector<24x256xf32>
    %182 = arith.mulf %180, %181 : vector<24x256xf32>
    %183 = arith.addf %178, %182 : vector<24x256xf32>
    %184 = vector.extract_strided_slice %183 {offsets = [0, 0], sizes = [24, 128], strides = [1, 1]} : vector<24x256xf32> to vector<24x128xf32>
    %185 = vector.broadcast %1 : vector<1x128xf32> to vector<24x128xf32>
    %186 = arith.addf %184, %185 : vector<24x128xf32>
    %187 = vector.extract_strided_slice %183 {offsets = [0, 128], sizes = [24, 128], strides = [1, 1]} : vector<24x256xf32> to vector<24x128xf32>
    %cst_65 = arith.constant dense<0.000000e+00> : vector<576x128xf32>
    %188 = tpu.matmul %143, %186, %cst_65 {dimension_numbers = #tpu.dot_dimension_numbers<[1], [0], [0], [1], [0, 0, 1, 1], [], []>} : vector<576x24xf32>, vector<24x128xf32>, vector<576x128xf32> -> vector<576x128xf32>
    %cst_66 = arith.constant dense<0.000000e+00> : vector<576x128xf32>
    %189 = tpu.matmul %147, %187, %cst_66 {dimension_numbers = #tpu.dot_dimension_numbers<[1], [0], [0], [1], [0, 0, 1, 1], [], []>} : vector<576x24xf32>, vector<24x128xf32>, vector<576x128xf32> -> vector<576x128xf32>
    %190 = arith.addf %188, %189 : vector<576x128xf32>
    %191 = arith.negf %190 : vector<576x128xf32>
    %192 = math.exp %191 : vector<576x128xf32>
    %cst_67 = arith.constant 1.000000e+00 : f32
    %193 = vector.broadcast %cst_67 : f32 to vector<576x128xf32>
    %194 = arith.addf %193, %192 : vector<576x128xf32>
    %195 = arith.divf %193, %194 : vector<576x128xf32>
    %196 = arith.mulf %190, %195 : vector<576x128xf32>
    %cst_68 = arith.constant dense<0.000000e+00> : vector<24x128xf32>
    %197 = tpu.matmul %169, %196, %cst_68 {dimension_numbers = #tpu.dot_dimension_numbers<[1], [0], [0], [1], [0, 0, 1, 1], [], []>} : vector<24x576xf32>, vector<576x128xf32>, vector<24x128xf32> -> vector<24x128xf32>
    %cst_69 = arith.constant dense<0.000000e+00> : vector<24x128xf32>
    %198 = tpu.matmul %197, %2, %cst_69 {dimension_numbers = #tpu.dot_dimension_numbers<[1], [0], [0], [1], [0, 0, 1, 1], [], []>} : vector<24x128xf32>, vector<128x128xf32>, vector<24x128xf32> -> vector<24x128xf32>
    %199 = vector.broadcast %3 : vector<1x128xf32> to vector<24x128xf32>
    %200 = arith.addf %198, %199 : vector<24x128xf32>
    %201 = arith.negf %200 : vector<24x128xf32>
    %202 = math.exp %201 : vector<24x128xf32>
    %cst_70 = arith.constant 1.000000e+00 : f32
    %203 = vector.broadcast %cst_70 : f32 to vector<24x128xf32>
    %204 = arith.addf %203, %202 : vector<24x128xf32>
    %205 = arith.divf %203, %204 : vector<24x128xf32>
    %206 = arith.mulf %200, %205 : vector<24x128xf32>
    %cst_71 = arith.constant dense<0.000000e+00> : vector<24x256xf32>
    %207 = tpu.matmul %206, %4, %cst_71 {dimension_numbers = #tpu.dot_dimension_numbers<[1], [0], [0], [1], [0, 0, 1, 1], [], []>} : vector<24x128xf32>, vector<128x256xf32>, vector<24x256xf32> -> vector<24x256xf32>
    %208 = vector.extract_strided_slice %207 {offsets = [0, 0], sizes = [24, 128], strides = [1, 1]} : vector<24x256xf32> to vector<24x128xf32>
    %209 = vector.broadcast %5 : vector<1x128xf32> to vector<24x128xf32>
    %210 = arith.addf %208, %209 : vector<24x128xf32>
    %211 = vector.extract_strided_slice %207 {offsets = [0, 128], sizes = [24, 128], strides = [1, 1]} : vector<24x256xf32> to vector<24x128xf32>
    %cst_72 = arith.constant dense<0.000000e+00> : vector<576x128xf32>
    %212 = tpu.matmul %143, %210, %cst_72 {dimension_numbers = #tpu.dot_dimension_numbers<[1], [0], [0], [1], [0, 0, 1, 1], [], []>} : vector<576x24xf32>, vector<24x128xf32>, vector<576x128xf32> -> vector<576x128xf32>
    %cst_73 = arith.constant dense<0.000000e+00> : vector<576x128xf32>
    %213 = tpu.matmul %147, %211, %cst_73 {dimension_numbers = #tpu.dot_dimension_numbers<[1], [0], [0], [1], [0, 0, 1, 1], [], []>} : vector<576x24xf32>, vector<24x128xf32>, vector<576x128xf32> -> vector<576x128xf32>
    %214 = arith.addf %212, %213 : vector<576x128xf32>
    %215 = arith.negf %214 : vector<576x128xf32>
    %216 = math.exp %215 : vector<576x128xf32>
    %cst_74 = arith.constant 1.000000e+00 : f32
    %217 = vector.broadcast %cst_74 : f32 to vector<576x128xf32>
    %218 = arith.addf %217, %216 : vector<576x128xf32>
    %219 = arith.divf %217, %218 : vector<576x128xf32>
    %220 = arith.mulf %214, %219 : vector<576x128xf32>
    %cst_75 = arith.constant dense<0.000000e+00> : vector<24x128xf32>
    %221 = tpu.matmul %169, %220, %cst_75 {dimension_numbers = #tpu.dot_dimension_numbers<[1], [0], [0], [1], [0, 0, 1, 1], [], []>} : vector<24x576xf32>, vector<576x128xf32>, vector<24x128xf32> -> vector<24x128xf32>
    %cst_76 = arith.constant dense<0.000000e+00> : vector<24x128xf32>
    %222 = tpu.matmul %221, %6, %cst_76 {dimension_numbers = #tpu.dot_dimension_numbers<[1], [0], [0], [1], [0, 0, 1, 1], [], []>} : vector<24x128xf32>, vector<128x128xf32>, vector<24x128xf32> -> vector<24x128xf32>
    %223 = vector.broadcast %7 : vector<1x128xf32> to vector<24x128xf32>
    %224 = arith.addf %222, %223 : vector<24x128xf32>
    %225 = arith.negf %224 : vector<24x128xf32>
    %226 = math.exp %225 : vector<24x128xf32>
    %cst_77 = arith.constant 1.000000e+00 : f32
    %227 = vector.broadcast %cst_77 : f32 to vector<24x128xf32>
    %228 = arith.addf %227, %226 : vector<24x128xf32>
    %229 = arith.divf %227, %228 : vector<24x128xf32>
    %230 = arith.mulf %224, %229 : vector<24x128xf32>
    %cst_78 = arith.constant dense<0.000000e+00> : vector<24x256xf32>
    %231 = tpu.matmul %230, %8, %cst_78 {dimension_numbers = #tpu.dot_dimension_numbers<[1], [0], [0], [1], [0, 0, 1, 1], [], []>} : vector<24x128xf32>, vector<128x256xf32>, vector<24x256xf32> -> vector<24x256xf32>
    %232 = vector.extract_strided_slice %231 {offsets = [0, 0], sizes = [24, 128], strides = [1, 1]} : vector<24x256xf32> to vector<24x128xf32>
    %233 = vector.broadcast %9 : vector<1x128xf32> to vector<24x128xf32>
    %234 = arith.addf %232, %233 : vector<24x128xf32>
    %235 = vector.extract_strided_slice %231 {offsets = [0, 128], sizes = [24, 128], strides = [1, 1]} : vector<24x256xf32> to vector<24x128xf32>
    %cst_79 = arith.constant dense<0.000000e+00> : vector<576x128xf32>
    %236 = tpu.matmul %143, %234, %cst_79 {dimension_numbers = #tpu.dot_dimension_numbers<[1], [0], [0], [1], [0, 0, 1, 1], [], []>} : vector<576x24xf32>, vector<24x128xf32>, vector<576x128xf32> -> vector<576x128xf32>
    %cst_80 = arith.constant dense<0.000000e+00> : vector<576x128xf32>
    %237 = tpu.matmul %147, %235, %cst_80 {dimension_numbers = #tpu.dot_dimension_numbers<[1], [0], [0], [1], [0, 0, 1, 1], [], []>} : vector<576x24xf32>, vector<24x128xf32>, vector<576x128xf32> -> vector<576x128xf32>
    %238 = arith.addf %236, %237 : vector<576x128xf32>
    %239 = arith.negf %238 : vector<576x128xf32>
    %240 = math.exp %239 : vector<576x128xf32>
    %cst_81 = arith.constant 1.000000e+00 : f32
    %241 = vector.broadcast %cst_81 : f32 to vector<576x128xf32>
    %242 = arith.addf %241, %240 : vector<576x128xf32>
    %243 = arith.divf %241, %242 : vector<576x128xf32>
    %244 = arith.mulf %238, %243 : vector<576x128xf32>
    %cst_82 = arith.constant dense<0.000000e+00> : vector<24x128xf32>
    %245 = tpu.matmul %169, %244, %cst_82 {dimension_numbers = #tpu.dot_dimension_numbers<[1], [0], [0], [1], [0, 0, 1, 1], [], []>} : vector<24x576xf32>, vector<576x128xf32>, vector<24x128xf32> -> vector<24x128xf32>
    %cst_83 = arith.constant dense<0.000000e+00> : vector<24x1xf32>
    %246 = tpu.matmul %245, %10, %cst_83 {dimension_numbers = #tpu.dot_dimension_numbers<[1], [0], [0], [1], [0, 0, 1, 1], [], []>} : vector<24x128xf32>, vector<128x1xf32>, vector<24x1xf32> -> vector<24x1xf32>
    %247 = vector.broadcast %11 : vector<1x1xf32> to vector<24x1xf32>
    %248 = arith.addf %246, %247 : vector<24x1xf32>
    %249 = arith.negf %248 : vector<24x1xf32>
    %250 = math.exp %249 : vector<24x1xf32>
    %cst_84 = arith.constant 1.000000e+00 : f32
    %251 = vector.broadcast %cst_84 : f32 to vector<24x1xf32>
    %252 = arith.addf %251, %250 : vector<24x1xf32>
    %253 = arith.divf %251, %252 : vector<24x1xf32>
    %cst_85 = arith.constant 5.000000e-01 : f32
    %254 = vector.broadcast %cst_85 : f32 to vector<24x1xf32>
    %255 = arith.mulf %253, %254 : vector<24x1xf32>
    %cst_86 = arith.constant 2.000000e+00 : f32
    %256 = vector.broadcast %cst_86 : f32 to vector<24x1xf32>
    %257 = arith.mulf %255, %256 : vector<24x1xf32>
    %cst_87 = arith.constant 5.000000e-01 : f32
    %258 = vector.broadcast %cst_87 : f32 to vector<24x1xf32>
    %259 = arith.addf %258, %257 : vector<24x1xf32>
    %260 = arith.mulf %127, %259 : vector<24x1xf32>
    %cst_88 = arith.constant 0.000000e+00 : f32
    %cst_89 = arith.constant 1.000000e+00 : f32
    %261 = vector.broadcast %cst_88 : f32 to vector<24x24xf32>
    %262 = vector.broadcast %cst_89 : f32 to vector<24x24xf32>
    %263 = arith.select %40, %261, %262 : vector<24x24xi1>, vector<24x24xf32>
    %264 = vector.broadcast %260 : vector<24x1xf32> to vector<24x24xf32>
    %265 = arith.mulf %264, %263 : vector<24x24xf32>
    %cst_90 = arith.constant dense<0.000000e+00> : vector<24xf32>
    %266 = vector.multi_reduction <add>, %265, %cst_90 [0] : vector<24x24xf32> to vector<24xf32>
    %267 = vector.shape_cast %266 : vector<24xf32> to vector<1x24xf32>
    %268 = vector.broadcast %260 : vector<24x1xf32> to vector<24x24xf32>
    %269 = vector.broadcast %267 : vector<1x24xf32> to vector<24x24xf32>
    %270 = arith.mulf %268, %269 : vector<24x24xf32>
    %cst_91 = arith.constant 0.000000e+00 : f32
    %271 = vector.broadcast %cst_91 : f32 to vector<24x24xf32>
    %272 = arith.subf %271, %37 : vector<24x24xf32>
    %cst_92 = arith.constant 4.000000e+00 : f32
    %273 = vector.broadcast %cst_92 : f32 to vector<24x24xf32>
    %274 = arith.mulf %273, %270 : vector<24x24xf32>
    %275 = arith.divf %272, %274 : vector<24x24xf32>
    %276 = math.exp %275 : vector<24x24xf32>
    %277 = arith.mulf %270, %276 : vector<24x24xf32>
    %278 = arith.addf %37, %277 : vector<24x24xf32>
    %279 = math.sqrt %278 : vector<24x24xf32>
    %280 = vector.broadcast %17 : vector<24x1xf32> to vector<24x24xf32>
    %281 = vector.broadcast %22 : vector<1x24xf32> to vector<24x24xf32>
    %282 = arith.mulf %280, %281 : vector<24x24xf32>
    %283 = arith.divf %282, %279 : vector<24x24xf32>
    %284 = arith.mulf %283, %49 : vector<24x24xf32>
    %cst_93 = arith.constant dense<0.000000e+00> : vector<24xf32>
    %285 = vector.multi_reduction <add>, %284, %cst_93 [0] : vector<24x24xf32> to vector<24xf32>
    %286 = vector.shape_cast %285 : vector<24xf32> to vector<1x24xf32>
    %287 = arith.mulf %22, %22 : vector<1x24xf32>
    %288 = arith.divf %287, %267 : vector<1x24xf32>
    %289 = arith.addf %288, %286 : vector<1x24xf32>
    %cst_94 = arith.constant -6.858280e+01 : f32
    %290 = vector.broadcast %cst_94 : f32 to vector<1x24xf32>
    %291 = arith.mulf %290, %289 : vector<1x24xf32>
    %c0_95 = arith.constant 0 : index
    %c0_96 = arith.constant 0 : index
    %292 = vector.load %arg14[%c0_95, %c0_96] : memref<1x24xf32, #tpu.memory_space<vmem>>, vector<1x24xf32>
    tpu.vector_store %arg14[%c0_95, %c0_96], %291 {strides = array<i32>} : memref<1x24xf32, #tpu.memory_space<vmem>>, vector<1x24xf32>,
    return
  }
}

</mosaic_0001>

<llo_original>
// kernel: jvp__.1
$region0: #{jvp__.1}
  #allocation0 [shape = 'u32[]', space=smem, size = 0x4, offset = 0x4, fixed_abs, tag = 'smem constant byte address 0x4 - core index']
  #allocation1 [shape = 'u32[144,128]{1,0:T(1,128)}', space=vmem, size = 0x12000, scoped, tag = 'internal scratch']
  #allocation2 [shape = 'f32[1,1]{1,0:T(1,128)S(1)}', space=vmem, size = 0x200, scoped, tag = 'scoped memory for jvp__.1']
  %s0 = inlined_call_operand.vmem [shape: f32[24,8], index: 0, kind: input, shape index: {}]
  %s1 = inlined_call_operand.vmem [shape: f32[8,24], index: 1, kind: input, shape index: {}]
  %s2 = inlined_call_operand.vmem [shape: f32[3,256], index: 2, kind: input, shape index: {}]
  %s3 = inlined_call_operand.vmem [shape: f32[1,128], index: 3, kind: input, shape index: {}]
  %s4 = inlined_call_operand.vmem [shape: f32[128,128], index: 4, kind: input, shape index: {}]
  %s5 = inlined_call_operand.vmem [shape: f32[1,128], index: 5, kind: input, shape index: {}]
  %s6 = inlined_call_operand.vmem [shape: f32[128,256], index: 6, kind: input, shape index: {}]
  %s7 = inlined_call_operand.vmem [shape: f32[1,128], index: 7, kind: input, shape index: {}]
  %s8 = inlined_call_operand.vmem [shape: f32[128,128], index: 8, kind: input, shape index: {}]
  %s9 = inlined_call_operand.vmem [shape: f32[1,128], index: 9, kind: input, shape index: {}]
  %s10 = inlined_call_operand.vmem [shape: f32[128,256], index: 10, kind: input, shape index: {}]
  %s11 = inlined_call_operand.vmem [shape: f32[1,128], index: 11, kind: input, shape index: {}]
  %s12 = inlined_call_operand.vmem [shape: f32[128,1], index: 12, kind: input, shape index: {}]
  %s13 = inlined_call_operand.<no memory space> [shape: f32[1,1], index: 13, kind: input, shape index: {}]
  %s14 = inlined_call_operand.vmem [shape: f32[1,24], index: 14, kind: output, shape index: {}]
  %s15 = sld [smem:[#allocation0]]
  $region66: #{jvp__.1} parent=0
    _
  %s17 = ssub.s32 1, %s15
  %s18 = scalar_select 0, %s17, %s15
  %v19 = vstv %s13
  %20 = vst [vmem:[#allocation2] sm:$0x1] %v19
  // Predicated region
  $region2: #{jvp__.1} parent=0 // pred_check
    _
  $region3: #{jvp__.1} parent=0 // pred_check_branch
    %22 = sbr.rel (0) target = $region5
  $region4: #{jvp__.1} parent=0 // pred_region
    _
  $region5: #{jvp__.1} parent=0 // pred_fallthru
    _
  // Predicated region
  $region6: #{jvp__.1} parent=0 // pred_check
    _
  $region7: #{jvp__.1} parent=0 // pred_check_branch
    %24 = sbr.rel (0) target = $region9
  $region8: #{jvp__.1} parent=0 // pred_region
    _
  $region9: #{jvp__.1} parent=0 // pred_fallthru
    _
  // Predicated region
  $region10: #{jvp__.1} parent=0 // pred_check
    _
  $region11: #{jvp__.1} parent=0 // pred_check_branch
    %26 = sbr.rel (0) target = $region13
  $region12: #{jvp__.1} parent=0 // pred_region
    _
  $region13: #{jvp__.1} parent=0 // pred_fallthru
    _
  // Predicated region
  $region14: #{jvp__.1} parent=0 // pred_check
    _
  $region15: #{jvp__.1} parent=0 // pred_check_branch
    %28 = sbr.rel (0) target = $region17
  $region16: #{jvp__.1} parent=0 // pred_region
    _
  $region17: #{jvp__.1} parent=0 // pred_fallthru
    _
  // Predicated region
  $region18: #{jvp__.1} parent=0 // pred_check
    _
  $region19: #{jvp__.1} parent=0 // pred_check_branch
    %30 = sbr.rel (0) target = $region21
  $region20: #{jvp__.1} parent=0 // pred_region
    _
  $region21: #{jvp__.1} parent=0 // pred_fallthru
    _
  // Predicated region
  $region22: #{jvp__.1} parent=0 // pred_check
    _
  $region23: #{jvp__.1} parent=0 // pred_check_branch
    %32 = sbr.rel (0) target = $region25
  $region24: #{jvp__.1} parent=0 // pred_region
    _
  $region25: #{jvp__.1} parent=0 // pred_fallthru
    _
  // Predicated region
  $region26: #{jvp__.1} parent=0 // pred_check
    _
  $region27: #{jvp__.1} parent=0 // pred_check_branch
    %34 = sbr.rel (0) target = $region29
  $region28: #{jvp__.1} parent=0 // pred_region
    _
  $region29: #{jvp__.1} parent=0 // pred_fallthru
    _
  // Predicated region
  $region30: #{jvp__.1} parent=0 // pred_check
    _
  $region31: #{jvp__.1} parent=0 // pred_check_branch
    %36 = sbr.rel (0) target = $region33
  $region32: #{jvp__.1} parent=0 // pred_region
    _
  $region33: #{jvp__.1} parent=0 // pred_fallthru
    _
  // Predicated region
  $region34: #{jvp__.1} parent=0 // pred_check
    _
  $region35: #{jvp__.1} parent=0 // pred_check_branch
    %38 = sbr.rel (0) target = $region37
  $region36: #{jvp__.1} parent=0 // pred_region
    _
  $region37: #{jvp__.1} parent=0 // pred_fallthru
    _
  // Predicated region
  $region38: #{jvp__.1} parent=0 // pred_check
    _
  $region39: #{jvp__.1} parent=0 // pred_check_branch
    %40 = sbr.rel (0) target = $region41
  $region40: #{jvp__.1} parent=0 // pred_region
    _
  $region41: #{jvp__.1} parent=0 // pred_fallthru
    _
  // Predicated region
  $region42: #{jvp__.1} parent=0 // pred_check
    _
  $region43: #{jvp__.1} parent=0 // pred_check_branch
    %42 = sbr.rel (0) target = $region45
  $region44: #{jvp__.1} parent=0 // pred_region
    _
  $region45: #{jvp__.1} parent=0 // pred_fallthru
    _
  // Predicated region
  $region46: #{jvp__.1} parent=0 // pred_check
    _
  $region47: #{jvp__.1} parent=0 // pred_check_branch
    %44 = sbr.rel (0) target = $region49
  $region48: #{jvp__.1} parent=0 // pred_region
    _
  $region49: #{jvp__.1} parent=0 // pred_fallthru
    _
  // Predicated region
  $region50: #{jvp__.1} parent=0 // pred_check
    _
  $region51: #{jvp__.1} parent=0 // pred_check_branch
    %46 = sbr.rel (0) target = $region53
  $region52: #{jvp__.1} parent=0 // pred_region
    _
  $region53: #{jvp__.1} parent=0 // pred_fallthru
    _
  // Predicated region
  $region54: #{jvp__.1} parent=0 // pred_check
    _
  $region55: #{jvp__.1} parent=0 // pred_check_branch
    %48 = sbr.rel (0) target = $region57
  $region56: #{jvp__.1} parent=0 // pred_region
    _
  $region57: #{jvp__.1} parent=0 // pred_fallthru
    _
  %v49 = vld [vmem:[%s2] sm:$0x77]
  %v50 = vld [vmem:[%s3] sm:$0x1]
  %v51 = vld [vmem:[%s4] sm:$0xff]
  %v52 = vld [vmem:[%s4 + $0x8] sm:$0xff]
  %v53 = vld [vmem:[%s4 + $0x10] sm:$0xff]
  %v54 = vld [vmem:[%s4 + $0x18] sm:$0xff]
  %v55 = vld [vmem:[%s4 + $0x20] sm:$0xff]
  %v56 = vld [vmem:[%s4 + $0x28] sm:$0xff]
  %v57 = vld [vmem:[%s4 + $0x30] sm:$0xff]
  %v58 = vld [vmem:[%s4 + $0x38] sm:$0xff]
  %v59 = vld [vmem:[%s4 + $0x40] sm:$0xff]
  %v60 = vld [vmem:[%s4 + $0x48] sm:$0xff]
  %v61 = vld [vmem:[%s4 + $0x50] sm:$0xff]
  %v62 = vld [vmem:[%s4 + $0x58] sm:$0xff]
  %v63 = vld [vmem:[%s4 + $0x60] sm:$0xff]
  %v64 = vld [vmem:[%s4 + $0x68] sm:$0xff]
  %v65 = vld [vmem:[%s4 + $0x70] sm:$0xff]
  %v66 = vld [vmem:[%s4 + $0x78] sm:$0xff]
  %v67 = vld [vmem:[%s5] sm:$0x1]
  %v68 = vld [vmem:[%s6] sm:$0xff]
  %v69 = vld [vmem:[%s6 + $0x8] sm:$0xff]
  %v70 = vld [vmem:[%s6 + $0x10] sm:$0xff]
  %v71 = vld [vmem:[%s6 + $0x18] sm:$0xff]
  %v72 = vld [vmem:[%s6 + $0x20] sm:$0xff]
  %v73 = vld [vmem:[%s6 + $0x28] sm:$0xff]
  %v74 = vld [vmem:[%s6 + $0x30] sm:$0xff]
  %v75 = vld [vmem:[%s6 + $0x38] sm:$0xff]
  %v76 = vld [vmem:[%s6 + $0x40] sm:$0xff]
  %v77 = vld [vmem:[%s6 + $0x48] sm:$0xff]
  %v78 = vld [vmem:[%s6 + $0x50] sm:$0xff]
  %v79 = vld [vmem:[%s6 + $0x58] sm:$0xff]
  %v80 = vld [vmem:[%s6 + $0x60] sm:$0xff]
  %v81 = vld [vmem:[%s6 + $0x68] sm:$0xff]
  %v82 = vld [vmem:[%s6 + $0x70] sm:$0xff]
  %v83 = vld [vmem:[%s6 + $0x78] sm:$0xff]
  %v84 = vld [vmem:[%s6 + $0x80] sm:$0xff]
  %v85 = vld [vmem:[%s6 + $0x88] sm:$0xff]
  %v86 = vld [vmem:[%s6 + $0x90] sm:$0xff]
  %v87 = vld [vmem:[%s6 + $0x98] sm:$0xff]
  %v88 = vld [vmem:[%s6 + $0xa0] sm:$0xff]
  %v89 = vld [vmem:[%s6 + $0xa8] sm:$0xff]
  %v90 = vld [vmem:[%s6 + $0xb0] sm:$0xff]
  %v91 = vld [vmem:[%s6 + $0xb8] sm:$0xff]
  %v92 = vld [vmem:[%s6 + $0xc0] sm:$0xff]
  %v93 = vld [vmem:[%s6 + $0xc8] sm:$0xff]
  %v94 = vld [vmem:[%s6 + $0xd0] sm:$0xff]
  %v95 = vld [vmem:[%s6 + $0xd8] sm:$0xff]
  %v96 = vld [vmem:[%s6 + $0xe0] sm:$0xff]
  %v97 = vld [vmem:[%s6 + $0xe8] sm:$0xff]
  %v98 = vld [vmem:[%s6 + $0xf0] sm:$0xff]
  %v99 = vld [vmem:[%s6 + $0xf8] sm:$0xff]
  %v100 = vld [vmem:[%s7] sm:$0x1]
  %v101 = vld [vmem:[%s8] sm:$0xff]
  %v102 = vld [vmem:[%s8 + $0x8] sm:$0xff]
  %v103 = vld [vmem:[%s8 + $0x10] sm:$0xff]
  %v104 = vld [vmem:[%s8 + $0x18] sm:$0xff]
  %v105 = vld [vmem:[%s8 + $0x20] sm:$0xff]
  %v106 = vld [vmem:[%s8 + $0x28] sm:$0xff]
  %v107 = vld [vmem:[%s8 + $0x30] sm:$0xff]
  %v108 = vld [vmem:[%s8 + $0x38] sm:$0xff]
  %v109 = vld [vmem:[%s8 + $0x40] sm:$0xff]
  %v110 = vld [vmem:[%s8 + $0x48] sm:$0xff]
  %v111 = vld [vmem:[%s8 + $0x50] sm:$0xff]
  %v112 = vld [vmem:[%s8 + $0x58] sm:$0xff]
  %v113 = vld [vmem:[%s8 + $0x60] sm:$0xff]
  %v114 = vld [vmem:[%s8 + $0x68] sm:$0xff]
  %v115 = vld [vmem:[%s8 + $0x70] sm:$0xff]
  %v116 = vld [vmem:[%s8 + $0x78] sm:$0xff]
  %v117 = vld [vmem:[%s9] sm:$0x1]
  %v118 = vld [vmem:[%s10] sm:$0xff]
  %v119 = vld [vmem:[%s10 + $0x8] sm:$0xff]
  %v120 = vld [vmem:[%s10 + $0x10] sm:$0xff]
  %v121 = vld [vmem:[%s10 + $0x18] sm:$0xff]
  %v122 = vld [vmem:[%s10 + $0x20] sm:$0xff]
  %v123 = vld [vmem:[%s10 + $0x28] sm:$0xff]
  %v124 = vld [vmem:[%s10 + $0x30] sm:$0xff]
  %v125 = vld [vmem:[%s10 + $0x38] sm:$0xff]
  %v126 = vld [vmem:[%s10 + $0x40] sm:$0xff]
  %v127 = vld [vmem:[%s10 + $0x48] sm:$0xff]
  %v128 = vld [vmem:[%s10 + $0x50] sm:$0xff]
  %v129 = vld [vmem:[%s10 + $0x58] sm:$0xff]
  %v130 = vld [vmem:[%s10 + $0x60] sm:$0xff]
  %v131 = vld [vmem:[%s10 + $0x68] sm:$0xff]
  %v132 = vld [vmem:[%s10 + $0x70] sm:$0xff]
  %v133 = vld [vmem:[%s10 + $0x78] sm:$0xff]
  %v134 = vld [vmem:[%s10 + $0x80] sm:$0xff]
  %v135 = vld [vmem:[%s10 + $0x88] sm:$0xff]
  %v136 = vld [vmem:[%s10 + $0x90] sm:$0xff]
  %v137 = vld [vmem:[%s10 + $0x98] sm:$0xff]
  %v138 = vld [vmem:[%s10 + $0xa0] sm:$0xff]
  %v139 = vld [vmem:[%s10 + $0xa8] sm:$0xff]
  %v140 = vld [vmem:[%s10 + $0xb0] sm:$0xff]
  %v141 = vld [vmem:[%s10 + $0xb8] sm:$0xff]
  %v142 = vld [vmem:[%s10 + $0xc0] sm:$0xff]
  %v143 = vld [vmem:[%s10 + $0xc8] sm:$0xff]
  %v144 = vld [vmem:[%s10 + $0xd0] sm:$0xff]
  %v145 = vld [vmem:[%s10 + $0xd8] sm:$0xff]
  %v146 = vld [vmem:[%s10 + $0xe0] sm:$0xff]
  %v147 = vld [vmem:[%s10 + $0xe8] sm:$0xff]
  %v148 = vld [vmem:[%s10 + $0xf0] sm:$0xff]
  %v149 = vld [vmem:[%s10 + $0xf8] sm:$0xff]
  %v150 = vld [vmem:[%s11] sm:$0x1]
  %v151 = vld [vmem:[%s12] sm:$0xff]
  %v152 = vld [vmem:[%s12 + $0x8] sm:$0xff]
  %v153 = vld [vmem:[%s12 + $0x10] sm:$0xff]
  %v154 = vld [vmem:[%s12 + $0x18] sm:$0xff]
  %v155 = vld [vmem:[%s12 + $0x20] sm:$0xff]
  %v156 = vld [vmem:[%s12 + $0x28] sm:$0xff]
  %v157 = vld [vmem:[%s12 + $0x30] sm:$0xff]
  %v158 = vld [vmem:[%s12 + $0x38] sm:$0xff]
  %v159 = vld [vmem:[%s12 + $0x40] sm:$0xff]
  %v160 = vld [vmem:[%s12 + $0x48] sm:$0xff]
  %v161 = vld [vmem:[%s12 + $0x50] sm:$0xff]
  %v162 = vld [vmem:[%s12 + $0x58] sm:$0xff]
  %v163 = vld [vmem:[%s12 + $0x60] sm:$0xff]
  %v164 = vld [vmem:[%s12 + $0x68] sm:$0xff]
  %v165 = vld [vmem:[%s12 + $0x70] sm:$0xff]
  %v166 = vld [vmem:[%s12 + $0x78] sm:$0xff]
  %v167 = vld [vmem:[#allocation2] sm:$0x1]
  %v168 = vld [vmem:[%s0] sm:$0xff]
  %v169 = vld [vmem:[%s0 + $0x8] sm:$0xff]
  %v170 = vld [vmem:[%s0 + $0x10] sm:$0xff]
  %v171 = vld [vmem:[%s1] sm:$0xff]
  %173 = vset.pattern.permute.xlu0 0
  %174 = vperm.xlu0 %173, %v168
  %v175 = vpop.permute.xlu0 %174
  %178 = vset.pattern.permute.xlu0 0
  %179 = vperm.xlu0 %178, %v169
  %v180 = vpop.permute.xlu0 %179
  %183 = vset.pattern.permute.xlu0 0
  %184 = vperm.xlu0 %183, %v170
  %v185 = vpop.permute.xlu0 %184
  %v187 = vlaneseq
  %v188 = vshrl.u32 %v187, 7
  %v189 = vsub.s32 0, %v188
  %v190 = vrot.slane %v171, %v189
  %v191 = vsub.f32 %v175, %v190
  %v192 = vsub.f32 %v180, %v190
  %v193 = vsub.f32 %v185, %v190
  %194 = vset.pattern.permute.xlu0 1
  %195 = vperm.xlu0 %194, %v168
  %v196 = vpop.permute.xlu0 %195
  %198 = vset.pattern.permute.xlu0 1
  %199 = vperm.xlu0 %198, %v169
  %v200 = vpop.permute.xlu0 %199
  %202 = vset.pattern.permute.xlu0 1
  %203 = vperm.xlu0 %202, %v170
  %v204 = vpop.permute.xlu0 %203
  %v206 = vlaneseq
  %v207 = vshrl.u32 %v206, 7
  %v208 = vsub.s32 1, %v207
  %v209 = vrot.slane %v171, %v208
  %v210 = vsub.f32 %v196, %v209
  %v211 = vsub.f32 %v200, %v209
  %v212 = vsub.f32 %v204, %v209
  %213 = vset.pattern.permute.xlu0 2
  %214 = vperm.xlu0 %213, %v168
  %v215 = vpop.permute.xlu0 %214
  %217 = vset.pattern.permute.xlu0 2
  %218 = vperm.xlu0 %217, %v169
  %v219 = vpop.permute.xlu0 %218
  %221 = vset.pattern.permute.xlu0 2
  %222 = vperm.xlu0 %221, %v170
  %v223 = vpop.permute.xlu0 %222
  %v225 = vlaneseq
  %v226 = vshrl.u32 %v225, 7
  %v227 = vsub.s32 2, %v226
  %v228 = vrot.slane %v171, %v227
  %v229 = vsub.f32 %v215, %v228
  %v230 = vsub.f32 %v219, %v228
  %v231 = vsub.f32 %v223, %v228
  %v232 = vmul.f32 %v191, %v191
  %v233 = vmul.f32 %v192, %v192
  %v234 = vmul.f32 %v193, %v193
  %v235 = vmul.f32 %v210, %v210
  %v236 = vmul.f32 %v211, %v211
  %v237 = vmul.f32 %v212, %v212
  %v238 = vadd.f32 %v232, %v235
  %v239 = vadd.f32 %v233, %v236
  %v240 = vadd.f32 %v234, %v237
  %v241 = vmul.f32 %v229, %v229
  %v242 = vmul.f32 %v230, %v230
  %v243 = vmul.f32 %v231, %v231
  %v244 = vadd.f32 %v238, %v241
  %v245 = vadd.f32 %v239, %v242
  %v246 = vadd.f32 %v240, %v243
  %v247 = vlaneseq
  %v248 = vshrl.u32 %v247, 7
  %v249 = vadd.s32 %v248, 8
  %v250 = vadd.s32 %v248, 16
  %v251 = vlaneseq
  %v252 = vand.u32 %v251, 127
  %vm253 = vcmp.ne.s32.totalorder %v248, %v252
  %vm254 = vcmp.ne.s32.totalorder %v249, %v252
  %vm255 = vcmp.ne.s32.totalorder %v250, %v252
  %v256 = vsel %vm253, %v244, 1.0
  %v257 = vsel %vm254, %v245, 1.0
  %v258 = vsel %vm255, %v246, 1.0
  %v259 = vrsqrt.pop %v256
  %v260 = vmul.f32 %v256, %v259
  %vm261 = vcmp.eq.f32.partialorder %v256, inf
  %v262 = vsel %vm261, %v256, %v260
  %vm263 = vcmp.eq.f32.partialorder %v256, 0.0
  %v264 = vand.u32 %v256, 2147483648
  %v265 = vsel %vm263, %v264, %v262
  %v266 = vrsqrt.pop %v257
  %v267 = vmul.f32 %v257, %v266
  %vm268 = vcmp.eq.f32.partialorder %v257, inf
  %v269 = vsel %vm268, %v257, %v267
  %vm270 = vcmp.eq.f32.partialorder %v257, 0.0
  %v271 = vand.u32 %v257, 2147483648
  %v272 = vsel %vm270, %v271, %v269
  %v273 = vrsqrt.pop %v258
  %v274 = vmul.f32 %v258, %v273
  %vm275 = vcmp.eq.f32.partialorder %v258, inf
  %v276 = vsel %vm275, %v258, %v274
  %vm277 = vcmp.eq.f32.partialorder %v258, 0.0
  %v278 = vand.u32 %v258, 2147483648
  %v279 = vsel %vm277, %v278, %v276
  %vm280 = vcmp.lt.f32.partialorder %v265, 10.0
  %vm281 = vcmp.lt.f32.partialorder %v272, 10.0
  %vm282 = vcmp.lt.f32.partialorder %v279, 10.0
  %vm283 = vmand %vm253, %vm280
  %vm284 = vmand %vm254, %vm281
  %vm285 = vmand %vm255, %vm282
  %v286 = vsel %vm283, 1.0, 0.0
  %v287 = vsel %vm284, 1.0, 0.0
  %v288 = vsel %vm285, 1.0, 0.0
  %vm289 = vcmp.lt.f32.partialorder %v265, 0.4
  %vm290 = vcmp.lt.f32.partialorder %v272, 0.4
  %vm291 = vcmp.lt.f32.partialorder %v279, 0.4
  %vm292 = vmand %vm253, %vm289
  %vm293 = vmand %vm254, %vm290
  %vm294 = vmand %vm255, %vm291
  %v295 = vsel %vm292, 1.0, 0.0
  %v296 = vsel %vm293, 1.0, 0.0
  %v297 = vsel %vm294, 1.0, 0.0
  %v298 = vsub.f32 %v168, 0.009
  %v299 = vsub.f32 %v169, 0.009
  %v300 = vsub.f32 %v170, 0.009
  %302 = vset.pattern.permute.xlu0 4
  %303 = vperm.xlu0 %302, %v298
  %v304 = vpop.permute.xlu0 %303
  %307 = vset.pattern.permute.xlu0 4
  %308 = vperm.xlu0 %307, %v299
  %v309 = vpop.permute.xlu0 %308
  %312 = vset.pattern.permute.xlu0 4
  %313 = vperm.xlu0 %312, %v300
  %v314 = vpop.permute.xlu0 %313
  %v316 = vrcp.pop %v265
  %v317 = vmul.f32 1.0, %v316
  %v318 = vrcp.pop %v272
  %v319 = vmul.f32 1.0, %v318
  %v320 = vrcp.pop %v279
  %v321 = vmul.f32 1.0, %v320
  %v322 = vlaneseq
  %v323 = vshrl.u32 %v322, 7
  %v324 = vsub.s32 4, %v323
  %v325 = vrot.slane %v171, %v324
  %v326 = vadd.f32 %v265, %v325
  %v327 = vadd.f32 %v272, %v325
  %v328 = vadd.f32 %v279, %v325
  %v329 = vsub.f32 %v265, %v325
  %v330 = vsub.f32 %v272, %v325
  %v331 = vsub.f32 %v279, %v325
  %v332 = vand.u32 2147483647, %v329
  %v333 = vand.u32 2147483647, %v330
  %v334 = vand.u32 2147483647, %v331
  %v335 = vmax.f32 %v304, %v332
  %v336 = vmax.f32 %v309, %v333
  %v337 = vmax.f32 %v314, %v334
  %v338 = vrcp.pop %v335
  %v339 = vmul.f32 1.0, %v338
  %v340 = vrcp.pop %v336
  %v341 = vmul.f32 1.0, %v340
  %v342 = vrcp.pop %v337
  %v343 = vmul.f32 1.0, %v342
  %v344 = vrcp.pop %v326
  %v345 = vmul.f32 1.0, %v344
  %v346 = vrcp.pop %v327
  %v347 = vmul.f32 1.0, %v346
  %v348 = vrcp.pop %v328
  %v349 = vmul.f32 1.0, %v348
  %v350 = vsub.f32 %v339, %v345
  %v351 = vsub.f32 %v341, %v347
  %v352 = vsub.f32 %v343, %v349
  %v353 = vmul.f32 %v171, %v171
  %v354 = vlaneseq
  %v355 = vshrl.u32 %v354, 7
  %v356 = vsub.s32 4, %v355
  %v357 = vrot.slane %v353, %v356
  %v358 = vmul.f32 %v357, %v317
  %v359 = vmul.f32 %v357, %v319
  %v360 = vmul.f32 %v357, %v321
  %v361 = vsub.f32 %v265, %v358
  %v362 = vsub.f32 %v272, %v359
  %v363 = vsub.f32 %v279, %v360
  %v364 = vmul.f32 %v361, 0.25
  %v365 = vmul.f32 %v362, 0.25
  %v366 = vmul.f32 %v363, 0.25
  %v367 = vmul.f32 %v345, %v345
  %v368 = vmul.f32 %v347, %v347
  %v369 = vmul.f32 %v349, %v349
  %v370 = vmul.f32 %v339, %v339
  %v371 = vmul.f32 %v341, %v341
  %v372 = vmul.f32 %v343, %v343
  %v373 = vsub.f32 %v367, %v370
  %v374 = vsub.f32 %v368, %v371
  %v375 = vsub.f32 %v369, %v372
  %v376 = vmul.f32 %v364, %v373
  %v377 = vmul.f32 %v365, %v374
  %v378 = vmul.f32 %v366, %v375
  %v379 = vadd.f32 %v350, %v376
  %v380 = vadd.f32 %v351, %v377
  %v381 = vadd.f32 %v352, %v378
  %v382 = vmul.f32 %v335, %v345
  %v383 = vmul.f32 %v336, %v347
  %v384 = vmul.f32 %v337, %v349
  %v385 = vlog2.pop %v382
  %v386 = vmul.f32 %v385, 0.6931472
  %v387 = vlog2.pop %v383
  %v388 = vmul.f32 %v387, 0.6931472
  %v389 = vlog2.pop %v384
  %v390 = vmul.f32 %v389, 0.6931472
  %v391 = vmul.f32 %v386, 0.5
  %v392 = vmul.f32 %v388, 0.5
  %v393 = vmul.f32 %v390, 0.5
  %v394 = vmul.f32 %v391, %v317
  %v395 = vmul.f32 %v392, %v319
  %v396 = vmul.f32 %v393, %v321
  %v397 = vadd.f32 %v379, %v394
  %v398 = vadd.f32 %v380, %v395
  %v399 = vadd.f32 %v381, %v396
  %v400 = vmul.f32 %v397, 0.5
  %v401 = vmul.f32 %v398, 0.5
  %v402 = vmul.f32 %v399, 0.5
  %v403 = vsub.f32 %v325, %v265
  %v404 = vsub.f32 %v325, %v272
  %v405 = vsub.f32 %v325, %v279
  %vm406 = vcmp.lt.f32.partialorder %v304, %v403
  %vm407 = vcmp.lt.f32.partialorder %v309, %v404
  %vm408 = vcmp.lt.f32.partialorder %v314, %v405
  %v409 = vrcp.pop %v304
  %v410 = vmul.f32 1.0, %v409
  %v411 = vrcp.pop %v309
  %v412 = vmul.f32 1.0, %v411
  %v413 = vrcp.pop %v314
  %v414 = vmul.f32 1.0, %v413
  %v415 = vsub.f32 %v410, %v339
  %v416 = vsub.f32 %v412, %v341
  %v417 = vsub.f32 %v414, %v343
  %v418 = vmul.f32 %v415, 2.0
  %v419 = vmul.f32 %v416, 2.0
  %v420 = vmul.f32 %v417, 2.0
  %v421 = vsel %vm406, %v418, 0.0
  %v422 = vsel %vm407, %v419, 0.0
  %v423 = vsel %vm408, %v420, 0.0
  %v424 = vadd.f32 %v400, %v421
  %v425 = vadd.f32 %v401, %v422
  %v426 = vadd.f32 %v402, %v423
  %vm427 = vcmp.lt.f32.partialorder %v304, %v326
  %vm428 = vcmp.lt.f32.partialorder %v309, %v327
  %vm429 = vcmp.lt.f32.partialorder %v314, %v328
  %v430 = vsel %vm427, %v424, 0.0
  %v431 = vsel %vm428, %v425, 0.0
  %v432 = vsel %vm429, %v426, 0.0
  %v433 = vmul.f32 %v430, %v286
  %v434 = vmul.f32 %v431, %v287
  %v435 = vmul.f32 %v432, %v288
  %vm436 = vcmask 195584
  %v437 = vsel %vm436, %v433, 0.0
  %438 = vadd.xlane.f32.xlu0 %v437
  %v439 = vpop.xlane.xlu0 %438
  %v440 = vsel %vm436, %v434, 0.0
  %441 = vadd.xlane.f32.xlu0 %v440
  %v442 = vpop.xlane.xlu0 %441
  %v443 = vsel %vm436, %v435, 0.0
  %444 = vadd.xlane.f32.xlu0 %v443
  %v445 = vpop.xlane.xlu0 %444
  %v446 = vmul.f32 %v439, %v298
  %v447 = vmul.f32 %v442, %v299
  %v448 = vmul.f32 %v445, %v300
  %v449 = vrcp.pop %v298
  %v450 = vmul.f32 1.0, %v449
  %v451 = vrcp.pop %v299
  %v452 = vmul.f32 1.0, %v451
  %v453 = vrcp.pop %v300
  %v454 = vmul.f32 1.0, %v453
  %v455 = vmul.f32 %v446, 0.8
  %v456 = vmul.f32 %v447, 0.8
  %v457 = vmul.f32 %v448, 0.8
  %v458 = vmul.f32 %v455, %v446
  %v459 = vmul.f32 %v456, %v447
  %v460 = vmul.f32 %v457, %v448
  %v461 = vsub.f32 %v446, %v458
  %v462 = vsub.f32 %v447, %v459
  %v463 = vsub.f32 %v448, %v460
  %v464 = vmul.f32 %v446, 4.85
  %v465 = vmul.f32 %v447, 4.85
  %v466 = vmul.f32 %v448, 4.85
  %v467 = vmul.f32 %v464, %v446
  %v468 = vmul.f32 %v465, %v447
  %v469 = vmul.f32 %v466, %v448
  %v470 = vmul.f32 %v467, %v446
  %v471 = vmul.f32 %v468, %v447
  %v472 = vmul.f32 %v469, %v448
  %v473 = vadd.f32 %v461, %v470
  %v474 = vadd.f32 %v462, %v471
  %v475 = vadd.f32 %v463, %v472
  %v476 = vtanh.pop %v473
  %v477 = vtanh.pop %v474
  %v478 = vtanh.pop %v475
  %v479 = vrcp.pop %v168
  %v480 = vmul.f32 %v476, %v479
  %v481 = vrcp.pop %v169
  %v482 = vmul.f32 %v477, %v481
  %v483 = vrcp.pop %v170
  %v484 = vmul.f32 %v478, %v483
  %v485 = vsub.f32 %v450, %v480
  %v486 = vsub.f32 %v452, %v482
  %v487 = vsub.f32 %v454, %v484
  %v488 = vrcp.pop %v485
  %v489 = vmul.f32 1.0, %v488
  %v490 = vrcp.pop %v486
  %v491 = vmul.f32 1.0, %v490
  %v492 = vrcp.pop %v487
  %v493 = vmul.f32 1.0, %v492
  %v494 = vadd.s32 %v248, 24
  %v495 = vadd.s32 %v248, 32
  %v496 = vadd.s32 %v248, 40
  %v497 = vadd.s32 %v248, 48
  %v498 = vadd.s32 %v248, 56
  %v499 = vadd.s32 %v248, 64
  %v500 = vadd.s32 %v248, 72
  %v501 = vadd.s32 %v248, 80
  %v502 = vadd.s32 %v248, 88
  %v503 = vadd.s32 %v248, 96
  %v504 = vadd.s32 %v248, 104
  %v505 = vadd.s32 %v248, 112
  %v506 = vadd.s32 %v248, 120
  %v507 = vadd.s32 %v248, 128
  %v508 = vadd.s32 %v248, 136
  %v509 = vadd.s32 %v248, 144
  %v510 = vadd.s32 %v248, 152
  %v511 = vadd.s32 %v248, 160
  %v512 = vadd.s32 %v248, 168
  %v513 = vadd.s32 %v248, 176
  %v514 = vadd.s32 %v248, 184
  %v515 = vadd.s32 %v248, 192
  %v516 = vadd.s32 %v248, 200
  %v517 = vadd.s32 %v248, 208
  %v518 = vadd.s32 %v248, 216
  %v519 = vadd.s32 %v248, 224
  %v520 = vadd.s32 %v248, 232
  %v521 = vadd.s32 %v248, 240
  %v522 = vadd.s32 %v248, 248
  %v523 = vadd.s32 %v248, 256
  %v524 = vadd.s32 %v248, 264
  %v525 = vadd.s32 %v248, 272
  %v526 = vadd.s32 %v248, 280
  %v527 = vadd.s32 %v248, 288
  %v528 = vadd.s32 %v248, 296
  %v529 = vadd.s32 %v248, 304
  %v530 = vadd.s32 %v248, 312
  %v531 = vadd.s32 %v248, 320
  %v532 = vadd.s32 %v248, 328
  %v533 = vadd.s32 %v248, 336
  %v534 = vadd.s32 %v248, 344
  %v535 = vadd.s32 %v248, 352
  %v536 = vadd.s32 %v248, 360
  %v537 = vadd.s32 %v248, 368
  %v538 = vadd.s32 %v248, 376
  %v539 = vadd.s32 %v248, 384
  %v540 = vadd.s32 %v248, 392
  %v541 = vadd.s32 %v248, 400
  %v542 = vadd.s32 %v248, 408
  %v543 = vadd.s32 %v248, 416
  %v544 = vadd.s32 %v248, 424
  %v545 = vadd.s32 %v248, 432
  %v546 = vadd.s32 %v248, 440
  %v547 = vadd.s32 %v248, 448
  %v548 = vadd.s32 %v248, 456
  %v549 = vadd.s32 %v248, 464
  %v550 = vadd.s32 %v248, 472
  %v551 = vadd.s32 %v248, 480
  %v552 = vadd.s32 %v248, 488
  %v553 = vadd.s32 %v248, 496
  %v554 = vadd.s32 %v248, 504
  %v555 = vadd.s32 %v248, 512
  %v556 = vadd.s32 %v248, 520
  %v557 = vadd.s32 %v248, 528
  %v558 = vadd.s32 %v248, 536
  %v559 = vadd.s32 %v248, 544
  %v560 = vadd.s32 %v248, 552
  %v561 = vadd.s32 %v248, 560
  %v562 = vadd.s32 %v248, 568
  %v563 = vcvt.s32.f32 %v248
  %v564 = vcvt.s32.f32 %v249
  %v565 = vcvt.s32.f32 %v250
  %v566 = vcvt.s32.f32 %v494
  %v567 = vcvt.s32.f32 %v495
  %v568 = vcvt.s32.f32 %v496
  %v569 = vcvt.s32.f32 %v497
  %v570 = vcvt.s32.f32 %v498
  %v571 = vcvt.s32.f32 %v499
  %v572 = vcvt.s32.f32 %v500
  %v573 = vcvt.s32.f32 %v501
  %v574 = vcvt.s32.f32 %v502
  %v575 = vcvt.s32.f32 %v503
  %v576 = vcvt.s32.f32 %v504
  %v577 = vcvt.s32.f32 %v505
  %v578 = vcvt.s32.f32 %v506
  %v579 = vcvt.s32.f32 %v507
  %v580 = vcvt.s32.f32 %v508
  %v581 = vcvt.s32.f32 %v509
  %v582 = vcvt.s32.f32 %v510
  %v583 = vcvt.s32.f32 %v511
  %v584 = vcvt.s32.f32 %v512
  %v585 = vcvt.s32.f32 %v513
  %v586 = vcvt.s32.f32 %v514
  %v587 = vcvt.s32.f32 %v515
  %v588 = vcvt.s32.f32 %v516
  %v589 = vcvt.s32.f32 %v517
  %v590 = vcvt.s32.f32 %v518
  %v591 = vcvt.s32.f32 %v519
  %v592 = vcvt.s32.f32 %v520
  %v593 = vcvt.s32.f32 %v521
  %v594 = vcvt.s32.f32 %v522
  %v595 = vcvt.s32.f32 %v523
  %v596 = vcvt.s32.f32 %v524
  %v597 = vcvt.s32.f32 %v525
  %v598 = vcvt.s32.f32 %v526
  %v599 = vcvt.s32.f32 %v527
  %v600 = vcvt.s32.f32 %v528
  %v601 = vcvt.s32.f32 %v529
  %v602 = vcvt.s32.f32 %v530
  %v603 = vcvt.s32.f32 %v531
  %v604 = vcvt.s32.f32 %v532
  %v605 = vcvt.s32.f32 %v533
  %v606 = vcvt.s32.f32 %v534
  %v607 = vcvt.s32.f32 %v535
  %v608 = vcvt.s32.f32 %v536
  %v609 = vcvt.s32.f32 %v537
  %v610 = vcvt.s32.f32 %v538
  %v611 = vcvt.s32.f32 %v539
  %v612 = vcvt.s32.f32 %v540
  %v613 = vcvt.s32.f32 %v541
  %v614 = vcvt.s32.f32 %v542
  %v615 = vcvt.s32.f32 %v543
  %v616 = vcvt.s32.f32 %v544
  %v617 = vcvt.s32.f32 %v545
  %v618 = vcvt.s32.f32 %v546
  %v619 = vcvt.s32.f32 %v547
  %v620 = vcvt.s32.f32 %v548
  %v621 = vcvt.s32.f32 %v549
  %v622 = vcvt.s32.f32 %v550
  %v623 = vcvt.s32.f32 %v551
  %v624 = vcvt.s32.f32 %v552
  %v625 = vcvt.s32.f32 %v553
  %v626 = vcvt.s32.f32 %v554
  %v627 = vcvt.s32.f32 %v555
  %v628 = vcvt.s32.f32 %v556
  %v629 = vcvt.s32.f32 %v557
  %v630 = vcvt.s32.f32 %v558
  %v631 = vcvt.s32.f32 %v559
  %v632 = vcvt.s32.f32 %v560
  %v633 = vcvt.s32.f32 %v561
  %v634 = vcvt.s32.f32 %v562
  %v635 = vcvt.s32.f32 %v252
  %v636 = vadd.f32 %v563, 0.5
  %v637 = vadd.f32 %v564, 0.5
  %v638 = vadd.f32 %v565, 0.5
  %v639 = vadd.f32 %v566, 0.5
  %v640 = vadd.f32 %v567, 0.5
  %v641 = vadd.f32 %v568, 0.5
  %v642 = vadd.f32 %v569, 0.5
  %v643 = vadd.f32 %v570, 0.5
  %v644 = vadd.f32 %v571, 0.5
  %v645 = vadd.f32 %v572, 0.5
  %v646 = vadd.f32 %v573, 0.5
  %v647 = vadd.f32 %v574, 0.5
  %v648 = vadd.f32 %v575, 0.5
  %v649 = vadd.f32 %v576, 0.5
  %v650 = vadd.f32 %v577, 0.5
  %v651 = vadd.f32 %v578, 0.5
  %v652 = vadd.f32 %v579, 0.5
  %v653 = vadd.f32 %v580, 0.5
  %v654 = vadd.f32 %v581, 0.5
  %v655 = vadd.f32 %v582, 0.5
  %v656 = vadd.f32 %v583, 0.5
  %v657 = vadd.f32 %v584, 0.5
  %v658 = vadd.f32 %v585, 0.5
  %v659 = vadd.f32 %v586, 0.5
  %v660 = vadd.f32 %v587, 0.5
  %v661 = vadd.f32 %v588, 0.5
  %v662 = vadd.f32 %v589, 0.5
  %v663 = vadd.f32 %v590, 0.5
  %v664 = vadd.f32 %v591, 0.5
  %v665 = vadd.f32 %v592, 0.5
  %v666 = vadd.f32 %v593, 0.5
  %v667 = vadd.f32 %v594, 0.5
  %v668 = vadd.f32 %v595, 0.5
  %v669 = vadd.f32 %v596, 0.5
  %v670 = vadd.f32 %v597, 0.5
  %v671 = vadd.f32 %v598, 0.5
  %v672 = vadd.f32 %v599, 0.5
  %v673 = vadd.f32 %v600, 0.5
  %v674 = vadd.f32 %v601, 0.5
  %v675 = vadd.f32 %v602, 0.5
  %v676 = vadd.f32 %v603, 0.5
  %v677 = vadd.f32 %v604, 0.5
  %v678 = vadd.f32 %v605, 0.5
  %v679 = vadd.f32 %v606, 0.5
  %v680 = vadd.f32 %v607, 0.5
  %v681 = vadd.f32 %v608, 0.5
  %v682 = vadd.f32 %v609, 0.5
  %v683 = vadd.f32 %v610, 0.5
  %v684 = vadd.f32 %v611, 0.5
  %v685 = vadd.f32 %v612, 0.5
  %v686 = vadd.f32 %v613, 0.5
  %v687 = vadd.f32 %v614, 0.5
  %v688 = vadd.f32 %v615, 0.5
  %v689 = vadd.f32 %v616, 0.5
  %v690 = vadd.f32 %v617, 0.5
  %v691 = vadd.f32 %v618, 0.5
  %v692 = vadd.f32 %v619, 0.5
  %v693 = vadd.f32 %v620, 0.5
  %v694 = vadd.f32 %v621, 0.5
  %v695 = vadd.f32 %v622, 0.5
  %v696 = vadd.f32 %v623, 0.5
  %v697 = vadd.f32 %v624, 0.5
  %v698 = vadd.f32 %v625, 0.5
  %v699 = vadd.f32 %v626, 0.5
  %v700 = vadd.f32 %v627, 0.5
  %v701 = vadd.f32 %v628, 0.5
  %v702 = vadd.f32 %v629, 0.5
  %v703 = vadd.f32 %v630, 0.5
  %v704 = vadd.f32 %v631, 0.5
  %v705 = vadd.f32 %v632, 0.5
  %v706 = vadd.f32 %v633, 0.5
  %v707 = vadd.f32 %v634, 0.5
  %v708 = vrcp.pop 24.0
  %v709 = vmul.f32 %v636, %v708
  %v710 = vmul.f32 %v637, %v708
  %v711 = vmul.f32 %v638, %v708
  %v712 = vmul.f32 %v639, %v708
  %v713 = vmul.f32 %v640, %v708
  %v714 = vmul.f32 %v641, %v708
  %v715 = vmul.f32 %v642, %v708
  %v716 = vmul.f32 %v643, %v708
  %v717 = vmul.f32 %v644, %v708
  %v718 = vmul.f32 %v645, %v708
  %v719 = vmul.f32 %v646, %v708
  %v720 = vmul.f32 %v647, %v708
  %v721 = vmul.f32 %v648, %v708
  %v722 = vmul.f32 %v649, %v708
  %v723 = vmul.f32 %v650, %v708
  %v724 = vmul.f32 %v651, %v708
  %v725 = vmul.f32 %v652, %v708
  %v726 = vmul.f32 %v653, %v708
  %v727 = vmul.f32 %v654, %v708
  %v728 = vmul.f32 %v655, %v708
  %v729 = vmul.f32 %v656, %v708
  %v730 = vmul.f32 %v657, %v708
  %v731 = vmul.f32 %v658, %v708
  %v732 = vmul.f32 %v659, %v708
  %v733 = vmul.f32 %v660, %v708
  %v734 = vmul.f32 %v661, %v708
  %v735 = vmul.f32 %v662, %v708
  %v736 = vmul.f32 %v663, %v708
  %v737 = vmul.f32 %v664, %v708
  %v738 = vmul.f32 %v665, %v708
  %v739 = vmul.f32 %v666, %v708
  %v740 = vmul.f32 %v667, %v708
  %v741 = vmul.f32 %v668, %v708
  %v742 = vmul.f32 %v669, %v708
  %v743 = vmul.f32 %v670, %v708
  %v744 = vmul.f32 %v671, %v708
  %v745 = vmul.f32 %v672, %v708
  %v746 = vmul.f32 %v673, %v708
  %v747 = vmul.f32 %v674, %v708
  %v748 = vmul.f32 %v675, %v708
  %v749 = vmul.f32 %v676, %v708
  %v750 = vmul.f32 %v677, %v708
  %v751 = vmul.f32 %v678, %v708
  %v752 = vmul.f32 %v679, %v708
  %v753 = vmul.f32 %v680, %v708
  %v754 = vmul.f32 %v681, %v708
  %v755 = vmul.f32 %v682, %v708
  %v756 = vmul.f32 %v683, %v708
  %v757 = vmul.f32 %v684, %v708
  %v758 = vmul.f32 %v685, %v708
  %v759 = vmul.f32 %v686, %v708
  %v760 = vmul.f32 %v687, %v708
  %v761 = vmul.f32 %v688, %v708
  %v762 = vmul.f32 %v689, %v708
  %v763 = vmul.f32 %v690, %v708
  %v764 = vmul.f32 %v691, %v708
  %v765 = vmul.f32 %v692, %v708
  %v766 = vmul.f32 %v693, %v708
  %v767 = vmul.f32 %v694, %v708
  %v768 = vmul.f32 %v695, %v708
  %v769 = vmul.f32 %v696, %v708
  %v770 = vmul.f32 %v697, %v708
  %v771 = vmul.f32 %v698, %v708
  %v772 = vmul.f32 %v699, %v708
  %v773 = vmul.f32 %v700, %v708
  %v774 = vmul.f32 %v701, %v708
  %v775 = vmul.f32 %v702, %v708
  %v776 = vmul.f32 %v703, %v708
  %v777 = vmul.f32 %v704, %v708
  %v778 = vmul.f32 %v705, %v708
  %v779 = vmul.f32 %v706, %v708
  %v780 = vmul.f32 %v707, %v708
  %v781 = vfloor.f32 %v709
  %v782 = vfloor.f32 %v710
  %v783 = vfloor.f32 %v711
  %v784 = vfloor.f32 %v712
  %v785 = vfloor.f32 %v713
  %v786 = vfloor.f32 %v714
  %v787 = vfloor.f32 %v715
  %v788 = vfloor.f32 %v716
  %v789 = vfloor.f32 %v717
  %v790 = vfloor.f32 %v718
  %v791 = vfloor.f32 %v719
  %v792 = vfloor.f32 %v720
  %v793 = vfloor.f32 %v721
  %v794 = vfloor.f32 %v722
  %v795 = vfloor.f32 %v723
  %v796 = vfloor.f32 %v724
  %v797 = vfloor.f32 %v725
  %v798 = vfloor.f32 %v726
  %v799 = vfloor.f32 %v727
  %v800 = vfloor.f32 %v728
  %v801 = vfloor.f32 %v729
  %v802 = vfloor.f32 %v730
  %v803 = vfloor.f32 %v731
  %v804 = vfloor.f32 %v732
  %v805 = vfloor.f32 %v733
  %v806 = vfloor.f32 %v734
  %v807 = vfloor.f32 %v735
  %v808 = vfloor.f32 %v736
  %v809 = vfloor.f32 %v737
  %v810 = vfloor.f32 %v738
  %v811 = vfloor.f32 %v739
  %v812 = vfloor.f32 %v740
  %v813 = vfloor.f32 %v741
  %v814 = vfloor.f32 %v742
  %v815 = vfloor.f32 %v743
  %v816 = vfloor.f32 %v744
  %v817 = vfloor.f32 %v745
  %v818 = vfloor.f32 %v746
  %v819 = vfloor.f32 %v747
  %v820 = vfloor.f32 %v748
  %v821 = vfloor.f32 %v749
  %v822 = vfloor.f32 %v750
  %v823 = vfloor.f32 %v751
  %v824 = vfloor.f32 %v752
  %v825 = vfloor.f32 %v753
  %v826 = vfloor.f32 %v754
  %v827 = vfloor.f32 %v755
  %v828 = vfloor.f32 %v756
  %v829 = vfloor.f32 %v757
  %v830 = vfloor.f32 %v758
  %v831 = vfloor.f32 %v759
  %v832 = vfloor.f32 %v760
  %v833 = vfloor.f32 %v761
  %v834 = vfloor.f32 %v762
  %v835 = vfloor.f32 %v763
  %v836 = vfloor.f32 %v764
  %v837 = vfloor.f32 %v765
  %v838 = vfloor.f32 %v766
  %v839 = vfloor.f32 %v767
  %v840 = vfloor.f32 %v768
  %v841 = vfloor.f32 %v769
  %v842 = vfloor.f32 %v770
  %v843 = vfloor.f32 %v771
  %v844 = vfloor.f32 %v772
  %v845 = vfloor.f32 %v773
  %v846 = vfloor.f32 %v774
  %v847 = vfloor.f32 %v775
  %v848 = vfloor.f32 %v776
  %v849 = vfloor.f32 %v777
  %v850 = vfloor.f32 %v778
  %v851 = vfloor.f32 %v779
  %v852 = vfloor.f32 %v780
  %v853 = vmul.f32 %v781, 24.0
  %v854 = vmul.f32 %v782, 24.0
  %v855 = vmul.f32 %v783, 24.0
  %v856 = vmul.f32 %v784, 24.0
  %v857 = vmul.f32 %v785, 24.0
  %v858 = vmul.f32 %v786, 24.0
  %v859 = vmul.f32 %v787, 24.0
  %v860 = vmul.f32 %v788, 24.0
  %v861 = vmul.f32 %v789, 24.0
  %v862 = vmul.f32 %v790, 24.0
  %v863 = vmul.f32 %v791, 24.0
  %v864 = vmul.f32 %v792, 24.0
  %v865 = vmul.f32 %v793, 24.0
  %v866 = vmul.f32 %v794, 24.0
  %v867 = vmul.f32 %v795, 24.0
  %v868 = vmul.f32 %v796, 24.0
  %v869 = vmul.f32 %v797, 24.0
  %v870 = vmul.f32 %v798, 24.0
  %v871 = vmul.f32 %v799, 24.0
  %v872 = vmul.f32 %v800, 24.0
  %v873 = vmul.f32 %v801, 24.0
  %v874 = vmul.f32 %v802, 24.0
  %v875 = vmul.f32 %v803, 24.0
  %v876 = vmul.f32 %v804, 24.0
  %v877 = vmul.f32 %v805, 24.0
  %v878 = vmul.f32 %v806, 24.0
  %v879 = vmul.f32 %v807, 24.0
  %v880 = vmul.f32 %v808, 24.0
  %v881 = vmul.f32 %v809, 24.0
  %v882 = vmul.f32 %v810, 24.0
  %v883 = vmul.f32 %v811, 24.0
  %v884 = vmul.f32 %v812, 24.0
  %v885 = vmul.f32 %v813, 24.0
  %v886 = vmul.f32 %v814, 24.0
  %v887 = vmul.f32 %v815, 24.0
  %v888 = vmul.f32 %v816, 24.0
  %v889 = vmul.f32 %v817, 24.0
  %v890 = vmul.f32 %v818, 24.0
  %v891 = vmul.f32 %v819, 24.0
  %v892 = vmul.f32 %v820, 24.0
  %v893 = vmul.f32 %v821, 24.0
  %v894 = vmul.f32 %v822, 24.0
  %v895 = vmul.f32 %v823, 24.0
  %v896 = vmul.f32 %v824, 24.0
  %v897 = vmul.f32 %v825, 24.0
  %v898 = vmul.f32 %v826, 24.0
  %v899 = vmul.f32 %v827, 24.0
  %v900 = vmul.f32 %v828, 24.0
  %v901 = vmul.f32 %v829, 24.0
  %v902 = vmul.f32 %v830, 24.0
  %v903 = vmul.f32 %v831, 24.0
  %v904 = vmul.f32 %v832, 24.0
  %v905 = vmul.f32 %v833, 24.0
  %v906 = vmul.f32 %v834, 24.0
  %v907 = vmul.f32 %v835, 24.0
  %v908 = vmul.f32 %v836, 24.0
  %v909 = vmul.f32 %v837, 24.0
  %v910 = vmul.f32 %v838, 24.0
  %v911 = vmul.f32 %v839, 24.0
  %v912 = vmul.f32 %v840, 24.0
  %v913 = vmul.f32 %v841, 24.0
  %v914 = vmul.f32 %v842, 24.0
  %v915 = vmul.f32 %v843, 24.0
  %v916 = vmul.f32 %v844, 24.0
  %v917 = vmul.f32 %v845, 24.0
  %v918 = vmul.f32 %v846, 24.0
  %v919 = vmul.f32 %v847, 24.0
  %v920 = vmul.f32 %v848, 24.0
  %v921 = vmul.f32 %v849, 24.0
  %v922 = vmul.f32 %v850, 24.0
  %v923 = vmul.f32 %v851, 24.0
  %v924 = vmul.f32 %v852, 24.0
  %v925 = vsub.f32 %v563, %v853
  %v926 = vsub.f32 %v564, %v854
  %v927 = vsub.f32 %v565, %v855
  %v928 = vsub.f32 %v566, %v856
  %v929 = vsub.f32 %v567, %v857
  %v930 = vsub.f32 %v568, %v858
  %v931 = vsub.f32 %v569, %v859
  %v932 = vsub.f32 %v570, %v860
  %v933 = vsub.f32 %v571, %v861
  %v934 = vsub.f32 %v572, %v862
  %v935 = vsub.f32 %v573, %v863
  %v936 = vsub.f32 %v574, %v864
  %v937 = vsub.f32 %v575, %v865
  %v938 = vsub.f32 %v576, %v866
  %v939 = vsub.f32 %v577, %v867
  %v940 = vsub.f32 %v578, %v868
  %v941 = vsub.f32 %v579, %v869
  %v942 = vsub.f32 %v580, %v870
  %v943 = vsub.f32 %v581, %v871
  %v944 = vsub.f32 %v582, %v872
  %v945 = vsub.f32 %v583, %v873
  %v946 = vsub.f32 %v584, %v874
  %v947 = vsub.f32 %v585, %v875
  %v948 = vsub.f32 %v586, %v876
  %v949 = vsub.f32 %v587, %v877
  %v950 = vsub.f32 %v588, %v878
  %v951 = vsub.f32 %v589, %v879
  %v952 = vsub.f32 %v590, %v880
  %v953 = vsub.f32 %v591, %v881
  %v954 = vsub.f32 %v592, %v882
  %v955 = vsub.f32 %v593, %v883
  %v956 = vsub.f32 %v594, %v884
  %v957 = vsub.f32 %v595, %v885
  %v958 = vsub.f32 %v596, %v886
  %v959 = vsub.f32 %v597, %v887
  %v960 = vsub.f32 %v598, %v888
  %v961 = vsub.f32 %v599, %v889
  %v962 = vsub.f32 %v600, %v890
  %v963 = vsub.f32 %v601, %v891
  %v964 = vsub.f32 %v602, %v892
  %v965 = vsub.f32 %v603, %v893
  %v966 = vsub.f32 %v604, %v894
  %v967 = vsub.f32 %v605, %v895
  %v968 = vsub.f32 %v606, %v896
  %v969 = vsub.f32 %v607, %v897
  %v970 = vsub.f32 %v608, %v898
  %v971 = vsub.f32 %v609, %v899
  %v972 = vsub.f32 %v610, %v900
  %v973 = vsub.f32 %v611, %v901
  %v974 = vsub.f32 %v612, %v902
  %v975 = vsub.f32 %v613, %v903
  %v976 = vsub.f32 %v614, %v904
  %v977 = vsub.f32 %v615, %v905
  %v978 = vsub.f32 %v616, %v906
  %v979 = vsub.f32 %v617, %v907
  %v980 = vsub.f32 %v618, %v908
  %v981 = vsub.f32 %v619, %v909
  %v982 = vsub.f32 %v620, %v910
  %v983 = vsub.f32 %v621, %v911
  %v984 = vsub.f32 %v622, %v912
  %v985 = vsub.f32 %v623, %v913
  %v986 = vsub.f32 %v624, %v914
  %v987 = vsub.f32 %v625, %v915
  %v988 = vsub.f32 %v626, %v916
  %v989 = vsub.f32 %v627, %v917
  %v990 = vsub.f32 %v628, %v918
  %v991 = vsub.f32 %v629, %v919
  %v992 = vsub.f32 %v630, %v920
  %v993 = vsub.f32 %v631, %v921
  %v994 = vsub.f32 %v632, %v922
  %v995 = vsub.f32 %v633, %v923
  %v996 = vsub.f32 %v634, %v924
  %vm997 = vcmp.eq.f32.partialorder %v781, %v635
  %vm998 = vcmp.eq.f32.partialorder %v782, %v635
  %vm999 = vcmp.eq.f32.partialorder %v783, %v635
  %vm1000 = vcmp.eq.f32.partialorder %v784, %v635
  %vm1001 = vcmp.eq.f32.partialorder %v785, %v635
  %vm1002 = vcmp.eq.f32.partialorder %v786, %v635
  %vm1003 = vcmp.eq.f32.partialorder %v787, %v635
  %vm1004 = vcmp.eq.f32.partialorder %v788, %v635
  %vm1005 = vcmp.eq.f32.partialorder %v789, %v635
  %vm1006 = vcmp.eq.f32.partialorder %v790, %v635
  %vm1007 = vcmp.eq.f32.partialorder %v791, %v635
  %vm1008 = vcmp.eq.f32.partialorder %v792, %v635
  %vm1009 = vcmp.eq.f32.partialorder %v793, %v635
  %vm1010 = vcmp.eq.f32.partialorder %v794, %v635
  %vm1011 = vcmp.eq.f32.partialorder %v795, %v635
  %vm1012 = vcmp.eq.f32.partialorder %v796, %v635
  %vm1013 = vcmp.eq.f32.partialorder %v797, %v635
  %vm1014 = vcmp.eq.f32.partialorder %v798, %v635
  %vm1015 = vcmp.eq.f32.partialorder %v799, %v635
  %vm1016 = vcmp.eq.f32.partialorder %v800, %v635
  %vm1017 = vcmp.eq.f32.partialorder %v801, %v635
  %vm1018 = vcmp.eq.f32.partialorder %v802, %v635
  %vm1019 = vcmp.eq.f32.partialorder %v803, %v635
  %vm1020 = vcmp.eq.f32.partialorder %v804, %v635
  %vm1021 = vcmp.eq.f32.partialorder %v805, %v635
  %vm1022 = vcmp.eq.f32.partialorder %v806, %v635
  %vm1023 = vcmp.eq.f32.partialorder %v807, %v635
  %vm1024 = vcmp.eq.f32.partialorder %v808, %v635
  %vm1025 = vcmp.eq.f32.partialorder %v809, %v635
  %vm1026 = vcmp.eq.f32.partialorder %v810, %v635
  %vm1027 = vcmp.eq.f32.partialorder %v811, %v635
  %vm1028 = vcmp.eq.f32.partialorder %v812, %v635
  %vm1029 = vcmp.eq.f32.partialorder %v813, %v635
  %vm1030 = vcmp.eq.f32.partialorder %v814, %v635
  %vm1031 = vcmp.eq.f32.partialorder %v815, %v635
  %vm1032 = vcmp.eq.f32.partialorder %v816, %v635
  %vm1033 = vcmp.eq.f32.partialorder %v817, %v635
  %vm1034 = vcmp.eq.f32.partialorder %v818, %v635
  %vm1035 = vcmp.eq.f32.partialorder %v819, %v635
  %vm1036 = vcmp.eq.f32.partialorder %v820, %v635
  %vm1037 = vcmp.eq.f32.partialorder %v821, %v635
  %vm1038 = vcmp.eq.f32.partialorder %v822, %v635
  %vm1039 = vcmp.eq.f32.partialorder %v823, %v635
  %vm1040 = vcmp.eq.f32.partialorder %v824, %v635
  %vm1041 = vcmp.eq.f32.partialorder %v825, %v635
  %vm1042 = vcmp.eq.f32.partialorder %v826, %v635
  %vm1043 = vcmp.eq.f32.partialorder %v827, %v635
  %vm1044 = vcmp.eq.f32.partialorder %v828, %v635
  %vm1045 = vcmp.eq.f32.partialorder %v829, %v635
  %vm1046 = vcmp.eq.f32.partialorder %v830, %v635
  %vm1047 = vcmp.eq.f32.partialorder %v831, %v635
  %vm1048 = vcmp.eq.f32.partialorder %v832, %v635
  %vm1049 = vcmp.eq.f32.partialorder %v833, %v635
  %vm1050 = vcmp.eq.f32.partialorder %v834, %v635
  %vm1051 = vcmp.eq.f32.partialorder %v835, %v635
  %vm1052 = vcmp.eq.f32.partialorder %v836, %v635
  %vm1053 = vcmp.eq.f32.partialorder %v837, %v635
  %vm1054 = vcmp.eq.f32.partialorder %v838, %v635
  %vm1055 = vcmp.eq.f32.partialorder %v839, %v635
  %vm1056 = vcmp.eq.f32.partialorder %v840, %v635
  %vm1057 = vcmp.eq.f32.partialorder %v841, %v635
  %vm1058 = vcmp.eq.f32.partialorder %v842, %v635
  %vm1059 = vcmp.eq.f32.partialorder %v843, %v635
  %vm1060 = vcmp.eq.f32.partialorder %v844, %v635
  %vm1061 = vcmp.eq.f32.partialorder %v845, %v635
  %vm1062 = vcmp.eq.f32.partialorder %v846, %v635
  %vm1063 = vcmp.eq.f32.partialorder %v847, %v635
  %vm1064 = vcmp.eq.f32.partialorder %v848, %v635
  %vm1065 = vcmp.eq.f32.partialorder %v849, %v635
  %vm1066 = vcmp.eq.f32.partialorder %v850, %v635
  %vm1067 = vcmp.eq.f32.partialorder %v851, %v635
  %vm1068 = vcmp.eq.f32.partialorder %v852, %v635
  %v1069 = vsel %vm997, 1.0, 0.0
  %v1070 = vsel %vm998, 1.0, 0.0
  %v1071 = vsel %vm999, 1.0, 0.0
  %v1072 = vsel %vm1000, 1.0, 0.0
  %v1073 = vsel %vm1001, 1.0, 0.0
  %v1074 = vsel %vm1002, 1.0, 0.0
  %v1075 = vsel %vm1003, 1.0, 0.0
  %v1076 = vsel %vm1004, 1.0, 0.0
  %v1077 = vsel %vm1005, 1.0, 0.0
  %v1078 = vsel %vm1006, 1.0, 0.0
  %v1079 = vsel %vm1007, 1.0, 0.0
  %v1080 = vsel %vm1008, 1.0, 0.0
  %v1081 = vsel %vm1009, 1.0, 0.0
  %v1082 = vsel %vm1010, 1.0, 0.0
  %v1083 = vsel %vm1011, 1.0, 0.0
  %v1084 = vsel %vm1012, 1.0, 0.0
  %v1085 = vsel %vm1013, 1.0, 0.0
  %v1086 = vsel %vm1014, 1.0, 0.0
  %v1087 = vsel %vm1015, 1.0, 0.0
  %v1088 = vsel %vm1016, 1.0, 0.0
  %v1089 = vsel %vm1017, 1.0, 0.0
  %v1090 = vsel %vm1018, 1.0, 0.0
  %v1091 = vsel %vm1019, 1.0, 0.0
  %v1092 = vsel %vm1020, 1.0, 0.0
  %v1093 = vsel %vm1021, 1.0, 0.0
  %v1094 = vsel %vm1022, 1.0, 0.0
  %v1095 = vsel %vm1023, 1.0, 0.0
  %v1096 = vsel %vm1024, 1.0, 0.0
  %v1097 = vsel %vm1025, 1.0, 0.0
  %v1098 = vsel %vm1026, 1.0, 0.0
  %v1099 = vsel %vm1027, 1.0, 0.0
  %v1100 = vsel %vm1028, 1.0, 0.0
  %v1101 = vsel %vm1029, 1.0, 0.0
  %v1102 = vsel %vm1030, 1.0, 0.0
  %v1103 = vsel %vm1031, 1.0, 0.0
  %v1104 = vsel %vm1032, 1.0, 0.0
  %v1105 = vsel %vm1033, 1.0, 0.0
  %v1106 = vsel %vm1034, 1.0, 0.0
  %v1107 = vsel %vm1035, 1.0, 0.0
  %v1108 = vsel %vm1036, 1.0, 0.0
  %v1109 = vsel %vm1037, 1.0, 0.0
  %v1110 = vsel %vm1038, 1.0, 0.0
  %v1111 = vsel %vm1039, 1.0, 0.0
  %v1112 = vsel %vm1040, 1.0, 0.0
  %v1113 = vsel %vm1041, 1.0, 0.0
  %v1114 = vsel %vm1042, 1.0, 0.0
  %v1115 = vsel %vm1043, 1.0, 0.0
  %v1116 = vsel %vm1044, 1.0, 0.0
  %v1117 = vsel %vm1045, 1.0, 0.0
  %v1118 = vsel %vm1046, 1.0, 0.0
  %v1119 = vsel %vm1047, 1.0, 0.0
  %v1120 = vsel %vm1048, 1.0, 0.0
  %v1121 = vsel %vm1049, 1.0, 0.0
  %v1122 = vsel %vm1050, 1.0, 0.0
  %v1123 = vsel %vm1051, 1.0, 0.0
  %v1124 = vsel %vm1052, 1.0, 0.0
  %v1125 = vsel %vm1053, 1.0, 0.0
  %v1126 = vsel %vm1054, 1.0, 0.0
  %v1127 = vsel %vm1055, 1.0, 0.0
  %v1128 = vsel %vm1056, 1.0, 0.0
  %v1129 = vsel %vm1057, 1.0, 0.0
  %v1130 = vsel %vm1058, 1.0, 0.0
  %v1131 = vsel %vm1059, 1.0, 0.0
  %v1132 = vsel %vm1060, 1.0, 0.0
  %v1133 = vsel %vm1061, 1.0, 0.0
  %v1134 = vsel %vm1062, 1.0, 0.0
  %v1135 = vsel %vm1063, 1.0, 0.0
  %v1136 = vsel %vm1064, 1.0, 0.0
  %v1137 = vsel %vm1065, 1.0, 0.0
  %v1138 = vsel %vm1066, 1.0, 0.0
  %v1139 = vsel %vm1067, 1.0, 0.0
  %v1140 = vsel %vm1068, 1.0, 0.0
  %vm1141 = vcmp.eq.f32.partialorder %v925, %v635
  %vm1142 = vcmp.eq.f32.partialorder %v926, %v635
  %vm1143 = vcmp.eq.f32.partialorder %v927, %v635
  %vm1144 = vcmp.eq.f32.partialorder %v928, %v635
  %vm1145 = vcmp.eq.f32.partialorder %v929, %v635
  %vm1146 = vcmp.eq.f32.partialorder %v930, %v635
  %vm1147 = vcmp.eq.f32.partialorder %v931, %v635
  %vm1148 = vcmp.eq.f32.partialorder %v932, %v635
  %vm1149 = vcmp.eq.f32.partialorder %v933, %v635
  %vm1150 = vcmp.eq.f32.partialorder %v934, %v635
  %vm1151 = vcmp.eq.f32.partialorder %v935, %v635
  %vm1152 = vcmp.eq.f32.partialorder %v936, %v635
  %vm1153 = vcmp.eq.f32.partialorder %v937, %v635
  %vm1154 = vcmp.eq.f32.partialorder %v938, %v635
  %vm1155 = vcmp.eq.f32.partialorder %v939, %v635
  %vm1156 = vcmp.eq.f32.partialorder %v940, %v635
  %vm1157 = vcmp.eq.f32.partialorder %v941, %v635
  %vm1158 = vcmp.eq.f32.partialorder %v942, %v635
  %vm1159 = vcmp.eq.f32.partialorder %v943, %v635
  %vm1160 = vcmp.eq.f32.partialorder %v944, %v635
  %vm1161 = vcmp.eq.f32.partialorder %v945, %v635
  %vm1162 = vcmp.eq.f32.partialorder %v946, %v635
  %vm1163 = vcmp.eq.f32.partialorder %v947, %v635
  %vm1164 = vcmp.eq.f32.partialorder %v948, %v635
  %vm1165 = vcmp.eq.f32.partialorder %v949, %v635
  %vm1166 = vcmp.eq.f32.partialorder %v950, %v635
  %vm1167 = vcmp.eq.f32.partialorder %v951, %v635
  %vm1168 = vcmp.eq.f32.partialorder %v952, %v635
  %vm1169 = vcmp.eq.f32.partialorder %v953, %v635
  %vm1170 = vcmp.eq.f32.partialorder %v954, %v635
  %vm1171 = vcmp.eq.f32.partialorder %v955, %v635
  %vm1172 = vcmp.eq.f32.partialorder %v956, %v635
  %vm1173 = vcmp.eq.f32.partialorder %v957, %v635
  %vm1174 = vcmp.eq.f32.partialorder %v958, %v635
  %vm1175 = vcmp.eq.f32.partialorder %v959, %v635
  %vm1176 = vcmp.eq.f32.partialorder %v960, %v635
  %vm1177 = vcmp.eq.f32.partialorder %v961, %v635
  %vm1178 = vcmp.eq.f32.partialorder %v962, %v635
  %vm1179 = vcmp.eq.f32.partialorder %v963, %v635
  %vm1180 = vcmp.eq.f32.partialorder %v964, %v635
  %vm1181 = vcmp.eq.f32.partialorder %v965, %v635
  %vm1182 = vcmp.eq.f32.partialorder %v966, %v635
  %vm1183 = vcmp.eq.f32.partialorder %v967, %v635
  %vm1184 = vcmp.eq.f32.partialorder %v968, %v635
  %vm1185 = vcmp.eq.f32.partialorder %v969, %v635
  %vm1186 = vcmp.eq.f32.partialorder %v970, %v635
  %vm1187 = vcmp.eq.f32.partialorder %v971, %v635
  %vm1188 = vcmp.eq.f32.partialorder %v972, %v635
  %vm1189 = vcmp.eq.f32.partialorder %v973, %v635
  %vm1190 = vcmp.eq.f32.partialorder %v974, %v635
  %vm1191 = vcmp.eq.f32.partialorder %v975, %v635
  %vm1192 = vcmp.eq.f32.partialorder %v976, %v635
  %vm1193 = vcmp.eq.f32.partialorder %v977, %v635
  %vm1194 = vcmp.eq.f32.partialorder %v978, %v635
  %vm1195 = vcmp.eq.f32.partialorder %v979, %v635
  %vm1196 = vcmp.eq.f32.partialorder %v980, %v635
  %vm1197 = vcmp.eq.f32.partialorder %v981, %v635
  %vm1198 = vcmp.eq.f32.partialorder %v982, %v635
  %vm1199 = vcmp.eq.f32.partialorder %v983, %v635
  %vm1200 = vcmp.eq.f32.partialorder %v984, %v635
  %vm1201 = vcmp.eq.f32.partialorder %v985, %v635
  %vm1202 = vcmp.eq.f32.partialorder %v986, %v635
  %vm1203 = vcmp.eq.f32.partialorder %v987, %v635
  %vm1204 = vcmp.eq.f32.partialorder %v988, %v635
  %vm1205 = vcmp.eq.f32.partialorder %v989, %v635
  %vm1206 = vcmp.eq.f32.partialorder %v990, %v635
  %vm1207 = vcmp.eq.f32.partialorder %v991, %v635
  %vm1208 = vcmp.eq.f32.partialorder %v992, %v635
  %vm1209 = vcmp.eq.f32.partialorder %v993, %v635
  %vm1210 = vcmp.eq.f32.partialorder %v994, %v635
  %vm1211 = vcmp.eq.f32.partialorder %v995, %v635
  %vm1212 = vcmp.eq.f32.partialorder %v996, %v635
  %v1213 = vsel %vm1141, 1.0, 0.0
  %v1214 = vsel %vm1142, 1.0, 0.0
  %v1215 = vsel %vm1143, 1.0, 0.0
  %v1216 = vsel %vm1144, 1.0, 0.0
  %v1217 = vsel %vm1145, 1.0, 0.0
  %v1218 = vsel %vm1146, 1.0, 0.0
  %v1219 = vsel %vm1147, 1.0, 0.0
  %v1220 = vsel %vm1148, 1.0, 0.0
  %v1221 = vsel %vm1149, 1.0, 0.0
  %v1222 = vsel %vm1150, 1.0, 0.0
  %v1223 = vsel %vm1151, 1.0, 0.0
  %v1224 = vsel %vm1152, 1.0, 0.0
  %v1225 = vsel %vm1153, 1.0, 0.0
  %v1226 = vsel %vm1154, 1.0, 0.0
  %v1227 = vsel %vm1155, 1.0, 0.0
  %v1228 = vsel %vm1156, 1.0, 0.0
  %v1229 = vsel %vm1157, 1.0, 0.0
  %v1230 = vsel %vm1158, 1.0, 0.0
  %v1231 = vsel %vm1159, 1.0, 0.0
  %v1232 = vsel %vm1160, 1.0, 0.0
  %v1233 = vsel %vm1161, 1.0, 0.0
  %v1234 = vsel %vm1162, 1.0, 0.0
  %v1235 = vsel %vm1163, 1.0, 0.0
  %v1236 = vsel %vm1164, 1.0, 0.0
  %v1237 = vsel %vm1165, 1.0, 0.0
  %v1238 = vsel %vm1166, 1.0, 0.0
  %v1239 = vsel %vm1167, 1.0, 0.0
  %v1240 = vsel %vm1168, 1.0, 0.0
  %v1241 = vsel %vm1169, 1.0, 0.0
  %v1242 = vsel %vm1170, 1.0, 0.0
  %v1243 = vsel %vm1171, 1.0, 0.0
  %v1244 = vsel %vm1172, 1.0, 0.0
  %v1245 = vsel %vm1173, 1.0, 0.0
  %v1246 = vsel %vm1174, 1.0, 0.0
  %v1247 = vsel %vm1175, 1.0, 0.0
  %v1248 = vsel %vm1176, 1.0, 0.0
  %v1249 = vsel %vm1177, 1.0, 0.0
  %v1250 = vsel %vm1178, 1.0, 0.0
  %v1251 = vsel %vm1179, 1.0, 0.0
  %v1252 = vsel %vm1180, 1.0, 0.0
  %v1253 = vsel %vm1181, 1.0, 0.0
  %v1254 = vsel %vm1182, 1.0, 0.0
  %v1255 = vsel %vm1183, 1.0, 0.0
  %v1256 = vsel %vm1184, 1.0, 0.0
  %v1257 = vsel %vm1185, 1.0, 0.0
  %v1258 = vsel %vm1186, 1.0, 0.0
  %v1259 = vsel %vm1187, 1.0, 0.0
  %v1260 = vsel %vm1188, 1.0, 0.0
  %v1261 = vsel %vm1189, 1.0, 0.0
  %v1262 = vsel %vm1190, 1.0, 0.0
  %v1263 = vsel %vm1191, 1.0, 0.0
  %v1264 = vsel %vm1192, 1.0, 0.0
  %v1265 = vsel %vm1193, 1.0, 0.0
  %v1266 = vsel %vm1194, 1.0, 0.0
  %v1267 = vsel %vm1195, 1.0, 0.0
  %v1268 = vsel %vm1196, 1.0, 0.0
  %v1269 = vsel %vm1197, 1.0, 0.0
  %v1270 = vsel %vm1198, 1.0, 0.0
  %v1271 = vsel %vm1199, 1.0, 0.0
  %v1272 = vsel %vm1200, 1.0, 0.0
  %v1273 = vsel %vm1201, 1.0, 0.0
  %v1274 = vsel %vm1202, 1.0, 0.0
  %v1275 = vsel %vm1203, 1.0, 0.0
  %v1276 = vsel %vm1204, 1.0, 0.0
  %v1277 = vsel %vm1205, 1.0, 0.0
  %v1278 = vsel %vm1206, 1.0, 0.0
  %v1279 = vsel %vm1207, 1.0, 0.0
  %v1280 = vsel %vm1208, 1.0, 0.0
  %v1281 = vsel %vm1209, 1.0, 0.0
  %v1282 = vsel %vm1210, 1.0, 0.0
  %v1283 = vsel %vm1211, 1.0, 0.0
  %v1284 = vsel %vm1212, 1.0, 0.0
  %v1285 = vadd.s32 %v252, 128
  %v1286 = vadd.s32 %v252, 256
  %v1287 = vadd.s32 %v252, 384
  %v1288 = vadd.s32 %v252, 512
  %v1289 = vcvt.s32.f32 %v1285
  %v1290 = vcvt.s32.f32 %v1286
  %v1291 = vcvt.s32.f32 %v1287
  %v1292 = vcvt.s32.f32 %v1288
  %v1293 = vadd.f32 %v635, 0.5
  %v1294 = vadd.f32 %v1289, 0.5
  %v1295 = vadd.f32 %v1290, 0.5
  %v1296 = vadd.f32 %v1291, 0.5
  %v1297 = vadd.f32 %v1292, 0.5
  %v1298 = vmul.f32 %v1293, %v708
  %v1299 = vmul.f32 %v1294, %v708
  %v1300 = vmul.f32 %v1295, %v708
  %v1301 = vmul.f32 %v1296, %v708
  %v1302 = vmul.f32 %v1297, %v708
  %v1303 = vfloor.f32 %v1298
  %v1304 = vfloor.f32 %v1299
  %v1305 = vfloor.f32 %v1300
  %v1306 = vfloor.f32 %v1301
  %v1307 = vfloor.f32 %v1302
  %v1308 = vmul.f32 %v1303, 24.0
  %v1309 = vmul.f32 %v1304, 24.0
  %v1310 = vmul.f32 %v1305, 24.0
  %v1311 = vmul.f32 %v1306, 24.0
  %v1312 = vmul.f32 %v1307, 24.0
  %v1313 = vsub.f32 %v635, %v1308
  %v1314 = vsub.f32 %v1289, %v1309
  %v1315 = vsub.f32 %v1290, %v1310
  %v1316 = vsub.f32 %v1291, %v1311
  %v1317 = vsub.f32 %v1292, %v1312
  %vm1318 = vcmp.eq.f32.partialorder %v1303, %v563
  %vm1319 = vcmp.eq.f32.partialorder %v1304, %v563
  %vm1320 = vcmp.eq.f32.partialorder %v1305, %v563
  %vm1321 = vcmp.eq.f32.partialorder %v1306, %v563
  %vm1322 = vcmp.eq.f32.partialorder %v1307, %v563
  %vm1323 = vcmp.eq.f32.partialorder %v1303, %v564
  %vm1324 = vcmp.eq.f32.partialorder %v1304, %v564
  %vm1325 = vcmp.eq.f32.partialorder %v1305, %v564
  %vm1326 = vcmp.eq.f32.partialorder %v1306, %v564
  %vm1327 = vcmp.eq.f32.partialorder %v1307, %v564
  %vm1328 = vcmp.eq.f32.partialorder %v1303, %v565
  %vm1329 = vcmp.eq.f32.partialorder %v1304, %v565
  %vm1330 = vcmp.eq.f32.partialorder %v1305, %v565
  %vm1331 = vcmp.eq.f32.partialorder %v1306, %v565
  %vm1332 = vcmp.eq.f32.partialorder %v1307, %v565
  %v1333 = vsel %vm1318, 1.0, 0.0
  %v1334 = vsel %vm1319, 1.0, 0.0
  %v1335 = vsel %vm1320, 1.0, 0.0
  %v1336 = vsel %vm1321, 1.0, 0.0
  %v1337 = vsel %vm1322, 1.0, 0.0
  %v1338 = vsel %vm1323, 1.0, 0.0
  %v1339 = vsel %vm1324, 1.0, 0.0
  %v1340 = vsel %vm1325, 1.0, 0.0
  %v1341 = vsel %vm1326, 1.0, 0.0
  %v1342 = vsel %vm1327, 1.0, 0.0
  %v1343 = vsel %vm1328, 1.0, 0.0
  %v1344 = vsel %vm1329, 1.0, 0.0
  %v1345 = vsel %vm1330, 1.0, 0.0
  %v1346 = vsel %vm1331, 1.0, 0.0
  %v1347 = vsel %vm1332, 1.0, 0.0
  %vm1348 = vcmp.eq.f32.partialorder %v1313, %v563
  %vm1349 = vcmp.eq.f32.partialorder %v1314, %v563
  %vm1350 = vcmp.eq.f32.partialorder %v1315, %v563
  %vm1351 = vcmp.eq.f32.partialorder %v1316, %v563
  %vm1352 = vcmp.eq.f32.partialorder %v1317, %v563
  %vm1353 = vcmp.eq.f32.partialorder %v1313, %v564
  %vm1354 = vcmp.eq.f32.partialorder %v1314, %v564
  %vm1355 = vcmp.eq.f32.partialorder %v1315, %v564
  %vm1356 = vcmp.eq.f32.partialorder %v1316, %v564
  %vm1357 = vcmp.eq.f32.partialorder %v1317, %v564
  %vm1358 = vcmp.eq.f32.partialorder %v1313, %v565
  %vm1359 = vcmp.eq.f32.partialorder %v1314, %v565
  %vm1360 = vcmp.eq.f32.partialorder %v1315, %v565
  %vm1361 = vcmp.eq.f32.partialorder %v1316, %v565
  %vm1362 = vcmp.eq.f32.partialorder %v1317, %v565
  %v1363 = vsel %vm1348, 1.0, 0.0
  %v1364 = vsel %vm1349, 1.0, 0.0
  %v1365 = vsel %vm1350, 1.0, 0.0
  %v1366 = vsel %vm1351, 1.0, 0.0
  %v1367 = vsel %vm1352, 1.0, 0.0
  %v1368 = vsel %vm1353, 1.0, 0.0
  %v1369 = vsel %vm1354, 1.0, 0.0
  %v1370 = vsel %vm1355, 1.0, 0.0
  %v1371 = vsel %vm1356, 1.0, 0.0
  %v1372 = vsel %vm1357, 1.0, 0.0
  %v1373 = vsel %vm1358, 1.0, 0.0
  %v1374 = vsel %vm1359, 1.0, 0.0
  %v1375 = vsel %vm1360, 1.0, 0.0
  %v1376 = vsel %vm1361, 1.0, 0.0
  %v1377 = vsel %vm1362, 1.0, 0.0
  %v1379 = vsel %vm436, %v295, 0
  %v1382 = vsel %vm436, %v296, 0
  %v1385 = vsel %vm436, %v297, 0
  %1387 = vmatprep.subr.mxu0 %v1364
  %1388 = vmatpush1.msra.mxu0 %v1363
  %1389 = vmatprep.subr.mxu0 %v1369
  %1390 = vmatpush1.msra.mxu0 %v1368
  %1391 = vmatprep.subr.mxu0 %v1374
  %1392 = vmatpush1.msra.mxu0 %v1373
  %1393 = vmatprep.subr.mxu0 0.0
  %1394 = vmatpush1.msra.mxu0 0.0
  %1395 = vmatprep.subr.mxu0 0.0
  %1396 = vmatpush1.msra.mxu0 0.0
  %1397 = vmatprep.subr.mxu0 0.0
  %1398 = vmatpush1.msra.mxu0 0.0
  %1399 = vmatprep.subr.mxu0 0.0
  %1400 = vmatpush1.msra.mxu0 0.0
  %1401 = vmatprep.subr.mxu0 0.0
  %1402 = vmatpush1.msra.mxu0 0.0
  %1403 = vmatprep.subr.mxu0 0.0
  %1404 = vmatpush1.msra.mxu0 0.0
  %1405 = vmatprep.subr.mxu0 0.0
  %1406 = vmatpush1.msra.mxu0 0.0
  %1407 = vmatprep.subr.mxu0 0.0
  %1408 = vmatpush1.msra.mxu0 0.0
  %1409 = vmatprep.subr.mxu0 0.0
  %1410 = vmatpush1.msra.mxu0 0.0
  %1411 = vmatprep.subr.mxu0 0.0
  %1412 = vmatpush1.msra.mxu0 0.0
  %1413 = vmatprep.subr.mxu0 0.0
  %1414 = vmatpush1.msra.mxu0 0.0
  %1415 = vmatprep.subr.mxu0 0.0
  %1416 = vmatpush1.msra.mxu0 0.0
  %1417 = vmatprep.subr.mxu0 0.0
  %1418 = vmatpush1.msra.mxu0 0.0
  %1419 = vmatprep.subr.mxu0 0.0
  %1420 = vmatpush1.msra.mxu0 0.0
  %1421 = vmatprep.subr.mxu0 0.0
  %1422 = vmatpush1.msra.mxu0 0.0
  %1423 = vmatprep.subr.mxu0 0.0
  %1424 = vmatpush1.msra.mxu0 0.0
  %1425 = vmatprep.subr.mxu0 0.0
  %1426 = vmatpush1.msra.mxu0 0.0
  %1427 = vmatprep.subr.mxu0 0.0
  %1428 = vmatpush1.msra.mxu0 0.0
  %1429 = vmatprep.subr.mxu0 0.0
  %1430 = vmatpush1.msra.mxu0 0.0
  %1431 = vmatprep.subr.mxu0 0.0
  %1432 = vmatpush1.msra.mxu0 0.0
  %1433 = vmatprep.subr.mxu0 0.0
  %1434 = vmatpush1.msra.mxu0 0.0
  %1435 = vmatprep.subr.mxu0 0.0
  %1436 = vmatpush1.msra.mxu0 0.0
  %1437 = vmatprep.subr.mxu0 0.0
  %1438 = vmatpush1.msra.mxu0 0.0
  %1439 = vmatprep.subr.mxu0 0.0
  %1440 = vmatpush1.msra.mxu0 0.0
  %1441 = vmatprep.subr.mxu0 0.0
  %1442 = vmatpush1.msra.mxu0 0.0
  %1443 = vmatprep.subr.mxu0 0.0
  %1444 = vmatpush1.msra.mxu0 0.0
  %1445 = vmatprep.subr.mxu0 0.0
  %1446 = vmatpush1.msra.mxu0 0.0
  %1447 = vmatprep.subr.mxu0 0.0
  %1448 = vmatpush1.msra.mxu0 0.0
  %1449 = vmatprep.subr.mxu0 0.0
  %1450 = vmatpush1.msra.mxu0 0.0
  %1451 = vmatprep.mubr.f32.mxu0 0.0
  %1452 = vmatmul.mubr.f32.gmra.mrb[0].mxu0 %v1379
  %v1453 = vpop.f32.mrb[0].mxu0
  %v1454 = vadd.f32 0.0, %v1453
  %v1455 = vpop.f32.mrb[0].mxu0
  %v1456 = vadd.f32 0.0, %v1455
  %1457 = vmatprep.mubr.f32.mxu0 0.0
  %1458 = vmatmul.mubr.f32.gmra.mrb[0].mxu0 %v1382
  %v1459 = vpop.f32.mrb[0].mxu0
  %v1460 = vadd.f32 0.0, %v1459
  %v1461 = vpop.f32.mrb[0].mxu0
  %v1462 = vadd.f32 0.0, %v1461
  %1463 = vmatprep.mubr.f32.mxu0 0.0
  %1464 = vmatmul.mubr.f32.gmra.mrb[0].mxu0 %v1385
  %v1465 = vpop.f32.mrb[0].mxu0
  %v1466 = vadd.f32 0.0, %v1465
  %v1467 = vpop.f32.mrb[0].mxu0
  %v1468 = vadd.f32 0.0, %v1467
  %1469 = vdwg.mxu0
  %1470 = vmatprep.subr.mxu0 %v1366
  %1471 = vmatpush1.msra.mxu0 %v1365
  %1472 = vmatprep.subr.mxu0 %v1371
  %1473 = vmatpush1.msra.mxu0 %v1370
  %1474 = vmatprep.subr.mxu0 %v1376
  %1475 = vmatpush1.msra.mxu0 %v1375
  %1476 = vmatprep.subr.mxu0 0.0
  %1477 = vmatpush1.msra.mxu0 0.0
  %1478 = vmatprep.subr.mxu0 0.0
  %1479 = vmatpush1.msra.mxu0 0.0
  %1480 = vmatprep.subr.mxu0 0.0
  %1481 = vmatpush1.msra.mxu0 0.0
  %1482 = vmatprep.subr.mxu0 0.0
  %1483 = vmatpush1.msra.mxu0 0.0
  %1484 = vmatprep.subr.mxu0 0.0
  %1485 = vmatpush1.msra.mxu0 0.0
  %1486 = vmatprep.subr.mxu0 0.0
  %1487 = vmatpush1.msra.mxu0 0.0
  %1488 = vmatprep.subr.mxu0 0.0
  %1489 = vmatpush1.msra.mxu0 0.0
  %1490 = vmatprep.subr.mxu0 0.0
  %1491 = vmatpush1.msra.mxu0 0.0
  %1492 = vmatprep.subr.mxu0 0.0
  %1493 = vmatpush1.msra.mxu0 0.0
  %1494 = vmatprep.subr.mxu0 0.0
  %1495 = vmatpush1.msra.mxu0 0.0
  %1496 = vmatprep.subr.mxu0 0.0
  %1497 = vmatpush1.msra.mxu0 0.0
  %1498 = vmatprep.subr.mxu0 0.0
  %1499 = vmatpush1.msra.mxu0 0.0
  %1500 = vmatprep.subr.mxu0 0.0
  %1501 = vmatpush1.msra.mxu0 0.0
  %1502 = vmatprep.subr.mxu0 0.0
  %1503 = vmatpush1.msra.mxu0 0.0
  %1504 = vmatprep.subr.mxu0 0.0
  %1505 = vmatpush1.msra.mxu0 0.0
  %1506 = vmatprep.subr.mxu0 0.0
  %1507 = vmatpush1.msra.mxu0 0.0
  %1508 = vmatprep.subr.mxu0 0.0
  %1509 = vmatpush1.msra.mxu0 0.0
  %1510 = vmatprep.subr.mxu0 0.0
  %1511 = vmatpush1.msra.mxu0 0.0
  %1512 = vmatprep.subr.mxu0 0.0
  %1513 = vmatpush1.msra.mxu0 0.0
  %1514 = vmatprep.subr.mxu0 0.0
  %1515 = vmatpush1.msra.mxu0 0.0
  %1516 = vmatprep.subr.mxu0 0.0
  %1517 = vmatpush1.msra.mxu0 0.0
  %1518 = vmatprep.subr.mxu0 0.0
  %1519 = vmatpush1.msra.mxu0 0.0
  %1520 = vmatprep.subr.mxu0 0.0
  %1521 = vmatpush1.msra.mxu0 0.0
  %1522 = vmatprep.subr.mxu0 0.0
  %1523 = vmatpush1.msra.mxu0 0.0
  %1524 = vmatprep.subr.mxu0 0.0
  %1525 = vmatpush1.msra.mxu0 0.0
  %1526 = vmatprep.subr.mxu0 0.0
  %1527 = vmatpush1.msra.mxu0 0.0
  %1528 = vmatprep.subr.mxu0 0.0
  %1529 = vmatpush1.msra.mxu0 0.0
  %1530 = vmatprep.subr.mxu0 0.0
  %1531 = vmatpush1.msra.mxu0 0.0
  %1532 = vmatprep.subr.mxu0 0.0
  %1533 = vmatpush1.msra.mxu0 0.0
  %1534 = vmatprep.mubr.f32.mxu0 0.0
  %1535 = vmatmul.mubr.f32.gmra.mrb[0].mxu0 %v1379
  %v1536 = vpop.f32.mrb[0].mxu0
  %v1537 = vadd.f32 0.0, %v1536
  %v1538 = vpop.f32.mrb[0].mxu0
  %v1539 = vadd.f32 0.0, %v1538
  %1540 = vmatprep.mubr.f32.mxu0 0.0
  %1541 = vmatmul.mubr.f32.gmra.mrb[0].mxu0 %v1382
  %v1542 = vpop.f32.mrb[0].mxu0
  %v1543 = vadd.f32 0.0, %v1542
  %v1544 = vpop.f32.mrb[0].mxu0
  %v1545 = vadd.f32 0.0, %v1544
  %1546 = vmatprep.mubr.f32.mxu0 0.0
  %1547 = vmatmul.mubr.f32.gmra.mrb[0].mxu0 %v1385
  %v1548 = vpop.f32.mrb[0].mxu0
  %v1549 = vadd.f32 0.0, %v1548
  %v1550 = vpop.f32.mrb[0].mxu0
  %v1551 = vadd.f32 0.0, %v1550
  %1552 = vdwg.mxu0
  %1553 = vmatprep.subr.mxu0 0.0
  %1554 = vmatpush1.msra.mxu0 %v1367
  %1555 = vmatprep.subr.mxu0 0.0
  %1556 = vmatpush1.msra.mxu0 %v1372
  %1557 = vmatprep.subr.mxu0 0.0
  %1558 = vmatpush1.msra.mxu0 %v1377
  %1559 = vmatprep.subr.mxu0 0.0
  %1560 = vmatpush1.msra.mxu0 0.0
  %1561 = vmatprep.subr.mxu0 0.0
  %1562 = vmatpush1.msra.mxu0 0.0
  %1563 = vmatprep.subr.mxu0 0.0
  %1564 = vmatpush1.msra.mxu0 0.0
  %1565 = vmatprep.subr.mxu0 0.0
  %1566 = vmatpush1.msra.mxu0 0.0
  %1567 = vmatprep.subr.mxu0 0.0
  %1568 = vmatpush1.msra.mxu0 0.0
  %1569 = vmatprep.subr.mxu0 0.0
  %1570 = vmatpush1.msra.mxu0 0.0
  %1571 = vmatprep.subr.mxu0 0.0
  %1572 = vmatpush1.msra.mxu0 0.0
  %1573 = vmatprep.subr.mxu0 0.0
  %1574 = vmatpush1.msra.mxu0 0.0
  %1575 = vmatprep.subr.mxu0 0.0
  %1576 = vmatpush1.msra.mxu0 0.0
  %1577 = vmatprep.subr.mxu0 0.0
  %1578 = vmatpush1.msra.mxu0 0.0
  %1579 = vmatprep.subr.mxu0 0.0
  %1580 = vmatpush1.msra.mxu0 0.0
  %1581 = vmatprep.subr.mxu0 0.0
  %1582 = vmatpush1.msra.mxu0 0.0
  %1583 = vmatprep.subr.mxu0 0.0
  %1584 = vmatpush1.msra.mxu0 0.0
  %1585 = vmatprep.subr.mxu0 0.0
  %1586 = vmatpush1.msra.mxu0 0.0
  %1587 = vmatprep.subr.mxu0 0.0
  %1588 = vmatpush1.msra.mxu0 0.0
  %1589 = vmatprep.subr.mxu0 0.0
  %1590 = vmatpush1.msra.mxu0 0.0
  %1591 = vmatprep.subr.mxu0 0.0
  %1592 = vmatpush1.msra.mxu0 0.0
  %1593 = vmatprep.subr.mxu0 0.0
  %1594 = vmatpush1.msra.mxu0 0.0
  %1595 = vmatprep.subr.mxu0 0.0
  %1596 = vmatpush1.msra.mxu0 0.0
  %1597 = vmatprep.subr.mxu0 0.0
  %1598 = vmatpush1.msra.mxu0 0.0
  %1599 = vmatprep.subr.mxu0 0.0
  %1600 = vmatpush1.msra.mxu0 0.0
  %1601 = vmatprep.subr.mxu0 0.0
  %1602 = vmatpush1.msra.mxu0 0.0
  %1603 = vmatprep.subr.mxu0 0.0
  %1604 = vmatpush1.msra.mxu0 0.0
  %1605 = vmatprep.subr.mxu0 0.0
  %1606 = vmatpush1.msra.mxu0 0.0
  %1607 = vmatprep.subr.mxu0 0.0
  %1608 = vmatpush1.msra.mxu0 0.0
  %1609 = vmatprep.subr.mxu0 0.0
  %1610 = vmatpush1.msra.mxu0 0.0
  %1611 = vmatprep.subr.mxu0 0.0
  %1612 = vmatpush1.msra.mxu0 0.0
  %1613 = vmatprep.subr.mxu0 0.0
  %1614 = vmatpush1.msra.mxu0 0.0
  %1615 = vmatprep.subr.mxu0 0.0
  %1616 = vmatpush1.msra.mxu0 0.0
  %1617 = vmatprep.mubr.f32.mxu0 0.0
  %1618 = vmatmul.mubr.f32.gmra.mrb[0].mxu0 %v1379
  %v1619 = vpop.f32.mrb[0].mxu0
  %v1620 = vadd.f32 0.0, %v1619
  %v1621 = vpop.f32.mrb[0].mxu0
  %1622 = vmatprep.mubr.f32.mxu0 0.0
  %1623 = vmatmul.mubr.f32.gmra.mrb[0].mxu0 %v1382
  %v1624 = vpop.f32.mrb[0].mxu0
  %v1625 = vadd.f32 0.0, %v1624
  %v1626 = vpop.f32.mrb[0].mxu0
  %1627 = vmatprep.mubr.f32.mxu0 0.0
  %1628 = vmatmul.mubr.f32.gmra.mrb[0].mxu0 %v1385
  %v1629 = vpop.f32.mrb[0].mxu0
  %v1630 = vadd.f32 0.0, %v1629
  %v1631 = vpop.f32.mrb[0].mxu0
  %1632 = vdwg.mxu0
  %v1633 = vmul.f32 %v1333, %v1454
  %v1634 = vmul.f32 %v1334, %v1456
  %v1635 = vmul.f32 %v1335, %v1537
  %v1636 = vmul.f32 %v1336, %v1539
  %v1637 = vmul.f32 %v1337, %v1620
  %v1638 = vmul.f32 %v1338, %v1460
  %v1639 = vmul.f32 %v1339, %v1462
  %v1640 = vmul.f32 %v1340, %v1543
  %v1641 = vmul.f32 %v1341, %v1545
  %v1642 = vmul.f32 %v1342, %v1625
  %v1643 = vmul.f32 %v1343, %v1466
  %v1644 = vmul.f32 %v1344, %v1468
  %v1645 = vmul.f32 %v1345, %v1549
  %v1646 = vmul.f32 %v1346, %v1551
  %v1647 = vmul.f32 %v1347, %v1630
  %1649 = vset.pattern.permute.xlu0 4
  %1650 = vperm.xlu0 %1649, %v489
  %v1651 = vpop.permute.xlu0 %1650
  %1654 = vset.pattern.permute.xlu0 4
  %1655 = vperm.xlu0 %1654, %v491
  %v1656 = vpop.permute.xlu0 %1655
  %1659 = vset.pattern.permute.xlu0 4
  %1660 = vperm.xlu0 %1659, %v493
  %v1661 = vpop.permute.xlu0 %1660
  %v1664 = vlaneseq
  %v1665 = vshrl.u32 %v1664, 7
  %v1666 = vsub.s32 0, %v1665
  %v1667 = vrot.slane %v49, %v1666
  %v1668 = vlaneseq
  %v1669 = vshrl.u32 %v1668, 7
  %v1670 = vsub.s32 4, %v1669
  %v1671 = vrot.slane %v49, %v1670
  %v1674 = vlaneseq
  %v1675 = vshrl.u32 %v1674, 7
  %v1676 = vsub.s32 0, %v1675
  %v1677 = vrot.slane %v1667, %v1676
  %v1678 = vlaneseq
  %v1679 = vshrl.u32 %v1678, 7
  %v1680 = vsub.s32 0, %v1679
  %v1681 = vrot.slane %v1671, %v1680
  %v1682 = vmul.f32 %v1651, %v1677
  %v1683 = vmul.f32 %v1651, %v1681
  %v1684 = vmul.f32 %v1656, %v1677
  %v1685 = vmul.f32 %v1656, %v1681
  %v1686 = vmul.f32 %v1661, %v1677
  %v1687 = vmul.f32 %v1661, %v1681
  %1688 = vset.pattern.permute.xlu0 3
  %1689 = vperm.xlu0 %1688, %v168
  %v1690 = vpop.permute.xlu0 %1689
  %1692 = vset.pattern.permute.xlu0 3
  %1693 = vperm.xlu0 %1692, %v169
  %v1694 = vpop.permute.xlu0 %1693
  %1696 = vset.pattern.permute.xlu0 3
  %1697 = vperm.xlu0 %1696, %v170
  %v1698 = vpop.permute.xlu0 %1697
  %v1700 = vlaneseq
  %v1701 = vshrl.u32 %v1700, 7
  %v1702 = vsub.s32 1, %v1701
  %v1703 = vrot.slane %v49, %v1702
  %v1704 = vlaneseq
  %v1705 = vshrl.u32 %v1704, 7
  %v1706 = vsub.s32 5, %v1705
  %v1707 = vrot.slane %v49, %v1706
  %v1710 = vlaneseq
  %v1711 = vshrl.u32 %v1710, 7
  %v1712 = vsub.s32 1, %v1711
  %v1713 = vrot.slane %v1703, %v1712
  %v1714 = vlaneseq
  %v1715 = vshrl.u32 %v1714, 7
  %v1716 = vsub.s32 1, %v1715
  %v1717 = vrot.slane %v1707, %v1716
  %v1718 = vmul.f32 %v1690, %v1713
  %v1719 = vmul.f32 %v1690, %v1717
  %v1720 = vmul.f32 %v1694, %v1713
  %v1721 = vmul.f32 %v1694, %v1717
  %v1722 = vmul.f32 %v1698, %v1713
  %v1723 = vmul.f32 %v1698, %v1717
  %v1724 = vadd.f32 %v1682, %v1718
  %v1725 = vadd.f32 %v1683, %v1719
  %v1726 = vadd.f32 %v1684, %v1720
  %v1727 = vadd.f32 %v1685, %v1721
  %v1728 = vadd.f32 %v1686, %v1722
  %v1729 = vadd.f32 %v1687, %v1723
  %1730 = vset.pattern.permute.xlu0 4
  %1731 = vperm.xlu0 %1730, %v168
  %v1732 = vpop.permute.xlu0 %1731
  %1734 = vset.pattern.permute.xlu0 4
  %1735 = vperm.xlu0 %1734, %v169
  %v1736 = vpop.permute.xlu0 %1735
  %1738 = vset.pattern.permute.xlu0 4
  %1739 = vperm.xlu0 %1738, %v170
  %v1740 = vpop.permute.xlu0 %1739
  %v1742 = vlaneseq
  %v1743 = vshrl.u32 %v1742, 7
  %v1744 = vsub.s32 2, %v1743
  %v1745 = vrot.slane %v49, %v1744
  %v1746 = vlaneseq
  %v1747 = vshrl.u32 %v1746, 7
  %v1748 = vsub.s32 6, %v1747
  %v1749 = vrot.slane %v49, %v1748
  %v1752 = vlaneseq
  %v1753 = vshrl.u32 %v1752, 7
  %v1754 = vsub.s32 2, %v1753
  %v1755 = vrot.slane %v1745, %v1754
  %v1756 = vlaneseq
  %v1757 = vshrl.u32 %v1756, 7
  %v1758 = vsub.s32 2, %v1757
  %v1759 = vrot.slane %v1749, %v1758
  %v1760 = vmul.f32 %v1732, %v1755
  %v1761 = vmul.f32 %v1732, %v1759
  %v1762 = vmul.f32 %v1736, %v1755
  %v1763 = vmul.f32 %v1736, %v1759
  %v1764 = vmul.f32 %v1740, %v1755
  %v1765 = vmul.f32 %v1740, %v1759
  %v1766 = vadd.f32 %v1724, %v1760
  %v1767 = vadd.f32 %v1725, %v1761
  %v1768 = vadd.f32 %v1726, %v1762
  %v1769 = vadd.f32 %v1727, %v1763
  %v1770 = vadd.f32 %v1728, %v1764
  %v1771 = vadd.f32 %v1729, %v1765
  %v1773 = vlaneseq
  %v1774 = vshrl.u32 %v1773, 7
  %v1775 = vsub.s32 0, %v1774
  %v1776 = vrot.slane %v50, %v1775
  %v1778 = vadd.f32 %v1766, %v1776
  %v1779 = vadd.f32 %v1768, %v1776
  %v1780 = vadd.f32 %v1770, %v1776
  %v1782 = vsel %vm436, %v1213, 0
  %v1785 = vsel %vm436, %v1214, 0
  %v1788 = vsel %vm436, %v1215, 0
  %v1791 = vsel %vm436, %v1216, 0
  %v1794 = vsel %vm436, %v1217, 0
  %v1797 = vsel %vm436, %v1218, 0
  %v1800 = vsel %vm436, %v1219, 0
  %v1803 = vsel %vm436, %v1220, 0
  %v1806 = vsel %vm436, %v1221, 0
  %v1809 = vsel %vm436, %v1222, 0
  %v1812 = vsel %vm436, %v1223, 0
  %v1815 = vsel %vm436, %v1224, 0
  %v1818 = vsel %vm436, %v1225, 0
  %v1821 = vsel %vm436, %v1226, 0
  %v1824 = vsel %vm436, %v1227, 0
  %v1827 = vsel %vm436, %v1228, 0
  %v1830 = vsel %vm436, %v1229, 0
  %v1833 = vsel %vm436, %v1230, 0
  %v1836 = vsel %vm436, %v1231, 0
  %v1839 = vsel %vm436, %v1232, 0
  %v1842 = vsel %vm436, %v1233, 0
  %v1845 = vsel %vm436, %v1234, 0
  %v1848 = vsel %vm436, %v1235, 0
  %v1851 = vsel %vm436, %v1236, 0
  %v1854 = vsel %vm436, %v1237, 0
  %v1857 = vsel %vm436, %v1238, 0
  %v1860 = vsel %vm436, %v1239, 0
  %v1863 = vsel %vm436, %v1240, 0
  %v1866 = vsel %vm436, %v1241, 0
  %v1869 = vsel %vm436, %v1242, 0
  %v1872 = vsel %vm436, %v1243, 0
  %v1875 = vsel %vm436, %v1244, 0
  %v1878 = vsel %vm436, %v1245, 0
  %v1881 = vsel %vm436, %v1246, 0
  %v1884 = vsel %vm436, %v1247, 0
  %v1887 = vsel %vm436, %v1248, 0
  %v1890 = vsel %vm436, %v1249, 0
  %v1893 = vsel %vm436, %v1250, 0
  %v1896 = vsel %vm436, %v1251, 0
  %v1899 = vsel %vm436, %v1252, 0
  %v1902 = vsel %vm436, %v1253, 0
  %v1905 = vsel %vm436, %v1254, 0
  %v1908 = vsel %vm436, %v1255, 0
  %v1911 = vsel %vm436, %v1256, 0
  %v1914 = vsel %vm436, %v1257, 0
  %v1917 = vsel %vm436, %v1258, 0
  %v1920 = vsel %vm436, %v1259, 0
  %v1923 = vsel %vm436, %v1260, 0
  %v1926 = vsel %vm436, %v1261, 0
  %v1929 = vsel %vm436, %v1262, 0
  %v1932 = vsel %vm436, %v1263, 0
  %v1935 = vsel %vm436, %v1264, 0
  %v1938 = vsel %vm436, %v1265, 0
  %v1941 = vsel %vm436, %v1266, 0
  %v1944 = vsel %vm436, %v1267, 0
  %v1947 = vsel %vm436, %v1268, 0
  %v1950 = vsel %vm436, %v1269, 0
  %v1953 = vsel %vm436, %v1270, 0
  %v1956 = vsel %vm436, %v1271, 0
  %v1959 = vsel %vm436, %v1272, 0
  %v1962 = vsel %vm436, %v1273, 0
  %v1965 = vsel %vm436, %v1274, 0
  %v1968 = vsel %vm436, %v1275, 0
  %v1971 = vsel %vm436, %v1276, 0
  %v1974 = vsel %vm436, %v1277, 0
  %v1977 = vsel %vm436, %v1278, 0
  %v1980 = vsel %vm436, %v1279, 0
  %v1983 = vsel %vm436, %v1280, 0
  %v1986 = vsel %vm436, %v1281, 0
  %v1989 = vsel %vm436, %v1282, 0
  %v1992 = vsel %vm436, %v1283, 0
  %v1995 = vsel %vm436, %v1284, 0
  %1997 = vmatprep.subr.mxu0 0.0
  %1998 = vmatpush1.msra.mxu0 %v1767
  %1999 = vmatprep.subr.mxu0 0.0
  %2000 = vmatpush1.msra.mxu0 %v1769
  %2001 = vmatprep.subr.mxu0 0.0
  %2002 = vmatpush1.msra.mxu0 %v1771
  %2003 = vmatprep.subr.mxu0 0.0
  %2004 = vmatpush1.msra.mxu0 0.0
  %2005 = vmatprep.subr.mxu0 0.0
  %2006 = vmatpush1.msra.mxu0 0.0
  %2007 = vmatprep.subr.mxu0 0.0
  %2008 = vmatpush1.msra.mxu0 0.0
  %2009 = vmatprep.subr.mxu0 0.0
  %2010 = vmatpush1.msra.mxu0 0.0
  %2011 = vmatprep.subr.mxu0 0.0
  %2012 = vmatpush1.msra.mxu0 0.0
  %2013 = vmatprep.subr.mxu0 0.0
  %2014 = vmatpush1.msra.mxu0 0.0
  %2015 = vmatprep.subr.mxu0 0.0
  %2016 = vmatpush1.msra.mxu0 0.0
  %2017 = vmatprep.subr.mxu0 0.0
  %2018 = vmatpush1.msra.mxu0 0.0
  %2019 = vmatprep.subr.mxu0 0.0
  %2020 = vmatpush1.msra.mxu0 0.0
  %2021 = vmatprep.subr.mxu0 0.0
  %2022 = vmatpush1.msra.mxu0 0.0
  %2023 = vmatprep.subr.mxu0 0.0
  %2024 = vmatpush1.msra.mxu0 0.0
  %2025 = vmatprep.subr.mxu0 0.0
  %2026 = vmatpush1.msra.mxu0 0.0
  %2027 = vmatprep.subr.mxu0 0.0
  %2028 = vmatpush1.msra.mxu0 0.0
  %2029 = vmatprep.subr.mxu0 0.0
  %2030 = vmatpush1.msra.mxu0 0.0
  %2031 = vmatprep.subr.mxu0 0.0
  %2032 = vmatpush1.msra.mxu0 0.0
  %2033 = vmatprep.subr.mxu0 0.0
  %2034 = vmatpush1.msra.mxu0 0.0
  %2035 = vmatprep.subr.mxu0 0.0
  %2036 = vmatpush1.msra.mxu0 0.0
  %2037 = vmatprep.subr.mxu0 0.0
  %2038 = vmatpush1.msra.mxu0 0.0
  %2039 = vmatprep.subr.mxu0 0.0
  %2040 = vmatpush1.msra.mxu0 0.0
  %2041 = vmatprep.subr.mxu0 0.0
  %2042 = vmatpush1.msra.mxu0 0.0
  %2043 = vmatprep.subr.mxu0 0.0
  %2044 = vmatpush1.msra.mxu0 0.0
  %2045 = vmatprep.subr.mxu0 0.0
  %2046 = vmatpush1.msra.mxu0 0.0
  %2047 = vmatprep.subr.mxu0 0.0
  %2048 = vmatpush1.msra.mxu0 0.0
  %2049 = vmatprep.subr.mxu0 0.0
  %2050 = vmatpush1.msra.mxu0 0.0
  %2051 = vmatprep.subr.mxu0 0.0
  %2052 = vmatpush1.msra.mxu0 0.0
  %2053 = vmatprep.subr.mxu0 0.0
  %2054 = vmatpush1.msra.mxu0 0.0
  %2055 = vmatprep.subr.mxu0 0.0
  %2056 = vmatpush1.msra.mxu0 0.0
  %2057 = vmatprep.subr.mxu0 0.0
  %2058 = vmatpush1.msra.mxu0 0.0
  %2059 = vmatprep.subr.mxu0 0.0
  %2060 = vmatpush1.msra.mxu0 0.0
  %2061 = vmatprep.mubr.f32.mxu0 0.0
  %2062 = vmatmul.mubr.f32.gmra.mrb[0].mxu0 %v1782
  %v2063 = vpop.f32.mrb[0].mxu0
  %v2064 = vadd.f32 0.0, %v2063
  %v2065 = vpop.f32.mrb[0].mxu0
  %2066 = vmatprep.mubr.f32.mxu0 0.0
  %2067 = vmatmul.mubr.f32.gmra.mrb[0].mxu0 %v1785
  %v2068 = vpop.f32.mrb[0].mxu0
  %v2069 = vadd.f32 0.0, %v2068
  %v2070 = vpop.f32.mrb[0].mxu0
  %2071 = vmatprep.mubr.f32.mxu0 0.0
  %2072 = vmatmul.mubr.f32.gmra.mrb[0].mxu0 %v1788
  %v2073 = vpop.f32.mrb[0].mxu0
  %v2074 = vadd.f32 0.0, %v2073
  %v2075 = vpop.f32.mrb[0].mxu0
  %2076 = vmatprep.mubr.f32.mxu0 0.0
  %2077 = vmatmul.mubr.f32.gmra.mrb[0].mxu0 %v1791
  %v2078 = vpop.f32.mrb[0].mxu0
  %v2079 = vadd.f32 0.0, %v2078
  %v2080 = vpop.f32.mrb[0].mxu0
  %2081 = vmatprep.mubr.f32.mxu0 0.0
  %2082 = vmatmul.mubr.f32.gmra.mrb[0].mxu0 %v1794
  %v2083 = vpop.f32.mrb[0].mxu0
  %v2084 = vadd.f32 0.0, %v2083
  %v2085 = vpop.f32.mrb[0].mxu0
  %2086 = vmatprep.mubr.f32.mxu0 0.0
  %2087 = vmatmul.mubr.f32.gmra.mrb[0].mxu0 %v1797
  %v2088 = vpop.f32.mrb[0].mxu0
  %v2089 = vadd.f32 0.0, %v2088
  %v2090 = vpop.f32.mrb[0].mxu0
  %2091 = vmatprep.mubr.f32.mxu0 0.0
  %2092 = vmatmul.mubr.f32.gmra.mrb[0].mxu0 %v1800
  %v2093 = vpop.f32.mrb[0].mxu0
  %v2094 = vadd.f32 0.0, %v2093
  %v2095 = vpop.f32.mrb[0].mxu0
  %2096 = vmatprep.mubr.f32.mxu0 0.0
  %2097 = vmatmul.mubr.f32.gmra.mrb[0].mxu0 %v1803
  %v2098 = vpop.f32.mrb[0].mxu0
  %v2099 = vadd.f32 0.0, %v2098
  %v2100 = vpop.f32.mrb[0].mxu0
  %2101 = vmatprep.mubr.f32.mxu0 0.0
  %2102 = vmatmul.mubr.f32.gmra.mrb[0].mxu0 %v1806
  %v2103 = vpop.f32.mrb[0].mxu0
  %v2104 = vadd.f32 0.0, %v2103
  %v2105 = vpop.f32.mrb[0].mxu0
  %2106 = vmatprep.mubr.f32.mxu0 0.0
  %2107 = vmatmul.mubr.f32.gmra.mrb[0].mxu0 %v1809
  %v2108 = vpop.f32.mrb[0].mxu0
  %v2109 = vadd.f32 0.0, %v2108
  %v2110 = vpop.f32.mrb[0].mxu0
  %2111 = vmatprep.mubr.f32.mxu0 0.0
  %2112 = vmatmul.mubr.f32.gmra.mrb[0].mxu0 %v1812
  %v2113 = vpop.f32.mrb[0].mxu0
  %v2114 = vadd.f32 0.0, %v2113
  %v2115 = vpop.f32.mrb[0].mxu0
  %2116 = vmatprep.mubr.f32.mxu0 0.0
  %2117 = vmatmul.mubr.f32.gmra.mrb[0].mxu0 %v1815
  %v2118 = vpop.f32.mrb[0].mxu0
  %v2119 = vadd.f32 0.0, %v2118
  %v2120 = vpop.f32.mrb[0].mxu0
  %2121 = vmatprep.mubr.f32.mxu0 0.0
  %2122 = vmatmul.mubr.f32.gmra.mrb[0].mxu0 %v1818
  %v2123 = vpop.f32.mrb[0].mxu0
  %v2124 = vadd.f32 0.0, %v2123
  %v2125 = vpop.f32.mrb[0].mxu0
  %2126 = vmatprep.mubr.f32.mxu0 0.0
  %2127 = vmatmul.mubr.f32.gmra.mrb[0].mxu0 %v1821
  %v2128 = vpop.f32.mrb[0].mxu0
  %v2129 = vadd.f32 0.0, %v2128
  %v2130 = vpop.f32.mrb[0].mxu0
  %2131 = vmatprep.mubr.f32.mxu0 0.0
  %2132 = vmatmul.mubr.f32.gmra.mrb[0].mxu0 %v1824
  %v2133 = vpop.f32.mrb[0].mxu0
  %v2134 = vadd.f32 0.0, %v2133
  %v2135 = vpop.f32.mrb[0].mxu0
  %2136 = vmatprep.mubr.f32.mxu0 0.0
  %2137 = vmatmul.mubr.f32.gmra.mrb[0].mxu0 %v1827
  %v2138 = vpop.f32.mrb[0].mxu0
  %v2139 = vadd.f32 0.0, %v2138
  %v2140 = vpop.f32.mrb[0].mxu0
  %2141 = vmatprep.mubr.f32.mxu0 0.0
  %2142 = vmatmul.mubr.f32.gmra.mrb[0].mxu0 %v1830
  %v2143 = vpop.f32.mrb[0].mxu0
  %v2144 = vadd.f32 0.0, %v2143
  %v2145 = vpop.f32.mrb[0].mxu0
  %2146 = vmatprep.mubr.f32.mxu0 0.0
  %2147 = vmatmul.mubr.f32.gmra.mrb[0].mxu0 %v1833
  %v2148 = vpop.f32.mrb[0].mxu0
  %v2149 = vadd.f32 0.0, %v2148
  %v2150 = vpop.f32.mrb[0].mxu0
  %2151 = vmatprep.mubr.f32.mxu0 0.0
  %2152 = vmatmul.mubr.f32.gmra.mrb[0].mxu0 %v1836
  %v2153 = vpop.f32.mrb[0].mxu0
  %v2154 = vadd.f32 0.0, %v2153
  %v2155 = vpop.f32.mrb[0].mxu0
  %2156 = vmatprep.mubr.f32.mxu0 0.0
  %2157 = vmatmul.mubr.f32.gmra.mrb[0].mxu0 %v1839
  %v2158 = vpop.f32.mrb[0].mxu0
  %v2159 = vadd.f32 0.0, %v2158
  %v2160 = vpop.f32.mrb[0].mxu0
  %2161 = vmatprep.mubr.f32.mxu0 0.0
  %2162 = vmatmul.mubr.f32.gmra.mrb[0].mxu0 %v1842
  %v2163 = vpop.f32.mrb[0].mxu0
  %v2164 = vadd.f32 0.0, %v2163
  %v2165 = vpop.f32.mrb[0].mxu0
  %2166 = vmatprep.mubr.f32.mxu0 0.0
  %2167 = vmatmul.mubr.f32.gmra.mrb[0].mxu0 %v1845
  %v2168 = vpop.f32.mrb[0].mxu0
  %v2169 = vadd.f32 0.0, %v2168
  %v2170 = vpop.f32.mrb[0].mxu0
  %2171 = vmatprep.mubr.f32.mxu0 0.0
  %2172 = vmatmul.mubr.f32.gmra.mrb[0].mxu0 %v1848
  %v2173 = vpop.f32.mrb[0].mxu0
  %v2174 = vadd.f32 0.0, %v2173
  %v2175 = vpop.f32.mrb[0].mxu0
  %2176 = vmatprep.mubr.f32.mxu0 0.0
  %2177 = vmatmul.mubr.f32.gmra.mrb[0].mxu0 %v1851
  %v2178 = vpop.f32.mrb[0].mxu0
  %v2179 = vadd.f32 0.0, %v2178
  %v2180 = vpop.f32.mrb[0].mxu0
  %2181 = vmatprep.mubr.f32.mxu0 0.0
  %2182 = vmatmul.mubr.f32.gmra.mrb[0].mxu0 %v1854
  %v2183 = vpop.f32.mrb[0].mxu0
  %v2184 = vadd.f32 0.0, %v2183
  %v2185 = vpop.f32.mrb[0].mxu0
  %2186 = vmatprep.mubr.f32.mxu0 0.0
  %2187 = vmatmul.mubr.f32.gmra.mrb[0].mxu0 %v1857
  %v2188 = vpop.f32.mrb[0].mxu0
  %v2189 = vadd.f32 0.0, %v2188
  %v2190 = vpop.f32.mrb[0].mxu0
  %2191 = vmatprep.mubr.f32.mxu0 0.0
  %2192 = vmatmul.mubr.f32.gmra.mrb[0].mxu0 %v1860
  %v2193 = vpop.f32.mrb[0].mxu0
  %v2194 = vadd.f32 0.0, %v2193
  %v2195 = vpop.f32.mrb[0].mxu0
  %2196 = vmatprep.mubr.f32.mxu0 0.0
  %2197 = vmatmul.mubr.f32.gmra.mrb[0].mxu0 %v1863
  %v2198 = vpop.f32.mrb[0].mxu0
  %v2199 = vadd.f32 0.0, %v2198
  %v2200 = vpop.f32.mrb[0].mxu0
  %2201 = vmatprep.mubr.f32.mxu0 0.0
  %2202 = vmatmul.mubr.f32.gmra.mrb[0].mxu0 %v1866
  %v2203 = vpop.f32.mrb[0].mxu0
  %v2204 = vadd.f32 0.0, %v2203
  %v2205 = vpop.f32.mrb[0].mxu0
  %2206 = vmatprep.mubr.f32.mxu0 0.0
  %2207 = vmatmul.mubr.f32.gmra.mrb[0].mxu0 %v1869
  %v2208 = vpop.f32.mrb[0].mxu0
  %v2209 = vadd.f32 0.0, %v2208
  %v2210 = vpop.f32.mrb[0].mxu0
  %2211 = vmatprep.mubr.f32.mxu0 0.0
  %2212 = vmatmul.mubr.f32.gmra.mrb[0].mxu0 %v1872
  %v2213 = vpop.f32.mrb[0].mxu0
  %v2214 = vadd.f32 0.0, %v2213
  %v2215 = vpop.f32.mrb[0].mxu0
  %2216 = vmatprep.mubr.f32.mxu0 0.0
  %2217 = vmatmul.mubr.f32.gmra.mrb[0].mxu0 %v1875
  %v2218 = vpop.f32.mrb[0].mxu0
  %v2219 = vadd.f32 0.0, %v2218
  %v2220 = vpop.f32.mrb[0].mxu0
  %2221 = vmatprep.mubr.f32.mxu0 0.0
  %2222 = vmatmul.mubr.f32.gmra.mrb[0].mxu0 %v1878
  %v2223 = vpop.f32.mrb[0].mxu0
  %v2224 = vadd.f32 0.0, %v2223
  %v2225 = vpop.f32.mrb[0].mxu0
  %2226 = vmatprep.mubr.f32.mxu0 0.0
  %2227 = vmatmul.mubr.f32.gmra.mrb[0].mxu0 %v1881
  %v2228 = vpop.f32.mrb[0].mxu0
  %v2229 = vadd.f32 0.0, %v2228
  %v2230 = vpop.f32.mrb[0].mxu0
  %2231 = vmatprep.mubr.f32.mxu0 0.0
  %2232 = vmatmul.mubr.f32.gmra.mrb[0].mxu0 %v1884
  %v2233 = vpop.f32.mrb[0].mxu0
  %v2234 = vadd.f32 0.0, %v2233
  %v2235 = vpop.f32.mrb[0].mxu0
  %2236 = vmatprep.mubr.f32.mxu0 0.0
  %2237 = vmatmul.mubr.f32.gmra.mrb[0].mxu0 %v1887
  %v2238 = vpop.f32.mrb[0].mxu0
  %v2239 = vadd.f32 0.0, %v2238
  %v2240 = vpop.f32.mrb[0].mxu0
  %2241 = vmatprep.mubr.f32.mxu0 0.0
  %2242 = vmatmul.mubr.f32.gmra.mrb[0].mxu0 %v1890
  %v2243 = vpop.f32.mrb[0].mxu0
  %v2244 = vadd.f32 0.0, %v2243
  %v2245 = vpop.f32.mrb[0].mxu0
  %2246 = vmatprep.mubr.f32.mxu0 0.0
  %2247 = vmatmul.mubr.f32.gmra.mrb[0].mxu0 %v1893
  %v2248 = vpop.f32.mrb[0].mxu0
  %v2249 = vadd.f32 0.0, %v2248
  %v2250 = vpop.f32.mrb[0].mxu0
  %2251 = vmatprep.mubr.f32.mxu0 0.0
  %2252 = vmatmul.mubr.f32.gmra.mrb[0].mxu0 %v1896
  %v2253 = vpop.f32.mrb[0].mxu0
  %v2254 = vadd.f32 0.0, %v2253
  %v2255 = vpop.f32.mrb[0].mxu0
  %2256 = vmatprep.mubr.f32.mxu0 0.0
  %2257 = vmatmul.mubr.f32.gmra.mrb[0].mxu0 %v1899
  %v2258 = vpop.f32.mrb[0].mxu0
  %v2259 = vadd.f32 0.0, %v2258
  %v2260 = vpop.f32.mrb[0].mxu0
  %2261 = vmatprep.mubr.f32.mxu0 0.0
  %2262 = vmatmul.mubr.f32.gmra.mrb[0].mxu0 %v1902
  %v2263 = vpop.f32.mrb[0].mxu0
  %v2264 = vadd.f32 0.0, %v2263
  %v2265 = vpop.f32.mrb[0].mxu0
  %2266 = vmatprep.mubr.f32.mxu0 0.0
  %2267 = vmatmul.mubr.f32.gmra.mrb[0].mxu0 %v1905
  %v2268 = vpop.f32.mrb[0].mxu0
  %v2269 = vadd.f32 0.0, %v2268
  %v2270 = vpop.f32.mrb[0].mxu0
  %2271 = vmatprep.mubr.f32.mxu0 0.0
  %2272 = vmatmul.mubr.f32.gmra.mrb[0].mxu0 %v1908
  %v2273 = vpop.f32.mrb[0].mxu0
  %v2274 = vadd.f32 0.0, %v2273
  %v2275 = vpop.f32.mrb[0].mxu0
  %2276 = vmatprep.mubr.f32.mxu0 0.0
  %2277 = vmatmul.mubr.f32.gmra.mrb[0].mxu0 %v1911
  %v2278 = vpop.f32.mrb[0].mxu0
  %v2279 = vadd.f32 0.0, %v2278
  %v2280 = vpop.f32.mrb[0].mxu0
  %2281 = vmatprep.mubr.f32.mxu0 0.0
  %2282 = vmatmul.mubr.f32.gmra.mrb[0].mxu0 %v1914
  %v2283 = vpop.f32.mrb[0].mxu0
  %v2284 = vadd.f32 0.0, %v2283
  %v2285 = vpop.f32.mrb[0].mxu0
  %2286 = vmatprep.mubr.f32.mxu0 0.0
  %2287 = vmatmul.mubr.f32.gmra.mrb[0].mxu0 %v1917
  %v2288 = vpop.f32.mrb[0].mxu0
  %v2289 = vadd.f32 0.0, %v2288
  %v2290 = vpop.f32.mrb[0].mxu0
  %2291 = vmatprep.mubr.f32.mxu0 0.0
  %2292 = vmatmul.mubr.f32.gmra.mrb[0].mxu0 %v1920
  %v2293 = vpop.f32.mrb[0].mxu0
  %v2294 = vadd.f32 0.0, %v2293
  %v2295 = vpop.f32.mrb[0].mxu0
  %2296 = vmatprep.mubr.f32.mxu0 0.0
  %2297 = vmatmul.mubr.f32.gmra.mrb[0].mxu0 %v1923
  %v2298 = vpop.f32.mrb[0].mxu0
  %v2299 = vadd.f32 0.0, %v2298
  %v2300 = vpop.f32.mrb[0].mxu0
  %2301 = vmatprep.mubr.f32.mxu0 0.0
  %2302 = vmatmul.mubr.f32.gmra.mrb[0].mxu0 %v1926
  %v2303 = vpop.f32.mrb[0].mxu0
  %v2304 = vadd.f32 0.0, %v2303
  %v2305 = vpop.f32.mrb[0].mxu0
  %2306 = vmatprep.mubr.f32.mxu0 0.0
  %2307 = vmatmul.mubr.f32.gmra.mrb[0].mxu0 %v1929
  %v2308 = vpop.f32.mrb[0].mxu0
  %v2309 = vadd.f32 0.0, %v2308
  %v2310 = vpop.f32.mrb[0].mxu0
  %2311 = vmatprep.mubr.f32.mxu0 0.0
  %2312 = vmatmul.mubr.f32.gmra.mrb[0].mxu0 %v1932
  %v2313 = vpop.f32.mrb[0].mxu0
  %v2314 = vadd.f32 0.0, %v2313
  %v2315 = vpop.f32.mrb[0].mxu0
  %2316 = vmatprep.mubr.f32.mxu0 0.0
  %2317 = vmatmul.mubr.f32.gmra.mrb[0].mxu0 %v1935
  %v2318 = vpop.f32.mrb[0].mxu0
  %v2319 = vadd.f32 0.0, %v2318
  %v2320 = vpop.f32.mrb[0].mxu0
  %2321 = vmatprep.mubr.f32.mxu0 0.0
  %2322 = vmatmul.mubr.f32.gmra.mrb[0].mxu0 %v1938
  %v2323 = vpop.f32.mrb[0].mxu0
  %v2324 = vadd.f32 0.0, %v2323
  %v2325 = vpop.f32.mrb[0].mxu0
  %2326 = vmatprep.mubr.f32.mxu0 0.0
  %2327 = vmatmul.mubr.f32.gmra.mrb[0].mxu0 %v1941
  %v2328 = vpop.f32.mrb[0].mxu0
  %v2329 = vadd.f32 0.0, %v2328
  %v2330 = vpop.f32.mrb[0].mxu0
  %2331 = vmatprep.mubr.f32.mxu0 0.0
  %2332 = vmatmul.mubr.f32.gmra.mrb[0].mxu0 %v1944
  %v2333 = vpop.f32.mrb[0].mxu0
  %v2334 = vadd.f32 0.0, %v2333
  %v2335 = vpop.f32.mrb[0].mxu0
  %2336 = vmatprep.mubr.f32.mxu0 0.0
  %2337 = vmatmul.mubr.f32.gmra.mrb[0].mxu0 %v1947
  %v2338 = vpop.f32.mrb[0].mxu0
  %v2339 = vadd.f32 0.0, %v2338
  %v2340 = vpop.f32.mrb[0].mxu0
  %2341 = vmatprep.mubr.f32.mxu0 0.0
  %2342 = vmatmul.mubr.f32.gmra.mrb[0].mxu0 %v1950
  %v2343 = vpop.f32.mrb[0].mxu0
  %v2344 = vadd.f32 0.0, %v2343
  %v2345 = vpop.f32.mrb[0].mxu0
  %2346 = vmatprep.mubr.f32.mxu0 0.0
  %2347 = vmatmul.mubr.f32.gmra.mrb[0].mxu0 %v1953
  %v2348 = vpop.f32.mrb[0].mxu0
  %v2349 = vadd.f32 0.0, %v2348
  %v2350 = vpop.f32.mrb[0].mxu0
  %2351 = vmatprep.mubr.f32.mxu0 0.0
  %2352 = vmatmul.mubr.f32.gmra.mrb[0].mxu0 %v1956
  %v2353 = vpop.f32.mrb[0].mxu0
  %v2354 = vadd.f32 0.0, %v2353
  %v2355 = vpop.f32.mrb[0].mxu0
  %2356 = vmatprep.mubr.f32.mxu0 0.0
  %2357 = vmatmul.mubr.f32.gmra.mrb[0].mxu0 %v1959
  %v2358 = vpop.f32.mrb[0].mxu0
  %v2359 = vadd.f32 0.0, %v2358
  %v2360 = vpop.f32.mrb[0].mxu0
  %2361 = vmatprep.mubr.f32.mxu0 0.0
  %2362 = vmatmul.mubr.f32.gmra.mrb[0].mxu0 %v1962
  %v2363 = vpop.f32.mrb[0].mxu0
  %v2364 = vadd.f32 0.0, %v2363
  %v2365 = vpop.f32.mrb[0].mxu0
  %2366 = vmatprep.mubr.f32.mxu0 0.0
  %2367 = vmatmul.mubr.f32.gmra.mrb[0].mxu0 %v1965
  %v2368 = vpop.f32.mrb[0].mxu0
  %v2369 = vadd.f32 0.0, %v2368
  %v2370 = vpop.f32.mrb[0].mxu0
  %2371 = vmatprep.mubr.f32.mxu0 0.0
  %2372 = vmatmul.mubr.f32.gmra.mrb[0].mxu0 %v1968
  %v2373 = vpop.f32.mrb[0].mxu0
  %v2374 = vadd.f32 0.0, %v2373
  %v2375 = vpop.f32.mrb[0].mxu0
  %2376 = vmatprep.mubr.f32.mxu0 0.0
  %2377 = vmatmul.mubr.f32.gmra.mrb[0].mxu0 %v1971
  %v2378 = vpop.f32.mrb[0].mxu0
  %v2379 = vadd.f32 0.0, %v2378
  %v2380 = vpop.f32.mrb[0].mxu0
  %2381 = vmatprep.mubr.f32.mxu0 0.0
  %2382 = vmatmul.mubr.f32.gmra.mrb[0].mxu0 %v1974
  %v2383 = vpop.f32.mrb[0].mxu0
  %v2384 = vadd.f32 0.0, %v2383
  %v2385 = vpop.f32.mrb[0].mxu0
  %2386 = vmatprep.mubr.f32.mxu0 0.0
  %2387 = vmatmul.mubr.f32.gmra.mrb[0].mxu0 %v1977
  %v2388 = vpop.f32.mrb[0].mxu0
  %v2389 = vadd.f32 0.0, %v2388
  %v2390 = vpop.f32.mrb[0].mxu0
  %2391 = vmatprep.mubr.f32.mxu0 0.0
  %2392 = vmatmul.mubr.f32.gmra.mrb[0].mxu0 %v1980
  %v2393 = vpop.f32.mrb[0].mxu0
  %v2394 = vadd.f32 0.0, %v2393
  %v2395 = vpop.f32.mrb[0].mxu0
  %2396 = vmatprep.mubr.f32.mxu0 0.0
  %2397 = vmatmul.mubr.f32.gmra.mrb[0].mxu0 %v1983
  %v2398 = vpop.f32.mrb[0].mxu0
  %v2399 = vadd.f32 0.0, %v2398
  %v2400 = vpop.f32.mrb[0].mxu0
  %2401 = vmatprep.mubr.f32.mxu0 0.0
  %2402 = vmatmul.mubr.f32.gmra.mrb[0].mxu0 %v1986
  %v2403 = vpop.f32.mrb[0].mxu0
  %v2404 = vadd.f32 0.0, %v2403
  %v2405 = vpop.f32.mrb[0].mxu0
  %2406 = vmatprep.mubr.f32.mxu0 0.0
  %2407 = vmatmul.mubr.f32.gmra.mrb[0].mxu0 %v1989
  %v2408 = vpop.f32.mrb[0].mxu0
  %v2409 = vadd.f32 0.0, %v2408
  %v2410 = vpop.f32.mrb[0].mxu0
  %2411 = vmatprep.mubr.f32.mxu0 0.0
  %2412 = vmatmul.mubr.f32.gmra.mrb[0].mxu0 %v1992
  %v2413 = vpop.f32.mrb[0].mxu0
  %v2414 = vadd.f32 0.0, %v2413
  %v2415 = vpop.f32.mrb[0].mxu0
  %2416 = vmatprep.mubr.f32.mxu0 0.0
  %2417 = vmatmul.mubr.f32.gmra.mrb[0].mxu0 %v1995
  %v2418 = vpop.f32.mrb[0].mxu0
  %v2419 = vadd.f32 0.0, %v2418
  %v2420 = vpop.f32.mrb[0].mxu0
  %2421 = vdwg.mxu0
  %v2423 = vsel %vm436, %v1069, 0
  %v2426 = vsel %vm436, %v1070, 0
  %v2429 = vsel %vm436, %v1071, 0
  %v2432 = vsel %vm436, %v1072, 0
  %v2435 = vsel %vm436, %v1073, 0
  %v2438 = vsel %vm436, %v1074, 0
  %v2441 = vsel %vm436, %v1075, 0
  %v2444 = vsel %vm436, %v1076, 0
  %v2447 = vsel %vm436, %v1077, 0
  %v2450 = vsel %vm436, %v1078, 0
  %v2453 = vsel %vm436, %v1079, 0
  %v2456 = vsel %vm436, %v1080, 0
  %v2459 = vsel %vm436, %v1081, 0
  %v2462 = vsel %vm436, %v1082, 0
  %v2465 = vsel %vm436, %v1083, 0
  %v2468 = vsel %vm436, %v1084, 0
  %v2471 = vsel %vm436, %v1085, 0
  %v2474 = vsel %vm436, %v1086, 0
  %v2477 = vsel %vm436, %v1087, 0
  %v2480 = vsel %vm436, %v1088, 0
  %v2483 = vsel %vm436, %v1089, 0
  %v2486 = vsel %vm436, %v1090, 0
  %v2489 = vsel %vm436, %v1091, 0
  %v2492 = vsel %vm436, %v1092, 0
  %v2495 = vsel %vm436, %v1093, 0
  %v2498 = vsel %vm436, %v1094, 0
  %v2501 = vsel %vm436, %v1095, 0
  %v2504 = vsel %vm436, %v1096, 0
  %v2507 = vsel %vm436, %v1097, 0
  %v2510 = vsel %vm436, %v1098, 0
  %v2513 = vsel %vm436, %v1099, 0
  %v2516 = vsel %vm436, %v1100, 0
  %v2519 = vsel %vm436, %v1101, 0
  %v2522 = vsel %vm436, %v1102, 0
  %v2525 = vsel %vm436, %v1103, 0
  %v2528 = vsel %vm436, %v1104, 0
  %v2531 = vsel %vm436, %v1105, 0
  %v2534 = vsel %vm436, %v1106, 0
  %v2537 = vsel %vm436, %v1107, 0
  %v2540 = vsel %vm436, %v1108, 0
  %v2543 = vsel %vm436, %v1109, 0
  %v2546 = vsel %vm436, %v1110, 0
  %v2549 = vsel %vm436, %v1111, 0
  %v2552 = vsel %vm436, %v1112, 0
  %v2555 = vsel %vm436, %v1113, 0
  %v2558 = vsel %vm436, %v1114, 0
  %v2561 = vsel %vm436, %v1115, 0
  %v2564 = vsel %vm436, %v1116, 0
  %v2567 = vsel %vm436, %v1117, 0
  %v2570 = vsel %vm436, %v1118, 0
  %v2573 = vsel %vm436, %v1119, 0
  %v2576 = vsel %vm436, %v1120, 0
  %v2579 = vsel %vm436, %v1121, 0
  %v2582 = vsel %vm436, %v1122, 0
  %v2585 = vsel %vm436, %v1123, 0
  %v2588 = vsel %vm436, %v1124, 0
  %v2591 = vsel %vm436, %v1125, 0
  %v2594 = vsel %vm436, %v1126, 0
  %v2597 = vsel %vm436, %v1127, 0
  %v2600 = vsel %vm436, %v1128, 0
  %v2603 = vsel %vm436, %v1129, 0
  %v2606 = vsel %vm436, %v1130, 0
  %v2609 = vsel %vm436, %v1131, 0
  %v2612 = vsel %vm436, %v1132, 0
  %v2615 = vsel %vm436, %v1133, 0
  %v2618 = vsel %vm436, %v1134, 0
  %v2621 = vsel %vm436, %v1135, 0
  %v2624 = vsel %vm436, %v1136, 0
  %v2627 = vsel %vm436, %v1137, 0
  %v2630 = vsel %vm436, %v1138, 0
  %v2633 = vsel %vm436, %v1139, 0
  %v2636 = vsel %vm436, %v1140, 0
  %2638 = vmatprep.subr.mxu0 0.0
  %2639 = vmatpush1.msra.mxu0 %v1778
  %2640 = vmatprep.subr.mxu0 0.0
  %2641 = vmatpush1.msra.mxu0 %v1779
  %2642 = vmatprep.subr.mxu0 0.0
  %2643 = vmatpush1.msra.mxu0 %v1780
  %2644 = vmatprep.subr.mxu0 0.0
  %2645 = vmatpush1.msra.mxu0 0.0
  %2646 = vmatprep.subr.mxu0 0.0
  %2647 = vmatpush1.msra.mxu0 0.0
  %2648 = vmatprep.subr.mxu0 0.0
  %2649 = vmatpush1.msra.mxu0 0.0
  %2650 = vmatprep.subr.mxu0 0.0
  %2651 = vmatpush1.msra.mxu0 0.0
  %2652 = vmatprep.subr.mxu0 0.0
  %2653 = vmatpush1.msra.mxu0 0.0
  %2654 = vmatprep.subr.mxu0 0.0
  %2655 = vmatpush1.msra.mxu0 0.0
  %2656 = vmatprep.subr.mxu0 0.0
  %2657 = vmatpush1.msra.mxu0 0.0
  %2658 = vmatprep.subr.mxu0 0.0
  %2659 = vmatpush1.msra.mxu0 0.0
  %2660 = vmatprep.subr.mxu0 0.0
  %2661 = vmatpush1.msra.mxu0 0.0
  %2662 = vmatprep.subr.mxu0 0.0
  %2663 = vmatpush1.msra.mxu0 0.0
  %2664 = vmatprep.subr.mxu0 0.0
  %2665 = vmatpush1.msra.mxu0 0.0
  %2666 = vmatprep.subr.mxu0 0.0
  %2667 = vmatpush1.msra.mxu0 0.0
  %2668 = vmatprep.subr.mxu0 0.0
  %2669 = vmatpush1.msra.mxu0 0.0
  %2670 = vmatprep.subr.mxu0 0.0
  %2671 = vmatpush1.msra.mxu0 0.0
  %2672 = vmatprep.subr.mxu0 0.0
  %2673 = vmatpush1.msra.mxu0 0.0
  %2674 = vmatprep.subr.mxu0 0.0
  %2675 = vmatpush1.msra.mxu0 0.0
  %2676 = vmatprep.subr.mxu0 0.0
  %2677 = vmatpush1.msra.mxu0 0.0
  %2678 = vmatprep.subr.mxu0 0.0
  %2679 = vmatpush1.msra.mxu0 0.0
  %2680 = vmatprep.subr.mxu0 0.0
  %2681 = vmatpush1.msra.mxu0 0.0
  %2682 = vmatprep.subr.mxu0 0.0
  %2683 = vmatpush1.msra.mxu0 0.0
  %2684 = vmatprep.subr.mxu0 0.0
  %2685 = vmatpush1.msra.mxu0 0.0
  %2686 = vmatprep.subr.mxu0 0.0
  %2687 = vmatpush1.msra.mxu0 0.0
  %2688 = vmatprep.subr.mxu0 0.0
  %2689 = vmatpush1.msra.mxu0 0.0
  %2690 = vmatprep.subr.mxu0 0.0
  %2691 = vmatpush1.msra.mxu0 0.0
  %2692 = vmatprep.subr.mxu0 0.0
  %2693 = vmatpush1.msra.mxu0 0.0
  %2694 = vmatprep.subr.mxu0 0.0
  %2695 = vmatpush1.msra.mxu0 0.0
  %2696 = vmatprep.subr.mxu0 0.0
  %2697 = vmatpush1.msra.mxu0 0.0
  %2698 = vmatprep.subr.mxu0 0.0
  %2699 = vmatpush1.msra.mxu0 0.0
  %2700 = vmatprep.subr.mxu0 0.0
  %2701 = vmatpush1.msra.mxu0 0.0
  %2702 = vmatprep.mubr.f32.mxu0 0.0
  %2703 = vmatmul.mubr.f32.gmra.mrb[0].mxu0 %v2423
  %v2704 = vpop.f32.mrb[0].mxu0
  %v2705 = vadd.f32 %v2064, %v2704
  %v2706 = vpop.f32.mrb[0].mxu0
  %2707 = vmatprep.mubr.f32.mxu0 0.0
  %2708 = vmatmul.mubr.f32.gmra.mrb[0].mxu0 %v2426
  %v2709 = vpop.f32.mrb[0].mxu0
  %v2710 = vadd.f32 %v2069, %v2709
  %v2711 = vpop.f32.mrb[0].mxu0
  %2712 = vmatprep.mubr.f32.mxu0 0.0
  %2713 = vmatmul.mubr.f32.gmra.mrb[0].mxu0 %v2429
  %v2714 = vpop.f32.mrb[0].mxu0
  %v2715 = vadd.f32 %v2074, %v2714
  %v2716 = vpop.f32.mrb[0].mxu0
  %2717 = vmatprep.mubr.f32.mxu0 0.0
  %2718 = vmatmul.mubr.f32.gmra.mrb[0].mxu0 %v2432
  %v2719 = vpop.f32.mrb[0].mxu0
  %v2720 = vadd.f32 %v2079, %v2719
  %v2721 = vpop.f32.mrb[0].mxu0
  %2722 = vmatprep.mubr.f32.mxu0 0.0
  %2723 = vmatmul.mubr.f32.gmra.mrb[0].mxu0 %v2435
  %v2724 = vpop.f32.mrb[0].mxu0
  %v2725 = vadd.f32 %v2084, %v2724
  %v2726 = vpop.f32.mrb[0].mxu0
  %2727 = vmatprep.mubr.f32.mxu0 0.0
  %2728 = vmatmul.mubr.f32.gmra.mrb[0].mxu0 %v2438
  %v2729 = vpop.f32.mrb[0].mxu0
  %v2730 = vadd.f32 %v2089, %v2729
  %v2731 = vpop.f32.mrb[0].mxu0
  %2732 = vmatprep.mubr.f32.mxu0 0.0
  %2733 = vmatmul.mubr.f32.gmra.mrb[0].mxu0 %v2441
  %v2734 = vpop.f32.mrb[0].mxu0
  %v2735 = vadd.f32 %v2094, %v2734
  %v2736 = vpop.f32.mrb[0].mxu0
  %2737 = vmatprep.mubr.f32.mxu0 0.0
  %2738 = vmatmul.mubr.f32.gmra.mrb[0].mxu0 %v2444
  %v2739 = vpop.f32.mrb[0].mxu0
  %v2740 = vadd.f32 %v2099, %v2739
  %v2741 = vpop.f32.mrb[0].mxu0
  %2742 = vmatprep.mubr.f32.mxu0 0.0
  %2743 = vmatmul.mubr.f32.gmra.mrb[0].mxu0 %v2447
  %v2744 = vpop.f32.mrb[0].mxu0
  %v2745 = vadd.f32 %v2104, %v2744
  %v2746 = vpop.f32.mrb[0].mxu0
  %2747 = vmatprep.mubr.f32.mxu0 0.0
  %2748 = vmatmul.mubr.f32.gmra.mrb[0].mxu0 %v2450
  %v2749 = vpop.f32.mrb[0].mxu0
  %v2750 = vadd.f32 %v2109, %v2749
  %v2751 = vpop.f32.mrb[0].mxu0
  %2752 = vmatprep.mubr.f32.mxu0 0.0
  %2753 = vmatmul.mubr.f32.gmra.mrb[0].mxu0 %v2453
  %v2754 = vpop.f32.mrb[0].mxu0
  %v2755 = vadd.f32 %v2114, %v2754
  %v2756 = vpop.f32.mrb[0].mxu0
  %2757 = vmatprep.mubr.f32.mxu0 0.0
  %2758 = vmatmul.mubr.f32.gmra.mrb[0].mxu0 %v2456
  %v2759 = vpop.f32.mrb[0].mxu0
  %v2760 = vadd.f32 %v2119, %v2759
  %v2761 = vpop.f32.mrb[0].mxu0
  %2762 = vmatprep.mubr.f32.mxu0 0.0
  %2763 = vmatmul.mubr.f32.gmra.mrb[0].mxu0 %v2459
  %v2764 = vpop.f32.mrb[0].mxu0
  %v2765 = vadd.f32 %v2124, %v2764
  %v2766 = vpop.f32.mrb[0].mxu0
  %2767 = vmatprep.mubr.f32.mxu0 0.0
  %2768 = vmatmul.mubr.f32.gmra.mrb[0].mxu0 %v2462
  %v2769 = vpop.f32.mrb[0].mxu0
  %v2770 = vadd.f32 %v2129, %v2769
  %v2771 = vpop.f32.mrb[0].mxu0
  %2772 = vmatprep.mubr.f32.mxu0 0.0
  %2773 = vmatmul.mubr.f32.gmra.mrb[0].mxu0 %v2465
  %v2774 = vpop.f32.mrb[0].mxu0
  %v2775 = vadd.f32 %v2134, %v2774
  %v2776 = vpop.f32.mrb[0].mxu0
  %2777 = vmatprep.mubr.f32.mxu0 0.0
  %2778 = vmatmul.mubr.f32.gmra.mrb[0].mxu0 %v2468
  %v2779 = vpop.f32.mrb[0].mxu0
  %v2780 = vadd.f32 %v2139, %v2779
  %v2781 = vpop.f32.mrb[0].mxu0
  %2782 = vmatprep.mubr.f32.mxu0 0.0
  %2783 = vmatmul.mubr.f32.gmra.mrb[0].mxu0 %v2471
  %v2784 = vpop.f32.mrb[0].mxu0
  %v2785 = vadd.f32 %v2144, %v2784
  %v2786 = vpop.f32.mrb[0].mxu0
  %2787 = vmatprep.mubr.f32.mxu0 0.0
  %2788 = vmatmul.mubr.f32.gmra.mrb[0].mxu0 %v2474
  %v2789 = vpop.f32.mrb[0].mxu0
  %v2790 = vadd.f32 %v2149, %v2789
  %v2791 = vpop.f32.mrb[0].mxu0
  %2792 = vmatprep.mubr.f32.mxu0 0.0
  %2793 = vmatmul.mubr.f32.gmra.mrb[0].mxu0 %v2477
  %v2794 = vpop.f32.mrb[0].mxu0
  %v2795 = vadd.f32 %v2154, %v2794
  %v2796 = vpop.f32.mrb[0].mxu0
  %2797 = vmatprep.mubr.f32.mxu0 0.0
  %2798 = vmatmul.mubr.f32.gmra.mrb[0].mxu0 %v2480
  %v2799 = vpop.f32.mrb[0].mxu0
  %v2800 = vadd.f32 %v2159, %v2799
  %v2801 = vpop.f32.mrb[0].mxu0
  %2802 = vmatprep.mubr.f32.mxu0 0.0
  %2803 = vmatmul.mubr.f32.gmra.mrb[0].mxu0 %v2483
  %v2804 = vpop.f32.mrb[0].mxu0
  %v2805 = vadd.f32 %v2164, %v2804
  %v2806 = vpop.f32.mrb[0].mxu0
  %2807 = vmatprep.mubr.f32.mxu0 0.0
  %2808 = vmatmul.mubr.f32.gmra.mrb[0].mxu0 %v2486
  %v2809 = vpop.f32.mrb[0].mxu0
  %v2810 = vadd.f32 %v2169, %v2809
  %v2811 = vpop.f32.mrb[0].mxu0
  %2812 = vmatprep.mubr.f32.mxu0 0.0
  %2813 = vmatmul.mubr.f32.gmra.mrb[0].mxu0 %v2489
  %v2814 = vpop.f32.mrb[0].mxu0
  %v2815 = vadd.f32 %v2174, %v2814
  %v2816 = vpop.f32.mrb[0].mxu0
  %2817 = vmatprep.mubr.f32.mxu0 0.0
  %2818 = vmatmul.mubr.f32.gmra.mrb[0].mxu0 %v2492
  %v2819 = vpop.f32.mrb[0].mxu0
  %v2820 = vadd.f32 %v2179, %v2819
  %v2821 = vpop.f32.mrb[0].mxu0
  %2822 = vmatprep.mubr.f32.mxu0 0.0
  %2823 = vmatmul.mubr.f32.gmra.mrb[0].mxu0 %v2495
  %v2824 = vpop.f32.mrb[0].mxu0
  %v2825 = vadd.f32 %v2184, %v2824
  %v2826 = vpop.f32.mrb[0].mxu0
  %2827 = vmatprep.mubr.f32.mxu0 0.0
  %2828 = vmatmul.mubr.f32.gmra.mrb[0].mxu0 %v2498
  %v2829 = vpop.f32.mrb[0].mxu0
  %v2830 = vadd.f32 %v2189, %v2829
  %v2831 = vpop.f32.mrb[0].mxu0
  %2832 = vmatprep.mubr.f32.mxu0 0.0
  %2833 = vmatmul.mubr.f32.gmra.mrb[0].mxu0 %v2501
  %v2834 = vpop.f32.mrb[0].mxu0
  %v2835 = vadd.f32 %v2194, %v2834
  %v2836 = vpop.f32.mrb[0].mxu0
  %2837 = vmatprep.mubr.f32.mxu0 0.0
  %2838 = vmatmul.mubr.f32.gmra.mrb[0].mxu0 %v2504
  %v2839 = vpop.f32.mrb[0].mxu0
  %v2840 = vadd.f32 %v2199, %v2839
  %v2841 = vpop.f32.mrb[0].mxu0
  %2842 = vmatprep.mubr.f32.mxu0 0.0
  %2843 = vmatmul.mubr.f32.gmra.mrb[0].mxu0 %v2507
  %v2844 = vpop.f32.mrb[0].mxu0
  %v2845 = vadd.f32 %v2204, %v2844
  %v2846 = vpop.f32.mrb[0].mxu0
  %2847 = vmatprep.mubr.f32.mxu0 0.0
  %2848 = vmatmul.mubr.f32.gmra.mrb[0].mxu0 %v2510
  %v2849 = vpop.f32.mrb[0].mxu0
  %v2850 = vadd.f32 %v2209, %v2849
  %v2851 = vpop.f32.mrb[0].mxu0
  %2852 = vmatprep.mubr.f32.mxu0 0.0
  %2853 = vmatmul.mubr.f32.gmra.mrb[0].mxu0 %v2513
  %v2854 = vpop.f32.mrb[0].mxu0
  %v2855 = vadd.f32 %v2214, %v2854
  %v2856 = vpop.f32.mrb[0].mxu0
  %2857 = vmatprep.mubr.f32.mxu0 0.0
  %2858 = vmatmul.mubr.f32.gmra.mrb[0].mxu0 %v2516
  %v2859 = vpop.f32.mrb[0].mxu0
  %v2860 = vadd.f32 %v2219, %v2859
  %v2861 = vpop.f32.mrb[0].mxu0
  %2862 = vmatprep.mubr.f32.mxu0 0.0
  %2863 = vmatmul.mubr.f32.gmra.mrb[0].mxu0 %v2519
  %v2864 = vpop.f32.mrb[0].mxu0
  %v2865 = vadd.f32 %v2224, %v2864
  %v2866 = vpop.f32.mrb[0].mxu0
  %2867 = vmatprep.mubr.f32.mxu0 0.0
  %2868 = vmatmul.mubr.f32.gmra.mrb[0].mxu0 %v2522
  %v2869 = vpop.f32.mrb[0].mxu0
  %v2870 = vadd.f32 %v2229, %v2869
  %v2871 = vpop.f32.mrb[0].mxu0
  %2872 = vmatprep.mubr.f32.mxu0 0.0
  %2873 = vmatmul.mubr.f32.gmra.mrb[0].mxu0 %v2525
  %v2874 = vpop.f32.mrb[0].mxu0
  %v2875 = vadd.f32 %v2234, %v2874
  %v2876 = vpop.f32.mrb[0].mxu0
  %2877 = vmatprep.mubr.f32.mxu0 0.0
  %2878 = vmatmul.mubr.f32.gmra.mrb[0].mxu0 %v2528
  %v2879 = vpop.f32.mrb[0].mxu0
  %v2880 = vadd.f32 %v2239, %v2879
  %v2881 = vpop.f32.mrb[0].mxu0
  %2882 = vmatprep.mubr.f32.mxu0 0.0
  %2883 = vmatmul.mubr.f32.gmra.mrb[0].mxu0 %v2531
  %v2884 = vpop.f32.mrb[0].mxu0
  %v2885 = vadd.f32 %v2244, %v2884
  %v2886 = vpop.f32.mrb[0].mxu0
  %2887 = vmatprep.mubr.f32.mxu0 0.0
  %2888 = vmatmul.mubr.f32.gmra.mrb[0].mxu0 %v2534
  %v2889 = vpop.f32.mrb[0].mxu0
  %v2890 = vadd.f32 %v2249, %v2889
  %v2891 = vpop.f32.mrb[0].mxu0
  %2892 = vmatprep.mubr.f32.mxu0 0.0
  %2893 = vmatmul.mubr.f32.gmra.mrb[0].mxu0 %v2537
  %v2894 = vpop.f32.mrb[0].mxu0
  %v2895 = vadd.f32 %v2254, %v2894
  %v2896 = vpop.f32.mrb[0].mxu0
  %2897 = vmatprep.mubr.f32.mxu0 0.0
  %2898 = vmatmul.mubr.f32.gmra.mrb[0].mxu0 %v2540
  %v2899 = vpop.f32.mrb[0].mxu0
  %v2900 = vadd.f32 %v2259, %v2899
  %v2901 = vpop.f32.mrb[0].mxu0
  %2902 = vmatprep.mubr.f32.mxu0 0.0
  %2903 = vmatmul.mubr.f32.gmra.mrb[0].mxu0 %v2543
  %v2904 = vpop.f32.mrb[0].mxu0
  %v2905 = vadd.f32 %v2264, %v2904
  %v2906 = vpop.f32.mrb[0].mxu0
  %2907 = vmatprep.mubr.f32.mxu0 0.0
  %2908 = vmatmul.mubr.f32.gmra.mrb[0].mxu0 %v2546
  %v2909 = vpop.f32.mrb[0].mxu0
  %v2910 = vadd.f32 %v2269, %v2909
  %v2911 = vpop.f32.mrb[0].mxu0
  %2912 = vmatprep.mubr.f32.mxu0 0.0
  %2913 = vmatmul.mubr.f32.gmra.mrb[0].mxu0 %v2549
  %v2914 = vpop.f32.mrb[0].mxu0
  %v2915 = vadd.f32 %v2274, %v2914
  %v2916 = vpop.f32.mrb[0].mxu0
  %2917 = vmatprep.mubr.f32.mxu0 0.0
  %2918 = vmatmul.mubr.f32.gmra.mrb[0].mxu0 %v2552
  %v2919 = vpop.f32.mrb[0].mxu0
  %v2920 = vadd.f32 %v2279, %v2919
  %v2921 = vpop.f32.mrb[0].mxu0
  %2922 = vmatprep.mubr.f32.mxu0 0.0
  %2923 = vmatmul.mubr.f32.gmra.mrb[0].mxu0 %v2555
  %v2924 = vpop.f32.mrb[0].mxu0
  %v2925 = vadd.f32 %v2284, %v2924
  %v2926 = vpop.f32.mrb[0].mxu0
  %2927 = vmatprep.mubr.f32.mxu0 0.0
  %2928 = vmatmul.mubr.f32.gmra.mrb[0].mxu0 %v2558
  %v2929 = vpop.f32.mrb[0].mxu0
  %v2930 = vadd.f32 %v2289, %v2929
  %v2931 = vpop.f32.mrb[0].mxu0
  %2932 = vmatprep.mubr.f32.mxu0 0.0
  %2933 = vmatmul.mubr.f32.gmra.mrb[0].mxu0 %v2561
  %v2934 = vpop.f32.mrb[0].mxu0
  %v2935 = vadd.f32 %v2294, %v2934
  %v2936 = vpop.f32.mrb[0].mxu0
  %2937 = vmatprep.mubr.f32.mxu0 0.0
  %2938 = vmatmul.mubr.f32.gmra.mrb[0].mxu0 %v2564
  %v2939 = vpop.f32.mrb[0].mxu0
  %v2940 = vadd.f32 %v2299, %v2939
  %v2941 = vpop.f32.mrb[0].mxu0
  %2942 = vmatprep.mubr.f32.mxu0 0.0
  %2943 = vmatmul.mubr.f32.gmra.mrb[0].mxu0 %v2567
  %v2944 = vpop.f32.mrb[0].mxu0
  %v2945 = vadd.f32 %v2304, %v2944
  %v2946 = vpop.f32.mrb[0].mxu0
  %2947 = vmatprep.mubr.f32.mxu0 0.0
  %2948 = vmatmul.mubr.f32.gmra.mrb[0].mxu0 %v2570
  %v2949 = vpop.f32.mrb[0].mxu0
  %v2950 = vadd.f32 %v2309, %v2949
  %v2951 = vpop.f32.mrb[0].mxu0
  %2952 = vmatprep.mubr.f32.mxu0 0.0
  %2953 = vmatmul.mubr.f32.gmra.mrb[0].mxu0 %v2573
  %v2954 = vpop.f32.mrb[0].mxu0
  %v2955 = vadd.f32 %v2314, %v2954
  %v2956 = vpop.f32.mrb[0].mxu0
  %2957 = vmatprep.mubr.f32.mxu0 0.0
  %2958 = vmatmul.mubr.f32.gmra.mrb[0].mxu0 %v2576
  %v2959 = vpop.f32.mrb[0].mxu0
  %v2960 = vadd.f32 %v2319, %v2959
  %v2961 = vpop.f32.mrb[0].mxu0
  %2962 = vmatprep.mubr.f32.mxu0 0.0
  %2963 = vmatmul.mubr.f32.gmra.mrb[0].mxu0 %v2579
  %v2964 = vpop.f32.mrb[0].mxu0
  %v2965 = vadd.f32 %v2324, %v2964
  %v2966 = vpop.f32.mrb[0].mxu0
  %2967 = vmatprep.mubr.f32.mxu0 0.0
  %2968 = vmatmul.mubr.f32.gmra.mrb[0].mxu0 %v2582
  %v2969 = vpop.f32.mrb[0].mxu0
  %v2970 = vadd.f32 %v2329, %v2969
  %v2971 = vpop.f32.mrb[0].mxu0
  %2972 = vmatprep.mubr.f32.mxu0 0.0
  %2973 = vmatmul.mubr.f32.gmra.mrb[0].mxu0 %v2585
  %v2974 = vpop.f32.mrb[0].mxu0
  %v2975 = vadd.f32 %v2334, %v2974
  %v2976 = vpop.f32.mrb[0].mxu0
  %2977 = vmatprep.mubr.f32.mxu0 0.0
  %2978 = vmatmul.mubr.f32.gmra.mrb[0].mxu0 %v2588
  %v2979 = vpop.f32.mrb[0].mxu0
  %v2980 = vadd.f32 %v2339, %v2979
  %v2981 = vpop.f32.mrb[0].mxu0
  %2982 = vmatprep.mubr.f32.mxu0 0.0
  %2983 = vmatmul.mubr.f32.gmra.mrb[0].mxu0 %v2591
  %v2984 = vpop.f32.mrb[0].mxu0
  %v2985 = vadd.f32 %v2344, %v2984
  %v2986 = vpop.f32.mrb[0].mxu0
  %2987 = vmatprep.mubr.f32.mxu0 0.0
  %2988 = vmatmul.mubr.f32.gmra.mrb[0].mxu0 %v2594
  %v2989 = vpop.f32.mrb[0].mxu0
  %v2990 = vadd.f32 %v2349, %v2989
  %v2991 = vpop.f32.mrb[0].mxu0
  %2992 = vmatprep.mubr.f32.mxu0 0.0
  %2993 = vmatmul.mubr.f32.gmra.mrb[0].mxu0 %v2597
  %v2994 = vpop.f32.mrb[0].mxu0
  %v2995 = vadd.f32 %v2354, %v2994
  %v2996 = vpop.f32.mrb[0].mxu0
  %2997 = vmatprep.mubr.f32.mxu0 0.0
  %2998 = vmatmul.mubr.f32.gmra.mrb[0].mxu0 %v2600
  %v2999 = vpop.f32.mrb[0].mxu0
  %v3000 = vadd.f32 %v2359, %v2999
  %v3001 = vpop.f32.mrb[0].mxu0
  %3002 = vmatprep.mubr.f32.mxu0 0.0
  %3003 = vmatmul.mubr.f32.gmra.mrb[0].mxu0 %v2603
  %v3004 = vpop.f32.mrb[0].mxu0
  %v3005 = vadd.f32 %v2364, %v3004
  %v3006 = vpop.f32.mrb[0].mxu0
  %3007 = vmatprep.mubr.f32.mxu0 0.0
  %3008 = vmatmul.mubr.f32.gmra.mrb[0].mxu0 %v2606
  %v3009 = vpop.f32.mrb[0].mxu0
  %v3010 = vadd.f32 %v2369, %v3009
  %v3011 = vpop.f32.mrb[0].mxu0
  %3012 = vmatprep.mubr.f32.mxu0 0.0
  %3013 = vmatmul.mubr.f32.gmra.mrb[0].mxu0 %v2609
  %v3014 = vpop.f32.mrb[0].mxu0
  %v3015 = vadd.f32 %v2374, %v3014
  %v3016 = vpop.f32.mrb[0].mxu0
  %3017 = vmatprep.mubr.f32.mxu0 0.0
  %3018 = vmatmul.mubr.f32.gmra.mrb[0].mxu0 %v2612
  %v3019 = vpop.f32.mrb[0].mxu0
  %v3020 = vadd.f32 %v2379, %v3019
  %v3021 = vpop.f32.mrb[0].mxu0
  %3022 = vmatprep.mubr.f32.mxu0 0.0
  %3023 = vmatmul.mubr.f32.gmra.mrb[0].mxu0 %v2615
  %v3024 = vpop.f32.mrb[0].mxu0
  %v3025 = vadd.f32 %v2384, %v3024
  %v3026 = vpop.f32.mrb[0].mxu0
  %3027 = vmatprep.mubr.f32.mxu0 0.0
  %3028 = vmatmul.mubr.f32.gmra.mrb[0].mxu0 %v2618
  %v3029 = vpop.f32.mrb[0].mxu0
  %v3030 = vadd.f32 %v2389, %v3029
  %v3031 = vpop.f32.mrb[0].mxu0
  %3032 = vmatprep.mubr.f32.mxu0 0.0
  %3033 = vmatmul.mubr.f32.gmra.mrb[0].mxu0 %v2621
  %v3034 = vpop.f32.mrb[0].mxu0
  %v3035 = vadd.f32 %v2394, %v3034
  %v3036 = vpop.f32.mrb[0].mxu0
  %3037 = vmatprep.mubr.f32.mxu0 0.0
  %3038 = vmatmul.mubr.f32.gmra.mrb[0].mxu0 %v2624
  %v3039 = vpop.f32.mrb[0].mxu0
  %v3040 = vadd.f32 %v2399, %v3039
  %v3041 = vpop.f32.mrb[0].mxu0
  %3042 = vmatprep.mubr.f32.mxu0 0.0
  %3043 = vmatmul.mubr.f32.gmra.mrb[0].mxu0 %v2627
  %v3044 = vpop.f32.mrb[0].mxu0
  %v3045 = vadd.f32 %v2404, %v3044
  %v3046 = vpop.f32.mrb[0].mxu0
  %3047 = vmatprep.mubr.f32.mxu0 0.0
  %3048 = vmatmul.mubr.f32.gmra.mrb[0].mxu0 %v2630
  %v3049 = vpop.f32.mrb[0].mxu0
  %v3050 = vadd.f32 %v2409, %v3049
  %v3051 = vpop.f32.mrb[0].mxu0
  %3052 = vmatprep.mubr.f32.mxu0 0.0
  %3053 = vmatmul.mubr.f32.gmra.mrb[0].mxu0 %v2633
  %v3054 = vpop.f32.mrb[0].mxu0
  %v3055 = vadd.f32 %v2414, %v3054
  %v3056 = vpop.f32.mrb[0].mxu0
  %3057 = vmatprep.mubr.f32.mxu0 0.0
  %3058 = vmatmul.mubr.f32.gmra.mrb[0].mxu0 %v2636
  %v3059 = vpop.f32.mrb[0].mxu0
  %v3060 = vadd.f32 %v2419, %v3059
  %v3061 = vpop.f32.mrb[0].mxu0
  %3062 = vdwg.mxu0
  %v3063 = vxor.u32 %v2705, 2147483648
  %v3064 = vxor.u32 %v2710, 2147483648
  %v3065 = vxor.u32 %v2715, 2147483648
  %v3066 = vxor.u32 %v2720, 2147483648
  %v3067 = vxor.u32 %v2725, 2147483648
  %v3068 = vxor.u32 %v2730, 2147483648
  %v3069 = vxor.u32 %v2735, 2147483648
  %v3070 = vxor.u32 %v2740, 2147483648
  %v3071 = vxor.u32 %v2745, 2147483648
  %v3072 = vxor.u32 %v2750, 2147483648
  %v3073 = vxor.u32 %v2755, 2147483648
  %v3074 = vxor.u32 %v2760, 2147483648
  %v3075 = vxor.u32 %v2765, 2147483648
  %v3076 = vxor.u32 %v2770, 2147483648
  %v3077 = vxor.u32 %v2775, 2147483648
  %v3078 = vxor.u32 %v2780, 2147483648
  %v3079 = vxor.u32 %v2785, 2147483648
  %v3080 = vxor.u32 %v2790, 2147483648
  %v3081 = vxor.u32 %v2795, 2147483648
  %v3082 = vxor.u32 %v2800, 2147483648
  %v3083 = vxor.u32 %v2805, 2147483648
  %v3084 = vxor.u32 %v2810, 2147483648
  %v3085 = vxor.u32 %v2815, 2147483648
  %v3086 = vxor.u32 %v2820, 2147483648
  %v3087 = vxor.u32 %v2825, 2147483648
  %v3088 = vxor.u32 %v2830, 2147483648
  %v3089 = vxor.u32 %v2835, 2147483648
  %v3090 = vxor.u32 %v2840, 2147483648
  %v3091 = vxor.u32 %v2845, 2147483648
  %v3092 = vxor.u32 %v2850, 2147483648
  %v3093 = vxor.u32 %v2855, 2147483648
  %v3094 = vxor.u32 %v2860, 2147483648
  %v3095 = vxor.u32 %v2865, 2147483648
  %v3096 = vxor.u32 %v2870, 2147483648
  %v3097 = vxor.u32 %v2875, 2147483648
  %v3098 = vxor.u32 %v2880, 2147483648
  %v3099 = vxor.u32 %v2885, 2147483648
  %v3100 = vxor.u32 %v2890, 2147483648
  %v3101 = vxor.u32 %v2895, 2147483648
  %v3102 = vxor.u32 %v2900, 2147483648
  %v3103 = vxor.u32 %v2905, 2147483648
  %v3104 = vxor.u32 %v2910, 2147483648
  %v3105 = vxor.u32 %v2915, 2147483648
  %v3106 = vxor.u32 %v2920, 2147483648
  %v3107 = vxor.u32 %v2925, 2147483648
  %v3108 = vxor.u32 %v2930, 2147483648
  %v3109 = vxor.u32 %v2935, 2147483648
  %v3110 = vxor.u32 %v2940, 2147483648
  %v3111 = vxor.u32 %v2945, 2147483648
  %v3112 = vxor.u32 %v2950, 2147483648
  %v3113 = vxor.u32 %v2955, 2147483648
  %v3114 = vxor.u32 %v2960, 2147483648
  %v3115 = vxor.u32 %v2965, 2147483648
  %v3116 = vxor.u32 %v2970, 2147483648
  %v3117 = vxor.u32 %v2975, 2147483648
  %v3118 = vxor.u32 %v2980, 2147483648
  %v3119 = vxor.u32 %v2985, 2147483648
  %v3120 = vxor.u32 %v2990, 2147483648
  %v3121 = vxor.u32 %v2995, 2147483648
  %v3122 = vxor.u32 %v3000, 2147483648
  %v3123 = vxor.u32 %v3005, 2147483648
  %v3124 = vxor.u32 %v3010, 2147483648
  %v3125 = vxor.u32 %v3015, 2147483648
  %v3126 = vxor.u32 %v3020, 2147483648
  %v3127 = vxor.u32 %v3025, 2147483648
  %v3128 = vxor.u32 %v3030, 2147483648
  %v3129 = vxor.u32 %v3035, 2147483648
  %v3130 = vxor.u32 %v3040, 2147483648
  %v3131 = vxor.u32 %v3045, 2147483648
  %v3132 = vxor.u32 %v3050, 2147483648
  %v3133 = vxor.u32 %v3055, 2147483648
  %v3134 = vxor.u32 %v3060, 2147483648
  %v3135 = vmul.f32 %v3063, 1.442695
  %v3136 = vpow.pop %v3135
  %v3137 = vmul.f32 %v3064, 1.442695
  %v3138 = vpow.pop %v3137
  %v3139 = vmul.f32 %v3065, 1.442695
  %v3140 = vpow.pop %v3139
  %v3141 = vmul.f32 %v3066, 1.442695
  %v3142 = vpow.pop %v3141
  %v3143 = vmul.f32 %v3067, 1.442695
  %v3144 = vpow.pop %v3143
  %v3145 = vmul.f32 %v3068, 1.442695
  %v3146 = vpow.pop %v3145
  %v3147 = vmul.f32 %v3069, 1.442695
  %v3148 = vpow.pop %v3147
  %v3149 = vmul.f32 %v3070, 1.442695
  %v3150 = vpow.pop %v3149
  %v3151 = vmul.f32 %v3071, 1.442695
  %v3152 = vpow.pop %v3151
  %v3153 = vmul.f32 %v3072, 1.442695
  %v3154 = vpow.pop %v3153
  %v3155 = vmul.f32 %v3073, 1.442695
  %v3156 = vpow.pop %v3155
  %v3157 = vmul.f32 %v3074, 1.442695
  %v3158 = vpow.pop %v3157
  %v3159 = vmul.f32 %v3075, 1.442695
  %v3160 = vpow.pop %v3159
  %v3161 = vmul.f32 %v3076, 1.442695
  %v3162 = vpow.pop %v3161
  %v3163 = vmul.f32 %v3077, 1.442695
  %v3164 = vpow.pop %v3163
  %v3165 = vmul.f32 %v3078, 1.442695
  %v3166 = vpow.pop %v3165
  %v3167 = vmul.f32 %v3079, 1.442695
  %v3168 = vpow.pop %v3167
  %v3169 = vmul.f32 %v3080, 1.442695
  %v3170 = vpow.pop %v3169
  %v3171 = vmul.f32 %v3081, 1.442695
  %v3172 = vpow.pop %v3171
  %v3173 = vmul.f32 %v3082, 1.442695
  %v3174 = vpow.pop %v3173
  %v3175 = vmul.f32 %v3083, 1.442695
  %v3176 = vpow.pop %v3175
  %v3177 = vmul.f32 %v3084, 1.442695
  %v3178 = vpow.pop %v3177
  %v3179 = vmul.f32 %v3085, 1.442695
  %v3180 = vpow.pop %v3179
  %v3181 = vmul.f32 %v3086, 1.442695
  %v3182 = vpow.pop %v3181
  %v3183 = vmul.f32 %v3087, 1.442695
  %v3184 = vpow.pop %v3183
  %v3185 = vmul.f32 %v3088, 1.442695
  %v3186 = vpow.pop %v3185
  %v3187 = vmul.f32 %v3089, 1.442695
  %v3188 = vpow.pop %v3187
  %v3189 = vmul.f32 %v3090, 1.442695
  %v3190 = vpow.pop %v3189
  %v3191 = vmul.f32 %v3091, 1.442695
  %v3192 = vpow.pop %v3191
  %v3193 = vmul.f32 %v3092, 1.442695
  %v3194 = vpow.pop %v3193
  %v3195 = vmul.f32 %v3093, 1.442695
  %v3196 = vpow.pop %v3195
  %v3197 = vmul.f32 %v3094, 1.442695
  %v3198 = vpow.pop %v3197
  %v3199 = vmul.f32 %v3095, 1.442695
  %v3200 = vpow.pop %v3199
  %v3201 = vmul.f32 %v3096, 1.442695
  %v3202 = vpow.pop %v3201
  %v3203 = vmul.f32 %v3097, 1.442695
  %v3204 = vpow.pop %v3203
  %v3205 = vmul.f32 %v3098, 1.442695
  %v3206 = vpow.pop %v3205
  %v3207 = vmul.f32 %v3099, 1.442695
  %v3208 = vpow.pop %v3207
  %v3209 = vmul.f32 %v3100, 1.442695
  %v3210 = vpow.pop %v3209
  %v3211 = vmul.f32 %v3101, 1.442695
  %v3212 = vpow.pop %v3211
  %v3213 = vmul.f32 %v3102, 1.442695
  %v3214 = vpow.pop %v3213
  %v3215 = vmul.f32 %v3103, 1.442695
  %v3216 = vpow.pop %v3215
  %v3217 = vmul.f32 %v3104, 1.442695
  %v3218 = vpow.pop %v3217
  %v3219 = vmul.f32 %v3105, 1.442695
  %v3220 = vpow.pop %v3219
  %v3221 = vmul.f32 %v3106, 1.442695
  %v3222 = vpow.pop %v3221
  %v3223 = vmul.f32 %v3107, 1.442695
  %v3224 = vpow.pop %v3223
  %v3225 = vmul.f32 %v3108, 1.442695
  %v3226 = vpow.pop %v3225
  %v3227 = vmul.f32 %v3109, 1.442695
  %v3228 = vpow.pop %v3227
  %v3229 = vmul.f32 %v3110, 1.442695
  %v3230 = vpow.pop %v3229
  %v3231 = vmul.f32 %v3111, 1.442695
  %v3232 = vpow.pop %v3231
  %v3233 = vmul.f32 %v3112, 1.442695
  %v3234 = vpow.pop %v3233
  %v3235 = vmul.f32 %v3113, 1.442695
  %v3236 = vpow.pop %v3235
  %v3237 = vmul.f32 %v3114, 1.442695
  %v3238 = vpow.pop %v3237
  %v3239 = vmul.f32 %v3115, 1.442695
  %v3240 = vpow.pop %v3239
  %v3241 = vmul.f32 %v3116, 1.442695
  %v3242 = vpow.pop %v3241
  %v3243 = vmul.f32 %v3117, 1.442695
  %v3244 = vpow.pop %v3243
  %v3245 = vmul.f32 %v3118, 1.442695
  %v3246 = vpow.pop %v3245
  %v3247 = vmul.f32 %v3119, 1.442695
  %v3248 = vpow.pop %v3247
  %v3249 = vmul.f32 %v3120, 1.442695
  %v3250 = vpow.pop %v3249
  %v3251 = vmul.f32 %v3121, 1.442695
  %v3252 = vpow.pop %v3251
  %v3253 = vmul.f32 %v3122, 1.442695
  %v3254 = vpow.pop %v3253
  %v3255 = vmul.f32 %v3123, 1.442695
  %v3256 = vpow.pop %v3255
  %v3257 = vmul.f32 %v3124, 1.442695
  %v3258 = vpow.pop %v3257
  %v3259 = vmul.f32 %v3125, 1.442695
  %v3260 = vpow.pop %v3259
  %v3261 = vmul.f32 %v3126, 1.442695
  %v3262 = vpow.pop %v3261
  %v3263 = vmul.f32 %v3127, 1.442695
  %v3264 = vpow.pop %v3263
  %v3265 = vmul.f32 %v3128, 1.442695
  %v3266 = vpow.pop %v3265
  %v3267 = vmul.f32 %v3129, 1.442695
  %v3268 = vpow.pop %v3267
  %v3269 = vmul.f32 %v3130, 1.442695
  %v3270 = vpow.pop %v3269
  %v3271 = vmul.f32 %v3131, 1.442695
  %v3272 = vpow.pop %v3271
  %v3273 = vmul.f32 %v3132, 1.442695
  %v3274 = vpow.pop %v3273
  %v3275 = vmul.f32 %v3133, 1.442695
  %v3276 = vpow.pop %v3275
  %v3277 = vmul.f32 %v3134, 1.442695
  %v3278 = vpow.pop %v3277
  %v3279 = vadd.f32 %v3136, 1.0
  %v3280 = vadd.f32 %v3138, 1.0
  %v3281 = vadd.f32 %v3140, 1.0
  %v3282 = vadd.f32 %v3142, 1.0
  %v3283 = vadd.f32 %v3144, 1.0
  %v3284 = vadd.f32 %v3146, 1.0
  %v3285 = vadd.f32 %v3148, 1.0
  %v3286 = vadd.f32 %v3150, 1.0
  %v3287 = vadd.f32 %v3152, 1.0
  %v3288 = vadd.f32 %v3154, 1.0
  %v3289 = vadd.f32 %v3156, 1.0
  %v3290 = vadd.f32 %v3158, 1.0
  %v3291 = vadd.f32 %v3160, 1.0
  %v3292 = vadd.f32 %v3162, 1.0
  %v3293 = vadd.f32 %v3164, 1.0
  %v3294 = vadd.f32 %v3166, 1.0
  %v3295 = vadd.f32 %v3168, 1.0
  %v3296 = vadd.f32 %v3170, 1.0
  %v3297 = vadd.f32 %v3172, 1.0
  %v3298 = vadd.f32 %v3174, 1.0
  %v3299 = vadd.f32 %v3176, 1.0
  %v3300 = vadd.f32 %v3178, 1.0
  %v3301 = vadd.f32 %v3180, 1.0
  %v3302 = vadd.f32 %v3182, 1.0
  %v3303 = vadd.f32 %v3184, 1.0
  %v3304 = vadd.f32 %v3186, 1.0
  %v3305 = vadd.f32 %v3188, 1.0
  %v3306 = vadd.f32 %v3190, 1.0
  %v3307 = vadd.f32 %v3192, 1.0
  %v3308 = vadd.f32 %v3194, 1.0
  %v3309 = vadd.f32 %v3196, 1.0
  %v3310 = vadd.f32 %v3198, 1.0
  %v3311 = vadd.f32 %v3200, 1.0
  %v3312 = vadd.f32 %v3202, 1.0
  %v3313 = vadd.f32 %v3204, 1.0
  %v3314 = vadd.f32 %v3206, 1.0
  %v3315 = vadd.f32 %v3208, 1.0
  %v3316 = vadd.f32 %v3210, 1.0
  %v3317 = vadd.f32 %v3212, 1.0
  %v3318 = vadd.f32 %v3214, 1.0
  %v3319 = vadd.f32 %v3216, 1.0
  %v3320 = vadd.f32 %v3218, 1.0
  %v3321 = vadd.f32 %v3220, 1.0
  %v3322 = vadd.f32 %v3222, 1.0
  %v3323 = vadd.f32 %v3224, 1.0
  %v3324 = vadd.f32 %v3226, 1.0
  %v3325 = vadd.f32 %v3228, 1.0
  %v3326 = vadd.f32 %v3230, 1.0
  %v3327 = vadd.f32 %v3232, 1.0
  %v3328 = vadd.f32 %v3234, 1.0
  %v3329 = vadd.f32 %v3236, 1.0
  %v3330 = vadd.f32 %v3238, 1.0
  %v3331 = vadd.f32 %v3240, 1.0
  %v3332 = vadd.f32 %v3242, 1.0
  %v3333 = vadd.f32 %v3244, 1.0
  %v3334 = vadd.f32 %v3246, 1.0
  %v3335 = vadd.f32 %v3248, 1.0
  %v3336 = vadd.f32 %v3250, 1.0
  %v3337 = vadd.f32 %v3252, 1.0
  %v3338 = vadd.f32 %v3254, 1.0
  %v3339 = vadd.f32 %v3256, 1.0
  %v3340 = vadd.f32 %v3258, 1.0
  %v3341 = vadd.f32 %v3260, 1.0
  %v3342 = vadd.f32 %v3262, 1.0
  %v3343 = vadd.f32 %v3264, 1.0
  %v3344 = vadd.f32 %v3266, 1.0
  %v3345 = vadd.f32 %v3268, 1.0
  %v3346 = vadd.f32 %v3270, 1.0
  %v3347 = vadd.f32 %v3272, 1.0
  %v3348 = vadd.f32 %v3274, 1.0
  %v3349 = vadd.f32 %v3276, 1.0
  %v3350 = vadd.f32 %v3278, 1.0
  %v3351 = vrcp.pop %v3279
  %v3352 = vmul.f32 1.0, %v3351
  %v3353 = vrcp.pop %v3280
  %v3354 = vmul.f32 1.0, %v3353
  %v3355 = vrcp.pop %v3281
  %v3356 = vmul.f32 1.0, %v3355
  %v3357 = vrcp.pop %v3282
  %v3358 = vmul.f32 1.0, %v3357
  %v3359 = vrcp.pop %v3283
  %v3360 = vmul.f32 1.0, %v3359
  %v3361 = vrcp.pop %v3284
  %v3362 = vmul.f32 1.0, %v3361
  %v3363 = vrcp.pop %v3285
  %v3364 = vmul.f32 1.0, %v3363
  %v3365 = vrcp.pop %v3286
  %v3366 = vmul.f32 1.0, %v3365
  %v3367 = vrcp.pop %v3287
  %v3368 = vmul.f32 1.0, %v3367
  %v3369 = vrcp.pop %v3288
  %v3370 = vmul.f32 1.0, %v3369
  %v3371 = vrcp.pop %v3289
  %v3372 = vmul.f32 1.0, %v3371
  %v3373 = vrcp.pop %v3290
  %v3374 = vmul.f32 1.0, %v3373
  %v3375 = vrcp.pop %v3291
  %v3376 = vmul.f32 1.0, %v3375
  %v3377 = vrcp.pop %v3292
  %v3378 = vmul.f32 1.0, %v3377
  %v3379 = vrcp.pop %v3293
  %v3380 = vmul.f32 1.0, %v3379
  %v3381 = vrcp.pop %v3294
  %v3382 = vmul.f32 1.0, %v3381
  %v3383 = vrcp.pop %v3295
  %v3384 = vmul.f32 1.0, %v3383
  %v3385 = vrcp.pop %v3296
  %v3386 = vmul.f32 1.0, %v3385
  %v3387 = vrcp.pop %v3297
  %v3388 = vmul.f32 1.0, %v3387
  %v3389 = vrcp.pop %v3298
  %v3390 = vmul.f32 1.0, %v3389
  %v3391 = vrcp.pop %v3299
  %v3392 = vmul.f32 1.0, %v3391
  %v3393 = vrcp.pop %v3300
  %v3394 = vmul.f32 1.0, %v3393
  %v3395 = vrcp.pop %v3301
  %v3396 = vmul.f32 1.0, %v3395
  %v3397 = vrcp.pop %v3302
  %v3398 = vmul.f32 1.0, %v3397
  %v3399 = vrcp.pop %v3303
  %v3400 = vmul.f32 1.0, %v3399
  %v3401 = vrcp.pop %v3304
  %v3402 = vmul.f32 1.0, %v3401
  %v3403 = vrcp.pop %v3305
  %v3404 = vmul.f32 1.0, %v3403
  %v3405 = vrcp.pop %v3306
  %v3406 = vmul.f32 1.0, %v3405
  %v3407 = vrcp.pop %v3307
  %v3408 = vmul.f32 1.0, %v3407
  %v3409 = vrcp.pop %v3308
  %v3410 = vmul.f32 1.0, %v3409
  %v3411 = vrcp.pop %v3309
  %v3412 = vmul.f32 1.0, %v3411
  %v3413 = vrcp.pop %v3310
  %v3414 = vmul.f32 1.0, %v3413
  %v3415 = vrcp.pop %v3311
  %v3416 = vmul.f32 1.0, %v3415
  %v3417 = vrcp.pop %v3312
  %v3418 = vmul.f32 1.0, %v3417
  %v3419 = vrcp.pop %v3313
  %v3420 = vmul.f32 1.0, %v3419
  %v3421 = vrcp.pop %v3314
  %v3422 = vmul.f32 1.0, %v3421
  %v3423 = vrcp.pop %v3315
  %v3424 = vmul.f32 1.0, %v3423
  %v3425 = vrcp.pop %v3316
  %v3426 = vmul.f32 1.0, %v3425
  %v3427 = vrcp.pop %v3317
  %v3428 = vmul.f32 1.0, %v3427
  %v3429 = vrcp.pop %v3318
  %v3430 = vmul.f32 1.0, %v3429
  %v3431 = vrcp.pop %v3319
  %v3432 = vmul.f32 1.0, %v3431
  %v3433 = vrcp.pop %v3320
  %v3434 = vmul.f32 1.0, %v3433
  %v3435 = vrcp.pop %v3321
  %v3436 = vmul.f32 1.0, %v3435
  %v3437 = vrcp.pop %v3322
  %v3438 = vmul.f32 1.0, %v3437
  %v3439 = vrcp.pop %v3323
  %v3440 = vmul.f32 1.0, %v3439
  %v3441 = vrcp.pop %v3324
  %v3442 = vmul.f32 1.0, %v3441
  %v3443 = vrcp.pop %v3325
  %v3444 = vmul.f32 1.0, %v3443
  %v3445 = vrcp.pop %v3326
  %v3446 = vmul.f32 1.0, %v3445
  %v3447 = vrcp.pop %v3327
  %v3448 = vmul.f32 1.0, %v3447
  %v3449 = vrcp.pop %v3328
  %v3450 = vmul.f32 1.0, %v3449
  %v3451 = vrcp.pop %v3329
  %v3452 = vmul.f32 1.0, %v3451
  %v3453 = vrcp.pop %v3330
  %v3454 = vmul.f32 1.0, %v3453
  %v3455 = vrcp.pop %v3331
  %v3456 = vmul.f32 1.0, %v3455
  %v3457 = vrcp.pop %v3332
  %v3458 = vmul.f32 1.0, %v3457
  %v3459 = vrcp.pop %v3333
  %v3460 = vmul.f32 1.0, %v3459
  %v3461 = vrcp.pop %v3334
  %v3462 = vmul.f32 1.0, %v3461
  %v3463 = vrcp.pop %v3335
  %v3464 = vmul.f32 1.0, %v3463
  %v3465 = vrcp.pop %v3336
  %v3466 = vmul.f32 1.0, %v3465
  %v3467 = vrcp.pop %v3337
  %v3468 = vmul.f32 1.0, %v3467
  %v3469 = vrcp.pop %v3338
  %v3470 = vmul.f32 1.0, %v3469
  %v3471 = vrcp.pop %v3339
  %v3472 = vmul.f32 1.0, %v3471
  %v3473 = vrcp.pop %v3340
  %v3474 = vmul.f32 1.0, %v3473
  %v3475 = vrcp.pop %v3341
  %v3476 = vmul.f32 1.0, %v3475
  %v3477 = vrcp.pop %v3342
  %v3478 = vmul.f32 1.0, %v3477
  %v3479 = vrcp.pop %v3343
  %v3480 = vmul.f32 1.0, %v3479
  %v3481 = vrcp.pop %v3344
  %v3482 = vmul.f32 1.0, %v3481
  %v3483 = vrcp.pop %v3345
  %v3484 = vmul.f32 1.0, %v3483
  %v3485 = vrcp.pop %v3346
  %v3486 = vmul.f32 1.0, %v3485
  %v3487 = vrcp.pop %v3347
  %v3488 = vmul.f32 1.0, %v3487
  %v3489 = vrcp.pop %v3348
  %v3490 = vmul.f32 1.0, %v3489
  %v3491 = vrcp.pop %v3349
  %v3492 = vmul.f32 1.0, %v3491
  %v3493 = vrcp.pop %v3350
  %v3494 = vmul.f32 1.0, %v3493
  %v3495 = vmul.f32 %v2705, %v3352
  %v3496 = vmul.f32 %v2710, %v3354
  %v3497 = vmul.f32 %v2715, %v3356
  %v3498 = vmul.f32 %v2720, %v3358
  %v3499 = vmul.f32 %v2725, %v3360
  %v3500 = vmul.f32 %v2730, %v3362
  %v3501 = vmul.f32 %v2735, %v3364
  %v3502 = vmul.f32 %v2740, %v3366
  %v3503 = vmul.f32 %v2745, %v3368
  %v3504 = vmul.f32 %v2750, %v3370
  %v3505 = vmul.f32 %v2755, %v3372
  %v3506 = vmul.f32 %v2760, %v3374
  %v3507 = vmul.f32 %v2765, %v3376
  %v3508 = vmul.f32 %v2770, %v3378
  %v3509 = vmul.f32 %v2775, %v3380
  %v3510 = vmul.f32 %v2780, %v3382
  %v3511 = vmul.f32 %v2785, %v3384
  %v3512 = vmul.f32 %v2790, %v3386
  %v3513 = vmul.f32 %v2795, %v3388
  %v3514 = vmul.f32 %v2800, %v3390
  %v3515 = vmul.f32 %v2805, %v3392
  %v3516 = vmul.f32 %v2810, %v3394
  %v3517 = vmul.f32 %v2815, %v3396
  %v3518 = vmul.f32 %v2820, %v3398
  %v3519 = vmul.f32 %v2825, %v3400
  %v3520 = vmul.f32 %v2830, %v3402
  %v3521 = vmul.f32 %v2835, %v3404
  %v3522 = vmul.f32 %v2840, %v3406
  %v3523 = vmul.f32 %v2845, %v3408
  %v3524 = vmul.f32 %v2850, %v3410
  %v3525 = vmul.f32 %v2855, %v3412
  %v3526 = vmul.f32 %v2860, %v3414
  %v3527 = vmul.f32 %v2865, %v3416
  %v3528 = vmul.f32 %v2870, %v3418
  %v3529 = vmul.f32 %v2875, %v3420
  %v3530 = vmul.f32 %v2880, %v3422
  %v3531 = vmul.f32 %v2885, %v3424
  %v3532 = vmul.f32 %v2890, %v3426
  %v3533 = vmul.f32 %v2895, %v3428
  %v3534 = vmul.f32 %v2900, %v3430
  %v3535 = vmul.f32 %v2905, %v3432
  %v3536 = vmul.f32 %v2910, %v3434
  %v3537 = vmul.f32 %v2915, %v3436
  %v3538 = vmul.f32 %v2920, %v3438
  %v3539 = vmul.f32 %v2925, %v3440
  %v3540 = vmul.f32 %v2930, %v3442
  %v3541 = vmul.f32 %v2935, %v3444
  %v3542 = vmul.f32 %v2940, %v3446
  %v3543 = vmul.f32 %v2945, %v3448
  %v3544 = vmul.f32 %v2950, %v3450
  %v3545 = vmul.f32 %v2955, %v3452
  %v3546 = vmul.f32 %v2960, %v3454
  %v3547 = vmul.f32 %v2965, %v3456
  %v3548 = vmul.f32 %v2970, %v3458
  %v3549 = vmul.f32 %v2975, %v3460
  %v3550 = vmul.f32 %v2980, %v3462
  %v3551 = vmul.f32 %v2985, %v3464
  %v3552 = vmul.f32 %v2990, %v3466
  %v3553 = vmul.f32 %v2995, %v3468
  %v3554 = vmul.f32 %v3000, %v3470
  %v3555 = vmul.f32 %v3005, %v3472
  %v3556 = vmul.f32 %v3010, %v3474
  %v3557 = vmul.f32 %v3015, %v3476
  %v3558 = vmul.f32 %v3020, %v3478
  %v3559 = vmul.f32 %v3025, %v3480
  %v3560 = vmul.f32 %v3030, %v3482
  %v3561 = vmul.f32 %v3035, %v3484
  %v3562 = vmul.f32 %v3040, %v3486
  %v3563 = vmul.f32 %v3045, %v3488
  %v3564 = vmul.f32 %v3050, %v3490
  %v3565 = vmul.f32 %v3055, %v3492
  %v3566 = vmul.f32 %v3060, %v3494
  %vm3567 = vcmask 523264
  %v3569 = vsel %vm3567, %v1637, 0
  %v3572 = vsel %vm3567, %v1642, 0
  %v3575 = vsel %vm3567, %v1647, 0
  %3577 = vmatprep.subr.mxu0 0.0
  %3578 = vmatpush1.msra.mxu0 %v3495
  %3579 = vmatprep.subr.mxu0 0.0
  %3580 = vmatpush1.msra.mxu0 %v3496
  %3581 = vmatprep.subr.mxu0 0.0
  %3582 = vmatpush1.msra.mxu0 %v3497
  %3583 = vmatprep.subr.mxu0 0.0
  %3584 = vmatpush1.msra.mxu0 %v3498
  %3585 = vmatprep.subr.mxu0 0.0
  %3586 = vmatpush1.msra.mxu0 %v3499
  %3587 = vmatprep.subr.mxu0 0.0
  %3588 = vmatpush1.msra.mxu0 %v3500
  %3589 = vmatprep.subr.mxu0 0.0
  %3590 = vmatpush1.msra.mxu0 %v3501
  %3591 = vmatprep.subr.mxu0 0.0
  %3592 = vmatpush1.msra.mxu0 %v3502
  %3593 = vmatprep.subr.mxu0 0.0
  %3594 = vmatpush1.msra.mxu0 %v3503
  %3595 = vmatprep.subr.mxu0 0.0
  %3596 = vmatpush1.msra.mxu0 %v3504
  %3597 = vmatprep.subr.mxu0 0.0
  %3598 = vmatpush1.msra.mxu0 %v3505
  %3599 = vmatprep.subr.mxu0 0.0
  %3600 = vmatpush1.msra.mxu0 %v3506
  %3601 = vmatprep.subr.mxu0 0.0
  %3602 = vmatpush1.msra.mxu0 %v3507
  %3603 = vmatprep.subr.mxu0 0.0
  %3604 = vmatpush1.msra.mxu0 %v3508
  %3605 = vmatprep.subr.mxu0 0.0
  %3606 = vmatpush1.msra.mxu0 %v3509
  %3607 = vmatprep.subr.mxu0 0.0
  %3608 = vmatpush1.msra.mxu0 %v3510
  %3609 = vmatprep.subr.mxu0 0.0
  %3610 = vmatpush1.msra.mxu0 %v3511
  %3611 = vmatprep.subr.mxu0 0.0
  %3612 = vmatpush1.msra.mxu0 %v3512
  %3613 = vmatprep.subr.mxu0 0.0
  %3614 = vmatpush1.msra.mxu0 %v3513
  %3615 = vmatprep.subr.mxu0 0.0
  %3616 = vmatpush1.msra.mxu0 %v3514
  %3617 = vmatprep.subr.mxu0 0.0
  %3618 = vmatpush1.msra.mxu0 %v3515
  %3619 = vmatprep.subr.mxu0 0.0
  %3620 = vmatpush1.msra.mxu0 %v3516
  %3621 = vmatprep.subr.mxu0 0.0
  %3622 = vmatpush1.msra.mxu0 %v3517
  %3623 = vmatprep.subr.mxu0 0.0
  %3624 = vmatpush1.msra.mxu0 %v3518
  %3625 = vmatprep.subr.mxu0 0.0
  %3626 = vmatpush1.msra.mxu0 %v3519
  %3627 = vmatprep.subr.mxu0 0.0
  %3628 = vmatpush1.msra.mxu0 %v3520
  %3629 = vmatprep.subr.mxu0 0.0
  %3630 = vmatpush1.msra.mxu0 %v3521
  %3631 = vmatprep.subr.mxu0 0.0
  %3632 = vmatpush1.msra.mxu0 %v3522
  %3633 = vmatprep.subr.mxu0 0.0
  %3634 = vmatpush1.msra.mxu0 %v3523
  %3635 = vmatprep.subr.mxu0 0.0
  %3636 = vmatpush1.msra.mxu0 %v3524
  %3637 = vmatprep.subr.mxu0 0.0
  %3638 = vmatpush1.msra.mxu0 %v3525
  %3639 = vmatprep.subr.mxu0 0.0
  %3640 = vmatpush1.msra.mxu0 %v3526
  %3641 = vmatprep.mubr.f32.mxu0 %v1634
  %3642 = vmatmul.mubr.f32.gmra.mrb[0].mxu0 %v1633
  %v3643 = vpop.f32.mrb[0].mxu0
  %v3644 = vadd.f32 0.0, %v3643
  %v3645 = vpop.f32.mrb[0].mxu0
  %3646 = vmatprep.mubr.f32.mxu0 %v1639
  %3647 = vmatmul.mubr.f32.gmra.mrb[0].mxu0 %v1638
  %v3648 = vpop.f32.mrb[0].mxu0
  %v3649 = vadd.f32 0.0, %v3648
  %v3650 = vpop.f32.mrb[0].mxu0
  %3651 = vmatprep.mubr.f32.mxu0 %v1644
  %3652 = vmatmul.mubr.f32.gmra.mrb[0].mxu0 %v1643
  %v3653 = vpop.f32.mrb[0].mxu0
  %v3654 = vadd.f32 0.0, %v3653
  %v3655 = vpop.f32.mrb[0].mxu0
  %3656 = vdwg.mxu0
  %3657 = vmatprep.subr.mxu0 0.0
  %3658 = vmatpush1.msra.mxu0 %v3527
  %3659 = vmatprep.subr.mxu0 0.0
  %3660 = vmatpush1.msra.mxu0 %v3528
  %3661 = vmatprep.subr.mxu0 0.0
  %3662 = vmatpush1.msra.mxu0 %v3529
  %3663 = vmatprep.subr.mxu0 0.0
  %3664 = vmatpush1.msra.mxu0 %v3530
  %3665 = vmatprep.subr.mxu0 0.0
  %3666 = vmatpush1.msra.mxu0 %v3531
  %3667 = vmatprep.subr.mxu0 0.0
  %3668 = vmatpush1.msra.mxu0 %v3532
  %3669 = vmatprep.subr.mxu0 0.0
  %3670 = vmatpush1.msra.mxu0 %v3533
  %3671 = vmatprep.subr.mxu0 0.0
  %3672 = vmatpush1.msra.mxu0 %v3534
  %3673 = vmatprep.subr.mxu0 0.0
  %3674 = vmatpush1.msra.mxu0 %v3535
  %3675 = vmatprep.subr.mxu0 0.0
  %3676 = vmatpush1.msra.mxu0 %v3536
  %3677 = vmatprep.subr.mxu0 0.0
  %3678 = vmatpush1.msra.mxu0 %v3537
  %3679 = vmatprep.subr.mxu0 0.0
  %3680 = vmatpush1.msra.mxu0 %v3538
  %3681 = vmatprep.subr.mxu0 0.0
  %3682 = vmatpush1.msra.mxu0 %v3539
  %3683 = vmatprep.subr.mxu0 0.0
  %3684 = vmatpush1.msra.mxu0 %v3540
  %3685 = vmatprep.subr.mxu0 0.0
  %3686 = vmatpush1.msra.mxu0 %v3541
  %3687 = vmatprep.subr.mxu0 0.0
  %3688 = vmatpush1.msra.mxu0 %v3542
  %3689 = vmatprep.subr.mxu0 0.0
  %3690 = vmatpush1.msra.mxu0 %v3543
  %3691 = vmatprep.subr.mxu0 0.0
  %3692 = vmatpush1.msra.mxu0 %v3544
  %3693 = vmatprep.subr.mxu0 0.0
  %3694 = vmatpush1.msra.mxu0 %v3545
  %3695 = vmatprep.subr.mxu0 0.0
  %3696 = vmatpush1.msra.mxu0 %v3546
  %3697 = vmatprep.subr.mxu0 0.0
  %3698 = vmatpush1.msra.mxu0 %v3547
  %3699 = vmatprep.subr.mxu0 0.0
  %3700 = vmatpush1.msra.mxu0 %v3548
  %3701 = vmatprep.subr.mxu0 0.0
  %3702 = vmatpush1.msra.mxu0 %v3549
  %3703 = vmatprep.subr.mxu0 0.0
  %3704 = vmatpush1.msra.mxu0 %v3550
  %3705 = vmatprep.subr.mxu0 0.0
  %3706 = vmatpush1.msra.mxu0 %v3551
  %3707 = vmatprep.subr.mxu0 0.0
  %3708 = vmatpush1.msra.mxu0 %v3552
  %3709 = vmatprep.subr.mxu0 0.0
  %3710 = vmatpush1.msra.mxu0 %v3553
  %3711 = vmatprep.subr.mxu0 0.0
  %3712 = vmatpush1.msra.mxu0 %v3554
  %3713 = vmatprep.subr.mxu0 0.0
  %3714 = vmatpush1.msra.mxu0 %v3555
  %3715 = vmatprep.subr.mxu0 0.0
  %3716 = vmatpush1.msra.mxu0 %v3556
  %3717 = vmatprep.subr.mxu0 0.0
  %3718 = vmatpush1.msra.mxu0 %v3557
  %3719 = vmatprep.subr.mxu0 0.0
  %3720 = vmatpush1.msra.mxu0 %v3558
  %3721 = vmatprep.mubr.f32.mxu0 %v1636
  %3722 = vmatmul.mubr.f32.gmra.mrb[0].mxu0 %v1635
  %v3723 = vpop.f32.mrb[0].mxu0
  %v3724 = vadd.f32 %v3644, %v3723
  %v3725 = vpop.f32.mrb[0].mxu0
  %3726 = vmatprep.mubr.f32.mxu0 %v1641
  %3727 = vmatmul.mubr.f32.gmra.mrb[0].mxu0 %v1640
  %v3728 = vpop.f32.mrb[0].mxu0
  %v3729 = vadd.f32 %v3649, %v3728
  %v3730 = vpop.f32.mrb[0].mxu0
  %3731 = vmatprep.mubr.f32.mxu0 %v1646
  %3732 = vmatmul.mubr.f32.gmra.mrb[0].mxu0 %v1645
  %v3733 = vpop.f32.mrb[0].mxu0
  %v3734 = vadd.f32 %v3654, %v3733
  %v3735 = vpop.f32.mrb[0].mxu0
  %3736 = vdwg.mxu0
  %3737 = vmatprep.subr.mxu0 0.0
  %3738 = vmatpush1.msra.mxu0 %v3559
  %3739 = vmatprep.subr.mxu0 0.0
  %3740 = vmatpush1.msra.mxu0 %v3560
  %3741 = vmatprep.subr.mxu0 0.0
  %3742 = vmatpush1.msra.mxu0 %v3561
  %3743 = vmatprep.subr.mxu0 0.0
  %3744 = vmatpush1.msra.mxu0 %v3562
  %3745 = vmatprep.subr.mxu0 0.0
  %3746 = vmatpush1.msra.mxu0 %v3563
  %3747 = vmatprep.subr.mxu0 0.0
  %3748 = vmatpush1.msra.mxu0 %v3564
  %3749 = vmatprep.subr.mxu0 0.0
  %3750 = vmatpush1.msra.mxu0 %v3565
  %3751 = vmatprep.subr.mxu0 0.0
  %3752 = vmatpush1.msra.mxu0 %v3566
  %3753 = vmatprep.subr.mxu0 0.0
  %3754 = vmatpush1.msra.mxu0 0.0
  %3755 = vmatprep.subr.mxu0 0.0
  %3756 = vmatpush1.msra.mxu0 0.0
  %3757 = vmatprep.subr.mxu0 0.0
  %3758 = vmatpush1.msra.mxu0 0.0
  %3759 = vmatprep.subr.mxu0 0.0
  %3760 = vmatpush1.msra.mxu0 0.0
  %3761 = vmatprep.subr.mxu0 0.0
  %3762 = vmatpush1.msra.mxu0 0.0
  %3763 = vmatprep.subr.mxu0 0.0
  %3764 = vmatpush1.msra.mxu0 0.0
  %3765 = vmatprep.subr.mxu0 0.0
  %3766 = vmatpush1.msra.mxu0 0.0
  %3767 = vmatprep.subr.mxu0 0.0
  %3768 = vmatpush1.msra.mxu0 0.0
  %3769 = vmatprep.subr.mxu0 0.0
  %3770 = vmatpush1.msra.mxu0 0.0
  %3771 = vmatprep.subr.mxu0 0.0
  %3772 = vmatpush1.msra.mxu0 0.0
  %3773 = vmatprep.subr.mxu0 0.0
  %3774 = vmatpush1.msra.mxu0 0.0
  %3775 = vmatprep.subr.mxu0 0.0
  %3776 = vmatpush1.msra.mxu0 0.0
  %3777 = vmatprep.subr.mxu0 0.0
  %3778 = vmatpush1.msra.mxu0 0.0
  %3779 = vmatprep.subr.mxu0 0.0
  %3780 = vmatpush1.msra.mxu0 0.0
  %3781 = vmatprep.subr.mxu0 0.0
  %3782 = vmatpush1.msra.mxu0 0.0
  %3783 = vmatprep.subr.mxu0 0.0
  %3784 = vmatpush1.msra.mxu0 0.0
  %3785 = vmatprep.subr.mxu0 0.0
  %3786 = vmatpush1.msra.mxu0 0.0
  %3787 = vmatprep.subr.mxu0 0.0
  %3788 = vmatpush1.msra.mxu0 0.0
  %3789 = vmatprep.subr.mxu0 0.0
  %3790 = vmatpush1.msra.mxu0 0.0
  %3791 = vmatprep.subr.mxu0 0.0
  %3792 = vmatpush1.msra.mxu0 0.0
  %3793 = vmatprep.subr.mxu0 0.0
  %3794 = vmatpush1.msra.mxu0 0.0
  %3795 = vmatprep.subr.mxu0 0.0
  %3796 = vmatpush1.msra.mxu0 0.0
  %3797 = vmatprep.subr.mxu0 0.0
  %3798 = vmatpush1.msra.mxu0 0.0
  %3799 = vmatprep.subr.mxu0 0.0
  %3800 = vmatpush1.msra.mxu0 0.0
  %3801 = vmatprep.mubr.f32.mxu0 0.0
  %3802 = vmatmul.mubr.f32.gmra.mrb[0].mxu0 %v3569
  %v3803 = vpop.f32.mrb[0].mxu0
  %v3804 = vadd.f32 %v3724, %v3803
  %v3805 = vpop.f32.mrb[0].mxu0
  %3806 = vmatprep.mubr.f32.mxu0 0.0
  %3807 = vmatmul.mubr.f32.gmra.mrb[0].mxu0 %v3572
  %v3808 = vpop.f32.mrb[0].mxu0
  %v3809 = vadd.f32 %v3729, %v3808
  %v3810 = vpop.f32.mrb[0].mxu0
  %3811 = vmatprep.mubr.f32.mxu0 0.0
  %3812 = vmatmul.mubr.f32.gmra.mrb[0].mxu0 %v3575
  %v3813 = vpop.f32.mrb[0].mxu0
  %v3814 = vadd.f32 %v3734, %v3813
  %v3815 = vpop.f32.mrb[0].mxu0
  %3816 = vdwg.mxu0
  %v3818 = vlaneseq
  %v3819 = vshrl.u32 %v3818, 7
  %v3820 = vsub.s32 0, %v3819
  %v3821 = vrot.slane %v67, %v3820
  %3823 = vmatprep.subr.mxu0 0.0
  %3824 = vmatpush1.msra.mxu0 %v51
  %3825 = vmatprep.subr.mxu0 0.0
  %3826 = vmatpush1.msra.mxu0 %v52
  %3827 = vmatprep.subr.mxu0 0.0
  %3828 = vmatpush1.msra.mxu0 %v53
  %3829 = vmatprep.subr.mxu0 0.0
  %3830 = vmatpush1.msra.mxu0 %v54
  %3831 = vmatprep.subr.mxu0 0.0
  %3832 = vmatpush1.msra.mxu0 %v55
  %3833 = vmatprep.subr.mxu0 0.0
  %3834 = vmatpush1.msra.mxu0 %v56
  %3835 = vmatprep.subr.mxu0 0.0
  %3836 = vmatpush1.msra.mxu0 %v57
  %3837 = vmatprep.subr.mxu0 0.0
  %3838 = vmatpush1.msra.mxu0 %v58
  %3839 = vmatprep.subr.mxu0 0.0
  %3840 = vmatpush1.msra.mxu0 %v59
  %3841 = vmatprep.subr.mxu0 0.0
  %3842 = vmatpush1.msra.mxu0 %v60
  %3843 = vmatprep.subr.mxu0 0.0
  %3844 = vmatpush1.msra.mxu0 %v61
  %3845 = vmatprep.subr.mxu0 0.0
  %3846 = vmatpush1.msra.mxu0 %v62
  %3847 = vmatprep.subr.mxu0 0.0
  %3848 = vmatpush1.msra.mxu0 %v63
  %3849 = vmatprep.subr.mxu0 0.0
  %3850 = vmatpush1.msra.mxu0 %v64
  %3851 = vmatprep.subr.mxu0 0.0
  %3852 = vmatpush1.msra.mxu0 %v65
  %3853 = vmatprep.subr.mxu0 0.0
  %3854 = vmatpush1.msra.mxu0 %v66
  %3855 = vmatprep.subr.mxu0 0.0
  %3856 = vmatpush1.msra.mxu0 0.0
  %3857 = vmatprep.subr.mxu0 0.0
  %3858 = vmatpush1.msra.mxu0 0.0
  %3859 = vmatprep.subr.mxu0 0.0
  %3860 = vmatpush1.msra.mxu0 0.0
  %3861 = vmatprep.subr.mxu0 0.0
  %3862 = vmatpush1.msra.mxu0 0.0
  %3863 = vmatprep.subr.mxu0 0.0
  %3864 = vmatpush1.msra.mxu0 0.0
  %3865 = vmatprep.subr.mxu0 0.0
  %3866 = vmatpush1.msra.mxu0 0.0
  %3867 = vmatprep.subr.mxu0 0.0
  %3868 = vmatpush1.msra.mxu0 0.0
  %3869 = vmatprep.subr.mxu0 0.0
  %3870 = vmatpush1.msra.mxu0 0.0
  %3871 = vmatprep.subr.mxu0 0.0
  %3872 = vmatpush1.msra.mxu0 0.0
  %3873 = vmatprep.subr.mxu0 0.0
  %3874 = vmatpush1.msra.mxu0 0.0
  %3875 = vmatprep.subr.mxu0 0.0
  %3876 = vmatpush1.msra.mxu0 0.0
  %3877 = vmatprep.subr.mxu0 0.0
  %3878 = vmatpush1.msra.mxu0 0.0
  %3879 = vmatprep.subr.mxu0 0.0
  %3880 = vmatpush1.msra.mxu0 0.0
  %3881 = vmatprep.subr.mxu0 0.0
  %3882 = vmatpush1.msra.mxu0 0.0
  %3883 = vmatprep.subr.mxu0 0.0
  %3884 = vmatpush1.msra.mxu0 0.0
  %3885 = vmatprep.subr.mxu0 0.0
  %3886 = vmatpush1.msra.mxu0 0.0
  %3887 = vmatprep.mubr.f32.mxu0 0.0
  %3888 = vmatmul.mubr.f32.gmra.mrb[0].mxu0 %v3804
  %v3889 = vpop.f32.mrb[0].mxu0
  %v3890 = vadd.f32 %v3821, %v3889
  %v3891 = vpop.f32.mrb[0].mxu0
  %3892 = vmatprep.mubr.f32.mxu0 0.0
  %3893 = vmatmul.mubr.f32.gmra.mrb[0].mxu0 %v3809
  %v3894 = vpop.f32.mrb[0].mxu0
  %v3895 = vadd.f32 %v3821, %v3894
  %v3896 = vpop.f32.mrb[0].mxu0
  %3897 = vmatprep.mubr.f32.mxu0 0.0
  %3898 = vmatmul.mubr.f32.gmra.mrb[0].mxu0 %v3814
  %v3899 = vpop.f32.mrb[0].mxu0
  %v3900 = vadd.f32 %v3821, %v3899
  %v3901 = vpop.f32.mrb[0].mxu0
  %3902 = vdwg.mxu0
  %v3903 = vxor.u32 %v3890, 2147483648
  %v3904 = vxor.u32 %v3895, 2147483648
  %v3905 = vxor.u32 %v3900, 2147483648
  %v3906 = vmul.f32 %v3903, 1.442695
  %v3907 = vpow.pop %v3906
  %v3908 = vmul.f32 %v3904, 1.442695
  %v3909 = vpow.pop %v3908
  %v3910 = vmul.f32 %v3905, 1.442695
  %v3911 = vpow.pop %v3910
  %v3912 = vadd.f32 %v3907, 1.0
  %v3913 = vadd.f32 %v3909, 1.0
  %v3914 = vadd.f32 %v3911, 1.0
  %v3915 = vrcp.pop %v3912
  %v3916 = vmul.f32 1.0, %v3915
  %v3917 = vrcp.pop %v3913
  %v3918 = vmul.f32 1.0, %v3917
  %v3919 = vrcp.pop %v3914
  %v3920 = vmul.f32 1.0, %v3919
  %v3921 = vmul.f32 %v3890, %v3916
  %v3922 = vmul.f32 %v3895, %v3918
  %v3923 = vmul.f32 %v3900, %v3920
  %3924 = vmatprep.subr.mxu0 %v69
  %3925 = vmatpush1.msra.mxu0 %v68
  %3926 = vmatprep.subr.mxu0 %v71
  %3927 = vmatpush1.msra.mxu0 %v70
  %3928 = vmatprep.subr.mxu0 %v73
  %3929 = vmatpush1.msra.mxu0 %v72
  %3930 = vmatprep.subr.mxu0 %v75
  %3931 = vmatpush1.msra.mxu0 %v74
  %3932 = vmatprep.subr.mxu0 %v77
  %3933 = vmatpush1.msra.mxu0 %v76
  %3934 = vmatprep.subr.mxu0 %v79
  %3935 = vmatpush1.msra.mxu0 %v78
  %3936 = vmatprep.subr.mxu0 %v81
  %3937 = vmatpush1.msra.mxu0 %v80
  %3938 = vmatprep.subr.mxu0 %v83
  %3939 = vmatpush1.msra.mxu0 %v82
  %3940 = vmatprep.subr.mxu0 %v85
  %3941 = vmatpush1.msra.mxu0 %v84
  %3942 = vmatprep.subr.mxu0 %v87
  %3943 = vmatpush1.msra.mxu0 %v86
  %3944 = vmatprep.subr.mxu0 %v89
  %3945 = vmatpush1.msra.mxu0 %v88
  %3946 = vmatprep.subr.mxu0 %v91
  %3947 = vmatpush1.msra.mxu0 %v90
  %3948 = vmatprep.subr.mxu0 %v93
  %3949 = vmatpush1.msra.mxu0 %v92
  %3950 = vmatprep.subr.mxu0 %v95
  %3951 = vmatpush1.msra.mxu0 %v94
  %3952 = vmatprep.subr.mxu0 %v97
  %3953 = vmatpush1.msra.mxu0 %v96
  %3954 = vmatprep.subr.mxu0 %v99
  %3955 = vmatpush1.msra.mxu0 %v98
  %3956 = vmatprep.subr.mxu0 0.0
  %3957 = vmatpush1.msra.mxu0 0.0
  %3958 = vmatprep.subr.mxu0 0.0
  %3959 = vmatpush1.msra.mxu0 0.0
  %3960 = vmatprep.subr.mxu0 0.0
  %3961 = vmatpush1.msra.mxu0 0.0
  %3962 = vmatprep.subr.mxu0 0.0
  %3963 = vmatpush1.msra.mxu0 0.0
  %3964 = vmatprep.subr.mxu0 0.0
  %3965 = vmatpush1.msra.mxu0 0.0
  %3966 = vmatprep.subr.mxu0 0.0
  %3967 = vmatpush1.msra.mxu0 0.0
  %3968 = vmatprep.subr.mxu0 0.0
  %3969 = vmatpush1.msra.mxu0 0.0
  %3970 = vmatprep.subr.mxu0 0.0
  %3971 = vmatpush1.msra.mxu0 0.0
  %3972 = vmatprep.subr.mxu0 0.0
  %3973 = vmatpush1.msra.mxu0 0.0
  %3974 = vmatprep.subr.mxu0 0.0
  %3975 = vmatpush1.msra.mxu0 0.0
  %3976 = vmatprep.subr.mxu0 0.0
  %3977 = vmatpush1.msra.mxu0 0.0
  %3978 = vmatprep.subr.mxu0 0.0
  %3979 = vmatpush1.msra.mxu0 0.0
  %3980 = vmatprep.subr.mxu0 0.0
  %3981 = vmatpush1.msra.mxu0 0.0
  %3982 = vmatprep.subr.mxu0 0.0
  %3983 = vmatpush1.msra.mxu0 0.0
  %3984 = vmatprep.subr.mxu0 0.0
  %3985 = vmatpush1.msra.mxu0 0.0
  %3986 = vmatprep.subr.mxu0 0.0
  %3987 = vmatpush1.msra.mxu0 0.0
  %3988 = vmatprep.mubr.f32.mxu0 0.0
  %3989 = vmatmul.mubr.f32.gmra.mrb[0].mxu0 %v3921
  %v3990 = vpop.f32.mrb[0].mxu0
  %v3991 = vadd.f32 0.0, %v3990
  %v3992 = vpop.f32.mrb[0].mxu0
  %v3993 = vadd.f32 0.0, %v3992
  %3994 = vmatprep.mubr.f32.mxu0 0.0
  %3995 = vmatmul.mubr.f32.gmra.mrb[0].mxu0 %v3922
  %v3996 = vpop.f32.mrb[0].mxu0
  %v3997 = vadd.f32 0.0, %v3996
  %v3998 = vpop.f32.mrb[0].mxu0
  %v3999 = vadd.f32 0.0, %v3998
  %4000 = vmatprep.mubr.f32.mxu0 0.0
  %4001 = vmatmul.mubr.f32.gmra.mrb[0].mxu0 %v3923
  %v4002 = vpop.f32.mrb[0].mxu0
  %v4003 = vadd.f32 0.0, %v4002
  %v4004 = vpop.f32.mrb[0].mxu0
  %v4005 = vadd.f32 0.0, %v4004
  %4006 = vdwg.mxu0
  %v4008 = vlaneseq
  %v4009 = vshrl.u32 %v4008, 7
  %v4010 = vsub.s32 0, %v4009
  %v4011 = vrot.slane %v100, %v4010
  %v4013 = vadd.f32 %v3991, %v4011
  %v4014 = vadd.f32 %v3997, %v4011
  %v4015 = vadd.f32 %v4003, %v4011
  %4016 = vmatprep.subr.mxu0 0.0
  %4017 = vmatpush1.msra.mxu0 %v3993
  %4018 = vmatprep.subr.mxu0 0.0
  %4019 = vmatpush1.msra.mxu0 %v3999
  %4020 = vmatprep.subr.mxu0 0.0
  %4021 = vmatpush1.msra.mxu0 %v4005
  %4022 = vmatprep.subr.mxu0 0.0
  %4023 = vmatpush1.msra.mxu0 0.0
  %4024 = vmatprep.subr.mxu0 0.0
  %4025 = vmatpush1.msra.mxu0 0.0
  %4026 = vmatprep.subr.mxu0 0.0
  %4027 = vmatpush1.msra.mxu0 0.0
  %4028 = vmatprep.subr.mxu0 0.0
  %4029 = vmatpush1.msra.mxu0 0.0
  %4030 = vmatprep.subr.mxu0 0.0
  %4031 = vmatpush1.msra.mxu0 0.0
  %4032 = vmatprep.subr.mxu0 0.0
  %4033 = vmatpush1.msra.mxu0 0.0
  %4034 = vmatprep.subr.mxu0 0.0
  %4035 = vmatpush1.msra.mxu0 0.0
  %4036 = vmatprep.subr.mxu0 0.0
  %4037 = vmatpush1.msra.mxu0 0.0
  %4038 = vmatprep.subr.mxu0 0.0
  %4039 = vmatpush1.msra.mxu0 0.0
  %4040 = vmatprep.subr.mxu0 0.0
  %4041 = vmatpush1.msra.mxu0 0.0
  %4042 = vmatprep.subr.mxu0 0.0
  %4043 = vmatpush1.msra.mxu0 0.0
  %4044 = vmatprep.subr.mxu0 0.0
  %4045 = vmatpush1.msra.mxu0 0.0
  %4046 = vmatprep.subr.mxu0 0.0
  %4047 = vmatpush1.msra.mxu0 0.0
  %4048 = vmatprep.subr.mxu0 0.0
  %4049 = vmatpush1.msra.mxu0 0.0
  %4050 = vmatprep.subr.mxu0 0.0
  %4051 = vmatpush1.msra.mxu0 0.0
  %4052 = vmatprep.subr.mxu0 0.0
  %4053 = vmatpush1.msra.mxu0 0.0
  %4054 = vmatprep.subr.mxu0 0.0
  %4055 = vmatpush1.msra.mxu0 0.0
  %4056 = vmatprep.subr.mxu0 0.0
  %4057 = vmatpush1.msra.mxu0 0.0
  %4058 = vmatprep.subr.mxu0 0.0
  %4059 = vmatpush1.msra.mxu0 0.0
  %4060 = vmatprep.subr.mxu0 0.0
  %4061 = vmatpush1.msra.mxu0 0.0
  %4062 = vmatprep.subr.mxu0 0.0
  %4063 = vmatpush1.msra.mxu0 0.0
  %4064 = vmatprep.subr.mxu0 0.0
  %4065 = vmatpush1.msra.mxu0 0.0
  %4066 = vmatprep.subr.mxu0 0.0
  %4067 = vmatpush1.msra.mxu0 0.0
  %4068 = vmatprep.subr.mxu0 0.0
  %4069 = vmatpush1.msra.mxu0 0.0
  %4070 = vmatprep.subr.mxu0 0.0
  %4071 = vmatpush1.msra.mxu0 0.0
  %4072 = vmatprep.subr.mxu0 0.0
  %4073 = vmatpush1.msra.mxu0 0.0
  %4074 = vmatprep.subr.mxu0 0.0
  %4075 = vmatpush1.msra.mxu0 0.0
  %4076 = vmatprep.subr.mxu0 0.0
  %4077 = vmatpush1.msra.mxu0 0.0
  %4078 = vmatprep.subr.mxu0 0.0
  %4079 = vmatpush1.msra.mxu0 0.0
  %4080 = vmatprep.mubr.f32.mxu0 0.0
  %4081 = vmatmul.mubr.f32.gmra.mrb[0].mxu0 %v1782
  %v4082 = vpop.f32.mrb[0].mxu0
  %v4083 = vadd.f32 0.0, %v4082
  %v4084 = vpop.f32.mrb[0].mxu0
  %4085 = vmatprep.mubr.f32.mxu0 0.0
  %4086 = vmatmul.mubr.f32.gmra.mrb[0].mxu0 %v1785
  %v4087 = vpop.f32.mrb[0].mxu0
  %v4088 = vadd.f32 0.0, %v4087
  %v4089 = vpop.f32.mrb[0].mxu0
  %4090 = vmatprep.mubr.f32.mxu0 0.0
  %4091 = vmatmul.mubr.f32.gmra.mrb[0].mxu0 %v1788
  %v4092 = vpop.f32.mrb[0].mxu0
  %v4093 = vadd.f32 0.0, %v4092
  %v4094 = vpop.f32.mrb[0].mxu0
  %4095 = vmatprep.mubr.f32.mxu0 0.0
  %4096 = vmatmul.mubr.f32.gmra.mrb[0].mxu0 %v1791
  %v4097 = vpop.f32.mrb[0].mxu0
  %v4098 = vadd.f32 0.0, %v4097
  %v4099 = vpop.f32.mrb[0].mxu0
  %4100 = vmatprep.mubr.f32.mxu0 0.0
  %4101 = vmatmul.mubr.f32.gmra.mrb[0].mxu0 %v1794
  %v4102 = vpop.f32.mrb[0].mxu0
  %v4103 = vadd.f32 0.0, %v4102
  %v4104 = vpop.f32.mrb[0].mxu0
  %4105 = vmatprep.mubr.f32.mxu0 0.0
  %4106 = vmatmul.mubr.f32.gmra.mrb[0].mxu0 %v1797
  %v4107 = vpop.f32.mrb[0].mxu0
  %v4108 = vadd.f32 0.0, %v4107
  %v4109 = vpop.f32.mrb[0].mxu0
  %4110 = vmatprep.mubr.f32.mxu0 0.0
  %4111 = vmatmul.mubr.f32.gmra.mrb[0].mxu0 %v1800
  %v4112 = vpop.f32.mrb[0].mxu0
  %v4113 = vadd.f32 0.0, %v4112
  %v4114 = vpop.f32.mrb[0].mxu0
  %4115 = vmatprep.mubr.f32.mxu0 0.0
  %4116 = vmatmul.mubr.f32.gmra.mrb[0].mxu0 %v1803
  %v4117 = vpop.f32.mrb[0].mxu0
  %v4118 = vadd.f32 0.0, %v4117
  %v4119 = vpop.f32.mrb[0].mxu0
  %4120 = vmatprep.mubr.f32.mxu0 0.0
  %4121 = vmatmul.mubr.f32.gmra.mrb[0].mxu0 %v1806
  %v4122 = vpop.f32.mrb[0].mxu0
  %v4123 = vadd.f32 0.0, %v4122
  %v4124 = vpop.f32.mrb[0].mxu0
  %4125 = vmatprep.mubr.f32.mxu0 0.0
  %4126 = vmatmul.mubr.f32.gmra.mrb[0].mxu0 %v1809
  %v4127 = vpop.f32.mrb[0].mxu0
  %v4128 = vadd.f32 0.0, %v4127
  %v4129 = vpop.f32.mrb[0].mxu0
  %4130 = vmatprep.mubr.f32.mxu0 0.0
  %4131 = vmatmul.mubr.f32.gmra.mrb[0].mxu0 %v1812
  %v4132 = vpop.f32.mrb[0].mxu0
  %v4133 = vadd.f32 0.0, %v4132
  %v4134 = vpop.f32.mrb[0].mxu0
  %4135 = vmatprep.mubr.f32.mxu0 0.0
  %4136 = vmatmul.mubr.f32.gmra.mrb[0].mxu0 %v1815
  %v4137 = vpop.f32.mrb[0].mxu0
  %v4138 = vadd.f32 0.0, %v4137
  %v4139 = vpop.f32.mrb[0].mxu0
  %4140 = vmatprep.mubr.f32.mxu0 0.0
  %4141 = vmatmul.mubr.f32.gmra.mrb[0].mxu0 %v1818
  %v4142 = vpop.f32.mrb[0].mxu0
  %v4143 = vadd.f32 0.0, %v4142
  %v4144 = vpop.f32.mrb[0].mxu0
  %4145 = vmatprep.mubr.f32.mxu0 0.0
  %4146 = vmatmul.mubr.f32.gmra.mrb[0].mxu0 %v1821
  %v4147 = vpop.f32.mrb[0].mxu0
  %v4148 = vadd.f32 0.0, %v4147
  %v4149 = vpop.f32.mrb[0].mxu0
  %4150 = vmatprep.mubr.f32.mxu0 0.0
  %4151 = vmatmul.mubr.f32.gmra.mrb[0].mxu0 %v1824
  %v4152 = vpop.f32.mrb[0].mxu0
  %v4153 = vadd.f32 0.0, %v4152
  %v4154 = vpop.f32.mrb[0].mxu0
  %4155 = vmatprep.mubr.f32.mxu0 0.0
  %4156 = vmatmul.mubr.f32.gmra.mrb[0].mxu0 %v1827
  %v4157 = vpop.f32.mrb[0].mxu0
  %v4158 = vadd.f32 0.0, %v4157
  %v4159 = vpop.f32.mrb[0].mxu0
  %4160 = vmatprep.mubr.f32.mxu0 0.0
  %4161 = vmatmul.mubr.f32.gmra.mrb[0].mxu0 %v1830
  %v4162 = vpop.f32.mrb[0].mxu0
  %v4163 = vadd.f32 0.0, %v4162
  %v4164 = vpop.f32.mrb[0].mxu0
  %4165 = vmatprep.mubr.f32.mxu0 0.0
  %4166 = vmatmul.mubr.f32.gmra.mrb[0].mxu0 %v1833
  %v4167 = vpop.f32.mrb[0].mxu0
  %v4168 = vadd.f32 0.0, %v4167
  %v4169 = vpop.f32.mrb[0].mxu0
  %4170 = vmatprep.mubr.f32.mxu0 0.0
  %4171 = vmatmul.mubr.f32.gmra.mrb[0].mxu0 %v1836
  %v4172 = vpop.f32.mrb[0].mxu0
  %v4173 = vadd.f32 0.0, %v4172
  %v4174 = vpop.f32.mrb[0].mxu0
  %4175 = vmatprep.mubr.f32.mxu0 0.0
  %4176 = vmatmul.mubr.f32.gmra.mrb[0].mxu0 %v1839
  %v4177 = vpop.f32.mrb[0].mxu0
  %v4178 = vadd.f32 0.0, %v4177
  %v4179 = vpop.f32.mrb[0].mxu0
  %4180 = vmatprep.mubr.f32.mxu0 0.0
  %4181 = vmatmul.mubr.f32.gmra.mrb[0].mxu0 %v1842
  %v4182 = vpop.f32.mrb[0].mxu0
  %v4183 = vadd.f32 0.0, %v4182
  %v4184 = vpop.f32.mrb[0].mxu0
  %4185 = vmatprep.mubr.f32.mxu0 0.0
  %4186 = vmatmul.mubr.f32.gmra.mrb[0].mxu0 %v1845
  %v4187 = vpop.f32.mrb[0].mxu0
  %v4188 = vadd.f32 0.0, %v4187
  %v4189 = vpop.f32.mrb[0].mxu0
  %4190 = vmatprep.mubr.f32.mxu0 0.0
  %4191 = vmatmul.mubr.f32.gmra.mrb[0].mxu0 %v1848
  %v4192 = vpop.f32.mrb[0].mxu0
  %v4193 = vadd.f32 0.0, %v4192
  %v4194 = vpop.f32.mrb[0].mxu0
  %4195 = vmatprep.mubr.f32.mxu0 0.0
  %4196 = vmatmul.mubr.f32.gmra.mrb[0].mxu0 %v1851
  %v4197 = vpop.f32.mrb[0].mxu0
  %v4198 = vadd.f32 0.0, %v4197
  %v4199 = vpop.f32.mrb[0].mxu0
  %4200 = vmatprep.mubr.f32.mxu0 0.0
  %4201 = vmatmul.mubr.f32.gmra.mrb[0].mxu0 %v1854
  %v4202 = vpop.f32.mrb[0].mxu0
  %v4203 = vadd.f32 0.0, %v4202
  %v4204 = vpop.f32.mrb[0].mxu0
  %4205 = vmatprep.mubr.f32.mxu0 0.0
  %4206 = vmatmul.mubr.f32.gmra.mrb[0].mxu0 %v1857
  %v4207 = vpop.f32.mrb[0].mxu0
  %v4208 = vadd.f32 0.0, %v4207
  %v4209 = vpop.f32.mrb[0].mxu0
  %4210 = vmatprep.mubr.f32.mxu0 0.0
  %4211 = vmatmul.mubr.f32.gmra.mrb[0].mxu0 %v1860
  %v4212 = vpop.f32.mrb[0].mxu0
  %v4213 = vadd.f32 0.0, %v4212
  %v4214 = vpop.f32.mrb[0].mxu0
  %4215 = vmatprep.mubr.f32.mxu0 0.0
  %4216 = vmatmul.mubr.f32.gmra.mrb[0].mxu0 %v1863
  %v4217 = vpop.f32.mrb[0].mxu0
  %v4218 = vadd.f32 0.0, %v4217
  %v4219 = vpop.f32.mrb[0].mxu0
  %4220 = vmatprep.mubr.f32.mxu0 0.0
  %4221 = vmatmul.mubr.f32.gmra.mrb[0].mxu0 %v1866
  %v4222 = vpop.f32.mrb[0].mxu0
  %v4223 = vadd.f32 0.0, %v4222
  %v4224 = vpop.f32.mrb[0].mxu0
  %4225 = vmatprep.mubr.f32.mxu0 0.0
  %4226 = vmatmul.mubr.f32.gmra.mrb[0].mxu0 %v1869
  %v4227 = vpop.f32.mrb[0].mxu0
  %v4228 = vadd.f32 0.0, %v4227
  %v4229 = vpop.f32.mrb[0].mxu0
  %4230 = vmatprep.mubr.f32.mxu0 0.0
  %4231 = vmatmul.mubr.f32.gmra.mrb[0].mxu0 %v1872
  %v4232 = vpop.f32.mrb[0].mxu0
  %v4233 = vadd.f32 0.0, %v4232
  %v4234 = vpop.f32.mrb[0].mxu0
  %4235 = vmatprep.mubr.f32.mxu0 0.0
  %4236 = vmatmul.mubr.f32.gmra.mrb[0].mxu0 %v1875
  %v4237 = vpop.f32.mrb[0].mxu0
  %v4238 = vadd.f32 0.0, %v4237
  %v4239 = vpop.f32.mrb[0].mxu0
  %4240 = vmatprep.mubr.f32.mxu0 0.0
  %4241 = vmatmul.mubr.f32.gmra.mrb[0].mxu0 %v1878
  %v4242 = vpop.f32.mrb[0].mxu0
  %v4243 = vadd.f32 0.0, %v4242
  %v4244 = vpop.f32.mrb[0].mxu0
  %4245 = vmatprep.mubr.f32.mxu0 0.0
  %4246 = vmatmul.mubr.f32.gmra.mrb[0].mxu0 %v1881
  %v4247 = vpop.f32.mrb[0].mxu0
  %v4248 = vadd.f32 0.0, %v4247
  %v4249 = vpop.f32.mrb[0].mxu0
  %4250 = vmatprep.mubr.f32.mxu0 0.0
  %4251 = vmatmul.mubr.f32.gmra.mrb[0].mxu0 %v1884
  %v4252 = vpop.f32.mrb[0].mxu0
  %v4253 = vadd.f32 0.0, %v4252
  %v4254 = vpop.f32.mrb[0].mxu0
  %4255 = vmatprep.mubr.f32.mxu0 0.0
  %4256 = vmatmul.mubr.f32.gmra.mrb[0].mxu0 %v1887
  %v4257 = vpop.f32.mrb[0].mxu0
  %v4258 = vadd.f32 0.0, %v4257
  %v4259 = vpop.f32.mrb[0].mxu0
  %4260 = vmatprep.mubr.f32.mxu0 0.0
  %4261 = vmatmul.mubr.f32.gmra.mrb[0].mxu0 %v1890
  %v4262 = vpop.f32.mrb[0].mxu0
  %v4263 = vadd.f32 0.0, %v4262
  %v4264 = vpop.f32.mrb[0].mxu0
  %4265 = vmatprep.mubr.f32.mxu0 0.0
  %4266 = vmatmul.mubr.f32.gmra.mrb[0].mxu0 %v1893
  %v4267 = vpop.f32.mrb[0].mxu0
  %v4268 = vadd.f32 0.0, %v4267
  %v4269 = vpop.f32.mrb[0].mxu0
  %4270 = vmatprep.mubr.f32.mxu0 0.0
  %4271 = vmatmul.mubr.f32.gmra.mrb[0].mxu0 %v1896
  %v4272 = vpop.f32.mrb[0].mxu0
  %v4273 = vadd.f32 0.0, %v4272
  %v4274 = vpop.f32.mrb[0].mxu0
  %4275 = vmatprep.mubr.f32.mxu0 0.0
  %4276 = vmatmul.mubr.f32.gmra.mrb[0].mxu0 %v1899
  %v4277 = vpop.f32.mrb[0].mxu0
  %v4278 = vadd.f32 0.0, %v4277
  %v4279 = vpop.f32.mrb[0].mxu0
  %4280 = vmatprep.mubr.f32.mxu0 0.0
  %4281 = vmatmul.mubr.f32.gmra.mrb[0].mxu0 %v1902
  %v4282 = vpop.f32.mrb[0].mxu0
  %v4283 = vadd.f32 0.0, %v4282
  %v4284 = vpop.f32.mrb[0].mxu0
  %4285 = vmatprep.mubr.f32.mxu0 0.0
  %4286 = vmatmul.mubr.f32.gmra.mrb[0].mxu0 %v1905
  %v4287 = vpop.f32.mrb[0].mxu0
  %v4288 = vadd.f32 0.0, %v4287
  %v4289 = vpop.f32.mrb[0].mxu0
  %4290 = vmatprep.mubr.f32.mxu0 0.0
  %4291 = vmatmul.mubr.f32.gmra.mrb[0].mxu0 %v1908
  %v4292 = vpop.f32.mrb[0].mxu0
  %v4293 = vadd.f32 0.0, %v4292
  %v4294 = vpop.f32.mrb[0].mxu0
  %4295 = vmatprep.mubr.f32.mxu0 0.0
  %4296 = vmatmul.mubr.f32.gmra.mrb[0].mxu0 %v1911
  %v4297 = vpop.f32.mrb[0].mxu0
  %v4298 = vadd.f32 0.0, %v4297
  %v4299 = vpop.f32.mrb[0].mxu0
  %4300 = vmatprep.mubr.f32.mxu0 0.0
  %4301 = vmatmul.mubr.f32.gmra.mrb[0].mxu0 %v1914
  %v4302 = vpop.f32.mrb[0].mxu0
  %v4303 = vadd.f32 0.0, %v4302
  %v4304 = vpop.f32.mrb[0].mxu0
  %4305 = vmatprep.mubr.f32.mxu0 0.0
  %4306 = vmatmul.mubr.f32.gmra.mrb[0].mxu0 %v1917
  %v4307 = vpop.f32.mrb[0].mxu0
  %v4308 = vadd.f32 0.0, %v4307
  %v4309 = vpop.f32.mrb[0].mxu0
  %4310 = vmatprep.mubr.f32.mxu0 0.0
  %4311 = vmatmul.mubr.f32.gmra.mrb[0].mxu0 %v1920
  %v4312 = vpop.f32.mrb[0].mxu0
  %v4313 = vadd.f32 0.0, %v4312
  %v4314 = vpop.f32.mrb[0].mxu0
  %4315 = vmatprep.mubr.f32.mxu0 0.0
  %4316 = vmatmul.mubr.f32.gmra.mrb[0].mxu0 %v1923
  %v4317 = vpop.f32.mrb[0].mxu0
  %v4318 = vadd.f32 0.0, %v4317
  %v4319 = vpop.f32.mrb[0].mxu0
  %4320 = vmatprep.mubr.f32.mxu0 0.0
  %4321 = vmatmul.mubr.f32.gmra.mrb[0].mxu0 %v1926
  %v4322 = vpop.f32.mrb[0].mxu0
  %v4323 = vadd.f32 0.0, %v4322
  %v4324 = vpop.f32.mrb[0].mxu0
  %4325 = vmatprep.mubr.f32.mxu0 0.0
  %4326 = vmatmul.mubr.f32.gmra.mrb[0].mxu0 %v1929
  %v4327 = vpop.f32.mrb[0].mxu0
  %v4328 = vadd.f32 0.0, %v4327
  %v4329 = vpop.f32.mrb[0].mxu0
  %4330 = vmatprep.mubr.f32.mxu0 0.0
  %4331 = vmatmul.mubr.f32.gmra.mrb[0].mxu0 %v1932
  %v4332 = vpop.f32.mrb[0].mxu0
  %v4333 = vadd.f32 0.0, %v4332
  %v4334 = vpop.f32.mrb[0].mxu0
  %4335 = vmatprep.mubr.f32.mxu0 0.0
  %4336 = vmatmul.mubr.f32.gmra.mrb[0].mxu0 %v1935
  %v4337 = vpop.f32.mrb[0].mxu0
  %v4338 = vadd.f32 0.0, %v4337
  %v4339 = vpop.f32.mrb[0].mxu0
  %4340 = vmatprep.mubr.f32.mxu0 0.0
  %4341 = vmatmul.mubr.f32.gmra.mrb[0].mxu0 %v1938
  %v4342 = vpop.f32.mrb[0].mxu0
  %v4343 = vadd.f32 0.0, %v4342
  %v4344 = vpop.f32.mrb[0].mxu0
  %4345 = vmatprep.mubr.f32.mxu0 0.0
  %4346 = vmatmul.mubr.f32.gmra.mrb[0].mxu0 %v1941
  %v4347 = vpop.f32.mrb[0].mxu0
  %v4348 = vadd.f32 0.0, %v4347
  %v4349 = vpop.f32.mrb[0].mxu0
  %4350 = vmatprep.mubr.f32.mxu0 0.0
  %4351 = vmatmul.mubr.f32.gmra.mrb[0].mxu0 %v1944
  %v4352 = vpop.f32.mrb[0].mxu0
  %v4353 = vadd.f32 0.0, %v4352
  %v4354 = vpop.f32.mrb[0].mxu0
  %4355 = vmatprep.mubr.f32.mxu0 0.0
  %4356 = vmatmul.mubr.f32.gmra.mrb[0].mxu0 %v1947
  %v4357 = vpop.f32.mrb[0].mxu0
  %v4358 = vadd.f32 0.0, %v4357
  %v4359 = vpop.f32.mrb[0].mxu0
  %4360 = vmatprep.mubr.f32.mxu0 0.0
  %4361 = vmatmul.mubr.f32.gmra.mrb[0].mxu0 %v1950
  %v4362 = vpop.f32.mrb[0].mxu0
  %v4363 = vadd.f32 0.0, %v4362
  %v4364 = vpop.f32.mrb[0].mxu0
  %4365 = vmatprep.mubr.f32.mxu0 0.0
  %4366 = vmatmul.mubr.f32.gmra.mrb[0].mxu0 %v1953
  %v4367 = vpop.f32.mrb[0].mxu0
  %v4368 = vadd.f32 0.0, %v4367
  %v4369 = vpop.f32.mrb[0].mxu0
  %4370 = vmatprep.mubr.f32.mxu0 0.0
  %4371 = vmatmul.mubr.f32.gmra.mrb[0].mxu0 %v1956
  %v4372 = vpop.f32.mrb[0].mxu0
  %v4373 = vadd.f32 0.0, %v4372
  %v4374 = vpop.f32.mrb[0].mxu0
  %4375 = vmatprep.mubr.f32.mxu0 0.0
  %4376 = vmatmul.mubr.f32.gmra.mrb[0].mxu0 %v1959
  %v4377 = vpop.f32.mrb[0].mxu0
  %v4378 = vadd.f32 0.0, %v4377
  %v4379 = vpop.f32.mrb[0].mxu0
  %4380 = vmatprep.mubr.f32.mxu0 0.0
  %4381 = vmatmul.mubr.f32.gmra.mrb[0].mxu0 %v1962
  %v4382 = vpop.f32.mrb[0].mxu0
  %v4383 = vadd.f32 0.0, %v4382
  %v4384 = vpop.f32.mrb[0].mxu0
  %4385 = vmatprep.mubr.f32.mxu0 0.0
  %4386 = vmatmul.mubr.f32.gmra.mrb[0].mxu0 %v1965
  %v4387 = vpop.f32.mrb[0].mxu0
  %v4388 = vadd.f32 0.0, %v4387
  %v4389 = vpop.f32.mrb[0].mxu0
  %4390 = vmatprep.mubr.f32.mxu0 0.0
  %4391 = vmatmul.mubr.f32.gmra.mrb[0].mxu0 %v1968
  %v4392 = vpop.f32.mrb[0].mxu0
  %v4393 = vadd.f32 0.0, %v4392
  %v4394 = vpop.f32.mrb[0].mxu0
  %4395 = vmatprep.mubr.f32.mxu0 0.0
  %4396 = vmatmul.mubr.f32.gmra.mrb[0].mxu0 %v1971
  %v4397 = vpop.f32.mrb[0].mxu0
  %v4398 = vadd.f32 0.0, %v4397
  %v4399 = vpop.f32.mrb[0].mxu0
  %4400 = vmatprep.mubr.f32.mxu0 0.0
  %4401 = vmatmul.mubr.f32.gmra.mrb[0].mxu0 %v1974
  %v4402 = vpop.f32.mrb[0].mxu0
  %v4403 = vadd.f32 0.0, %v4402
  %v4404 = vpop.f32.mrb[0].mxu0
  %4405 = vmatprep.mubr.f32.mxu0 0.0
  %4406 = vmatmul.mubr.f32.gmra.mrb[0].mxu0 %v1977
  %v4407 = vpop.f32.mrb[0].mxu0
  %v4408 = vadd.f32 0.0, %v4407
  %v4409 = vpop.f32.mrb[0].mxu0
  %4410 = vmatprep.mubr.f32.mxu0 0.0
  %4411 = vmatmul.mubr.f32.gmra.mrb[0].mxu0 %v1980
  %v4412 = vpop.f32.mrb[0].mxu0
  %v4413 = vadd.f32 0.0, %v4412
  %v4414 = vpop.f32.mrb[0].mxu0
  %4415 = vmatprep.mubr.f32.mxu0 0.0
  %4416 = vmatmul.mubr.f32.gmra.mrb[0].mxu0 %v1983
  %v4417 = vpop.f32.mrb[0].mxu0
  %v4418 = vadd.f32 0.0, %v4417
  %v4419 = vpop.f32.mrb[0].mxu0
  %4420 = vmatprep.mubr.f32.mxu0 0.0
  %4421 = vmatmul.mubr.f32.gmra.mrb[0].mxu0 %v1986
  %v4422 = vpop.f32.mrb[0].mxu0
  %v4423 = vadd.f32 0.0, %v4422
  %v4424 = vpop.f32.mrb[0].mxu0
  %4425 = vmatprep.mubr.f32.mxu0 0.0
  %4426 = vmatmul.mubr.f32.gmra.mrb[0].mxu0 %v1989
  %v4427 = vpop.f32.mrb[0].mxu0
  %v4428 = vadd.f32 0.0, %v4427
  %v4429 = vpop.f32.mrb[0].mxu0
  %4430 = vmatprep.mubr.f32.mxu0 0.0
  %4431 = vmatmul.mubr.f32.gmra.mrb[0].mxu0 %v1992
  %v4432 = vpop.f32.mrb[0].mxu0
  %v4433 = vadd.f32 0.0, %v4432
  %v4434 = vpop.f32.mrb[0].mxu0
  %4435 = vmatprep.mubr.f32.mxu0 0.0
  %4436 = vmatmul.mubr.f32.gmra.mrb[0].mxu0 %v1995
  %v4437 = vpop.f32.mrb[0].mxu0
  %v4438 = vadd.f32 0.0, %v4437
  %v4439 = vpop.f32.mrb[0].mxu0
  %4440 = vdwg.mxu0
  %4441 = vmatprep.subr.mxu0 0.0
  %4442 = vmatpush1.msra.mxu0 %v4013
  %4443 = vmatprep.subr.mxu0 0.0
  %4444 = vmatpush1.msra.mxu0 %v4014
  %4445 = vmatprep.subr.mxu0 0.0
  %4446 = vmatpush1.msra.mxu0 %v4015
  %4447 = vmatprep.subr.mxu0 0.0
  %4448 = vmatpush1.msra.mxu0 0.0
  %4449 = vmatprep.subr.mxu0 0.0
  %4450 = vmatpush1.msra.mxu0 0.0
  %4451 = vmatprep.subr.mxu0 0.0
  %4452 = vmatpush1.msra.mxu0 0.0
  %4453 = vmatprep.subr.mxu0 0.0
  %4454 = vmatpush1.msra.mxu0 0.0
  %4455 = vmatprep.subr.mxu0 0.0
  %4456 = vmatpush1.msra.mxu0 0.0
  %4457 = vmatprep.subr.mxu0 0.0
  %4458 = vmatpush1.msra.mxu0 0.0
  %4459 = vmatprep.subr.mxu0 0.0
  %4460 = vmatpush1.msra.mxu0 0.0
  %4461 = vmatprep.subr.mxu0 0.0
  %4462 = vmatpush1.msra.mxu0 0.0
  %4463 = vmatprep.subr.mxu0 0.0
  %4464 = vmatpush1.msra.mxu0 0.0
  %4465 = vmatprep.subr.mxu0 0.0
  %4466 = vmatpush1.msra.mxu0 0.0
  %4467 = vmatprep.subr.mxu0 0.0
  %4468 = vmatpush1.msra.mxu0 0.0
  %4469 = vmatprep.subr.mxu0 0.0
  %4470 = vmatpush1.msra.mxu0 0.0
  %4471 = vmatprep.subr.mxu0 0.0
  %4472 = vmatpush1.msra.mxu0 0.0
  %4473 = vmatprep.subr.mxu0 0.0
  %4474 = vmatpush1.msra.mxu0 0.0
  %4475 = vmatprep.subr.mxu0 0.0
  %4476 = vmatpush1.msra.mxu0 0.0
  %4477 = vmatprep.subr.mxu0 0.0
  %4478 = vmatpush1.msra.mxu0 0.0
  %4479 = vmatprep.subr.mxu0 0.0
  %4480 = vmatpush1.msra.mxu0 0.0
  %4481 = vmatprep.subr.mxu0 0.0
  %4482 = vmatpush1.msra.mxu0 0.0
  %4483 = vmatprep.subr.mxu0 0.0
  %4484 = vmatpush1.msra.mxu0 0.0
  %4485 = vmatprep.subr.mxu0 0.0
  %4486 = vmatpush1.msra.mxu0 0.0
  %4487 = vmatprep.subr.mxu0 0.0
  %4488 = vmatpush1.msra.mxu0 0.0
  %4489 = vmatprep.subr.mxu0 0.0
  %4490 = vmatpush1.msra.mxu0 0.0
  %4491 = vmatprep.subr.mxu0 0.0
  %4492 = vmatpush1.msra.mxu0 0.0
  %4493 = vmatprep.subr.mxu0 0.0
  %4494 = vmatpush1.msra.mxu0 0.0
  %4495 = vmatprep.subr.mxu0 0.0
  %4496 = vmatpush1.msra.mxu0 0.0
  %4497 = vmatprep.subr.mxu0 0.0
  %4498 = vmatpush1.msra.mxu0 0.0
  %4499 = vmatprep.subr.mxu0 0.0
  %4500 = vmatpush1.msra.mxu0 0.0
  %4501 = vmatprep.subr.mxu0 0.0
  %4502 = vmatpush1.msra.mxu0 0.0
  %4503 = vmatprep.subr.mxu0 0.0
  %4504 = vmatpush1.msra.mxu0 0.0
  %4505 = vmatprep.mubr.f32.mxu0 0.0
  %4506 = vmatmul.mubr.f32.gmra.mrb[0].mxu0 %v2423
  %v4507 = vpop.f32.mrb[0].mxu0
  %v4508 = vadd.f32 %v4083, %v4507
  %v4509 = vpop.f32.mrb[0].mxu0
  %4510 = vmatprep.mubr.f32.mxu0 0.0
  %4511 = vmatmul.mubr.f32.gmra.mrb[0].mxu0 %v2426
  %v4512 = vpop.f32.mrb[0].mxu0
  %v4513 = vadd.f32 %v4088, %v4512
  %v4514 = vpop.f32.mrb[0].mxu0
  %4515 = vmatprep.mubr.f32.mxu0 0.0
  %4516 = vmatmul.mubr.f32.gmra.mrb[0].mxu0 %v2429
  %v4517 = vpop.f32.mrb[0].mxu0
  %v4518 = vadd.f32 %v4093, %v4517
  %v4519 = vpop.f32.mrb[0].mxu0
  %4520 = vmatprep.mubr.f32.mxu0 0.0
  %4521 = vmatmul.mubr.f32.gmra.mrb[0].mxu0 %v2432
  %v4522 = vpop.f32.mrb[0].mxu0
  %v4523 = vadd.f32 %v4098, %v4522
  %v4524 = vpop.f32.mrb[0].mxu0
  %4525 = vmatprep.mubr.f32.mxu0 0.0
  %4526 = vmatmul.mubr.f32.gmra.mrb[0].mxu0 %v2435
  %v4527 = vpop.f32.mrb[0].mxu0
  %v4528 = vadd.f32 %v4103, %v4527
  %v4529 = vpop.f32.mrb[0].mxu0
  %4530 = vmatprep.mubr.f32.mxu0 0.0
  %4531 = vmatmul.mubr.f32.gmra.mrb[0].mxu0 %v2438
  %v4532 = vpop.f32.mrb[0].mxu0
  %v4533 = vadd.f32 %v4108, %v4532
  %v4534 = vpop.f32.mrb[0].mxu0
  %4535 = vmatprep.mubr.f32.mxu0 0.0
  %4536 = vmatmul.mubr.f32.gmra.mrb[0].mxu0 %v2441
  %v4537 = vpop.f32.mrb[0].mxu0
  %v4538 = vadd.f32 %v4113, %v4537
  %v4539 = vpop.f32.mrb[0].mxu0
  %4540 = vmatprep.mubr.f32.mxu0 0.0
  %4541 = vmatmul.mubr.f32.gmra.mrb[0].mxu0 %v2444
  %v4542 = vpop.f32.mrb[0].mxu0
  %v4543 = vadd.f32 %v4118, %v4542
  %v4544 = vpop.f32.mrb[0].mxu0
  %4545 = vmatprep.mubr.f32.mxu0 0.0
  %4546 = vmatmul.mubr.f32.gmra.mrb[0].mxu0 %v2447
  %v4547 = vpop.f32.mrb[0].mxu0
  %v4548 = vadd.f32 %v4123, %v4547
  %v4549 = vpop.f32.mrb[0].mxu0
  %4550 = vmatprep.mubr.f32.mxu0 0.0
  %4551 = vmatmul.mubr.f32.gmra.mrb[0].mxu0 %v2450
  %v4552 = vpop.f32.mrb[0].mxu0
  %v4553 = vadd.f32 %v4128, %v4552
  %v4554 = vpop.f32.mrb[0].mxu0
  %4555 = vmatprep.mubr.f32.mxu0 0.0
  %4556 = vmatmul.mubr.f32.gmra.mrb[0].mxu0 %v2453
  %v4557 = vpop.f32.mrb[0].mxu0
  %v4558 = vadd.f32 %v4133, %v4557
  %v4559 = vpop.f32.mrb[0].mxu0
  %4560 = vmatprep.mubr.f32.mxu0 0.0
  %4561 = vmatmul.mubr.f32.gmra.mrb[0].mxu0 %v2456
  %v4562 = vpop.f32.mrb[0].mxu0
  %v4563 = vadd.f32 %v4138, %v4562
  %v4564 = vpop.f32.mrb[0].mxu0
  %4565 = vmatprep.mubr.f32.mxu0 0.0
  %4566 = vmatmul.mubr.f32.gmra.mrb[0].mxu0 %v2459
  %v4567 = vpop.f32.mrb[0].mxu0
  %v4568 = vadd.f32 %v4143, %v4567
  %v4569 = vpop.f32.mrb[0].mxu0
  %4570 = vmatprep.mubr.f32.mxu0 0.0
  %4571 = vmatmul.mubr.f32.gmra.mrb[0].mxu0 %v2462
  %v4572 = vpop.f32.mrb[0].mxu0
  %v4573 = vadd.f32 %v4148, %v4572
  %v4574 = vpop.f32.mrb[0].mxu0
  %4575 = vmatprep.mubr.f32.mxu0 0.0
  %4576 = vmatmul.mubr.f32.gmra.mrb[0].mxu0 %v2465
  %v4577 = vpop.f32.mrb[0].mxu0
  %v4578 = vadd.f32 %v4153, %v4577
  %v4579 = vpop.f32.mrb[0].mxu0
  %4580 = vmatprep.mubr.f32.mxu0 0.0
  %4581 = vmatmul.mubr.f32.gmra.mrb[0].mxu0 %v2468
  %v4582 = vpop.f32.mrb[0].mxu0
  %v4583 = vadd.f32 %v4158, %v4582
  %v4584 = vpop.f32.mrb[0].mxu0
  %4585 = vmatprep.mubr.f32.mxu0 0.0
  %4586 = vmatmul.mubr.f32.gmra.mrb[0].mxu0 %v2471
  %v4587 = vpop.f32.mrb[0].mxu0
  %v4588 = vadd.f32 %v4163, %v4587
  %v4589 = vpop.f32.mrb[0].mxu0
  %4590 = vmatprep.mubr.f32.mxu0 0.0
  %4591 = vmatmul.mubr.f32.gmra.mrb[0].mxu0 %v2474
  %v4592 = vpop.f32.mrb[0].mxu0
  %v4593 = vadd.f32 %v4168, %v4592
  %v4594 = vpop.f32.mrb[0].mxu0
  %4595 = vmatprep.mubr.f32.mxu0 0.0
  %4596 = vmatmul.mubr.f32.gmra.mrb[0].mxu0 %v2477
  %v4597 = vpop.f32.mrb[0].mxu0
  %v4598 = vadd.f32 %v4173, %v4597
  %v4599 = vpop.f32.mrb[0].mxu0
  %4600 = vmatprep.mubr.f32.mxu0 0.0
  %4601 = vmatmul.mubr.f32.gmra.mrb[0].mxu0 %v2480
  %v4602 = vpop.f32.mrb[0].mxu0
  %v4603 = vadd.f32 %v4178, %v4602
  %v4604 = vpop.f32.mrb[0].mxu0
  %4605 = vmatprep.mubr.f32.mxu0 0.0
  %4606 = vmatmul.mubr.f32.gmra.mrb[0].mxu0 %v2483
  %v4607 = vpop.f32.mrb[0].mxu0
  %v4608 = vadd.f32 %v4183, %v4607
  %v4609 = vpop.f32.mrb[0].mxu0
  %4610 = vmatprep.mubr.f32.mxu0 0.0
  %4611 = vmatmul.mubr.f32.gmra.mrb[0].mxu0 %v2486
  %v4612 = vpop.f32.mrb[0].mxu0
  %v4613 = vadd.f32 %v4188, %v4612
  %v4614 = vpop.f32.mrb[0].mxu0
  %4615 = vmatprep.mubr.f32.mxu0 0.0
  %4616 = vmatmul.mubr.f32.gmra.mrb[0].mxu0 %v2489
  %v4617 = vpop.f32.mrb[0].mxu0
  %v4618 = vadd.f32 %v4193, %v4617
  %v4619 = vpop.f32.mrb[0].mxu0
  %4620 = vmatprep.mubr.f32.mxu0 0.0
  %4621 = vmatmul.mubr.f32.gmra.mrb[0].mxu0 %v2492
  %v4622 = vpop.f32.mrb[0].mxu0
  %v4623 = vadd.f32 %v4198, %v4622
  %v4624 = vpop.f32.mrb[0].mxu0
  %4625 = vmatprep.mubr.f32.mxu0 0.0
  %4626 = vmatmul.mubr.f32.gmra.mrb[0].mxu0 %v2495
  %v4627 = vpop.f32.mrb[0].mxu0
  %v4628 = vadd.f32 %v4203, %v4627
  %v4629 = vpop.f32.mrb[0].mxu0
  %4630 = vmatprep.mubr.f32.mxu0 0.0
  %4631 = vmatmul.mubr.f32.gmra.mrb[0].mxu0 %v2498
  %v4632 = vpop.f32.mrb[0].mxu0
  %v4633 = vadd.f32 %v4208, %v4632
  %v4634 = vpop.f32.mrb[0].mxu0
  %4635 = vmatprep.mubr.f32.mxu0 0.0
  %4636 = vmatmul.mubr.f32.gmra.mrb[0].mxu0 %v2501
  %v4637 = vpop.f32.mrb[0].mxu0
  %v4638 = vadd.f32 %v4213, %v4637
  %v4639 = vpop.f32.mrb[0].mxu0
  %4640 = vmatprep.mubr.f32.mxu0 0.0
  %4641 = vmatmul.mubr.f32.gmra.mrb[0].mxu0 %v2504
  %v4642 = vpop.f32.mrb[0].mxu0
  %v4643 = vadd.f32 %v4218, %v4642
  %v4644 = vpop.f32.mrb[0].mxu0
  %4645 = vmatprep.mubr.f32.mxu0 0.0
  %4646 = vmatmul.mubr.f32.gmra.mrb[0].mxu0 %v2507
  %v4647 = vpop.f32.mrb[0].mxu0
  %v4648 = vadd.f32 %v4223, %v4647
  %v4649 = vpop.f32.mrb[0].mxu0
  %4650 = vmatprep.mubr.f32.mxu0 0.0
  %4651 = vmatmul.mubr.f32.gmra.mrb[0].mxu0 %v2510
  %v4652 = vpop.f32.mrb[0].mxu0
  %v4653 = vadd.f32 %v4228, %v4652
  %v4654 = vpop.f32.mrb[0].mxu0
  %4655 = vmatprep.mubr.f32.mxu0 0.0
  %4656 = vmatmul.mubr.f32.gmra.mrb[0].mxu0 %v2513
  %v4657 = vpop.f32.mrb[0].mxu0
  %v4658 = vadd.f32 %v4233, %v4657
  %v4659 = vpop.f32.mrb[0].mxu0
  %4660 = vmatprep.mubr.f32.mxu0 0.0
  %4661 = vmatmul.mubr.f32.gmra.mrb[0].mxu0 %v2516
  %v4662 = vpop.f32.mrb[0].mxu0
  %v4663 = vadd.f32 %v4238, %v4662
  %v4664 = vpop.f32.mrb[0].mxu0
  %4665 = vmatprep.mubr.f32.mxu0 0.0
  %4666 = vmatmul.mubr.f32.gmra.mrb[0].mxu0 %v2519
  %v4667 = vpop.f32.mrb[0].mxu0
  %v4668 = vadd.f32 %v4243, %v4667
  %v4669 = vpop.f32.mrb[0].mxu0
  %4670 = vmatprep.mubr.f32.mxu0 0.0
  %4671 = vmatmul.mubr.f32.gmra.mrb[0].mxu0 %v2522
  %v4672 = vpop.f32.mrb[0].mxu0
  %v4673 = vadd.f32 %v4248, %v4672
  %v4674 = vpop.f32.mrb[0].mxu0
  %4675 = vmatprep.mubr.f32.mxu0 0.0
  %4676 = vmatmul.mubr.f32.gmra.mrb[0].mxu0 %v2525
  %v4677 = vpop.f32.mrb[0].mxu0
  %v4678 = vadd.f32 %v4253, %v4677
  %v4679 = vpop.f32.mrb[0].mxu0
  %4680 = vmatprep.mubr.f32.mxu0 0.0
  %4681 = vmatmul.mubr.f32.gmra.mrb[0].mxu0 %v2528
  %v4682 = vpop.f32.mrb[0].mxu0
  %v4683 = vadd.f32 %v4258, %v4682
  %v4684 = vpop.f32.mrb[0].mxu0
  %4685 = vmatprep.mubr.f32.mxu0 0.0
  %4686 = vmatmul.mubr.f32.gmra.mrb[0].mxu0 %v2531
  %v4687 = vpop.f32.mrb[0].mxu0
  %v4688 = vadd.f32 %v4263, %v4687
  %v4689 = vpop.f32.mrb[0].mxu0
  %4690 = vmatprep.mubr.f32.mxu0 0.0
  %4691 = vmatmul.mubr.f32.gmra.mrb[0].mxu0 %v2534
  %v4692 = vpop.f32.mrb[0].mxu0
  %v4693 = vadd.f32 %v4268, %v4692
  %v4694 = vpop.f32.mrb[0].mxu0
  %4695 = vmatprep.mubr.f32.mxu0 0.0
  %4696 = vmatmul.mubr.f32.gmra.mrb[0].mxu0 %v2537
  %v4697 = vpop.f32.mrb[0].mxu0
  %v4698 = vadd.f32 %v4273, %v4697
  %v4699 = vpop.f32.mrb[0].mxu0
  %4700 = vmatprep.mubr.f32.mxu0 0.0
  %4701 = vmatmul.mubr.f32.gmra.mrb[0].mxu0 %v2540
  %v4702 = vpop.f32.mrb[0].mxu0
  %v4703 = vadd.f32 %v4278, %v4702
  %v4704 = vpop.f32.mrb[0].mxu0
  %4705 = vmatprep.mubr.f32.mxu0 0.0
  %4706 = vmatmul.mubr.f32.gmra.mrb[0].mxu0 %v2543
  %v4707 = vpop.f32.mrb[0].mxu0
  %v4708 = vadd.f32 %v4283, %v4707
  %v4709 = vpop.f32.mrb[0].mxu0
  %4710 = vmatprep.mubr.f32.mxu0 0.0
  %4711 = vmatmul.mubr.f32.gmra.mrb[0].mxu0 %v2546
  %v4712 = vpop.f32.mrb[0].mxu0
  %v4713 = vadd.f32 %v4288, %v4712
  %v4714 = vpop.f32.mrb[0].mxu0
  %4715 = vmatprep.mubr.f32.mxu0 0.0
  %4716 = vmatmul.mubr.f32.gmra.mrb[0].mxu0 %v2549
  %v4717 = vpop.f32.mrb[0].mxu0
  %v4718 = vadd.f32 %v4293, %v4717
  %v4719 = vpop.f32.mrb[0].mxu0
  %4720 = vmatprep.mubr.f32.mxu0 0.0
  %4721 = vmatmul.mubr.f32.gmra.mrb[0].mxu0 %v2552
  %v4722 = vpop.f32.mrb[0].mxu0
  %v4723 = vadd.f32 %v4298, %v4722
  %v4724 = vpop.f32.mrb[0].mxu0
  %4725 = vmatprep.mubr.f32.mxu0 0.0
  %4726 = vmatmul.mubr.f32.gmra.mrb[0].mxu0 %v2555
  %v4727 = vpop.f32.mrb[0].mxu0
  %v4728 = vadd.f32 %v4303, %v4727
  %v4729 = vpop.f32.mrb[0].mxu0
  %4730 = vmatprep.mubr.f32.mxu0 0.0
  %4731 = vmatmul.mubr.f32.gmra.mrb[0].mxu0 %v2558
  %v4732 = vpop.f32.mrb[0].mxu0
  %v4733 = vadd.f32 %v4308, %v4732
  %v4734 = vpop.f32.mrb[0].mxu0
  %4735 = vmatprep.mubr.f32.mxu0 0.0
  %4736 = vmatmul.mubr.f32.gmra.mrb[0].mxu0 %v2561
  %v4737 = vpop.f32.mrb[0].mxu0
  %v4738 = vadd.f32 %v4313, %v4737
  %v4739 = vpop.f32.mrb[0].mxu0
  %4740 = vmatprep.mubr.f32.mxu0 0.0
  %4741 = vmatmul.mubr.f32.gmra.mrb[0].mxu0 %v2564
  %v4742 = vpop.f32.mrb[0].mxu0
  %v4743 = vadd.f32 %v4318, %v4742
  %v4744 = vpop.f32.mrb[0].mxu0
  %4745 = vmatprep.mubr.f32.mxu0 0.0
  %4746 = vmatmul.mubr.f32.gmra.mrb[0].mxu0 %v2567
  %v4747 = vpop.f32.mrb[0].mxu0
  %v4748 = vadd.f32 %v4323, %v4747
  %v4749 = vpop.f32.mrb[0].mxu0
  %4750 = vmatprep.mubr.f32.mxu0 0.0
  %4751 = vmatmul.mubr.f32.gmra.mrb[0].mxu0 %v2570
  %v4752 = vpop.f32.mrb[0].mxu0
  %v4753 = vadd.f32 %v4328, %v4752
  %v4754 = vpop.f32.mrb[0].mxu0
  %4755 = vmatprep.mubr.f32.mxu0 0.0
  %4756 = vmatmul.mubr.f32.gmra.mrb[0].mxu0 %v2573
  %v4757 = vpop.f32.mrb[0].mxu0
  %v4758 = vadd.f32 %v4333, %v4757
  %v4759 = vpop.f32.mrb[0].mxu0
  %4760 = vmatprep.mubr.f32.mxu0 0.0
  %4761 = vmatmul.mubr.f32.gmra.mrb[0].mxu0 %v2576
  %v4762 = vpop.f32.mrb[0].mxu0
  %v4763 = vadd.f32 %v4338, %v4762
  %v4764 = vpop.f32.mrb[0].mxu0
  %4765 = vmatprep.mubr.f32.mxu0 0.0
  %4766 = vmatmul.mubr.f32.gmra.mrb[0].mxu0 %v2579
  %v4767 = vpop.f32.mrb[0].mxu0
  %v4768 = vadd.f32 %v4343, %v4767
  %v4769 = vpop.f32.mrb[0].mxu0
  %4770 = vmatprep.mubr.f32.mxu0 0.0
  %4771 = vmatmul.mubr.f32.gmra.mrb[0].mxu0 %v2582
  %v4772 = vpop.f32.mrb[0].mxu0
  %v4773 = vadd.f32 %v4348, %v4772
  %v4774 = vpop.f32.mrb[0].mxu0
  %4775 = vmatprep.mubr.f32.mxu0 0.0
  %4776 = vmatmul.mubr.f32.gmra.mrb[0].mxu0 %v2585
  %v4777 = vpop.f32.mrb[0].mxu0
  %v4778 = vadd.f32 %v4353, %v4777
  %v4779 = vpop.f32.mrb[0].mxu0
  %4780 = vmatprep.mubr.f32.mxu0 0.0
  %4781 = vmatmul.mubr.f32.gmra.mrb[0].mxu0 %v2588
  %v4782 = vpop.f32.mrb[0].mxu0
  %v4783 = vadd.f32 %v4358, %v4782
  %v4784 = vpop.f32.mrb[0].mxu0
  %4785 = vmatprep.mubr.f32.mxu0 0.0
  %4786 = vmatmul.mubr.f32.gmra.mrb[0].mxu0 %v2591
  %v4787 = vpop.f32.mrb[0].mxu0
  %v4788 = vadd.f32 %v4363, %v4787
  %v4789 = vpop.f32.mrb[0].mxu0
  %4790 = vmatprep.mubr.f32.mxu0 0.0
  %4791 = vmatmul.mubr.f32.gmra.mrb[0].mxu0 %v2594
  %v4792 = vpop.f32.mrb[0].mxu0
  %v4793 = vadd.f32 %v4368, %v4792
  %v4794 = vpop.f32.mrb[0].mxu0
  %4795 = vmatprep.mubr.f32.mxu0 0.0
  %4796 = vmatmul.mubr.f32.gmra.mrb[0].mxu0 %v2597
  %v4797 = vpop.f32.mrb[0].mxu0
  %v4798 = vadd.f32 %v4373, %v4797
  %v4799 = vpop.f32.mrb[0].mxu0
  %4800 = vmatprep.mubr.f32.mxu0 0.0
  %4801 = vmatmul.mubr.f32.gmra.mrb[0].mxu0 %v2600
  %v4802 = vpop.f32.mrb[0].mxu0
  %v4803 = vadd.f32 %v4378, %v4802
  %v4804 = vpop.f32.mrb[0].mxu0
  %4805 = vmatprep.mubr.f32.mxu0 0.0
  %4806 = vmatmul.mubr.f32.gmra.mrb[0].mxu0 %v2603
  %v4807 = vpop.f32.mrb[0].mxu0
  %v4808 = vadd.f32 %v4383, %v4807
  %v4809 = vpop.f32.mrb[0].mxu0
  %4810 = vmatprep.mubr.f32.mxu0 0.0
  %4811 = vmatmul.mubr.f32.gmra.mrb[0].mxu0 %v2606
  %v4812 = vpop.f32.mrb[0].mxu0
  %v4813 = vadd.f32 %v4388, %v4812
  %v4814 = vpop.f32.mrb[0].mxu0
  %4815 = vmatprep.mubr.f32.mxu0 0.0
  %4816 = vmatmul.mubr.f32.gmra.mrb[0].mxu0 %v2609
  %v4817 = vpop.f32.mrb[0].mxu0
  %v4818 = vadd.f32 %v4393, %v4817
  %v4819 = vpop.f32.mrb[0].mxu0
  %4820 = vmatprep.mubr.f32.mxu0 0.0
  %4821 = vmatmul.mubr.f32.gmra.mrb[0].mxu0 %v2612
  %v4822 = vpop.f32.mrb[0].mxu0
  %v4823 = vadd.f32 %v4398, %v4822
  %v4824 = vpop.f32.mrb[0].mxu0
  %4825 = vmatprep.mubr.f32.mxu0 0.0
  %4826 = vmatmul.mubr.f32.gmra.mrb[0].mxu0 %v2615
  %v4827 = vpop.f32.mrb[0].mxu0
  %v4828 = vadd.f32 %v4403, %v4827
  %v4829 = vpop.f32.mrb[0].mxu0
  %4830 = vmatprep.mubr.f32.mxu0 0.0
  %4831 = vmatmul.mubr.f32.gmra.mrb[0].mxu0 %v2618
  %v4832 = vpop.f32.mrb[0].mxu0
  %v4833 = vadd.f32 %v4408, %v4832
  %v4834 = vpop.f32.mrb[0].mxu0
  %4835 = vmatprep.mubr.f32.mxu0 0.0
  %4836 = vmatmul.mubr.f32.gmra.mrb[0].mxu0 %v2621
  %v4837 = vpop.f32.mrb[0].mxu0
  %v4838 = vadd.f32 %v4413, %v4837
  %v4839 = vpop.f32.mrb[0].mxu0
  %4840 = vmatprep.mubr.f32.mxu0 0.0
  %4841 = vmatmul.mubr.f32.gmra.mrb[0].mxu0 %v2624
  %v4842 = vpop.f32.mrb[0].mxu0
  %v4843 = vadd.f32 %v4418, %v4842
  %v4844 = vpop.f32.mrb[0].mxu0
  %4845 = vmatprep.mubr.f32.mxu0 0.0
  %4846 = vmatmul.mubr.f32.gmra.mrb[0].mxu0 %v2627
  %v4847 = vpop.f32.mrb[0].mxu0
  %v4848 = vadd.f32 %v4423, %v4847
  %v4849 = vpop.f32.mrb[0].mxu0
  %4850 = vmatprep.mubr.f32.mxu0 0.0
  %4851 = vmatmul.mubr.f32.gmra.mrb[0].mxu0 %v2630
  %v4852 = vpop.f32.mrb[0].mxu0
  %v4853 = vadd.f32 %v4428, %v4852
  %v4854 = vpop.f32.mrb[0].mxu0
  %4855 = vmatprep.mubr.f32.mxu0 0.0
  %4856 = vmatmul.mubr.f32.gmra.mrb[0].mxu0 %v2633
  %v4857 = vpop.f32.mrb[0].mxu0
  %v4858 = vadd.f32 %v4433, %v4857
  %v4859 = vpop.f32.mrb[0].mxu0
  %4860 = vmatprep.mubr.f32.mxu0 0.0
  %4861 = vmatmul.mubr.f32.gmra.mrb[0].mxu0 %v2636
  %v4862 = vpop.f32.mrb[0].mxu0
  %v4863 = vadd.f32 %v4438, %v4862
  %v4864 = vpop.f32.mrb[0].mxu0
  %4865 = vdwg.mxu0
  %v4866 = vxor.u32 %v4508, 2147483648
  %v4867 = vxor.u32 %v4513, 2147483648
  %v4868 = vxor.u32 %v4518, 2147483648
  %v4869 = vxor.u32 %v4523, 2147483648
  %v4870 = vxor.u32 %v4528, 2147483648
  %v4871 = vxor.u32 %v4533, 2147483648
  %v4872 = vxor.u32 %v4538, 2147483648
  %v4873 = vxor.u32 %v4543, 2147483648
  %v4874 = vxor.u32 %v4548, 2147483648
  %v4875 = vxor.u32 %v4553, 2147483648
  %v4876 = vxor.u32 %v4558, 2147483648
  %v4877 = vxor.u32 %v4563, 2147483648
  %v4878 = vxor.u32 %v4568, 2147483648
  %v4879 = vxor.u32 %v4573, 2147483648
  %v4880 = vxor.u32 %v4578, 2147483648
  %v4881 = vxor.u32 %v4583, 2147483648
  %v4882 = vxor.u32 %v4588, 2147483648
  %v4883 = vxor.u32 %v4593, 2147483648
  %v4884 = vxor.u32 %v4598, 2147483648
  %v4885 = vxor.u32 %v4603, 2147483648
  %v4886 = vxor.u32 %v4608, 2147483648
  %v4887 = vxor.u32 %v4613, 2147483648
  %v4888 = vxor.u32 %v4618, 2147483648
  %v4889 = vxor.u32 %v4623, 2147483648
  %v4890 = vxor.u32 %v4628, 2147483648
  %v4891 = vxor.u32 %v4633, 2147483648
  %v4892 = vxor.u32 %v4638, 2147483648
  %v4893 = vxor.u32 %v4643, 2147483648
  %v4894 = vxor.u32 %v4648, 2147483648
  %v4895 = vxor.u32 %v4653, 2147483648
  %v4896 = vxor.u32 %v4658, 2147483648
  %v4897 = vxor.u32 %v4663, 2147483648
  %v4898 = vxor.u32 %v4668, 2147483648
  %v4899 = vxor.u32 %v4673, 2147483648
  %v4900 = vxor.u32 %v4678, 2147483648
  %v4901 = vxor.u32 %v4683, 2147483648
  %v4902 = vxor.u32 %v4688, 2147483648
  %v4903 = vxor.u32 %v4693, 2147483648
  %v4904 = vxor.u32 %v4698, 2147483648
  %v4905 = vxor.u32 %v4703, 2147483648
  %v4906 = vxor.u32 %v4708, 2147483648
  %v4907 = vxor.u32 %v4713, 2147483648
  %v4908 = vxor.u32 %v4718, 2147483648
  %v4909 = vxor.u32 %v4723, 2147483648
  %v4910 = vxor.u32 %v4728, 2147483648
  %v4911 = vxor.u32 %v4733, 2147483648
  %v4912 = vxor.u32 %v4738, 2147483648
  %v4913 = vxor.u32 %v4743, 2147483648
  %v4914 = vxor.u32 %v4748, 2147483648
  %v4915 = vxor.u32 %v4753, 2147483648
  %v4916 = vxor.u32 %v4758, 2147483648
  %v4917 = vxor.u32 %v4763, 2147483648
  %v4918 = vxor.u32 %v4768, 2147483648
  %v4919 = vxor.u32 %v4773, 2147483648
  %v4920 = vxor.u32 %v4778, 2147483648
  %v4921 = vxor.u32 %v4783, 2147483648
  %v4922 = vxor.u32 %v4788, 2147483648
  %v4923 = vxor.u32 %v4793, 2147483648
  %v4924 = vxor.u32 %v4798, 2147483648
  %v4925 = vxor.u32 %v4803, 2147483648
  %v4926 = vxor.u32 %v4808, 2147483648
  %v4927 = vxor.u32 %v4813, 2147483648
  %v4928 = vxor.u32 %v4818, 2147483648
  %v4929 = vxor.u32 %v4823, 2147483648
  %v4930 = vxor.u32 %v4828, 2147483648
  %v4931 = vxor.u32 %v4833, 2147483648
  %v4932 = vxor.u32 %v4838, 2147483648
  %v4933 = vxor.u32 %v4843, 2147483648
  %v4934 = vxor.u32 %v4848, 2147483648
  %v4935 = vxor.u32 %v4853, 2147483648
  %v4936 = vxor.u32 %v4858, 2147483648
  %v4937 = vxor.u32 %v4863, 2147483648
  %v4938 = vmul.f32 %v4866, 1.442695
  %v4939 = vpow.pop %v4938
  %v4940 = vmul.f32 %v4867, 1.442695
  %v4941 = vpow.pop %v4940
  %v4942 = vmul.f32 %v4868, 1.442695
  %v4943 = vpow.pop %v4942
  %v4944 = vmul.f32 %v4869, 1.442695
  %v4945 = vpow.pop %v4944
  %v4946 = vmul.f32 %v4870, 1.442695
  %v4947 = vpow.pop %v4946
  %v4948 = vmul.f32 %v4871, 1.442695
  %v4949 = vpow.pop %v4948
  %v4950 = vmul.f32 %v4872, 1.442695
  %v4951 = vpow.pop %v4950
  %v4952 = vmul.f32 %v4873, 1.442695
  %v4953 = vpow.pop %v4952
  %v4954 = vmul.f32 %v4874, 1.442695
  %v4955 = vpow.pop %v4954
  %v4956 = vmul.f32 %v4875, 1.442695
  %v4957 = vpow.pop %v4956
  %v4958 = vmul.f32 %v4876, 1.442695
  %v4959 = vpow.pop %v4958
  %v4960 = vmul.f32 %v4877, 1.442695
  %v4961 = vpow.pop %v4960
  %v4962 = vmul.f32 %v4878, 1.442695
  %v4963 = vpow.pop %v4962
  %v4964 = vmul.f32 %v4879, 1.442695
  %v4965 = vpow.pop %v4964
  %v4966 = vmul.f32 %v4880, 1.442695
  %v4967 = vpow.pop %v4966
  %v4968 = vmul.f32 %v4881, 1.442695
  %v4969 = vpow.pop %v4968
  %v4970 = vmul.f32 %v4882, 1.442695
  %v4971 = vpow.pop %v4970
  %v4972 = vmul.f32 %v4883, 1.442695
  %v4973 = vpow.pop %v4972
  %v4974 = vmul.f32 %v4884, 1.442695
  %v4975 = vpow.pop %v4974
  %v4976 = vmul.f32 %v4885, 1.442695
  %v4977 = vpow.pop %v4976
  %v4978 = vmul.f32 %v4886, 1.442695
  %v4979 = vpow.pop %v4978
  %v4980 = vmul.f32 %v4887, 1.442695
  %v4981 = vpow.pop %v4980
  %v4982 = vmul.f32 %v4888, 1.442695
  %v4983 = vpow.pop %v4982
  %v4984 = vmul.f32 %v4889, 1.442695
  %v4985 = vpow.pop %v4984
  %v4986 = vmul.f32 %v4890, 1.442695
  %v4987 = vpow.pop %v4986
  %v4988 = vmul.f32 %v4891, 1.442695
  %v4989 = vpow.pop %v4988
  %v4990 = vmul.f32 %v4892, 1.442695
  %v4991 = vpow.pop %v4990
  %v4992 = vmul.f32 %v4893, 1.442695
  %v4993 = vpow.pop %v4992
  %v4994 = vmul.f32 %v4894, 1.442695
  %v4995 = vpow.pop %v4994
  %v4996 = vmul.f32 %v4895, 1.442695
  %v4997 = vpow.pop %v4996
  %v4998 = vmul.f32 %v4896, 1.442695
  %v4999 = vpow.pop %v4998
  %v5000 = vmul.f32 %v4897, 1.442695
  %v5001 = vpow.pop %v5000
  %v5002 = vmul.f32 %v4898, 1.442695
  %v5003 = vpow.pop %v5002
  %v5004 = vmul.f32 %v4899, 1.442695
  %v5005 = vpow.pop %v5004
  %v5006 = vmul.f32 %v4900, 1.442695
  %v5007 = vpow.pop %v5006
  %v5008 = vmul.f32 %v4901, 1.442695
  %v5009 = vpow.pop %v5008
  %v5010 = vmul.f32 %v4902, 1.442695
  %v5011 = vpow.pop %v5010
  %v5012 = vmul.f32 %v4903, 1.442695
  %v5013 = vpow.pop %v5012
  %v5014 = vmul.f32 %v4904, 1.442695
  %v5015 = vpow.pop %v5014
  %v5016 = vmul.f32 %v4905, 1.442695
  %v5017 = vpow.pop %v5016
  %v5018 = vmul.f32 %v4906, 1.442695
  %v5019 = vpow.pop %v5018
  %v5020 = vmul.f32 %v4907, 1.442695
  %v5021 = vpow.pop %v5020
  %v5022 = vmul.f32 %v4908, 1.442695
  %v5023 = vpow.pop %v5022
  %v5024 = vmul.f32 %v4909, 1.442695
  %v5025 = vpow.pop %v5024
  %v5026 = vmul.f32 %v4910, 1.442695
  %v5027 = vpow.pop %v5026
  %v5028 = vmul.f32 %v4911, 1.442695
  %v5029 = vpow.pop %v5028
  %v5030 = vmul.f32 %v4912, 1.442695
  %v5031 = vpow.pop %v5030
  %v5032 = vmul.f32 %v4913, 1.442695
  %v5033 = vpow.pop %v5032
  %v5034 = vmul.f32 %v4914, 1.442695
  %v5035 = vpow.pop %v5034
  %v5036 = vmul.f32 %v4915, 1.442695
  %v5037 = vpow.pop %v5036
  %v5038 = vmul.f32 %v4916, 1.442695
  %v5039 = vpow.pop %v5038
  %v5040 = vmul.f32 %v4917, 1.442695
  %v5041 = vpow.pop %v5040
  %v5042 = vmul.f32 %v4918, 1.442695
  %v5043 = vpow.pop %v5042
  %v5044 = vmul.f32 %v4919, 1.442695
  %v5045 = vpow.pop %v5044
  %v5046 = vmul.f32 %v4920, 1.442695
  %v5047 = vpow.pop %v5046
  %v5048 = vmul.f32 %v4921, 1.442695
  %v5049 = vpow.pop %v5048
  %v5050 = vmul.f32 %v4922, 1.442695
  %v5051 = vpow.pop %v5050
  %v5052 = vmul.f32 %v4923, 1.442695
  %v5053 = vpow.pop %v5052
  %v5054 = vmul.f32 %v4924, 1.442695
  %v5055 = vpow.pop %v5054
  %v5056 = vmul.f32 %v4925, 1.442695
  %v5057 = vpow.pop %v5056
  %v5058 = vmul.f32 %v4926, 1.442695
  %v5059 = vpow.pop %v5058
  %v5060 = vmul.f32 %v4927, 1.442695
  %v5061 = vpow.pop %v5060
  %v5062 = vmul.f32 %v4928, 1.442695
  %v5063 = vpow.pop %v5062
  %v5064 = vmul.f32 %v4929, 1.442695
  %v5065 = vpow.pop %v5064
  %v5066 = vmul.f32 %v4930, 1.442695
  %v5067 = vpow.pop %v5066
  %v5068 = vmul.f32 %v4931, 1.442695
  %v5069 = vpow.pop %v5068
  %v5070 = vmul.f32 %v4932, 1.442695
  %v5071 = vpow.pop %v5070
  %v5072 = vmul.f32 %v4933, 1.442695
  %v5073 = vpow.pop %v5072
  %v5074 = vmul.f32 %v4934, 1.442695
  %v5075 = vpow.pop %v5074
  %v5076 = vmul.f32 %v4935, 1.442695
  %v5077 = vpow.pop %v5076
  %v5078 = vmul.f32 %v4936, 1.442695
  %v5079 = vpow.pop %v5078
  %v5080 = vmul.f32 %v4937, 1.442695
  %v5081 = vpow.pop %v5080
  %v5082 = vadd.f32 %v4939, 1.0
  %v5083 = vadd.f32 %v4941, 1.0
  %v5084 = vadd.f32 %v4943, 1.0
  %v5085 = vadd.f32 %v4945, 1.0
  %v5086 = vadd.f32 %v4947, 1.0
  %v5087 = vadd.f32 %v4949, 1.0
  %v5088 = vadd.f32 %v4951, 1.0
  %v5089 = vadd.f32 %v4953, 1.0
  %v5090 = vadd.f32 %v4955, 1.0
  %v5091 = vadd.f32 %v4957, 1.0
  %v5092 = vadd.f32 %v4959, 1.0
  %v5093 = vadd.f32 %v4961, 1.0
  %v5094 = vadd.f32 %v4963, 1.0
  %v5095 = vadd.f32 %v4965, 1.0
  %v5096 = vadd.f32 %v4967, 1.0
  %v5097 = vadd.f32 %v4969, 1.0
  %v5098 = vadd.f32 %v4971, 1.0
  %v5099 = vadd.f32 %v4973, 1.0
  %v5100 = vadd.f32 %v4975, 1.0
  %v5101 = vadd.f32 %v4977, 1.0
  %v5102 = vadd.f32 %v4979, 1.0
  %v5103 = vadd.f32 %v4981, 1.0
  %v5104 = vadd.f32 %v4983, 1.0
  %v5105 = vadd.f32 %v4985, 1.0
  %v5106 = vadd.f32 %v4987, 1.0
  %v5107 = vadd.f32 %v4989, 1.0
  %v5108 = vadd.f32 %v4991, 1.0
  %v5109 = vadd.f32 %v4993, 1.0
  %v5110 = vadd.f32 %v4995, 1.0
  %v5111 = vadd.f32 %v4997, 1.0
  %v5112 = vadd.f32 %v4999, 1.0
  %v5113 = vadd.f32 %v5001, 1.0
  %v5114 = vadd.f32 %v5003, 1.0
  %v5115 = vadd.f32 %v5005, 1.0
  %v5116 = vadd.f32 %v5007, 1.0
  %v5117 = vadd.f32 %v5009, 1.0
  %v5118 = vadd.f32 %v5011, 1.0
  %v5119 = vadd.f32 %v5013, 1.0
  %v5120 = vadd.f32 %v5015, 1.0
  %v5121 = vadd.f32 %v5017, 1.0
  %v5122 = vadd.f32 %v5019, 1.0
  %v5123 = vadd.f32 %v5021, 1.0
  %v5124 = vadd.f32 %v5023, 1.0
  %v5125 = vadd.f32 %v5025, 1.0
  %v5126 = vadd.f32 %v5027, 1.0
  %v5127 = vadd.f32 %v5029, 1.0
  %v5128 = vadd.f32 %v5031, 1.0
  %v5129 = vadd.f32 %v5033, 1.0
  %v5130 = vadd.f32 %v5035, 1.0
  %v5131 = vadd.f32 %v5037, 1.0
  %v5132 = vadd.f32 %v5039, 1.0
  %v5133 = vadd.f32 %v5041, 1.0
  %v5134 = vadd.f32 %v5043, 1.0
  %v5135 = vadd.f32 %v5045, 1.0
  %v5136 = vadd.f32 %v5047, 1.0
  %v5137 = vadd.f32 %v5049, 1.0
  %v5138 = vadd.f32 %v5051, 1.0
  %v5139 = vadd.f32 %v5053, 1.0
  %v5140 = vadd.f32 %v5055, 1.0
  %v5141 = vadd.f32 %v5057, 1.0
  %v5142 = vadd.f32 %v5059, 1.0
  %v5143 = vadd.f32 %v5061, 1.0
  %v5144 = vadd.f32 %v5063, 1.0
  %v5145 = vadd.f32 %v5065, 1.0
  %v5146 = vadd.f32 %v5067, 1.0
  %v5147 = vadd.f32 %v5069, 1.0
  %v5148 = vadd.f32 %v5071, 1.0
  %v5149 = vadd.f32 %v5073, 1.0
  %v5150 = vadd.f32 %v5075, 1.0
  %v5151 = vadd.f32 %v5077, 1.0
  %v5152 = vadd.f32 %v5079, 1.0
  %v5153 = vadd.f32 %v5081, 1.0
  %v5154 = vrcp.pop %v5082
  %v5155 = vmul.f32 1.0, %v5154
  %v5156 = vrcp.pop %v5083
  %v5157 = vmul.f32 1.0, %v5156
  %v5158 = vrcp.pop %v5084
  %v5159 = vmul.f32 1.0, %v5158
  %v5160 = vrcp.pop %v5085
  %v5161 = vmul.f32 1.0, %v5160
  %v5162 = vrcp.pop %v5086
  %v5163 = vmul.f32 1.0, %v5162
  %v5164 = vrcp.pop %v5087
  %v5165 = vmul.f32 1.0, %v5164
  %v5166 = vrcp.pop %v5088
  %v5167 = vmul.f32 1.0, %v5166
  %v5168 = vrcp.pop %v5089
  %v5169 = vmul.f32 1.0, %v5168
  %v5170 = vrcp.pop %v5090
  %v5171 = vmul.f32 1.0, %v5170
  %v5172 = vrcp.pop %v5091
  %v5173 = vmul.f32 1.0, %v5172
  %v5174 = vrcp.pop %v5092
  %v5175 = vmul.f32 1.0, %v5174
  %v5176 = vrcp.pop %v5093
  %v5177 = vmul.f32 1.0, %v5176
  %v5178 = vrcp.pop %v5094
  %v5179 = vmul.f32 1.0, %v5178
  %v5180 = vrcp.pop %v5095
  %v5181 = vmul.f32 1.0, %v5180
  %v5182 = vrcp.pop %v5096
  %v5183 = vmul.f32 1.0, %v5182
  %v5184 = vrcp.pop %v5097
  %v5185 = vmul.f32 1.0, %v5184
  %v5186 = vrcp.pop %v5098
  %v5187 = vmul.f32 1.0, %v5186
  %v5188 = vrcp.pop %v5099
  %v5189 = vmul.f32 1.0, %v5188
  %v5190 = vrcp.pop %v5100
  %v5191 = vmul.f32 1.0, %v5190
  %v5192 = vrcp.pop %v5101
  %v5193 = vmul.f32 1.0, %v5192
  %v5194 = vrcp.pop %v5102
  %v5195 = vmul.f32 1.0, %v5194
  %v5196 = vrcp.pop %v5103
  %v5197 = vmul.f32 1.0, %v5196
  %v5198 = vrcp.pop %v5104
  %v5199 = vmul.f32 1.0, %v5198
  %v5200 = vrcp.pop %v5105
  %v5201 = vmul.f32 1.0, %v5200
  %v5202 = vrcp.pop %v5106
  %v5203 = vmul.f32 1.0, %v5202
  %v5204 = vrcp.pop %v5107
  %v5205 = vmul.f32 1.0, %v5204
  %v5206 = vrcp.pop %v5108
  %v5207 = vmul.f32 1.0, %v5206
  %v5208 = vrcp.pop %v5109
  %v5209 = vmul.f32 1.0, %v5208
  %v5210 = vrcp.pop %v5110
  %v5211 = vmul.f32 1.0, %v5210
  %v5212 = vrcp.pop %v5111
  %v5213 = vmul.f32 1.0, %v5212
  %v5214 = vrcp.pop %v5112
  %v5215 = vmul.f32 1.0, %v5214
  %v5216 = vrcp.pop %v5113
  %v5217 = vmul.f32 1.0, %v5216
  %v5218 = vrcp.pop %v5114
  %v5219 = vmul.f32 1.0, %v5218
  %v5220 = vrcp.pop %v5115
  %v5221 = vmul.f32 1.0, %v5220
  %v5222 = vrcp.pop %v5116
  %v5223 = vmul.f32 1.0, %v5222
  %v5224 = vrcp.pop %v5117
  %v5225 = vmul.f32 1.0, %v5224
  %v5226 = vrcp.pop %v5118
  %v5227 = vmul.f32 1.0, %v5226
  %v5228 = vrcp.pop %v5119
  %v5229 = vmul.f32 1.0, %v5228
  %v5230 = vrcp.pop %v5120
  %v5231 = vmul.f32 1.0, %v5230
  %v5232 = vrcp.pop %v5121
  %v5233 = vmul.f32 1.0, %v5232
  %v5234 = vrcp.pop %v5122
  %v5235 = vmul.f32 1.0, %v5234
  %v5236 = vrcp.pop %v5123
  %v5237 = vmul.f32 1.0, %v5236
  %v5238 = vrcp.pop %v5124
  %v5239 = vmul.f32 1.0, %v5238
  %v5240 = vrcp.pop %v5125
  %v5241 = vmul.f32 1.0, %v5240
  %v5242 = vrcp.pop %v5126
  %v5243 = vmul.f32 1.0, %v5242
  %v5244 = vrcp.pop %v5127
  %v5245 = vmul.f32 1.0, %v5244
  %v5246 = vrcp.pop %v5128
  %v5247 = vmul.f32 1.0, %v5246
  %v5248 = vrcp.pop %v5129
  %v5249 = vmul.f32 1.0, %v5248
  %v5250 = vrcp.pop %v5130
  %v5251 = vmul.f32 1.0, %v5250
  %v5252 = vrcp.pop %v5131
  %v5253 = vmul.f32 1.0, %v5252
  %v5254 = vrcp.pop %v5132
  %v5255 = vmul.f32 1.0, %v5254
  %v5256 = vrcp.pop %v5133
  %v5257 = vmul.f32 1.0, %v5256
  %v5258 = vrcp.pop %v5134
  %v5259 = vmul.f32 1.0, %v5258
  %v5260 = vrcp.pop %v5135
  %v5261 = vmul.f32 1.0, %v5260
  %v5262 = vrcp.pop %v5136
  %v5263 = vmul.f32 1.0, %v5262
  %v5264 = vrcp.pop %v5137
  %v5265 = vmul.f32 1.0, %v5264
  %v5266 = vrcp.pop %v5138
  %v5267 = vmul.f32 1.0, %v5266
  %v5268 = vrcp.pop %v5139
  %v5269 = vmul.f32 1.0, %v5268
  %v5270 = vrcp.pop %v5140
  %v5271 = vmul.f32 1.0, %v5270
  %v5272 = vrcp.pop %v5141
  %v5273 = vmul.f32 1.0, %v5272
  %v5274 = vrcp.pop %v5142
  %v5275 = vmul.f32 1.0, %v5274
  %v5276 = vrcp.pop %v5143
  %v5277 = vmul.f32 1.0, %v5276
  %v5278 = vrcp.pop %v5144
  %v5279 = vmul.f32 1.0, %v5278
  %v5280 = vrcp.pop %v5145
  %v5281 = vmul.f32 1.0, %v5280
  %v5282 = vrcp.pop %v5146
  %v5283 = vmul.f32 1.0, %v5282
  %v5284 = vrcp.pop %v5147
  %v5285 = vmul.f32 1.0, %v5284
  %v5286 = vrcp.pop %v5148
  %v5287 = vmul.f32 1.0, %v5286
  %v5288 = vrcp.pop %v5149
  %v5289 = vmul.f32 1.0, %v5288
  %v5290 = vrcp.pop %v5150
  %v5291 = vmul.f32 1.0, %v5290
  %v5292 = vrcp.pop %v5151
  %v5293 = vmul.f32 1.0, %v5292
  %v5294 = vrcp.pop %v5152
  %v5295 = vmul.f32 1.0, %v5294
  %v5296 = vrcp.pop %v5153
  %v5297 = vmul.f32 1.0, %v5296
  %v5298 = vmul.f32 %v4508, %v5155
  %v5299 = vmul.f32 %v4513, %v5157
  %v5300 = vmul.f32 %v4518, %v5159
  %v5301 = vmul.f32 %v4523, %v5161
  %v5302 = vmul.f32 %v4528, %v5163
  %v5303 = vmul.f32 %v4533, %v5165
  %v5304 = vmul.f32 %v4538, %v5167
  %v5305 = vmul.f32 %v4543, %v5169
  %v5306 = vmul.f32 %v4548, %v5171
  %v5307 = vmul.f32 %v4553, %v5173
  %v5308 = vmul.f32 %v4558, %v5175
  %v5309 = vmul.f32 %v4563, %v5177
  %v5310 = vmul.f32 %v4568, %v5179
  %v5311 = vmul.f32 %v4573, %v5181
  %v5312 = vmul.f32 %v4578, %v5183
  %v5313 = vmul.f32 %v4583, %v5185
  %v5314 = vmul.f32 %v4588, %v5187
  %v5315 = vmul.f32 %v4593, %v5189
  %v5316 = vmul.f32 %v4598, %v5191
  %v5317 = vmul.f32 %v4603, %v5193
  %v5318 = vmul.f32 %v4608, %v5195
  %v5319 = vmul.f32 %v4613, %v5197
  %v5320 = vmul.f32 %v4618, %v5199
  %v5321 = vmul.f32 %v4623, %v5201
  %v5322 = vmul.f32 %v4628, %v5203
  %v5323 = vmul.f32 %v4633, %v5205
  %v5324 = vmul.f32 %v4638, %v5207
  %v5325 = vmul.f32 %v4643, %v5209
  %v5326 = vmul.f32 %v4648, %v5211
  %v5327 = vmul.f32 %v4653, %v5213
  %v5328 = vmul.f32 %v4658, %v5215
  %v5329 = vmul.f32 %v4663, %v5217
  %v5330 = vmul.f32 %v4668, %v5219
  %v5331 = vmul.f32 %v4673, %v5221
  %v5332 = vmul.f32 %v4678, %v5223
  %v5333 = vmul.f32 %v4683, %v5225
  %v5334 = vmul.f32 %v4688, %v5227
  %v5335 = vmul.f32 %v4693, %v5229
  %v5336 = vmul.f32 %v4698, %v5231
  %v5337 = vmul.f32 %v4703, %v5233
  %v5338 = vmul.f32 %v4708, %v5235
  %v5339 = vmul.f32 %v4713, %v5237
  %v5340 = vmul.f32 %v4718, %v5239
  %v5341 = vmul.f32 %v4723, %v5241
  %v5342 = vmul.f32 %v4728, %v5243
  %v5343 = vmul.f32 %v4733, %v5245
  %v5344 = vmul.f32 %v4738, %v5247
  %v5345 = vmul.f32 %v4743, %v5249
  %v5346 = vmul.f32 %v4748, %v5251
  %v5347 = vmul.f32 %v4753, %v5253
  %v5348 = vmul.f32 %v4758, %v5255
  %v5349 = vmul.f32 %v4763, %v5257
  %v5350 = vmul.f32 %v4768, %v5259
  %v5351 = vmul.f32 %v4773, %v5261
  %v5352 = vmul.f32 %v4778, %v5263
  %v5353 = vmul.f32 %v4783, %v5265
  %v5354 = vmul.f32 %v4788, %v5267
  %v5355 = vmul.f32 %v4793, %v5269
  %v5356 = vmul.f32 %v4798, %v5271
  %v5357 = vmul.f32 %v4803, %v5273
  %v5358 = vmul.f32 %v4808, %v5275
  %v5359 = vmul.f32 %v4813, %v5277
  %v5360 = vmul.f32 %v4818, %v5279
  %v5361 = vmul.f32 %v4823, %v5281
  %v5362 = vmul.f32 %v4828, %v5283
  %v5363 = vmul.f32 %v4833, %v5285
  %v5364 = vmul.f32 %v4838, %v5287
  %v5365 = vmul.f32 %v4843, %v5289
  %v5366 = vmul.f32 %v4848, %v5291
  %v5367 = vmul.f32 %v4853, %v5293
  %v5368 = vmul.f32 %v4858, %v5295
  %v5369 = vmul.f32 %v4863, %v5297
  %5370 = vmatprep.subr.mxu0 0.0
  %5371 = vmatpush1.msra.mxu0 %v5298
  %5372 = vmatprep.subr.mxu0 0.0
  %5373 = vmatpush1.msra.mxu0 %v5299
  %5374 = vmatprep.subr.mxu0 0.0
  %5375 = vmatpush1.msra.mxu0 %v5300
  %5376 = vmatprep.subr.mxu0 0.0
  %5377 = vmatpush1.msra.mxu0 %v5301
  %5378 = vmatprep.subr.mxu0 0.0
  %5379 = vmatpush1.msra.mxu0 %v5302
  %5380 = vmatprep.subr.mxu0 0.0
  %5381 = vmatpush1.msra.mxu0 %v5303
  %5382 = vmatprep.subr.mxu0 0.0
  %5383 = vmatpush1.msra.mxu0 %v5304
  %5384 = vmatprep.subr.mxu0 0.0
  %5385 = vmatpush1.msra.mxu0 %v5305
  %5386 = vmatprep.subr.mxu0 0.0
  %5387 = vmatpush1.msra.mxu0 %v5306
  %5388 = vmatprep.subr.mxu0 0.0
  %5389 = vmatpush1.msra.mxu0 %v5307
  %5390 = vmatprep.subr.mxu0 0.0
  %5391 = vmatpush1.msra.mxu0 %v5308
  %5392 = vmatprep.subr.mxu0 0.0
  %5393 = vmatpush1.msra.mxu0 %v5309
  %5394 = vmatprep.subr.mxu0 0.0
  %5395 = vmatpush1.msra.mxu0 %v5310
  %5396 = vmatprep.subr.mxu0 0.0
  %5397 = vmatpush1.msra.mxu0 %v5311
  %5398 = vmatprep.subr.mxu0 0.0
  %5399 = vmatpush1.msra.mxu0 %v5312
  %5400 = vmatprep.subr.mxu0 0.0
  %5401 = vmatpush1.msra.mxu0 %v5313
  %5402 = vmatprep.subr.mxu0 0.0
  %5403 = vmatpush1.msra.mxu0 %v5314
  %5404 = vmatprep.subr.mxu0 0.0
  %5405 = vmatpush1.msra.mxu0 %v5315
  %5406 = vmatprep.subr.mxu0 0.0
  %5407 = vmatpush1.msra.mxu0 %v5316
  %5408 = vmatprep.subr.mxu0 0.0
  %5409 = vmatpush1.msra.mxu0 %v5317
  %5410 = vmatprep.subr.mxu0 0.0
  %5411 = vmatpush1.msra.mxu0 %v5318
  %5412 = vmatprep.subr.mxu0 0.0
  %5413 = vmatpush1.msra.mxu0 %v5319
  %5414 = vmatprep.subr.mxu0 0.0
  %5415 = vmatpush1.msra.mxu0 %v5320
  %5416 = vmatprep.subr.mxu0 0.0
  %5417 = vmatpush1.msra.mxu0 %v5321
  %5418 = vmatprep.subr.mxu0 0.0
  %5419 = vmatpush1.msra.mxu0 %v5322
  %5420 = vmatprep.subr.mxu0 0.0
  %5421 = vmatpush1.msra.mxu0 %v5323
  %5422 = vmatprep.subr.mxu0 0.0
  %5423 = vmatpush1.msra.mxu0 %v5324
  %5424 = vmatprep.subr.mxu0 0.0
  %5425 = vmatpush1.msra.mxu0 %v5325
  %5426 = vmatprep.subr.mxu0 0.0
  %5427 = vmatpush1.msra.mxu0 %v5326
  %5428 = vmatprep.subr.mxu0 0.0
  %5429 = vmatpush1.msra.mxu0 %v5327
  %5430 = vmatprep.subr.mxu0 0.0
  %5431 = vmatpush1.msra.mxu0 %v5328
  %5432 = vmatprep.subr.mxu0 0.0
  %5433 = vmatpush1.msra.mxu0 %v5329
  %5434 = vmatprep.mubr.f32.mxu0 %v1634
  %5435 = vmatmul.mubr.f32.gmra.mrb[0].mxu0 %v1633
  %v5436 = vpop.f32.mrb[0].mxu0
  %v5437 = vadd.f32 0.0, %v5436
  %v5438 = vpop.f32.mrb[0].mxu0
  %5439 = vmatprep.mubr.f32.mxu0 %v1639
  %5440 = vmatmul.mubr.f32.gmra.mrb[0].mxu0 %v1638
  %v5441 = vpop.f32.mrb[0].mxu0
  %v5442 = vadd.f32 0.0, %v5441
  %v5443 = vpop.f32.mrb[0].mxu0
  %5444 = vmatprep.mubr.f32.mxu0 %v1644
  %5445 = vmatmul.mubr.f32.gmra.mrb[0].mxu0 %v1643
  %v5446 = vpop.f32.mrb[0].mxu0
  %v5447 = vadd.f32 0.0, %v5446
  %v5448 = vpop.f32.mrb[0].mxu0
  %5449 = vdwg.mxu0
  %5450 = vmatprep.subr.mxu0 0.0
  %5451 = vmatpush1.msra.mxu0 %v5330
  %5452 = vmatprep.subr.mxu0 0.0
  %5453 = vmatpush1.msra.mxu0 %v5331
  %5454 = vmatprep.subr.mxu0 0.0
  %5455 = vmatpush1.msra.mxu0 %v5332
  %5456 = vmatprep.subr.mxu0 0.0
  %5457 = vmatpush1.msra.mxu0 %v5333
  %5458 = vmatprep.subr.mxu0 0.0
  %5459 = vmatpush1.msra.mxu0 %v5334
  %5460 = vmatprep.subr.mxu0 0.0
  %5461 = vmatpush1.msra.mxu0 %v5335
  %5462 = vmatprep.subr.mxu0 0.0
  %5463 = vmatpush1.msra.mxu0 %v5336
  %5464 = vmatprep.subr.mxu0 0.0
  %5465 = vmatpush1.msra.mxu0 %v5337
  %5466 = vmatprep.subr.mxu0 0.0
  %5467 = vmatpush1.msra.mxu0 %v5338
  %5468 = vmatprep.subr.mxu0 0.0
  %5469 = vmatpush1.msra.mxu0 %v5339
  %5470 = vmatprep.subr.mxu0 0.0
  %5471 = vmatpush1.msra.mxu0 %v5340
  %5472 = vmatprep.subr.mxu0 0.0
  %5473 = vmatpush1.msra.mxu0 %v5341
  %5474 = vmatprep.subr.mxu0 0.0
  %5475 = vmatpush1.msra.mxu0 %v5342
  %5476 = vmatprep.subr.mxu0 0.0
  %5477 = vmatpush1.msra.mxu0 %v5343
  %5478 = vmatprep.subr.mxu0 0.0
  %5479 = vmatpush1.msra.mxu0 %v5344
  %5480 = vmatprep.subr.mxu0 0.0
  %5481 = vmatpush1.msra.mxu0 %v5345
  %5482 = vmatprep.subr.mxu0 0.0
  %5483 = vmatpush1.msra.mxu0 %v5346
  %5484 = vmatprep.subr.mxu0 0.0
  %5485 = vmatpush1.msra.mxu0 %v5347
  %5486 = vmatprep.subr.mxu0 0.0
  %5487 = vmatpush1.msra.mxu0 %v5348
  %5488 = vmatprep.subr.mxu0 0.0
  %5489 = vmatpush1.msra.mxu0 %v5349
  %5490 = vmatprep.subr.mxu0 0.0
  %5491 = vmatpush1.msra.mxu0 %v5350
  %5492 = vmatprep.subr.mxu0 0.0
  %5493 = vmatpush1.msra.mxu0 %v5351
  %5494 = vmatprep.subr.mxu0 0.0
  %5495 = vmatpush1.msra.mxu0 %v5352
  %5496 = vmatprep.subr.mxu0 0.0
  %5497 = vmatpush1.msra.mxu0 %v5353
  %5498 = vmatprep.subr.mxu0 0.0
  %5499 = vmatpush1.msra.mxu0 %v5354
  %5500 = vmatprep.subr.mxu0 0.0
  %5501 = vmatpush1.msra.mxu0 %v5355
  %5502 = vmatprep.subr.mxu0 0.0
  %5503 = vmatpush1.msra.mxu0 %v5356
  %5504 = vmatprep.subr.mxu0 0.0
  %5505 = vmatpush1.msra.mxu0 %v5357
  %5506 = vmatprep.subr.mxu0 0.0
  %5507 = vmatpush1.msra.mxu0 %v5358
  %5508 = vmatprep.subr.mxu0 0.0
  %5509 = vmatpush1.msra.mxu0 %v5359
  %5510 = vmatprep.subr.mxu0 0.0
  %5511 = vmatpush1.msra.mxu0 %v5360
  %5512 = vmatprep.subr.mxu0 0.0
  %5513 = vmatpush1.msra.mxu0 %v5361
  %5514 = vmatprep.mubr.f32.mxu0 %v1636
  %5515 = vmatmul.mubr.f32.gmra.mrb[0].mxu0 %v1635
  %v5516 = vpop.f32.mrb[0].mxu0
  %v5517 = vadd.f32 %v5437, %v5516
  %v5518 = vpop.f32.mrb[0].mxu0
  %5519 = vmatprep.mubr.f32.mxu0 %v1641
  %5520 = vmatmul.mubr.f32.gmra.mrb[0].mxu0 %v1640
  %v5521 = vpop.f32.mrb[0].mxu0
  %v5522 = vadd.f32 %v5442, %v5521
  %v5523 = vpop.f32.mrb[0].mxu0
  %5524 = vmatprep.mubr.f32.mxu0 %v1646
  %5525 = vmatmul.mubr.f32.gmra.mrb[0].mxu0 %v1645
  %v5526 = vpop.f32.mrb[0].mxu0
  %v5527 = vadd.f32 %v5447, %v5526
  %v5528 = vpop.f32.mrb[0].mxu0
  %5529 = vdwg.mxu0
  %5530 = vmatprep.subr.mxu0 0.0
  %5531 = vmatpush1.msra.mxu0 %v5362
  %5532 = vmatprep.subr.mxu0 0.0
  %5533 = vmatpush1.msra.mxu0 %v5363
  %5534 = vmatprep.subr.mxu0 0.0
  %5535 = vmatpush1.msra.mxu0 %v5364
  %5536 = vmatprep.subr.mxu0 0.0
  %5537 = vmatpush1.msra.mxu0 %v5365
  %5538 = vmatprep.subr.mxu0 0.0
  %5539 = vmatpush1.msra.mxu0 %v5366
  %5540 = vmatprep.subr.mxu0 0.0
  %5541 = vmatpush1.msra.mxu0 %v5367
  %5542 = vmatprep.subr.mxu0 0.0
  %5543 = vmatpush1.msra.mxu0 %v5368
  %5544 = vmatprep.subr.mxu0 0.0
  %5545 = vmatpush1.msra.mxu0 %v5369
  %5546 = vmatprep.subr.mxu0 0.0
  %5547 = vmatpush1.msra.mxu0 0.0
  %5548 = vmatprep.subr.mxu0 0.0
  %5549 = vmatpush1.msra.mxu0 0.0
  %5550 = vmatprep.subr.mxu0 0.0
  %5551 = vmatpush1.msra.mxu0 0.0
  %5552 = vmatprep.subr.mxu0 0.0
  %5553 = vmatpush1.msra.mxu0 0.0
  %5554 = vmatprep.subr.mxu0 0.0
  %5555 = vmatpush1.msra.mxu0 0.0
  %5556 = vmatprep.subr.mxu0 0.0
  %5557 = vmatpush1.msra.mxu0 0.0
  %5558 = vmatprep.subr.mxu0 0.0
  %5559 = vmatpush1.msra.mxu0 0.0
  %5560 = vmatprep.subr.mxu0 0.0
  %5561 = vmatpush1.msra.mxu0 0.0
  %5562 = vmatprep.subr.mxu0 0.0
  %5563 = vmatpush1.msra.mxu0 0.0
  %5564 = vmatprep.subr.mxu0 0.0
  %5565 = vmatpush1.msra.mxu0 0.0
  %5566 = vmatprep.subr.mxu0 0.0
  %5567 = vmatpush1.msra.mxu0 0.0
  %5568 = vmatprep.subr.mxu0 0.0
  %5569 = vmatpush1.msra.mxu0 0.0
  %5570 = vmatprep.subr.mxu0 0.0
  %5571 = vmatpush1.msra.mxu0 0.0
  %5572 = vmatprep.subr.mxu0 0.0
  %5573 = vmatpush1.msra.mxu0 0.0
  %5574 = vmatprep.subr.mxu0 0.0
  %5575 = vmatpush1.msra.mxu0 0.0
  %5576 = vmatprep.subr.mxu0 0.0
  %5577 = vmatpush1.msra.mxu0 0.0
  %5578 = vmatprep.subr.mxu0 0.0
  %5579 = vmatpush1.msra.mxu0 0.0
  %5580 = vmatprep.subr.mxu0 0.0
  %5581 = vmatpush1.msra.mxu0 0.0
  %5582 = vmatprep.subr.mxu0 0.0
  %5583 = vmatpush1.msra.mxu0 0.0
  %5584 = vmatprep.subr.mxu0 0.0
  %5585 = vmatpush1.msra.mxu0 0.0
  %5586 = vmatprep.subr.mxu0 0.0
  %5587 = vmatpush1.msra.mxu0 0.0
  %5588 = vmatprep.subr.mxu0 0.0
  %5589 = vmatpush1.msra.mxu0 0.0
  %5590 = vmatprep.subr.mxu0 0.0
  %5591 = vmatpush1.msra.mxu0 0.0
  %5592 = vmatprep.subr.mxu0 0.0
  %5593 = vmatpush1.msra.mxu0 0.0
  %5594 = vmatprep.mubr.f32.mxu0 0.0
  %5595 = vmatmul.mubr.f32.gmra.mrb[0].mxu0 %v3569
  %v5596 = vpop.f32.mrb[0].mxu0
  %v5597 = vadd.f32 %v5517, %v5596
  %v5598 = vpop.f32.mrb[0].mxu0
  %5599 = vmatprep.mubr.f32.mxu0 0.0
  %5600 = vmatmul.mubr.f32.gmra.mrb[0].mxu0 %v3572
  %v5601 = vpop.f32.mrb[0].mxu0
  %v5602 = vadd.f32 %v5522, %v5601
  %v5603 = vpop.f32.mrb[0].mxu0
  %5604 = vmatprep.mubr.f32.mxu0 0.0
  %5605 = vmatmul.mubr.f32.gmra.mrb[0].mxu0 %v3575
  %v5606 = vpop.f32.mrb[0].mxu0
  %v5607 = vadd.f32 %v5527, %v5606
  %v5608 = vpop.f32.mrb[0].mxu0
  %5609 = vdwg.mxu0
  %v5611 = vlaneseq
  %v5612 = vshrl.u32 %v5611, 7
  %v5613 = vsub.s32 0, %v5612
  %v5614 = vrot.slane %v117, %v5613
  %5616 = vmatprep.subr.mxu0 0.0
  %5617 = vmatpush1.msra.mxu0 %v101
  %5618 = vmatprep.subr.mxu0 0.0
  %5619 = vmatpush1.msra.mxu0 %v102
  %5620 = vmatprep.subr.mxu0 0.0
  %5621 = vmatpush1.msra.mxu0 %v103
  %5622 = vmatprep.subr.mxu0 0.0
  %5623 = vmatpush1.msra.mxu0 %v104
  %5624 = vmatprep.subr.mxu0 0.0
  %5625 = vmatpush1.msra.mxu0 %v105
  %5626 = vmatprep.subr.mxu0 0.0
  %5627 = vmatpush1.msra.mxu0 %v106
  %5628 = vmatprep.subr.mxu0 0.0
  %5629 = vmatpush1.msra.mxu0 %v107
  %5630 = vmatprep.subr.mxu0 0.0
  %5631 = vmatpush1.msra.mxu0 %v108
  %5632 = vmatprep.subr.mxu0 0.0
  %5633 = vmatpush1.msra.mxu0 %v109
  %5634 = vmatprep.subr.mxu0 0.0
  %5635 = vmatpush1.msra.mxu0 %v110
  %5636 = vmatprep.subr.mxu0 0.0
  %5637 = vmatpush1.msra.mxu0 %v111
  %5638 = vmatprep.subr.mxu0 0.0
  %5639 = vmatpush1.msra.mxu0 %v112
  %5640 = vmatprep.subr.mxu0 0.0
  %5641 = vmatpush1.msra.mxu0 %v113
  %5642 = vmatprep.subr.mxu0 0.0
  %5643 = vmatpush1.msra.mxu0 %v114
  %5644 = vmatprep.subr.mxu0 0.0
  %5645 = vmatpush1.msra.mxu0 %v115
  %5646 = vmatprep.subr.mxu0 0.0
  %5647 = vmatpush1.msra.mxu0 %v116
  %5648 = vmatprep.subr.mxu0 0.0
  %5649 = vmatpush1.msra.mxu0 0.0
  %5650 = vmatprep.subr.mxu0 0.0
  %5651 = vmatpush1.msra.mxu0 0.0
  %5652 = vmatprep.subr.mxu0 0.0
  %5653 = vmatpush1.msra.mxu0 0.0
  %5654 = vmatprep.subr.mxu0 0.0
  %5655 = vmatpush1.msra.mxu0 0.0
  %5656 = vmatprep.subr.mxu0 0.0
  %5657 = vmatpush1.msra.mxu0 0.0
  %5658 = vmatprep.subr.mxu0 0.0
  %5659 = vmatpush1.msra.mxu0 0.0
  %5660 = vmatprep.subr.mxu0 0.0
  %5661 = vmatpush1.msra.mxu0 0.0
  %5662 = vmatprep.subr.mxu0 0.0
  %5663 = vmatpush1.msra.mxu0 0.0
  %5664 = vmatprep.subr.mxu0 0.0
  %5665 = vmatpush1.msra.mxu0 0.0
  %5666 = vmatprep.subr.mxu0 0.0
  %5667 = vmatpush1.msra.mxu0 0.0
  %5668 = vmatprep.subr.mxu0 0.0
  %5669 = vmatpush1.msra.mxu0 0.0
  %5670 = vmatprep.subr.mxu0 0.0
  %5671 = vmatpush1.msra.mxu0 0.0
  %5672 = vmatprep.subr.mxu0 0.0
  %5673 = vmatpush1.msra.mxu0 0.0
  %5674 = vmatprep.subr.mxu0 0.0
  %5675 = vmatpush1.msra.mxu0 0.0
  %5676 = vmatprep.subr.mxu0 0.0
  %5677 = vmatpush1.msra.mxu0 0.0
  %5678 = vmatprep.subr.mxu0 0.0
  %5679 = vmatpush1.msra.mxu0 0.0
  %5680 = vmatprep.mubr.f32.mxu0 0.0
  %5681 = vmatmul.mubr.f32.gmra.mrb[0].mxu0 %v5597
  %v5682 = vpop.f32.mrb[0].mxu0
  %v5683 = vadd.f32 %v5614, %v5682
  %v5684 = vpop.f32.mrb[0].mxu0
  %5685 = vmatprep.mubr.f32.mxu0 0.0
  %5686 = vmatmul.mubr.f32.gmra.mrb[0].mxu0 %v5602
  %v5687 = vpop.f32.mrb[0].mxu0
  %v5688 = vadd.f32 %v5614, %v5687
  %v5689 = vpop.f32.mrb[0].mxu0
  %5690 = vmatprep.mubr.f32.mxu0 0.0
  %5691 = vmatmul.mubr.f32.gmra.mrb[0].mxu0 %v5607
  %v5692 = vpop.f32.mrb[0].mxu0
  %v5693 = vadd.f32 %v5614, %v5692
  %v5694 = vpop.f32.mrb[0].mxu0
  %5695 = vdwg.mxu0
  %v5696 = vxor.u32 %v5683, 2147483648
  %v5697 = vxor.u32 %v5688, 2147483648
  %v5698 = vxor.u32 %v5693, 2147483648
  %v5699 = vmul.f32 %v5696, 1.442695
  %v5700 = vpow.pop %v5699
  %v5701 = vmul.f32 %v5697, 1.442695
  %v5702 = vpow.pop %v5701
  %v5703 = vmul.f32 %v5698, 1.442695
  %v5704 = vpow.pop %v5703
  %v5705 = vadd.f32 %v5700, 1.0
  %v5706 = vadd.f32 %v5702, 1.0
  %v5707 = vadd.f32 %v5704, 1.0
  %v5708 = vrcp.pop %v5705
  %v5709 = vmul.f32 1.0, %v5708
  %v5710 = vrcp.pop %v5706
  %v5711 = vmul.f32 1.0, %v5710
  %v5712 = vrcp.pop %v5707
  %v5713 = vmul.f32 1.0, %v5712
  %v5714 = vmul.f32 %v5683, %v5709
  %v5715 = vmul.f32 %v5688, %v5711
  %v5716 = vmul.f32 %v5693, %v5713
  %5717 = vmatprep.subr.mxu0 %v119
  %5718 = vmatpush1.msra.mxu0 %v118
  %5719 = vmatprep.subr.mxu0 %v121
  %5720 = vmatpush1.msra.mxu0 %v120
  %5721 = vmatprep.subr.mxu0 %v123
  %5722 = vmatpush1.msra.mxu0 %v122
  %5723 = vmatprep.subr.mxu0 %v125
  %5724 = vmatpush1.msra.mxu0 %v124
  %5725 = vmatprep.subr.mxu0 %v127
  %5726 = vmatpush1.msra.mxu0 %v126
  %5727 = vmatprep.subr.mxu0 %v129
  %5728 = vmatpush1.msra.mxu0 %v128
  %5729 = vmatprep.subr.mxu0 %v131
  %5730 = vmatpush1.msra.mxu0 %v130
  %5731 = vmatprep.subr.mxu0 %v133
  %5732 = vmatpush1.msra.mxu0 %v132
  %5733 = vmatprep.subr.mxu0 %v135
  %5734 = vmatpush1.msra.mxu0 %v134
  %5735 = vmatprep.subr.mxu0 %v137
  %5736 = vmatpush1.msra.mxu0 %v136
  %5737 = vmatprep.subr.mxu0 %v139
  %5738 = vmatpush1.msra.mxu0 %v138
  %5739 = vmatprep.subr.mxu0 %v141
  %5740 = vmatpush1.msra.mxu0 %v140
  %5741 = vmatprep.subr.mxu0 %v143
  %5742 = vmatpush1.msra.mxu0 %v142
  %5743 = vmatprep.subr.mxu0 %v145
  %5744 = vmatpush1.msra.mxu0 %v144
  %5745 = vmatprep.subr.mxu0 %v147
  %5746 = vmatpush1.msra.mxu0 %v146
  %5747 = vmatprep.subr.mxu0 %v149
  %5748 = vmatpush1.msra.mxu0 %v148
  %5749 = vmatprep.subr.mxu0 0.0
  %5750 = vmatpush1.msra.mxu0 0.0
  %5751 = vmatprep.subr.mxu0 0.0
  %5752 = vmatpush1.msra.mxu0 0.0
  %5753 = vmatprep.subr.mxu0 0.0
  %5754 = vmatpush1.msra.mxu0 0.0
  %5755 = vmatprep.subr.mxu0 0.0
  %5756 = vmatpush1.msra.mxu0 0.0
  %5757 = vmatprep.subr.mxu0 0.0
  %5758 = vmatpush1.msra.mxu0 0.0
  %5759 = vmatprep.subr.mxu0 0.0
  %5760 = vmatpush1.msra.mxu0 0.0
  %5761 = vmatprep.subr.mxu0 0.0
  %5762 = vmatpush1.msra.mxu0 0.0
  %5763 = vmatprep.subr.mxu0 0.0
  %5764 = vmatpush1.msra.mxu0 0.0
  %5765 = vmatprep.subr.mxu0 0.0
  %5766 = vmatpush1.msra.mxu0 0.0
  %5767 = vmatprep.subr.mxu0 0.0
  %5768 = vmatpush1.msra.mxu0 0.0
  %5769 = vmatprep.subr.mxu0 0.0
  %5770 = vmatpush1.msra.mxu0 0.0
  %5771 = vmatprep.subr.mxu0 0.0
  %5772 = vmatpush1.msra.mxu0 0.0
  %5773 = vmatprep.subr.mxu0 0.0
  %5774 = vmatpush1.msra.mxu0 0.0
  %5775 = vmatprep.subr.mxu0 0.0
  %5776 = vmatpush1.msra.mxu0 0.0
  %5777 = vmatprep.subr.mxu0 0.0
  %5778 = vmatpush1.msra.mxu0 0.0
  %5779 = vmatprep.subr.mxu0 0.0
  %5780 = vmatpush1.msra.mxu0 0.0
  %5781 = vmatprep.mubr.f32.mxu0 0.0
  %5782 = vmatmul.mubr.f32.gmra.mrb[0].mxu0 %v5714
  %v5783 = vpop.f32.mrb[0].mxu0
  %v5784 = vadd.f32 0.0, %v5783
  %v5785 = vpop.f32.mrb[0].mxu0
  %v5786 = vadd.f32 0.0, %v5785
  %5787 = vmatprep.mubr.f32.mxu0 0.0
  %5788 = vmatmul.mubr.f32.gmra.mrb[0].mxu0 %v5715
  %v5789 = vpop.f32.mrb[0].mxu0
  %v5790 = vadd.f32 0.0, %v5789
  %v5791 = vpop.f32.mrb[0].mxu0
  %v5792 = vadd.f32 0.0, %v5791
  %5793 = vmatprep.mubr.f32.mxu0 0.0
  %5794 = vmatmul.mubr.f32.gmra.mrb[0].mxu0 %v5716
  %v5795 = vpop.f32.mrb[0].mxu0
  %v5796 = vadd.f32 0.0, %v5795
  %v5797 = vpop.f32.mrb[0].mxu0
  %v5798 = vadd.f32 0.0, %v5797
  %5799 = vdwg.mxu0
  %v5801 = vlaneseq
  %v5802 = vshrl.u32 %v5801, 7
  %v5803 = vsub.s32 0, %v5802
  %v5804 = vrot.slane %v150, %v5803
  %v5806 = vadd.f32 %v5784, %v5804
  %v5807 = vadd.f32 %v5790, %v5804
  %v5808 = vadd.f32 %v5796, %v5804
  %5809 = vmatprep.subr.mxu0 0.0
  %5810 = vmatpush1.msra.mxu0 %v5786
  %5811 = vmatprep.subr.mxu0 0.0
  %5812 = vmatpush1.msra.mxu0 %v5792
  %5813 = vmatprep.subr.mxu0 0.0
  %5814 = vmatpush1.msra.mxu0 %v5798
  %5815 = vmatprep.subr.mxu0 0.0
  %5816 = vmatpush1.msra.mxu0 0.0
  %5817 = vmatprep.subr.mxu0 0.0
  %5818 = vmatpush1.msra.mxu0 0.0
  %5819 = vmatprep.subr.mxu0 0.0
  %5820 = vmatpush1.msra.mxu0 0.0
  %5821 = vmatprep.subr.mxu0 0.0
  %5822 = vmatpush1.msra.mxu0 0.0
  %5823 = vmatprep.subr.mxu0 0.0
  %5824 = vmatpush1.msra.mxu0 0.0
  %5825 = vmatprep.subr.mxu0 0.0
  %5826 = vmatpush1.msra.mxu0 0.0
  %5827 = vmatprep.subr.mxu0 0.0
  %5828 = vmatpush1.msra.mxu0 0.0
  %5829 = vmatprep.subr.mxu0 0.0
  %5830 = vmatpush1.msra.mxu0 0.0
  %5831 = vmatprep.subr.mxu0 0.0
  %5832 = vmatpush1.msra.mxu0 0.0
  %5833 = vmatprep.subr.mxu0 0.0
  %5834 = vmatpush1.msra.mxu0 0.0
  %5835 = vmatprep.subr.mxu0 0.0
  %5836 = vmatpush1.msra.mxu0 0.0
  %5837 = vmatprep.subr.mxu0 0.0
  %5838 = vmatpush1.msra.mxu0 0.0
  %5839 = vmatprep.subr.mxu0 0.0
  %5840 = vmatpush1.msra.mxu0 0.0
  %5841 = vmatprep.subr.mxu0 0.0
  %5842 = vmatpush1.msra.mxu0 0.0
  %5843 = vmatprep.subr.mxu0 0.0
  %5844 = vmatpush1.msra.mxu0 0.0
  %5845 = vmatprep.subr.mxu0 0.0
  %5846 = vmatpush1.msra.mxu0 0.0
  %5847 = vmatprep.subr.mxu0 0.0
  %5848 = vmatpush1.msra.mxu0 0.0
  %5849 = vmatprep.subr.mxu0 0.0
  %5850 = vmatpush1.msra.mxu0 0.0
  %5851 = vmatprep.subr.mxu0 0.0
  %5852 = vmatpush1.msra.mxu0 0.0
  %5853 = vmatprep.subr.mxu0 0.0
  %5854 = vmatpush1.msra.mxu0 0.0
  %5855 = vmatprep.subr.mxu0 0.0
  %5856 = vmatpush1.msra.mxu0 0.0
  %5857 = vmatprep.subr.mxu0 0.0
  %5858 = vmatpush1.msra.mxu0 0.0
  %5859 = vmatprep.subr.mxu0 0.0
  %5860 = vmatpush1.msra.mxu0 0.0
  %5861 = vmatprep.subr.mxu0 0.0
  %5862 = vmatpush1.msra.mxu0 0.0
  %5863 = vmatprep.subr.mxu0 0.0
  %5864 = vmatpush1.msra.mxu0 0.0
  %5865 = vmatprep.subr.mxu0 0.0
  %5866 = vmatpush1.msra.mxu0 0.0
  %5867 = vmatprep.subr.mxu0 0.0
  %5868 = vmatpush1.msra.mxu0 0.0
  %5869 = vmatprep.subr.mxu0 0.0
  %5870 = vmatpush1.msra.mxu0 0.0
  %5871 = vmatprep.subr.mxu0 0.0
  %5872 = vmatpush1.msra.mxu0 0.0
  %5873 = vmatprep.mubr.f32.mxu0 0.0
  %5874 = vmatmul.mubr.f32.gmra.mrb[0].mxu0 %v1782
  %v5875 = vpop.f32.mrb[0].mxu0
  %v5876 = vadd.f32 0.0, %v5875
  %v5877 = vpop.f32.mrb[0].mxu0
  %5878 = vmatprep.mubr.f32.mxu0 0.0
  %5879 = vmatmul.mubr.f32.gmra.mrb[0].mxu0 %v1785
  %v5880 = vpop.f32.mrb[0].mxu0
  %v5881 = vadd.f32 0.0, %v5880
  %v5882 = vpop.f32.mrb[0].mxu0
  %5883 = vmatprep.mubr.f32.mxu0 0.0
  %5884 = vmatmul.mubr.f32.gmra.mrb[0].mxu0 %v1788
  %v5885 = vpop.f32.mrb[0].mxu0
  %v5886 = vadd.f32 0.0, %v5885
  %v5887 = vpop.f32.mrb[0].mxu0
  %5888 = vmatprep.mubr.f32.mxu0 0.0
  %5889 = vmatmul.mubr.f32.gmra.mrb[0].mxu0 %v1791
  %v5890 = vpop.f32.mrb[0].mxu0
  %v5891 = vadd.f32 0.0, %v5890
  %v5892 = vpop.f32.mrb[0].mxu0
  %5893 = vmatprep.mubr.f32.mxu0 0.0
  %5894 = vmatmul.mubr.f32.gmra.mrb[0].mxu0 %v1794
  %v5895 = vpop.f32.mrb[0].mxu0
  %v5896 = vadd.f32 0.0, %v5895
  %v5897 = vpop.f32.mrb[0].mxu0
  %5898 = vmatprep.mubr.f32.mxu0 0.0
  %5899 = vmatmul.mubr.f32.gmra.mrb[0].mxu0 %v1797
  %v5900 = vpop.f32.mrb[0].mxu0
  %v5901 = vadd.f32 0.0, %v5900
  %v5902 = vpop.f32.mrb[0].mxu0
  %5903 = vmatprep.mubr.f32.mxu0 0.0
  %5904 = vmatmul.mubr.f32.gmra.mrb[0].mxu0 %v1800
  %v5905 = vpop.f32.mrb[0].mxu0
  %v5906 = vadd.f32 0.0, %v5905
  %v5907 = vpop.f32.mrb[0].mxu0
  %5908 = vmatprep.mubr.f32.mxu0 0.0
  %5909 = vmatmul.mubr.f32.gmra.mrb[0].mxu0 %v1803
  %v5910 = vpop.f32.mrb[0].mxu0
  %v5911 = vadd.f32 0.0, %v5910
  %v5912 = vpop.f32.mrb[0].mxu0
  %5913 = vmatprep.mubr.f32.mxu0 0.0
  %5914 = vmatmul.mubr.f32.gmra.mrb[0].mxu0 %v1806
  %v5915 = vpop.f32.mrb[0].mxu0
  %v5916 = vadd.f32 0.0, %v5915
  %v5917 = vpop.f32.mrb[0].mxu0
  %5918 = vmatprep.mubr.f32.mxu0 0.0
  %5919 = vmatmul.mubr.f32.gmra.mrb[0].mxu0 %v1809
  %v5920 = vpop.f32.mrb[0].mxu0
  %v5921 = vadd.f32 0.0, %v5920
  %v5922 = vpop.f32.mrb[0].mxu0
  %5923 = vmatprep.mubr.f32.mxu0 0.0
  %5924 = vmatmul.mubr.f32.gmra.mrb[0].mxu0 %v1812
  %v5925 = vpop.f32.mrb[0].mxu0
  %v5926 = vadd.f32 0.0, %v5925
  %v5927 = vpop.f32.mrb[0].mxu0
  %5928 = vmatprep.mubr.f32.mxu0 0.0
  %5929 = vmatmul.mubr.f32.gmra.mrb[0].mxu0 %v1815
  %v5930 = vpop.f32.mrb[0].mxu0
  %v5931 = vadd.f32 0.0, %v5930
  %v5932 = vpop.f32.mrb[0].mxu0
  %5933 = vmatprep.mubr.f32.mxu0 0.0
  %5934 = vmatmul.mubr.f32.gmra.mrb[0].mxu0 %v1818
  %v5935 = vpop.f32.mrb[0].mxu0
  %v5936 = vadd.f32 0.0, %v5935
  %v5937 = vpop.f32.mrb[0].mxu0
  %5938 = vmatprep.mubr.f32.mxu0 0.0
  %5939 = vmatmul.mubr.f32.gmra.mrb[0].mxu0 %v1821
  %v5940 = vpop.f32.mrb[0].mxu0
  %v5941 = vadd.f32 0.0, %v5940
  %v5942 = vpop.f32.mrb[0].mxu0
  %5943 = vmatprep.mubr.f32.mxu0 0.0
  %5944 = vmatmul.mubr.f32.gmra.mrb[0].mxu0 %v1824
  %v5945 = vpop.f32.mrb[0].mxu0
  %v5946 = vadd.f32 0.0, %v5945
  %v5947 = vpop.f32.mrb[0].mxu0
  %5948 = vmatprep.mubr.f32.mxu0 0.0
  %5949 = vmatmul.mubr.f32.gmra.mrb[0].mxu0 %v1827
  %v5950 = vpop.f32.mrb[0].mxu0
  %v5951 = vadd.f32 0.0, %v5950
  %v5952 = vpop.f32.mrb[0].mxu0
  %5953 = vmatprep.mubr.f32.mxu0 0.0
  %5954 = vmatmul.mubr.f32.gmra.mrb[0].mxu0 %v1830
  %v5955 = vpop.f32.mrb[0].mxu0
  %v5956 = vadd.f32 0.0, %v5955
  %v5957 = vpop.f32.mrb[0].mxu0
  %5958 = vmatprep.mubr.f32.mxu0 0.0
  %5959 = vmatmul.mubr.f32.gmra.mrb[0].mxu0 %v1833
  %v5960 = vpop.f32.mrb[0].mxu0
  %v5961 = vadd.f32 0.0, %v5960
  %v5962 = vpop.f32.mrb[0].mxu0
  %5963 = vmatprep.mubr.f32.mxu0 0.0
  %5964 = vmatmul.mubr.f32.gmra.mrb[0].mxu0 %v1836
  %v5965 = vpop.f32.mrb[0].mxu0
  %v5966 = vadd.f32 0.0, %v5965
  %v5967 = vpop.f32.mrb[0].mxu0
  %5968 = vmatprep.mubr.f32.mxu0 0.0
  %5969 = vmatmul.mubr.f32.gmra.mrb[0].mxu0 %v1839
  %v5970 = vpop.f32.mrb[0].mxu0
  %v5971 = vadd.f32 0.0, %v5970
  %v5972 = vpop.f32.mrb[0].mxu0
  %5973 = vmatprep.mubr.f32.mxu0 0.0
  %5974 = vmatmul.mubr.f32.gmra.mrb[0].mxu0 %v1842
  %v5975 = vpop.f32.mrb[0].mxu0
  %v5976 = vadd.f32 0.0, %v5975
  %v5977 = vpop.f32.mrb[0].mxu0
  %5978 = vmatprep.mubr.f32.mxu0 0.0
  %5979 = vmatmul.mubr.f32.gmra.mrb[0].mxu0 %v1845
  %v5980 = vpop.f32.mrb[0].mxu0
  %v5981 = vadd.f32 0.0, %v5980
  %v5982 = vpop.f32.mrb[0].mxu0
  %5983 = vmatprep.mubr.f32.mxu0 0.0
  %5984 = vmatmul.mubr.f32.gmra.mrb[0].mxu0 %v1848
  %v5985 = vpop.f32.mrb[0].mxu0
  %v5986 = vadd.f32 0.0, %v5985
  %v5987 = vpop.f32.mrb[0].mxu0
  %5988 = vmatprep.mubr.f32.mxu0 0.0
  %5989 = vmatmul.mubr.f32.gmra.mrb[0].mxu0 %v1851
  %v5990 = vpop.f32.mrb[0].mxu0
  %v5991 = vadd.f32 0.0, %v5990
  %v5992 = vpop.f32.mrb[0].mxu0
  %5993 = vmatprep.mubr.f32.mxu0 0.0
  %5994 = vmatmul.mubr.f32.gmra.mrb[0].mxu0 %v1854
  %v5995 = vpop.f32.mrb[0].mxu0
  %v5996 = vadd.f32 0.0, %v5995
  %v5997 = vpop.f32.mrb[0].mxu0
  %5998 = vmatprep.mubr.f32.mxu0 0.0
  %5999 = vmatmul.mubr.f32.gmra.mrb[0].mxu0 %v1857
  %v6000 = vpop.f32.mrb[0].mxu0
  %v6001 = vadd.f32 0.0, %v6000
  %v6002 = vpop.f32.mrb[0].mxu0
  %6003 = vmatprep.mubr.f32.mxu0 0.0
  %6004 = vmatmul.mubr.f32.gmra.mrb[0].mxu0 %v1860
  %v6005 = vpop.f32.mrb[0].mxu0
  %v6006 = vadd.f32 0.0, %v6005
  %v6007 = vpop.f32.mrb[0].mxu0
  %6008 = vmatprep.mubr.f32.mxu0 0.0
  %6009 = vmatmul.mubr.f32.gmra.mrb[0].mxu0 %v1863
  %v6010 = vpop.f32.mrb[0].mxu0
  %v6011 = vadd.f32 0.0, %v6010
  %v6012 = vpop.f32.mrb[0].mxu0
  %6013 = vmatprep.mubr.f32.mxu0 0.0
  %6014 = vmatmul.mubr.f32.gmra.mrb[0].mxu0 %v1866
  %v6015 = vpop.f32.mrb[0].mxu0
  %v6016 = vadd.f32 0.0, %v6015
  %v6017 = vpop.f32.mrb[0].mxu0
  %6018 = vmatprep.mubr.f32.mxu0 0.0
  %6019 = vmatmul.mubr.f32.gmra.mrb[0].mxu0 %v1869
  %v6020 = vpop.f32.mrb[0].mxu0
  %v6021 = vadd.f32 0.0, %v6020
  %v6022 = vpop.f32.mrb[0].mxu0
  %6023 = vmatprep.mubr.f32.mxu0 0.0
  %6024 = vmatmul.mubr.f32.gmra.mrb[0].mxu0 %v1872
  %v6025 = vpop.f32.mrb[0].mxu0
  %v6026 = vadd.f32 0.0, %v6025
  %v6027 = vpop.f32.mrb[0].mxu0
  %6028 = vmatprep.mubr.f32.mxu0 0.0
  %6029 = vmatmul.mubr.f32.gmra.mrb[0].mxu0 %v1875
  %v6030 = vpop.f32.mrb[0].mxu0
  %v6031 = vadd.f32 0.0, %v6030
  %v6032 = vpop.f32.mrb[0].mxu0
  %6033 = vmatprep.mubr.f32.mxu0 0.0
  %6034 = vmatmul.mubr.f32.gmra.mrb[0].mxu0 %v1878
  %v6035 = vpop.f32.mrb[0].mxu0
  %v6036 = vadd.f32 0.0, %v6035
  %v6037 = vpop.f32.mrb[0].mxu0
  %6038 = vmatprep.mubr.f32.mxu0 0.0
  %6039 = vmatmul.mubr.f32.gmra.mrb[0].mxu0 %v1881
  %v6040 = vpop.f32.mrb[0].mxu0
  %v6041 = vadd.f32 0.0, %v6040
  %v6042 = vpop.f32.mrb[0].mxu0
  %6043 = vmatprep.mubr.f32.mxu0 0.0
  %6044 = vmatmul.mubr.f32.gmra.mrb[0].mxu0 %v1884
  %v6045 = vpop.f32.mrb[0].mxu0
  %v6046 = vadd.f32 0.0, %v6045
  %v6047 = vpop.f32.mrb[0].mxu0
  %6048 = vmatprep.mubr.f32.mxu0 0.0
  %6049 = vmatmul.mubr.f32.gmra.mrb[0].mxu0 %v1887
  %v6050 = vpop.f32.mrb[0].mxu0
  %v6051 = vadd.f32 0.0, %v6050
  %v6052 = vpop.f32.mrb[0].mxu0
  %6053 = vmatprep.mubr.f32.mxu0 0.0
  %6054 = vmatmul.mubr.f32.gmra.mrb[0].mxu0 %v1890
  %v6055 = vpop.f32.mrb[0].mxu0
  %v6056 = vadd.f32 0.0, %v6055
  %v6057 = vpop.f32.mrb[0].mxu0
  %6058 = vmatprep.mubr.f32.mxu0 0.0
  %6059 = vmatmul.mubr.f32.gmra.mrb[0].mxu0 %v1893
  %v6060 = vpop.f32.mrb[0].mxu0
  %v6061 = vadd.f32 0.0, %v6060
  %v6062 = vpop.f32.mrb[0].mxu0
  %6063 = vmatprep.mubr.f32.mxu0 0.0
  %6064 = vmatmul.mubr.f32.gmra.mrb[0].mxu0 %v1896
  %v6065 = vpop.f32.mrb[0].mxu0
  %v6066 = vadd.f32 0.0, %v6065
  %v6067 = vpop.f32.mrb[0].mxu0
  %6068 = vmatprep.mubr.f32.mxu0 0.0
  %6069 = vmatmul.mubr.f32.gmra.mrb[0].mxu0 %v1899
  %v6070 = vpop.f32.mrb[0].mxu0
  %v6071 = vadd.f32 0.0, %v6070
  %v6072 = vpop.f32.mrb[0].mxu0
  %6073 = vmatprep.mubr.f32.mxu0 0.0
  %6074 = vmatmul.mubr.f32.gmra.mrb[0].mxu0 %v1902
  %v6075 = vpop.f32.mrb[0].mxu0
  %v6076 = vadd.f32 0.0, %v6075
  %v6077 = vpop.f32.mrb[0].mxu0
  %6078 = vmatprep.mubr.f32.mxu0 0.0
  %6079 = vmatmul.mubr.f32.gmra.mrb[0].mxu0 %v1905
  %v6080 = vpop.f32.mrb[0].mxu0
  %v6081 = vadd.f32 0.0, %v6080
  %v6082 = vpop.f32.mrb[0].mxu0
  %6083 = vmatprep.mubr.f32.mxu0 0.0
  %6084 = vmatmul.mubr.f32.gmra.mrb[0].mxu0 %v1908
  %v6085 = vpop.f32.mrb[0].mxu0
  %v6086 = vadd.f32 0.0, %v6085
  %v6087 = vpop.f32.mrb[0].mxu0
  %6088 = vmatprep.mubr.f32.mxu0 0.0
  %6089 = vmatmul.mubr.f32.gmra.mrb[0].mxu0 %v1911
  %v6090 = vpop.f32.mrb[0].mxu0
  %v6091 = vadd.f32 0.0, %v6090
  %v6092 = vpop.f32.mrb[0].mxu0
  %6093 = vmatprep.mubr.f32.mxu0 0.0
  %6094 = vmatmul.mubr.f32.gmra.mrb[0].mxu0 %v1914
  %v6095 = vpop.f32.mrb[0].mxu0
  %v6096 = vadd.f32 0.0, %v6095
  %v6097 = vpop.f32.mrb[0].mxu0
  %6098 = vmatprep.mubr.f32.mxu0 0.0
  %6099 = vmatmul.mubr.f32.gmra.mrb[0].mxu0 %v1917
  %v6100 = vpop.f32.mrb[0].mxu0
  %v6101 = vadd.f32 0.0, %v6100
  %v6102 = vpop.f32.mrb[0].mxu0
  %6103 = vmatprep.mubr.f32.mxu0 0.0
  %6104 = vmatmul.mubr.f32.gmra.mrb[0].mxu0 %v1920
  %v6105 = vpop.f32.mrb[0].mxu0
  %v6106 = vadd.f32 0.0, %v6105
  %v6107 = vpop.f32.mrb[0].mxu0
  %6108 = vmatprep.mubr.f32.mxu0 0.0
  %6109 = vmatmul.mubr.f32.gmra.mrb[0].mxu0 %v1923
  %v6110 = vpop.f32.mrb[0].mxu0
  %v6111 = vadd.f32 0.0, %v6110
  %v6112 = vpop.f32.mrb[0].mxu0
  %6113 = vmatprep.mubr.f32.mxu0 0.0
  %6114 = vmatmul.mubr.f32.gmra.mrb[0].mxu0 %v1926
  %v6115 = vpop.f32.mrb[0].mxu0
  %v6116 = vadd.f32 0.0, %v6115
  %v6117 = vpop.f32.mrb[0].mxu0
  %6118 = vmatprep.mubr.f32.mxu0 0.0
  %6119 = vmatmul.mubr.f32.gmra.mrb[0].mxu0 %v1929
  %v6120 = vpop.f32.mrb[0].mxu0
  %v6121 = vadd.f32 0.0, %v6120
  %v6122 = vpop.f32.mrb[0].mxu0
  %6123 = vmatprep.mubr.f32.mxu0 0.0
  %6124 = vmatmul.mubr.f32.gmra.mrb[0].mxu0 %v1932
  %v6125 = vpop.f32.mrb[0].mxu0
  %v6126 = vadd.f32 0.0, %v6125
  %v6127 = vpop.f32.mrb[0].mxu0
  %6128 = vmatprep.mubr.f32.mxu0 0.0
  %6129 = vmatmul.mubr.f32.gmra.mrb[0].mxu0 %v1935
  %v6130 = vpop.f32.mrb[0].mxu0
  %v6131 = vadd.f32 0.0, %v6130
  %v6132 = vpop.f32.mrb[0].mxu0
  %6133 = vmatprep.mubr.f32.mxu0 0.0
  %6134 = vmatmul.mubr.f32.gmra.mrb[0].mxu0 %v1938
  %v6135 = vpop.f32.mrb[0].mxu0
  %v6136 = vadd.f32 0.0, %v6135
  %v6137 = vpop.f32.mrb[0].mxu0
  %6138 = vmatprep.mubr.f32.mxu0 0.0
  %6139 = vmatmul.mubr.f32.gmra.mrb[0].mxu0 %v1941
  %v6140 = vpop.f32.mrb[0].mxu0
  %v6141 = vadd.f32 0.0, %v6140
  %v6142 = vpop.f32.mrb[0].mxu0
  %6143 = vmatprep.mubr.f32.mxu0 0.0
  %6144 = vmatmul.mubr.f32.gmra.mrb[0].mxu0 %v1944
  %v6145 = vpop.f32.mrb[0].mxu0
  %v6146 = vadd.f32 0.0, %v6145
  %v6147 = vpop.f32.mrb[0].mxu0
  %6148 = vmatprep.mubr.f32.mxu0 0.0
  %6149 = vmatmul.mubr.f32.gmra.mrb[0].mxu0 %v1947
  %v6150 = vpop.f32.mrb[0].mxu0
  %v6151 = vadd.f32 0.0, %v6150
  %v6152 = vpop.f32.mrb[0].mxu0
  %6153 = vmatprep.mubr.f32.mxu0 0.0
  %6154 = vmatmul.mubr.f32.gmra.mrb[0].mxu0 %v1950
  %v6155 = vpop.f32.mrb[0].mxu0
  %v6156 = vadd.f32 0.0, %v6155
  %v6157 = vpop.f32.mrb[0].mxu0
  %6158 = vmatprep.mubr.f32.mxu0 0.0
  %6159 = vmatmul.mubr.f32.gmra.mrb[0].mxu0 %v1953
  %v6160 = vpop.f32.mrb[0].mxu0
  %v6161 = vadd.f32 0.0, %v6160
  %v6162 = vpop.f32.mrb[0].mxu0
  %6163 = vmatprep.mubr.f32.mxu0 0.0
  %6164 = vmatmul.mubr.f32.gmra.mrb[0].mxu0 %v1956
  %v6165 = vpop.f32.mrb[0].mxu0
  %v6166 = vadd.f32 0.0, %v6165
  %v6167 = vpop.f32.mrb[0].mxu0
  %6168 = vmatprep.mubr.f32.mxu0 0.0
  %6169 = vmatmul.mubr.f32.gmra.mrb[0].mxu0 %v1959
  %v6170 = vpop.f32.mrb[0].mxu0
  %v6171 = vadd.f32 0.0, %v6170
  %v6172 = vpop.f32.mrb[0].mxu0
  %6173 = vmatprep.mubr.f32.mxu0 0.0
  %6174 = vmatmul.mubr.f32.gmra.mrb[0].mxu0 %v1962
  %v6175 = vpop.f32.mrb[0].mxu0
  %v6176 = vadd.f32 0.0, %v6175
  %v6177 = vpop.f32.mrb[0].mxu0
  %6178 = vmatprep.mubr.f32.mxu0 0.0
  %6179 = vmatmul.mubr.f32.gmra.mrb[0].mxu0 %v1965
  %v6180 = vpop.f32.mrb[0].mxu0
  %v6181 = vadd.f32 0.0, %v6180
  %v6182 = vpop.f32.mrb[0].mxu0
  %6183 = vmatprep.mubr.f32.mxu0 0.0
  %6184 = vmatmul.mubr.f32.gmra.mrb[0].mxu0 %v1968
  %v6185 = vpop.f32.mrb[0].mxu0
  %v6186 = vadd.f32 0.0, %v6185
  %v6187 = vpop.f32.mrb[0].mxu0
  %6188 = vmatprep.mubr.f32.mxu0 0.0
  %6189 = vmatmul.mubr.f32.gmra.mrb[0].mxu0 %v1971
  %v6190 = vpop.f32.mrb[0].mxu0
  %v6191 = vadd.f32 0.0, %v6190
  %v6192 = vpop.f32.mrb[0].mxu0
  %6193 = vmatprep.mubr.f32.mxu0 0.0
  %6194 = vmatmul.mubr.f32.gmra.mrb[0].mxu0 %v1974
  %v6195 = vpop.f32.mrb[0].mxu0
  %v6196 = vadd.f32 0.0, %v6195
  %v6197 = vpop.f32.mrb[0].mxu0
  %6198 = vmatprep.mubr.f32.mxu0 0.0
  %6199 = vmatmul.mubr.f32.gmra.mrb[0].mxu0 %v1977
  %v6200 = vpop.f32.mrb[0].mxu0
  %v6201 = vadd.f32 0.0, %v6200
  %v6202 = vpop.f32.mrb[0].mxu0
  %6203 = vmatprep.mubr.f32.mxu0 0.0
  %6204 = vmatmul.mubr.f32.gmra.mrb[0].mxu0 %v1980
  %v6205 = vpop.f32.mrb[0].mxu0
  %v6206 = vadd.f32 0.0, %v6205
  %v6207 = vpop.f32.mrb[0].mxu0
  %6208 = vmatprep.mubr.f32.mxu0 0.0
  %6209 = vmatmul.mubr.f32.gmra.mrb[0].mxu0 %v1983
  %v6210 = vpop.f32.mrb[0].mxu0
  %v6211 = vadd.f32 0.0, %v6210
  %v6212 = vpop.f32.mrb[0].mxu0
  %6213 = vmatprep.mubr.f32.mxu0 0.0
  %6214 = vmatmul.mubr.f32.gmra.mrb[0].mxu0 %v1986
  %v6215 = vpop.f32.mrb[0].mxu0
  %v6216 = vadd.f32 0.0, %v6215
  %v6217 = vpop.f32.mrb[0].mxu0
  %6218 = vmatprep.mubr.f32.mxu0 0.0
  %6219 = vmatmul.mubr.f32.gmra.mrb[0].mxu0 %v1989
  %v6220 = vpop.f32.mrb[0].mxu0
  %v6221 = vadd.f32 0.0, %v6220
  %v6222 = vpop.f32.mrb[0].mxu0
  %6223 = vmatprep.mubr.f32.mxu0 0.0
  %6224 = vmatmul.mubr.f32.gmra.mrb[0].mxu0 %v1992
  %v6225 = vpop.f32.mrb[0].mxu0
  %v6226 = vadd.f32 0.0, %v6225
  %v6227 = vpop.f32.mrb[0].mxu0
  %6228 = vmatprep.mubr.f32.mxu0 0.0
  %6229 = vmatmul.mubr.f32.gmra.mrb[0].mxu0 %v1995
  %v6230 = vpop.f32.mrb[0].mxu0
  %v6231 = vadd.f32 0.0, %v6230
  %v6232 = vpop.f32.mrb[0].mxu0
  %6233 = vdwg.mxu0
  %6234 = vmatprep.subr.mxu0 0.0
  %6235 = vmatpush1.msra.mxu0 %v5806
  %6236 = vmatprep.subr.mxu0 0.0
  %6237 = vmatpush1.msra.mxu0 %v5807
  %6238 = vmatprep.subr.mxu0 0.0
  %6239 = vmatpush1.msra.mxu0 %v5808
  %6240 = vmatprep.subr.mxu0 0.0
  %6241 = vmatpush1.msra.mxu0 0.0
  %6242 = vmatprep.subr.mxu0 0.0
  %6243 = vmatpush1.msra.mxu0 0.0
  %6244 = vmatprep.subr.mxu0 0.0
  %6245 = vmatpush1.msra.mxu0 0.0
  %6246 = vmatprep.subr.mxu0 0.0
  %6247 = vmatpush1.msra.mxu0 0.0
  %6248 = vmatprep.subr.mxu0 0.0
  %6249 = vmatpush1.msra.mxu0 0.0
  %6250 = vmatprep.subr.mxu0 0.0
  %6251 = vmatpush1.msra.mxu0 0.0
  %6252 = vmatprep.subr.mxu0 0.0
  %6253 = vmatpush1.msra.mxu0 0.0
  %6254 = vmatprep.subr.mxu0 0.0
  %6255 = vmatpush1.msra.mxu0 0.0
  %6256 = vmatprep.subr.mxu0 0.0
  %6257 = vmatpush1.msra.mxu0 0.0
  %6258 = vmatprep.subr.mxu0 0.0
  %6259 = vmatpush1.msra.mxu0 0.0
  %6260 = vmatprep.subr.mxu0 0.0
  %6261 = vmatpush1.msra.mxu0 0.0
  %6262 = vmatprep.subr.mxu0 0.0
  %6263 = vmatpush1.msra.mxu0 0.0
  %6264 = vmatprep.subr.mxu0 0.0
  %6265 = vmatpush1.msra.mxu0 0.0
  %6266 = vmatprep.subr.mxu0 0.0
  %6267 = vmatpush1.msra.mxu0 0.0
  %6268 = vmatprep.subr.mxu0 0.0
  %6269 = vmatpush1.msra.mxu0 0.0
  %6270 = vmatprep.subr.mxu0 0.0
  %6271 = vmatpush1.msra.mxu0 0.0
  %6272 = vmatprep.subr.mxu0 0.0
  %6273 = vmatpush1.msra.mxu0 0.0
  %6274 = vmatprep.subr.mxu0 0.0
  %6275 = vmatpush1.msra.mxu0 0.0
  %6276 = vmatprep.subr.mxu0 0.0
  %6277 = vmatpush1.msra.mxu0 0.0
  %6278 = vmatprep.subr.mxu0 0.0
  %6279 = vmatpush1.msra.mxu0 0.0
  %6280 = vmatprep.subr.mxu0 0.0
  %6281 = vmatpush1.msra.mxu0 0.0
  %6282 = vmatprep.subr.mxu0 0.0
  %6283 = vmatpush1.msra.mxu0 0.0
  %6284 = vmatprep.subr.mxu0 0.0
  %6285 = vmatpush1.msra.mxu0 0.0
  %6286 = vmatprep.subr.mxu0 0.0
  %6287 = vmatpush1.msra.mxu0 0.0
  %6288 = vmatprep.subr.mxu0 0.0
  %6289 = vmatpush1.msra.mxu0 0.0
  %6290 = vmatprep.subr.mxu0 0.0
  %6291 = vmatpush1.msra.mxu0 0.0
  %6292 = vmatprep.subr.mxu0 0.0
  %6293 = vmatpush1.msra.mxu0 0.0
  %6294 = vmatprep.subr.mxu0 0.0
  %6295 = vmatpush1.msra.mxu0 0.0
  %6296 = vmatprep.subr.mxu0 0.0
  %6297 = vmatpush1.msra.mxu0 0.0
  %6298 = vmatprep.mubr.f32.mxu0 0.0
  %6299 = vmatmul.mubr.f32.gmra.mrb[0].mxu0 %v2423
  %v6300 = vpop.f32.mrb[0].mxu0
  %v6301 = vadd.f32 %v5876, %v6300
  %v6302 = vpop.f32.mrb[0].mxu0
  %6303 = vmatprep.mubr.f32.mxu0 0.0
  %6304 = vmatmul.mubr.f32.gmra.mrb[0].mxu0 %v2426
  %v6305 = vpop.f32.mrb[0].mxu0
  %v6306 = vadd.f32 %v5881, %v6305
  %v6307 = vpop.f32.mrb[0].mxu0
  %6308 = vmatprep.mubr.f32.mxu0 0.0
  %6309 = vmatmul.mubr.f32.gmra.mrb[0].mxu0 %v2429
  %v6310 = vpop.f32.mrb[0].mxu0
  %v6311 = vadd.f32 %v5886, %v6310
  %v6312 = vpop.f32.mrb[0].mxu0
  %6313 = vmatprep.mubr.f32.mxu0 0.0
  %6314 = vmatmul.mubr.f32.gmra.mrb[0].mxu0 %v2432
  %v6315 = vpop.f32.mrb[0].mxu0
  %v6316 = vadd.f32 %v5891, %v6315
  %v6317 = vpop.f32.mrb[0].mxu0
  %6318 = vmatprep.mubr.f32.mxu0 0.0
  %6319 = vmatmul.mubr.f32.gmra.mrb[0].mxu0 %v2435
  %v6320 = vpop.f32.mrb[0].mxu0
  %v6321 = vadd.f32 %v5896, %v6320
  %v6322 = vpop.f32.mrb[0].mxu0
  %6323 = vmatprep.mubr.f32.mxu0 0.0
  %6324 = vmatmul.mubr.f32.gmra.mrb[0].mxu0 %v2438
  %v6325 = vpop.f32.mrb[0].mxu0
  %v6326 = vadd.f32 %v5901, %v6325
  %v6327 = vpop.f32.mrb[0].mxu0
  %6328 = vmatprep.mubr.f32.mxu0 0.0
  %6329 = vmatmul.mubr.f32.gmra.mrb[0].mxu0 %v2441
  %v6330 = vpop.f32.mrb[0].mxu0
  %v6331 = vadd.f32 %v5906, %v6330
  %v6332 = vpop.f32.mrb[0].mxu0
  %6333 = vmatprep.mubr.f32.mxu0 0.0
  %6334 = vmatmul.mubr.f32.gmra.mrb[0].mxu0 %v2444
  %v6335 = vpop.f32.mrb[0].mxu0
  %v6336 = vadd.f32 %v5911, %v6335
  %v6337 = vpop.f32.mrb[0].mxu0
  %6338 = vmatprep.mubr.f32.mxu0 0.0
  %6339 = vmatmul.mubr.f32.gmra.mrb[0].mxu0 %v2447
  %v6340 = vpop.f32.mrb[0].mxu0
  %v6341 = vadd.f32 %v5916, %v6340
  %v6342 = vpop.f32.mrb[0].mxu0
  %6343 = vmatprep.mubr.f32.mxu0 0.0
  %6344 = vmatmul.mubr.f32.gmra.mrb[0].mxu0 %v2450
  %v6345 = vpop.f32.mrb[0].mxu0
  %v6346 = vadd.f32 %v5921, %v6345
  %v6347 = vpop.f32.mrb[0].mxu0
  %6348 = vmatprep.mubr.f32.mxu0 0.0
  %6349 = vmatmul.mubr.f32.gmra.mrb[0].mxu0 %v2453
  %v6350 = vpop.f32.mrb[0].mxu0
  %v6351 = vadd.f32 %v5926, %v6350
  %v6352 = vpop.f32.mrb[0].mxu0
  %6353 = vmatprep.mubr.f32.mxu0 0.0
  %6354 = vmatmul.mubr.f32.gmra.mrb[0].mxu0 %v2456
  %v6355 = vpop.f32.mrb[0].mxu0
  %v6356 = vadd.f32 %v5931, %v6355
  %v6357 = vpop.f32.mrb[0].mxu0
  %6358 = vmatprep.mubr.f32.mxu0 0.0
  %6359 = vmatmul.mubr.f32.gmra.mrb[0].mxu0 %v2459
  %v6360 = vpop.f32.mrb[0].mxu0
  %v6361 = vadd.f32 %v5936, %v6360
  %v6362 = vpop.f32.mrb[0].mxu0
  %6363 = vmatprep.mubr.f32.mxu0 0.0
  %6364 = vmatmul.mubr.f32.gmra.mrb[0].mxu0 %v2462
  %v6365 = vpop.f32.mrb[0].mxu0
  %v6366 = vadd.f32 %v5941, %v6365
  %v6367 = vpop.f32.mrb[0].mxu0
  %6368 = vmatprep.mubr.f32.mxu0 0.0
  %6369 = vmatmul.mubr.f32.gmra.mrb[0].mxu0 %v2465
  %v6370 = vpop.f32.mrb[0].mxu0
  %v6371 = vadd.f32 %v5946, %v6370
  %v6372 = vpop.f32.mrb[0].mxu0
  %6373 = vmatprep.mubr.f32.mxu0 0.0
  %6374 = vmatmul.mubr.f32.gmra.mrb[0].mxu0 %v2468
  %v6375 = vpop.f32.mrb[0].mxu0
  %v6376 = vadd.f32 %v5951, %v6375
  %v6377 = vpop.f32.mrb[0].mxu0
  %6378 = vmatprep.mubr.f32.mxu0 0.0
  %6379 = vmatmul.mubr.f32.gmra.mrb[0].mxu0 %v2471
  %v6380 = vpop.f32.mrb[0].mxu0
  %v6381 = vadd.f32 %v5956, %v6380
  %v6382 = vpop.f32.mrb[0].mxu0
  %6383 = vmatprep.mubr.f32.mxu0 0.0
  %6384 = vmatmul.mubr.f32.gmra.mrb[0].mxu0 %v2474
  %v6385 = vpop.f32.mrb[0].mxu0
  %v6386 = vadd.f32 %v5961, %v6385
  %v6387 = vpop.f32.mrb[0].mxu0
  %6388 = vmatprep.mubr.f32.mxu0 0.0
  %6389 = vmatmul.mubr.f32.gmra.mrb[0].mxu0 %v2477
  %v6390 = vpop.f32.mrb[0].mxu0
  %v6391 = vadd.f32 %v5966, %v6390
  %v6392 = vpop.f32.mrb[0].mxu0
  %6393 = vmatprep.mubr.f32.mxu0 0.0
  %6394 = vmatmul.mubr.f32.gmra.mrb[0].mxu0 %v2480
  %v6395 = vpop.f32.mrb[0].mxu0
  %v6396 = vadd.f32 %v5971, %v6395
  %v6397 = vpop.f32.mrb[0].mxu0
  %6398 = vmatprep.mubr.f32.mxu0 0.0
  %6399 = vmatmul.mubr.f32.gmra.mrb[0].mxu0 %v2483
  %v6400 = vpop.f32.mrb[0].mxu0
  %v6401 = vadd.f32 %v5976, %v6400
  %v6402 = vpop.f32.mrb[0].mxu0
  %6403 = vmatprep.mubr.f32.mxu0 0.0
  %6404 = vmatmul.mubr.f32.gmra.mrb[0].mxu0 %v2486
  %v6405 = vpop.f32.mrb[0].mxu0
  %v6406 = vadd.f32 %v5981, %v6405
  %v6407 = vpop.f32.mrb[0].mxu0
  %6408 = vmatprep.mubr.f32.mxu0 0.0
  %6409 = vmatmul.mubr.f32.gmra.mrb[0].mxu0 %v2489
  %v6410 = vpop.f32.mrb[0].mxu0
  %v6411 = vadd.f32 %v5986, %v6410
  %v6412 = vpop.f32.mrb[0].mxu0
  %6413 = vmatprep.mubr.f32.mxu0 0.0
  %6414 = vmatmul.mubr.f32.gmra.mrb[0].mxu0 %v2492
  %v6415 = vpop.f32.mrb[0].mxu0
  %v6416 = vadd.f32 %v5991, %v6415
  %v6417 = vpop.f32.mrb[0].mxu0
  %6418 = vmatprep.mubr.f32.mxu0 0.0
  %6419 = vmatmul.mubr.f32.gmra.mrb[0].mxu0 %v2495
  %v6420 = vpop.f32.mrb[0].mxu0
  %v6421 = vadd.f32 %v5996, %v6420
  %v6422 = vpop.f32.mrb[0].mxu0
  %6423 = vmatprep.mubr.f32.mxu0 0.0
  %6424 = vmatmul.mubr.f32.gmra.mrb[0].mxu0 %v2498
  %v6425 = vpop.f32.mrb[0].mxu0
  %v6426 = vadd.f32 %v6001, %v6425
  %v6427 = vpop.f32.mrb[0].mxu0
  %6428 = vmatprep.mubr.f32.mxu0 0.0
  %6429 = vmatmul.mubr.f32.gmra.mrb[0].mxu0 %v2501
  %v6430 = vpop.f32.mrb[0].mxu0
  %v6431 = vadd.f32 %v6006, %v6430
  %v6432 = vpop.f32.mrb[0].mxu0
  %6433 = vmatprep.mubr.f32.mxu0 0.0
  %6434 = vmatmul.mubr.f32.gmra.mrb[0].mxu0 %v2504
  %v6435 = vpop.f32.mrb[0].mxu0
  %v6436 = vadd.f32 %v6011, %v6435
  %v6437 = vpop.f32.mrb[0].mxu0
  %6438 = vmatprep.mubr.f32.mxu0 0.0
  %6439 = vmatmul.mubr.f32.gmra.mrb[0].mxu0 %v2507
  %v6440 = vpop.f32.mrb[0].mxu0
  %v6441 = vadd.f32 %v6016, %v6440
  %v6442 = vpop.f32.mrb[0].mxu0
  %6443 = vmatprep.mubr.f32.mxu0 0.0
  %6444 = vmatmul.mubr.f32.gmra.mrb[0].mxu0 %v2510
  %v6445 = vpop.f32.mrb[0].mxu0
  %v6446 = vadd.f32 %v6021, %v6445
  %v6447 = vpop.f32.mrb[0].mxu0
  %6448 = vmatprep.mubr.f32.mxu0 0.0
  %6449 = vmatmul.mubr.f32.gmra.mrb[0].mxu0 %v2513
  %v6450 = vpop.f32.mrb[0].mxu0
  %v6451 = vadd.f32 %v6026, %v6450
  %v6452 = vpop.f32.mrb[0].mxu0
  %6453 = vmatprep.mubr.f32.mxu0 0.0
  %6454 = vmatmul.mubr.f32.gmra.mrb[0].mxu0 %v2516
  %v6455 = vpop.f32.mrb[0].mxu0
  %v6456 = vadd.f32 %v6031, %v6455
  %v6457 = vpop.f32.mrb[0].mxu0
  %6458 = vmatprep.mubr.f32.mxu0 0.0
  %6459 = vmatmul.mubr.f32.gmra.mrb[0].mxu0 %v2519
  %v6460 = vpop.f32.mrb[0].mxu0
  %v6461 = vadd.f32 %v6036, %v6460
  %v6462 = vpop.f32.mrb[0].mxu0
  %6463 = vmatprep.mubr.f32.mxu0 0.0
  %6464 = vmatmul.mubr.f32.gmra.mrb[0].mxu0 %v2522
  %v6465 = vpop.f32.mrb[0].mxu0
  %v6466 = vadd.f32 %v6041, %v6465
  %v6467 = vpop.f32.mrb[0].mxu0
  %6468 = vmatprep.mubr.f32.mxu0 0.0
  %6469 = vmatmul.mubr.f32.gmra.mrb[0].mxu0 %v2525
  %v6470 = vpop.f32.mrb[0].mxu0
  %v6471 = vadd.f32 %v6046, %v6470
  %v6472 = vpop.f32.mrb[0].mxu0
  %6473 = vmatprep.mubr.f32.mxu0 0.0
  %6474 = vmatmul.mubr.f32.gmra.mrb[0].mxu0 %v2528
  %v6475 = vpop.f32.mrb[0].mxu0
  %v6476 = vadd.f32 %v6051, %v6475
  %v6477 = vpop.f32.mrb[0].mxu0
  %6478 = vmatprep.mubr.f32.mxu0 0.0
  %6479 = vmatmul.mubr.f32.gmra.mrb[0].mxu0 %v2531
  %v6480 = vpop.f32.mrb[0].mxu0
  %v6481 = vadd.f32 %v6056, %v6480
  %v6482 = vpop.f32.mrb[0].mxu0
  %6483 = vmatprep.mubr.f32.mxu0 0.0
  %6484 = vmatmul.mubr.f32.gmra.mrb[0].mxu0 %v2534
  %v6485 = vpop.f32.mrb[0].mxu0
  %v6486 = vadd.f32 %v6061, %v6485
  %v6487 = vpop.f32.mrb[0].mxu0
  %6488 = vmatprep.mubr.f32.mxu0 0.0
  %6489 = vmatmul.mubr.f32.gmra.mrb[0].mxu0 %v2537
  %v6490 = vpop.f32.mrb[0].mxu0
  %v6491 = vadd.f32 %v6066, %v6490
  %v6492 = vpop.f32.mrb[0].mxu0
  %6493 = vmatprep.mubr.f32.mxu0 0.0
  %6494 = vmatmul.mubr.f32.gmra.mrb[0].mxu0 %v2540
  %v6495 = vpop.f32.mrb[0].mxu0
  %v6496 = vadd.f32 %v6071, %v6495
  %v6497 = vpop.f32.mrb[0].mxu0
  %6498 = vmatprep.mubr.f32.mxu0 0.0
  %6499 = vmatmul.mubr.f32.gmra.mrb[0].mxu0 %v2543
  %v6500 = vpop.f32.mrb[0].mxu0
  %v6501 = vadd.f32 %v6076, %v6500
  %v6502 = vpop.f32.mrb[0].mxu0
  %6503 = vmatprep.mubr.f32.mxu0 0.0
  %6504 = vmatmul.mubr.f32.gmra.mrb[0].mxu0 %v2546
  %v6505 = vpop.f32.mrb[0].mxu0
  %v6506 = vadd.f32 %v6081, %v6505
  %v6507 = vpop.f32.mrb[0].mxu0
  %6508 = vmatprep.mubr.f32.mxu0 0.0
  %6509 = vmatmul.mubr.f32.gmra.mrb[0].mxu0 %v2549
  %v6510 = vpop.f32.mrb[0].mxu0
  %v6511 = vadd.f32 %v6086, %v6510
  %v6512 = vpop.f32.mrb[0].mxu0
  %6513 = vmatprep.mubr.f32.mxu0 0.0
  %6514 = vmatmul.mubr.f32.gmra.mrb[0].mxu0 %v2552
  %v6515 = vpop.f32.mrb[0].mxu0
  %v6516 = vadd.f32 %v6091, %v6515
  %v6517 = vpop.f32.mrb[0].mxu0
  %6518 = vmatprep.mubr.f32.mxu0 0.0
  %6519 = vmatmul.mubr.f32.gmra.mrb[0].mxu0 %v2555
  %v6520 = vpop.f32.mrb[0].mxu0
  %v6521 = vadd.f32 %v6096, %v6520
  %v6522 = vpop.f32.mrb[0].mxu0
  %6523 = vmatprep.mubr.f32.mxu0 0.0
  %6524 = vmatmul.mubr.f32.gmra.mrb[0].mxu0 %v2558
  %v6525 = vpop.f32.mrb[0].mxu0
  %v6526 = vadd.f32 %v6101, %v6525
  %v6527 = vpop.f32.mrb[0].mxu0
  %6528 = vmatprep.mubr.f32.mxu0 0.0
  %6529 = vmatmul.mubr.f32.gmra.mrb[0].mxu0 %v2561
  %v6530 = vpop.f32.mrb[0].mxu0
  %v6531 = vadd.f32 %v6106, %v6530
  %v6532 = vpop.f32.mrb[0].mxu0
  %6533 = vmatprep.mubr.f32.mxu0 0.0
  %6534 = vmatmul.mubr.f32.gmra.mrb[0].mxu0 %v2564
  %v6535 = vpop.f32.mrb[0].mxu0
  %v6536 = vadd.f32 %v6111, %v6535
  %v6537 = vpop.f32.mrb[0].mxu0
  %6538 = vmatprep.mubr.f32.mxu0 0.0
  %6539 = vmatmul.mubr.f32.gmra.mrb[0].mxu0 %v2567
  %v6540 = vpop.f32.mrb[0].mxu0
  %v6541 = vadd.f32 %v6116, %v6540
  %v6542 = vpop.f32.mrb[0].mxu0
  %6543 = vmatprep.mubr.f32.mxu0 0.0
  %6544 = vmatmul.mubr.f32.gmra.mrb[0].mxu0 %v2570
  %v6545 = vpop.f32.mrb[0].mxu0
  %v6546 = vadd.f32 %v6121, %v6545
  %v6547 = vpop.f32.mrb[0].mxu0
  %6548 = vmatprep.mubr.f32.mxu0 0.0
  %6549 = vmatmul.mubr.f32.gmra.mrb[0].mxu0 %v2573
  %v6550 = vpop.f32.mrb[0].mxu0
  %v6551 = vadd.f32 %v6126, %v6550
  %v6552 = vpop.f32.mrb[0].mxu0
  %6553 = vmatprep.mubr.f32.mxu0 0.0
  %6554 = vmatmul.mubr.f32.gmra.mrb[0].mxu0 %v2576
  %v6555 = vpop.f32.mrb[0].mxu0
  %v6556 = vadd.f32 %v6131, %v6555
  %v6557 = vpop.f32.mrb[0].mxu0
  %6558 = vmatprep.mubr.f32.mxu0 0.0
  %6559 = vmatmul.mubr.f32.gmra.mrb[0].mxu0 %v2579
  %v6560 = vpop.f32.mrb[0].mxu0
  %v6561 = vadd.f32 %v6136, %v6560
  %v6562 = vpop.f32.mrb[0].mxu0
  %6563 = vmatprep.mubr.f32.mxu0 0.0
  %6564 = vmatmul.mubr.f32.gmra.mrb[0].mxu0 %v2582
  %v6565 = vpop.f32.mrb[0].mxu0
  %v6566 = vadd.f32 %v6141, %v6565
  %v6567 = vpop.f32.mrb[0].mxu0
  %6568 = vmatprep.mubr.f32.mxu0 0.0
  %6569 = vmatmul.mubr.f32.gmra.mrb[0].mxu0 %v2585
  %v6570 = vpop.f32.mrb[0].mxu0
  %v6571 = vadd.f32 %v6146, %v6570
  %v6572 = vpop.f32.mrb[0].mxu0
  %6573 = vmatprep.mubr.f32.mxu0 0.0
  %6574 = vmatmul.mubr.f32.gmra.mrb[0].mxu0 %v2588
  %v6575 = vpop.f32.mrb[0].mxu0
  %v6576 = vadd.f32 %v6151, %v6575
  %v6577 = vpop.f32.mrb[0].mxu0
  %6578 = vmatprep.mubr.f32.mxu0 0.0
  %6579 = vmatmul.mubr.f32.gmra.mrb[0].mxu0 %v2591
  %v6580 = vpop.f32.mrb[0].mxu0
  %v6581 = vadd.f32 %v6156, %v6580
  %v6582 = vpop.f32.mrb[0].mxu0
  %6583 = vmatprep.mubr.f32.mxu0 0.0
  %6584 = vmatmul.mubr.f32.gmra.mrb[0].mxu0 %v2594
  %v6585 = vpop.f32.mrb[0].mxu0
  %v6586 = vadd.f32 %v6161, %v6585
  %v6587 = vpop.f32.mrb[0].mxu0
  %6588 = vmatprep.mubr.f32.mxu0 0.0
  %6589 = vmatmul.mubr.f32.gmra.mrb[0].mxu0 %v2597
  %v6590 = vpop.f32.mrb[0].mxu0
  %v6591 = vadd.f32 %v6166, %v6590
  %v6592 = vpop.f32.mrb[0].mxu0
  %6593 = vmatprep.mubr.f32.mxu0 0.0
  %6594 = vmatmul.mubr.f32.gmra.mrb[0].mxu0 %v2600
  %v6595 = vpop.f32.mrb[0].mxu0
  %v6596 = vadd.f32 %v6171, %v6595
  %v6597 = vpop.f32.mrb[0].mxu0
  %6598 = vmatprep.mubr.f32.mxu0 0.0
  %6599 = vmatmul.mubr.f32.gmra.mrb[0].mxu0 %v2603
  %v6600 = vpop.f32.mrb[0].mxu0
  %v6601 = vadd.f32 %v6176, %v6600
  %v6602 = vpop.f32.mrb[0].mxu0
  %6603 = vmatprep.mubr.f32.mxu0 0.0
  %6604 = vmatmul.mubr.f32.gmra.mrb[0].mxu0 %v2606
  %v6605 = vpop.f32.mrb[0].mxu0
  %v6606 = vadd.f32 %v6181, %v6605
  %v6607 = vpop.f32.mrb[0].mxu0
  %6608 = vmatprep.mubr.f32.mxu0 0.0
  %6609 = vmatmul.mubr.f32.gmra.mrb[0].mxu0 %v2609
  %v6610 = vpop.f32.mrb[0].mxu0
  %v6611 = vadd.f32 %v6186, %v6610
  %v6612 = vpop.f32.mrb[0].mxu0
  %6613 = vmatprep.mubr.f32.mxu0 0.0
  %6614 = vmatmul.mubr.f32.gmra.mrb[0].mxu0 %v2612
  %v6615 = vpop.f32.mrb[0].mxu0
  %v6616 = vadd.f32 %v6191, %v6615
  %v6617 = vpop.f32.mrb[0].mxu0
  %6618 = vmatprep.mubr.f32.mxu0 0.0
  %6619 = vmatmul.mubr.f32.gmra.mrb[0].mxu0 %v2615
  %v6620 = vpop.f32.mrb[0].mxu0
  %v6621 = vadd.f32 %v6196, %v6620
  %v6622 = vpop.f32.mrb[0].mxu0
  %6623 = vmatprep.mubr.f32.mxu0 0.0
  %6624 = vmatmul.mubr.f32.gmra.mrb[0].mxu0 %v2618
  %v6625 = vpop.f32.mrb[0].mxu0
  %v6626 = vadd.f32 %v6201, %v6625
  %v6627 = vpop.f32.mrb[0].mxu0
  %6628 = vmatprep.mubr.f32.mxu0 0.0
  %6629 = vmatmul.mubr.f32.gmra.mrb[0].mxu0 %v2621
  %v6630 = vpop.f32.mrb[0].mxu0
  %v6631 = vadd.f32 %v6206, %v6630
  %v6632 = vpop.f32.mrb[0].mxu0
  %6633 = vmatprep.mubr.f32.mxu0 0.0
  %6634 = vmatmul.mubr.f32.gmra.mrb[0].mxu0 %v2624
  %v6635 = vpop.f32.mrb[0].mxu0
  %v6636 = vadd.f32 %v6211, %v6635
  %v6637 = vpop.f32.mrb[0].mxu0
  %6638 = vmatprep.mubr.f32.mxu0 0.0
  %6639 = vmatmul.mubr.f32.gmra.mrb[0].mxu0 %v2627
  %v6640 = vpop.f32.mrb[0].mxu0
  %v6641 = vadd.f32 %v6216, %v6640
  %v6642 = vpop.f32.mrb[0].mxu0
  %6643 = vmatprep.mubr.f32.mxu0 0.0
  %6644 = vmatmul.mubr.f32.gmra.mrb[0].mxu0 %v2630
  %v6645 = vpop.f32.mrb[0].mxu0
  %v6646 = vadd.f32 %v6221, %v6645
  %v6647 = vpop.f32.mrb[0].mxu0
  %6648 = vmatprep.mubr.f32.mxu0 0.0
  %6649 = vmatmul.mubr.f32.gmra.mrb[0].mxu0 %v2633
  %v6650 = vpop.f32.mrb[0].mxu0
  %v6651 = vadd.f32 %v6226, %v6650
  %v6652 = vpop.f32.mrb[0].mxu0
  %6653 = vmatprep.mubr.f32.mxu0 0.0
  %6654 = vmatmul.mubr.f32.gmra.mrb[0].mxu0 %v2636
  %v6655 = vpop.f32.mrb[0].mxu0
  %v6656 = vadd.f32 %v6231, %v6655
  %v6657 = vpop.f32.mrb[0].mxu0
  %6658 = vdwg.mxu0
  %v6659 = vxor.u32 %v6301, 2147483648
  %v6660 = vxor.u32 %v6306, 2147483648
  %v6661 = vxor.u32 %v6311, 2147483648
  %v6662 = vxor.u32 %v6316, 2147483648
  %v6663 = vxor.u32 %v6321, 2147483648
  %v6664 = vxor.u32 %v6326, 2147483648
  %v6665 = vxor.u32 %v6331, 2147483648
  %v6666 = vxor.u32 %v6336, 2147483648
  %v6667 = vxor.u32 %v6341, 2147483648
  %v6668 = vxor.u32 %v6346, 2147483648
  %v6669 = vxor.u32 %v6351, 2147483648
  %v6670 = vxor.u32 %v6356, 2147483648
  %v6671 = vxor.u32 %v6361, 2147483648
  %v6672 = vxor.u32 %v6366, 2147483648
  %v6673 = vxor.u32 %v6371, 2147483648
  %v6674 = vxor.u32 %v6376, 2147483648
  %v6675 = vxor.u32 %v6381, 2147483648
  %v6676 = vxor.u32 %v6386, 2147483648
  %v6677 = vxor.u32 %v6391, 2147483648
  %v6678 = vxor.u32 %v6396, 2147483648
  %v6679 = vxor.u32 %v6401, 2147483648
  %v6680 = vxor.u32 %v6406, 2147483648
  %v6681 = vxor.u32 %v6411, 2147483648
  %v6682 = vxor.u32 %v6416, 2147483648
  %v6683 = vxor.u32 %v6421, 2147483648
  %v6684 = vxor.u32 %v6426, 2147483648
  %v6685 = vxor.u32 %v6431, 2147483648
  %v6686 = vxor.u32 %v6436, 2147483648
  %v6687 = vxor.u32 %v6441, 2147483648
  %v6688 = vxor.u32 %v6446, 2147483648
  %v6689 = vxor.u32 %v6451, 2147483648
  %v6690 = vxor.u32 %v6456, 2147483648
  %v6691 = vxor.u32 %v6461, 2147483648
  %v6692 = vxor.u32 %v6466, 2147483648
  %v6693 = vxor.u32 %v6471, 2147483648
  %v6694 = vxor.u32 %v6476, 2147483648
  %v6695 = vxor.u32 %v6481, 2147483648
  %v6696 = vxor.u32 %v6486, 2147483648
  %v6697 = vxor.u32 %v6491, 2147483648
  %v6698 = vxor.u32 %v6496, 2147483648
  %v6699 = vxor.u32 %v6501, 2147483648
  %v6700 = vxor.u32 %v6506, 2147483648
  %v6701 = vxor.u32 %v6511, 2147483648
  %v6702 = vxor.u32 %v6516, 2147483648
  %v6703 = vxor.u32 %v6521, 2147483648
  %v6704 = vxor.u32 %v6526, 2147483648
  %v6705 = vxor.u32 %v6531, 2147483648
  %v6706 = vxor.u32 %v6536, 2147483648
  %v6707 = vxor.u32 %v6541, 2147483648
  %v6708 = vxor.u32 %v6546, 2147483648
  %v6709 = vxor.u32 %v6551, 2147483648
  %v6710 = vxor.u32 %v6556, 2147483648
  %v6711 = vxor.u32 %v6561, 2147483648
  %v6712 = vxor.u32 %v6566, 2147483648
  %v6713 = vxor.u32 %v6571, 2147483648
  %v6714 = vxor.u32 %v6576, 2147483648
  %v6715 = vxor.u32 %v6581, 2147483648
  %v6716 = vxor.u32 %v6586, 2147483648
  %v6717 = vxor.u32 %v6591, 2147483648
  %v6718 = vxor.u32 %v6596, 2147483648
  %v6719 = vxor.u32 %v6601, 2147483648
  %v6720 = vxor.u32 %v6606, 2147483648
  %v6721 = vxor.u32 %v6611, 2147483648
  %v6722 = vxor.u32 %v6616, 2147483648
  %v6723 = vxor.u32 %v6621, 2147483648
  %v6724 = vxor.u32 %v6626, 2147483648
  %v6725 = vxor.u32 %v6631, 2147483648
  %v6726 = vxor.u32 %v6636, 2147483648
  %v6727 = vxor.u32 %v6641, 2147483648
  %v6728 = vxor.u32 %v6646, 2147483648
  %v6729 = vxor.u32 %v6651, 2147483648
  %v6730 = vxor.u32 %v6656, 2147483648
  %v6731 = vmul.f32 %v6659, 1.442695
  %v6732 = vpow.pop %v6731
  %v6733 = vmul.f32 %v6660, 1.442695
  %v6734 = vpow.pop %v6733
  %v6735 = vmul.f32 %v6661, 1.442695
  %v6736 = vpow.pop %v6735
  %v6737 = vmul.f32 %v6662, 1.442695
  %v6738 = vpow.pop %v6737
  %v6739 = vmul.f32 %v6663, 1.442695
  %v6740 = vpow.pop %v6739
  %v6741 = vmul.f32 %v6664, 1.442695
  %v6742 = vpow.pop %v6741
  %v6743 = vmul.f32 %v6665, 1.442695
  %v6744 = vpow.pop %v6743
  %v6745 = vmul.f32 %v6666, 1.442695
  %v6746 = vpow.pop %v6745
  %v6747 = vmul.f32 %v6667, 1.442695
  %v6748 = vpow.pop %v6747
  %v6749 = vmul.f32 %v6668, 1.442695
  %v6750 = vpow.pop %v6749
  %v6751 = vmul.f32 %v6669, 1.442695
  %v6752 = vpow.pop %v6751
  %v6753 = vmul.f32 %v6670, 1.442695
  %v6754 = vpow.pop %v6753
  %v6755 = vmul.f32 %v6671, 1.442695
  %v6756 = vpow.pop %v6755
  %v6757 = vmul.f32 %v6672, 1.442695
  %v6758 = vpow.pop %v6757
  %v6759 = vmul.f32 %v6673, 1.442695
  %v6760 = vpow.pop %v6759
  %v6761 = vmul.f32 %v6674, 1.442695
  %v6762 = vpow.pop %v6761
  %v6763 = vmul.f32 %v6675, 1.442695
  %v6764 = vpow.pop %v6763
  %v6765 = vmul.f32 %v6676, 1.442695
  %v6766 = vpow.pop %v6765
  %v6767 = vmul.f32 %v6677, 1.442695
  %v6768 = vpow.pop %v6767
  %v6769 = vmul.f32 %v6678, 1.442695
  %v6770 = vpow.pop %v6769
  %v6771 = vmul.f32 %v6679, 1.442695
  %v6772 = vpow.pop %v6771
  %v6773 = vmul.f32 %v6680, 1.442695
  %v6774 = vpow.pop %v6773
  %v6775 = vmul.f32 %v6681, 1.442695
  %v6776 = vpow.pop %v6775
  %v6777 = vmul.f32 %v6682, 1.442695
  %v6778 = vpow.pop %v6777
  %v6779 = vmul.f32 %v6683, 1.442695
  %v6780 = vpow.pop %v6779
  %v6781 = vmul.f32 %v6684, 1.442695
  %v6782 = vpow.pop %v6781
  %v6783 = vmul.f32 %v6685, 1.442695
  %v6784 = vpow.pop %v6783
  %v6785 = vmul.f32 %v6686, 1.442695
  %v6786 = vpow.pop %v6785
  %v6787 = vmul.f32 %v6687, 1.442695
  %v6788 = vpow.pop %v6787
  %v6789 = vmul.f32 %v6688, 1.442695
  %v6790 = vpow.pop %v6789
  %v6791 = vmul.f32 %v6689, 1.442695
  %v6792 = vpow.pop %v6791
  %v6793 = vmul.f32 %v6690, 1.442695
  %v6794 = vpow.pop %v6793
  %v6795 = vmul.f32 %v6691, 1.442695
  %v6796 = vpow.pop %v6795
  %v6797 = vmul.f32 %v6692, 1.442695
  %v6798 = vpow.pop %v6797
  %v6799 = vmul.f32 %v6693, 1.442695
  %v6800 = vpow.pop %v6799
  %v6801 = vmul.f32 %v6694, 1.442695
  %v6802 = vpow.pop %v6801
  %v6803 = vmul.f32 %v6695, 1.442695
  %v6804 = vpow.pop %v6803
  %v6805 = vmul.f32 %v6696, 1.442695
  %v6806 = vpow.pop %v6805
  %v6807 = vmul.f32 %v6697, 1.442695
  %v6808 = vpow.pop %v6807
  %v6809 = vmul.f32 %v6698, 1.442695
  %v6810 = vpow.pop %v6809
  %v6811 = vmul.f32 %v6699, 1.442695
  %v6812 = vpow.pop %v6811
  %v6813 = vmul.f32 %v6700, 1.442695
  %v6814 = vpow.pop %v6813
  %v6815 = vmul.f32 %v6701, 1.442695
  %v6816 = vpow.pop %v6815
  %v6817 = vmul.f32 %v6702, 1.442695
  %v6818 = vpow.pop %v6817
  %v6819 = vmul.f32 %v6703, 1.442695
  %v6820 = vpow.pop %v6819
  %v6821 = vmul.f32 %v6704, 1.442695
  %v6822 = vpow.pop %v6821
  %v6823 = vmul.f32 %v6705, 1.442695
  %v6824 = vpow.pop %v6823
  %v6825 = vmul.f32 %v6706, 1.442695
  %v6826 = vpow.pop %v6825
  %v6827 = vmul.f32 %v6707, 1.442695
  %v6828 = vpow.pop %v6827
  %v6829 = vmul.f32 %v6708, 1.442695
  %v6830 = vpow.pop %v6829
  %v6831 = vmul.f32 %v6709, 1.442695
  %v6832 = vpow.pop %v6831
  %v6833 = vmul.f32 %v6710, 1.442695
  %v6834 = vpow.pop %v6833
  %v6835 = vmul.f32 %v6711, 1.442695
  %v6836 = vpow.pop %v6835
  %v6837 = vmul.f32 %v6712, 1.442695
  %v6838 = vpow.pop %v6837
  %v6839 = vmul.f32 %v6713, 1.442695
  %v6840 = vpow.pop %v6839
  %v6841 = vmul.f32 %v6714, 1.442695
  %v6842 = vpow.pop %v6841
  %v6843 = vmul.f32 %v6715, 1.442695
  %v6844 = vpow.pop %v6843
  %v6845 = vmul.f32 %v6716, 1.442695
  %v6846 = vpow.pop %v6845
  %v6847 = vmul.f32 %v6717, 1.442695
  %v6848 = vpow.pop %v6847
  %v6849 = vmul.f32 %v6718, 1.442695
  %v6850 = vpow.pop %v6849
  %v6851 = vmul.f32 %v6719, 1.442695
  %v6852 = vpow.pop %v6851
  %v6853 = vmul.f32 %v6720, 1.442695
  %v6854 = vpow.pop %v6853
  %v6855 = vmul.f32 %v6721, 1.442695
  %v6856 = vpow.pop %v6855
  %v6857 = vmul.f32 %v6722, 1.442695
  %v6858 = vpow.pop %v6857
  %v6859 = vmul.f32 %v6723, 1.442695
  %v6860 = vpow.pop %v6859
  %v6861 = vmul.f32 %v6724, 1.442695
  %v6862 = vpow.pop %v6861
  %v6863 = vmul.f32 %v6725, 1.442695
  %v6864 = vpow.pop %v6863
  %v6865 = vmul.f32 %v6726, 1.442695
  %v6866 = vpow.pop %v6865
  %v6867 = vmul.f32 %v6727, 1.442695
  %v6868 = vpow.pop %v6867
  %v6869 = vmul.f32 %v6728, 1.442695
  %v6870 = vpow.pop %v6869
  %v6871 = vmul.f32 %v6729, 1.442695
  %v6872 = vpow.pop %v6871
  %v6873 = vmul.f32 %v6730, 1.442695
  %v6874 = vpow.pop %v6873
  %v6875 = vadd.f32 %v6732, 1.0
  %v6876 = vadd.f32 %v6734, 1.0
  %v6877 = vadd.f32 %v6736, 1.0
  %v6878 = vadd.f32 %v6738, 1.0
  %v6879 = vadd.f32 %v6740, 1.0
  %v6880 = vadd.f32 %v6742, 1.0
  %v6881 = vadd.f32 %v6744, 1.0
  %v6882 = vadd.f32 %v6746, 1.0
  %v6883 = vadd.f32 %v6748, 1.0
  %v6884 = vadd.f32 %v6750, 1.0
  %v6885 = vadd.f32 %v6752, 1.0
  %v6886 = vadd.f32 %v6754, 1.0
  %v6887 = vadd.f32 %v6756, 1.0
  %v6888 = vadd.f32 %v6758, 1.0
  %v6889 = vadd.f32 %v6760, 1.0
  %v6890 = vadd.f32 %v6762, 1.0
  %v6891 = vadd.f32 %v6764, 1.0
  %v6892 = vadd.f32 %v6766, 1.0
  %v6893 = vadd.f32 %v6768, 1.0
  %v6894 = vadd.f32 %v6770, 1.0
  %v6895 = vadd.f32 %v6772, 1.0
  %v6896 = vadd.f32 %v6774, 1.0
  %v6897 = vadd.f32 %v6776, 1.0
  %v6898 = vadd.f32 %v6778, 1.0
  %v6899 = vadd.f32 %v6780, 1.0
  %v6900 = vadd.f32 %v6782, 1.0
  %v6901 = vadd.f32 %v6784, 1.0
  %v6902 = vadd.f32 %v6786, 1.0
  %v6903 = vadd.f32 %v6788, 1.0
  %v6904 = vadd.f32 %v6790, 1.0
  %v6905 = vadd.f32 %v6792, 1.0
  %v6906 = vadd.f32 %v6794, 1.0
  %v6907 = vadd.f32 %v6796, 1.0
  %v6908 = vadd.f32 %v6798, 1.0
  %v6909 = vadd.f32 %v6800, 1.0
  %v6910 = vadd.f32 %v6802, 1.0
  %v6911 = vadd.f32 %v6804, 1.0
  %v6912 = vadd.f32 %v6806, 1.0
  %v6913 = vadd.f32 %v6808, 1.0
  %v6914 = vadd.f32 %v6810, 1.0
  %v6915 = vadd.f32 %v6812, 1.0
  %v6916 = vadd.f32 %v6814, 1.0
  %v6917 = vadd.f32 %v6816, 1.0
  %v6918 = vadd.f32 %v6818, 1.0
  %v6919 = vadd.f32 %v6820, 1.0
  %v6920 = vadd.f32 %v6822, 1.0
  %v6921 = vadd.f32 %v6824, 1.0
  %v6922 = vadd.f32 %v6826, 1.0
  %v6923 = vadd.f32 %v6828, 1.0
  %v6924 = vadd.f32 %v6830, 1.0
  %v6925 = vadd.f32 %v6832, 1.0
  %v6926 = vadd.f32 %v6834, 1.0
  %v6927 = vadd.f32 %v6836, 1.0
  %v6928 = vadd.f32 %v6838, 1.0
  %v6929 = vadd.f32 %v6840, 1.0
  %v6930 = vadd.f32 %v6842, 1.0
  %v6931 = vadd.f32 %v6844, 1.0
  %v6932 = vadd.f32 %v6846, 1.0
  %v6933 = vadd.f32 %v6848, 1.0
  %v6934 = vadd.f32 %v6850, 1.0
  %v6935 = vadd.f32 %v6852, 1.0
  %v6936 = vadd.f32 %v6854, 1.0
  %v6937 = vadd.f32 %v6856, 1.0
  %v6938 = vadd.f32 %v6858, 1.0
  %v6939 = vadd.f32 %v6860, 1.0
  %v6940 = vadd.f32 %v6862, 1.0
  %v6941 = vadd.f32 %v6864, 1.0
  %v6942 = vadd.f32 %v6866, 1.0
  %v6943 = vadd.f32 %v6868, 1.0
  %v6944 = vadd.f32 %v6870, 1.0
  %v6945 = vadd.f32 %v6872, 1.0
  %v6946 = vadd.f32 %v6874, 1.0
  %v6947 = vrcp.pop %v6875
  %v6948 = vmul.f32 1.0, %v6947
  %v6949 = vrcp.pop %v6876
  %v6950 = vmul.f32 1.0, %v6949
  %v6951 = vrcp.pop %v6877
  %v6952 = vmul.f32 1.0, %v6951
  %v6953 = vrcp.pop %v6878
  %v6954 = vmul.f32 1.0, %v6953
  %v6955 = vrcp.pop %v6879
  %v6956 = vmul.f32 1.0, %v6955
  %v6957 = vrcp.pop %v6880
  %v6958 = vmul.f32 1.0, %v6957
  %v6959 = vrcp.pop %v6881
  %v6960 = vmul.f32 1.0, %v6959
  %v6961 = vrcp.pop %v6882
  %v6962 = vmul.f32 1.0, %v6961
  %v6963 = vrcp.pop %v6883
  %v6964 = vmul.f32 1.0, %v6963
  %v6965 = vrcp.pop %v6884
  %v6966 = vmul.f32 1.0, %v6965
  %v6967 = vrcp.pop %v6885
  %v6968 = vmul.f32 1.0, %v6967
  %v6969 = vrcp.pop %v6886
  %v6970 = vmul.f32 1.0, %v6969
  %v6971 = vrcp.pop %v6887
  %v6972 = vmul.f32 1.0, %v6971
  %v6973 = vrcp.pop %v6888
  %v6974 = vmul.f32 1.0, %v6973
  %v6975 = vrcp.pop %v6889
  %v6976 = vmul.f32 1.0, %v6975
  %v6977 = vrcp.pop %v6890
  %v6978 = vmul.f32 1.0, %v6977
  %v6979 = vrcp.pop %v6891
  %v6980 = vmul.f32 1.0, %v6979
  %v6981 = vrcp.pop %v6892
  %v6982 = vmul.f32 1.0, %v6981
  %v6983 = vrcp.pop %v6893
  %v6984 = vmul.f32 1.0, %v6983
  %v6985 = vrcp.pop %v6894
  %v6986 = vmul.f32 1.0, %v6985
  %v6987 = vrcp.pop %v6895
  %v6988 = vmul.f32 1.0, %v6987
  %v6989 = vrcp.pop %v6896
  %v6990 = vmul.f32 1.0, %v6989
  %v6991 = vrcp.pop %v6897
  %v6992 = vmul.f32 1.0, %v6991
  %v6993 = vrcp.pop %v6898
  %v6994 = vmul.f32 1.0, %v6993
  %v6995 = vrcp.pop %v6899
  %v6996 = vmul.f32 1.0, %v6995
  %v6997 = vrcp.pop %v6900
  %v6998 = vmul.f32 1.0, %v6997
  %v6999 = vrcp.pop %v6901
  %v7000 = vmul.f32 1.0, %v6999
  %v7001 = vrcp.pop %v6902
  %v7002 = vmul.f32 1.0, %v7001
  %v7003 = vrcp.pop %v6903
  %v7004 = vmul.f32 1.0, %v7003
  %v7005 = vrcp.pop %v6904
  %v7006 = vmul.f32 1.0, %v7005
  %v7007 = vrcp.pop %v6905
  %v7008 = vmul.f32 1.0, %v7007
  %v7009 = vrcp.pop %v6906
  %v7010 = vmul.f32 1.0, %v7009
  %v7011 = vrcp.pop %v6907
  %v7012 = vmul.f32 1.0, %v7011
  %v7013 = vrcp.pop %v6908
  %v7014 = vmul.f32 1.0, %v7013
  %v7015 = vrcp.pop %v6909
  %v7016 = vmul.f32 1.0, %v7015
  %v7017 = vrcp.pop %v6910
  %v7018 = vmul.f32 1.0, %v7017
  %v7019 = vrcp.pop %v6911
  %v7020 = vmul.f32 1.0, %v7019
  %v7021 = vrcp.pop %v6912
  %v7022 = vmul.f32 1.0, %v7021
  %v7023 = vrcp.pop %v6913
  %v7024 = vmul.f32 1.0, %v7023
  %v7025 = vrcp.pop %v6914
  %v7026 = vmul.f32 1.0, %v7025
  %v7027 = vrcp.pop %v6915
  %v7028 = vmul.f32 1.0, %v7027
  %v7029 = vrcp.pop %v6916
  %v7030 = vmul.f32 1.0, %v7029
  %v7031 = vrcp.pop %v6917
  %v7032 = vmul.f32 1.0, %v7031
  %v7033 = vrcp.pop %v6918
  %v7034 = vmul.f32 1.0, %v7033
  %v7035 = vrcp.pop %v6919
  %v7036 = vmul.f32 1.0, %v7035
  %v7037 = vrcp.pop %v6920
  %v7038 = vmul.f32 1.0, %v7037
  %v7039 = vrcp.pop %v6921
  %v7040 = vmul.f32 1.0, %v7039
  %v7041 = vrcp.pop %v6922
  %v7042 = vmul.f32 1.0, %v7041
  %v7043 = vrcp.pop %v6923
  %v7044 = vmul.f32 1.0, %v7043
  %v7045 = vrcp.pop %v6924
  %v7046 = vmul.f32 1.0, %v7045
  %v7047 = vrcp.pop %v6925
  %v7048 = vmul.f32 1.0, %v7047
  %v7049 = vrcp.pop %v6926
  %v7050 = vmul.f32 1.0, %v7049
  %v7051 = vrcp.pop %v6927
  %v7052 = vmul.f32 1.0, %v7051
  %v7053 = vrcp.pop %v6928
  %v7054 = vmul.f32 1.0, %v7053
  %v7055 = vrcp.pop %v6929
  %v7056 = vmul.f32 1.0, %v7055
  %v7057 = vrcp.pop %v6930
  %v7058 = vmul.f32 1.0, %v7057
  %v7059 = vrcp.pop %v6931
  %v7060 = vmul.f32 1.0, %v7059
  %v7061 = vrcp.pop %v6932
  %v7062 = vmul.f32 1.0, %v7061
  %v7063 = vrcp.pop %v6933
  %v7064 = vmul.f32 1.0, %v7063
  %v7065 = vrcp.pop %v6934
  %v7066 = vmul.f32 1.0, %v7065
  %v7067 = vrcp.pop %v6935
  %v7068 = vmul.f32 1.0, %v7067
  %v7069 = vrcp.pop %v6936
  %v7070 = vmul.f32 1.0, %v7069
  %v7071 = vrcp.pop %v6937
  %v7072 = vmul.f32 1.0, %v7071
  %v7073 = vrcp.pop %v6938
  %v7074 = vmul.f32 1.0, %v7073
  %v7075 = vrcp.pop %v6939
  %v7076 = vmul.f32 1.0, %v7075
  %v7077 = vrcp.pop %v6940
  %v7078 = vmul.f32 1.0, %v7077
  %v7079 = vrcp.pop %v6941
  %v7080 = vmul.f32 1.0, %v7079
  %v7081 = vrcp.pop %v6942
  %v7082 = vmul.f32 1.0, %v7081
  %v7083 = vrcp.pop %v6943
  %v7084 = vmul.f32 1.0, %v7083
  %v7085 = vrcp.pop %v6944
  %v7086 = vmul.f32 1.0, %v7085
  %v7087 = vrcp.pop %v6945
  %v7088 = vmul.f32 1.0, %v7087
  %v7089 = vrcp.pop %v6946
  %v7090 = vmul.f32 1.0, %v7089
  %v7091 = vmul.f32 %v6301, %v6948
  %v7092 = vmul.f32 %v6306, %v6950
  %v7093 = vmul.f32 %v6311, %v6952
  %v7094 = vmul.f32 %v6316, %v6954
  %v7095 = vmul.f32 %v6321, %v6956
  %v7096 = vmul.f32 %v6326, %v6958
  %v7097 = vmul.f32 %v6331, %v6960
  %v7098 = vmul.f32 %v6336, %v6962
  %v7099 = vmul.f32 %v6341, %v6964
  %v7100 = vmul.f32 %v6346, %v6966
  %v7101 = vmul.f32 %v6351, %v6968
  %v7102 = vmul.f32 %v6356, %v6970
  %v7103 = vmul.f32 %v6361, %v6972
  %v7104 = vmul.f32 %v6366, %v6974
  %v7105 = vmul.f32 %v6371, %v6976
  %v7106 = vmul.f32 %v6376, %v6978
  %v7107 = vmul.f32 %v6381, %v6980
  %v7108 = vmul.f32 %v6386, %v6982
  %v7109 = vmul.f32 %v6391, %v6984
  %v7110 = vmul.f32 %v6396, %v6986
  %v7111 = vmul.f32 %v6401, %v6988
  %v7112 = vmul.f32 %v6406, %v6990
  %v7113 = vmul.f32 %v6411, %v6992
  %v7114 = vmul.f32 %v6416, %v6994
  %v7115 = vmul.f32 %v6421, %v6996
  %v7116 = vmul.f32 %v6426, %v6998
  %v7117 = vmul.f32 %v6431, %v7000
  %v7118 = vmul.f32 %v6436, %v7002
  %v7119 = vmul.f32 %v6441, %v7004
  %v7120 = vmul.f32 %v6446, %v7006
  %v7121 = vmul.f32 %v6451, %v7008
  %v7122 = vmul.f32 %v6456, %v7010
  %v7123 = vmul.f32 %v6461, %v7012
  %v7124 = vmul.f32 %v6466, %v7014
  %v7125 = vmul.f32 %v6471, %v7016
  %v7126 = vmul.f32 %v6476, %v7018
  %v7127 = vmul.f32 %v6481, %v7020
  %v7128 = vmul.f32 %v6486, %v7022
  %v7129 = vmul.f32 %v6491, %v7024
  %v7130 = vmul.f32 %v6496, %v7026
  %v7131 = vmul.f32 %v6501, %v7028
  %v7132 = vmul.f32 %v6506, %v7030
  %v7133 = vmul.f32 %v6511, %v7032
  %v7134 = vmul.f32 %v6516, %v7034
  %v7135 = vmul.f32 %v6521, %v7036
  %v7136 = vmul.f32 %v6526, %v7038
  %v7137 = vmul.f32 %v6531, %v7040
  %v7138 = vmul.f32 %v6536, %v7042
  %v7139 = vmul.f32 %v6541, %v7044
  %v7140 = vmul.f32 %v6546, %v7046
  %v7141 = vmul.f32 %v6551, %v7048
  %v7142 = vmul.f32 %v6556, %v7050
  %v7143 = vmul.f32 %v6561, %v7052
  %v7144 = vmul.f32 %v6566, %v7054
  %v7145 = vmul.f32 %v6571, %v7056
  %v7146 = vmul.f32 %v6576, %v7058
  %v7147 = vmul.f32 %v6581, %v7060
  %v7148 = vmul.f32 %v6586, %v7062
  %v7149 = vmul.f32 %v6591, %v7064
  %v7150 = vmul.f32 %v6596, %v7066
  %v7151 = vmul.f32 %v6601, %v7068
  %v7152 = vmul.f32 %v6606, %v7070
  %v7153 = vmul.f32 %v6611, %v7072
  %v7154 = vmul.f32 %v6616, %v7074
  %v7155 = vmul.f32 %v6621, %v7076
  %v7156 = vmul.f32 %v6626, %v7078
  %v7157 = vmul.f32 %v6631, %v7080
  %v7158 = vmul.f32 %v6636, %v7082
  %v7159 = vmul.f32 %v6641, %v7084
  %v7160 = vmul.f32 %v6646, %v7086
  %v7161 = vmul.f32 %v6651, %v7088
  %v7162 = vmul.f32 %v6656, %v7090
  %7163 = vmatprep.subr.mxu0 0.0
  %7164 = vmatpush1.msra.mxu0 %v7091
  %7165 = vmatprep.subr.mxu0 0.0
  %7166 = vmatpush1.msra.mxu0 %v7092
  %7167 = vmatprep.subr.mxu0 0.0
  %7168 = vmatpush1.msra.mxu0 %v7093
  %7169 = vmatprep.subr.mxu0 0.0
  %7170 = vmatpush1.msra.mxu0 %v7094
  %7171 = vmatprep.subr.mxu0 0.0
  %7172 = vmatpush1.msra.mxu0 %v7095
  %7173 = vmatprep.subr.mxu0 0.0
  %7174 = vmatpush1.msra.mxu0 %v7096
  %7175 = vmatprep.subr.mxu0 0.0
  %7176 = vmatpush1.msra.mxu0 %v7097
  %7177 = vmatprep.subr.mxu0 0.0
  %7178 = vmatpush1.msra.mxu0 %v7098
  %7179 = vmatprep.subr.mxu0 0.0
  %7180 = vmatpush1.msra.mxu0 %v7099
  %7181 = vmatprep.subr.mxu0 0.0
  %7182 = vmatpush1.msra.mxu0 %v7100
  %7183 = vmatprep.subr.mxu0 0.0
  %7184 = vmatpush1.msra.mxu0 %v7101
  %7185 = vmatprep.subr.mxu0 0.0
  %7186 = vmatpush1.msra.mxu0 %v7102
  %7187 = vmatprep.subr.mxu0 0.0
  %7188 = vmatpush1.msra.mxu0 %v7103
  %7189 = vmatprep.subr.mxu0 0.0
  %7190 = vmatpush1.msra.mxu0 %v7104
  %7191 = vmatprep.subr.mxu0 0.0
  %7192 = vmatpush1.msra.mxu0 %v7105
  %7193 = vmatprep.subr.mxu0 0.0
  %7194 = vmatpush1.msra.mxu0 %v7106
  %7195 = vmatprep.subr.mxu0 0.0
  %7196 = vmatpush1.msra.mxu0 %v7107
  %7197 = vmatprep.subr.mxu0 0.0
  %7198 = vmatpush1.msra.mxu0 %v7108
  %7199 = vmatprep.subr.mxu0 0.0
  %7200 = vmatpush1.msra.mxu0 %v7109
  %7201 = vmatprep.subr.mxu0 0.0
  %7202 = vmatpush1.msra.mxu0 %v7110
  %7203 = vmatprep.subr.mxu0 0.0
  %7204 = vmatpush1.msra.mxu0 %v7111
  %7205 = vmatprep.subr.mxu0 0.0
  %7206 = vmatpush1.msra.mxu0 %v7112
  %7207 = vmatprep.subr.mxu0 0.0
  %7208 = vmatpush1.msra.mxu0 %v7113
  %7209 = vmatprep.subr.mxu0 0.0
  %7210 = vmatpush1.msra.mxu0 %v7114
  %7211 = vmatprep.subr.mxu0 0.0
  %7212 = vmatpush1.msra.mxu0 %v7115
  %7213 = vmatprep.subr.mxu0 0.0
  %7214 = vmatpush1.msra.mxu0 %v7116
  %7215 = vmatprep.subr.mxu0 0.0
  %7216 = vmatpush1.msra.mxu0 %v7117
  %7217 = vmatprep.subr.mxu0 0.0
  %7218 = vmatpush1.msra.mxu0 %v7118
  %7219 = vmatprep.subr.mxu0 0.0
  %7220 = vmatpush1.msra.mxu0 %v7119
  %7221 = vmatprep.subr.mxu0 0.0
  %7222 = vmatpush1.msra.mxu0 %v7120
  %7223 = vmatprep.subr.mxu0 0.0
  %7224 = vmatpush1.msra.mxu0 %v7121
  %7225 = vmatprep.subr.mxu0 0.0
  %7226 = vmatpush1.msra.mxu0 %v7122
  %7227 = vmatprep.mubr.f32.mxu0 %v1634
  %7228 = vmatmul.mubr.f32.gmra.mrb[0].mxu0 %v1633
  %v7229 = vpop.f32.mrb[0].mxu0
  %v7230 = vadd.f32 0.0, %v7229
  %v7231 = vpop.f32.mrb[0].mxu0
  %7232 = vmatprep.mubr.f32.mxu0 %v1639
  %7233 = vmatmul.mubr.f32.gmra.mrb[0].mxu0 %v1638
  %v7234 = vpop.f32.mrb[0].mxu0
  %v7235 = vadd.f32 0.0, %v7234
  %v7236 = vpop.f32.mrb[0].mxu0
  %7237 = vmatprep.mubr.f32.mxu0 %v1644
  %7238 = vmatmul.mubr.f32.gmra.mrb[0].mxu0 %v1643
  %v7239 = vpop.f32.mrb[0].mxu0
  %v7240 = vadd.f32 0.0, %v7239
  %v7241 = vpop.f32.mrb[0].mxu0
  %7242 = vdwg.mxu0
  %7243 = vmatprep.subr.mxu0 0.0
  %7244 = vmatpush1.msra.mxu0 %v7123
  %7245 = vmatprep.subr.mxu0 0.0
  %7246 = vmatpush1.msra.mxu0 %v7124
  %7247 = vmatprep.subr.mxu0 0.0
  %7248 = vmatpush1.msra.mxu0 %v7125
  %7249 = vmatprep.subr.mxu0 0.0
  %7250 = vmatpush1.msra.mxu0 %v7126
  %7251 = vmatprep.subr.mxu0 0.0
  %7252 = vmatpush1.msra.mxu0 %v7127
  %7253 = vmatprep.subr.mxu0 0.0
  %7254 = vmatpush1.msra.mxu0 %v7128
  %7255 = vmatprep.subr.mxu0 0.0
  %7256 = vmatpush1.msra.mxu0 %v7129
  %7257 = vmatprep.subr.mxu0 0.0
  %7258 = vmatpush1.msra.mxu0 %v7130
  %7259 = vmatprep.subr.mxu0 0.0
  %7260 = vmatpush1.msra.mxu0 %v7131
  %7261 = vmatprep.subr.mxu0 0.0
  %7262 = vmatpush1.msra.mxu0 %v7132
  %7263 = vmatprep.subr.mxu0 0.0
  %7264 = vmatpush1.msra.mxu0 %v7133
  %7265 = vmatprep.subr.mxu0 0.0
  %7266 = vmatpush1.msra.mxu0 %v7134
  %7267 = vmatprep.subr.mxu0 0.0
  %7268 = vmatpush1.msra.mxu0 %v7135
  %7269 = vmatprep.subr.mxu0 0.0
  %7270 = vmatpush1.msra.mxu0 %v7136
  %7271 = vmatprep.subr.mxu0 0.0
  %7272 = vmatpush1.msra.mxu0 %v7137
  %7273 = vmatprep.subr.mxu0 0.0
  %7274 = vmatpush1.msra.mxu0 %v7138
  %7275 = vmatprep.subr.mxu0 0.0
  %7276 = vmatpush1.msra.mxu0 %v7139
  %7277 = vmatprep.subr.mxu0 0.0
  %7278 = vmatpush1.msra.mxu0 %v7140
  %7279 = vmatprep.subr.mxu0 0.0
  %7280 = vmatpush1.msra.mxu0 %v7141
  %7281 = vmatprep.subr.mxu0 0.0
  %7282 = vmatpush1.msra.mxu0 %v7142
  %7283 = vmatprep.subr.mxu0 0.0
  %7284 = vmatpush1.msra.mxu0 %v7143
  %7285 = vmatprep.subr.mxu0 0.0
  %7286 = vmatpush1.msra.mxu0 %v7144
  %7287 = vmatprep.subr.mxu0 0.0
  %7288 = vmatpush1.msra.mxu0 %v7145
  %7289 = vmatprep.subr.mxu0 0.0
  %7290 = vmatpush1.msra.mxu0 %v7146
  %7291 = vmatprep.subr.mxu0 0.0
  %7292 = vmatpush1.msra.mxu0 %v7147
  %7293 = vmatprep.subr.mxu0 0.0
  %7294 = vmatpush1.msra.mxu0 %v7148
  %7295 = vmatprep.subr.mxu0 0.0
  %7296 = vmatpush1.msra.mxu0 %v7149
  %7297 = vmatprep.subr.mxu0 0.0
  %7298 = vmatpush1.msra.mxu0 %v7150
  %7299 = vmatprep.subr.mxu0 0.0
  %7300 = vmatpush1.msra.mxu0 %v7151
  %7301 = vmatprep.subr.mxu0 0.0
  %7302 = vmatpush1.msra.mxu0 %v7152
  %7303 = vmatprep.subr.mxu0 0.0
  %7304 = vmatpush1.msra.mxu0 %v7153
  %7305 = vmatprep.subr.mxu0 0.0
  %7306 = vmatpush1.msra.mxu0 %v7154
  %7307 = vmatprep.mubr.f32.mxu0 %v1636
  %7308 = vmatmul.mubr.f32.gmra.mrb[0].mxu0 %v1635
  %v7309 = vpop.f32.mrb[0].mxu0
  %v7310 = vadd.f32 %v7230, %v7309
  %v7311 = vpop.f32.mrb[0].mxu0
  %7312 = vmatprep.mubr.f32.mxu0 %v1641
  %7313 = vmatmul.mubr.f32.gmra.mrb[0].mxu0 %v1640
  %v7314 = vpop.f32.mrb[0].mxu0
  %v7315 = vadd.f32 %v7235, %v7314
  %v7316 = vpop.f32.mrb[0].mxu0
  %7317 = vmatprep.mubr.f32.mxu0 %v1646
  %7318 = vmatmul.mubr.f32.gmra.mrb[0].mxu0 %v1645
  %v7319 = vpop.f32.mrb[0].mxu0
  %v7320 = vadd.f32 %v7240, %v7319
  %v7321 = vpop.f32.mrb[0].mxu0
  %7322 = vdwg.mxu0
  %7323 = vmatprep.subr.mxu0 0.0
  %7324 = vmatpush1.msra.mxu0 %v7155
  %7325 = vmatprep.subr.mxu0 0.0
  %7326 = vmatpush1.msra.mxu0 %v7156
  %7327 = vmatprep.subr.mxu0 0.0
  %7328 = vmatpush1.msra.mxu0 %v7157
  %7329 = vmatprep.subr.mxu0 0.0
  %7330 = vmatpush1.msra.mxu0 %v7158
  %7331 = vmatprep.subr.mxu0 0.0
  %7332 = vmatpush1.msra.mxu0 %v7159
  %7333 = vmatprep.subr.mxu0 0.0
  %7334 = vmatpush1.msra.mxu0 %v7160
  %7335 = vmatprep.subr.mxu0 0.0
  %7336 = vmatpush1.msra.mxu0 %v7161
  %7337 = vmatprep.subr.mxu0 0.0
  %7338 = vmatpush1.msra.mxu0 %v7162
  %7339 = vmatprep.subr.mxu0 0.0
  %7340 = vmatpush1.msra.mxu0 0.0
  %7341 = vmatprep.subr.mxu0 0.0
  %7342 = vmatpush1.msra.mxu0 0.0
  %7343 = vmatprep.subr.mxu0 0.0
  %7344 = vmatpush1.msra.mxu0 0.0
  %7345 = vmatprep.subr.mxu0 0.0
  %7346 = vmatpush1.msra.mxu0 0.0
  %7347 = vmatprep.subr.mxu0 0.0
  %7348 = vmatpush1.msra.mxu0 0.0
  %7349 = vmatprep.subr.mxu0 0.0
  %7350 = vmatpush1.msra.mxu0 0.0
  %7351 = vmatprep.subr.mxu0 0.0
  %7352 = vmatpush1.msra.mxu0 0.0
  %7353 = vmatprep.subr.mxu0 0.0
  %7354 = vmatpush1.msra.mxu0 0.0
  %7355 = vmatprep.subr.mxu0 0.0
  %7356 = vmatpush1.msra.mxu0 0.0
  %7357 = vmatprep.subr.mxu0 0.0
  %7358 = vmatpush1.msra.mxu0 0.0
  %7359 = vmatprep.subr.mxu0 0.0
  %7360 = vmatpush1.msra.mxu0 0.0
  %7361 = vmatprep.subr.mxu0 0.0
  %7362 = vmatpush1.msra.mxu0 0.0
  %7363 = vmatprep.subr.mxu0 0.0
  %7364 = vmatpush1.msra.mxu0 0.0
  %7365 = vmatprep.subr.mxu0 0.0
  %7366 = vmatpush1.msra.mxu0 0.0
  %7367 = vmatprep.subr.mxu0 0.0
  %7368 = vmatpush1.msra.mxu0 0.0
  %7369 = vmatprep.subr.mxu0 0.0
  %7370 = vmatpush1.msra.mxu0 0.0
  %7371 = vmatprep.subr.mxu0 0.0
  %7372 = vmatpush1.msra.mxu0 0.0
  %7373 = vmatprep.subr.mxu0 0.0
  %7374 = vmatpush1.msra.mxu0 0.0
  %7375 = vmatprep.subr.mxu0 0.0
  %7376 = vmatpush1.msra.mxu0 0.0
  %7377 = vmatprep.subr.mxu0 0.0
  %7378 = vmatpush1.msra.mxu0 0.0
  %7379 = vmatprep.subr.mxu0 0.0
  %7380 = vmatpush1.msra.mxu0 0.0
  %7381 = vmatprep.subr.mxu0 0.0
  %7382 = vmatpush1.msra.mxu0 0.0
  %7383 = vmatprep.subr.mxu0 0.0
  %7384 = vmatpush1.msra.mxu0 0.0
  %7385 = vmatprep.subr.mxu0 0.0
  %7386 = vmatpush1.msra.mxu0 0.0
  %7387 = vmatprep.mubr.f32.mxu0 0.0
  %7388 = vmatmul.mubr.f32.gmra.mrb[0].mxu0 %v3569
  %v7389 = vpop.f32.mrb[0].mxu0
  %v7390 = vadd.f32 %v7310, %v7389
  %v7391 = vpop.f32.mrb[0].mxu0
  %7392 = vmatprep.mubr.f32.mxu0 0.0
  %7393 = vmatmul.mubr.f32.gmra.mrb[0].mxu0 %v3572
  %v7394 = vpop.f32.mrb[0].mxu0
  %v7395 = vadd.f32 %v7315, %v7394
  %v7396 = vpop.f32.mrb[0].mxu0
  %7397 = vmatprep.mubr.f32.mxu0 0.0
  %7398 = vmatmul.mubr.f32.gmra.mrb[0].mxu0 %v3575
  %v7399 = vpop.f32.mrb[0].mxu0
  %v7400 = vadd.f32 %v7320, %v7399
  %v7401 = vpop.f32.mrb[0].mxu0
  %7402 = vdwg.mxu0
  %v7404 = vlaneseq
  %v7405 = vshrl.u32 %v7404, 7
  %v7406 = vsub.s32 0, %v7405
  %v7407 = vrot.slane %v167, %v7406
  %7409 = vmatprep.subr.mxu0 0.0
  %7410 = vmatpush1.msra.mxu0 %v151
  %7411 = vmatprep.subr.mxu0 0.0
  %7412 = vmatpush1.msra.mxu0 %v152
  %7413 = vmatprep.subr.mxu0 0.0
  %7414 = vmatpush1.msra.mxu0 %v153
  %7415 = vmatprep.subr.mxu0 0.0
  %7416 = vmatpush1.msra.mxu0 %v154
  %7417 = vmatprep.subr.mxu0 0.0
  %7418 = vmatpush1.msra.mxu0 %v155
  %7419 = vmatprep.subr.mxu0 0.0
  %7420 = vmatpush1.msra.mxu0 %v156
  %7421 = vmatprep.subr.mxu0 0.0
  %7422 = vmatpush1.msra.mxu0 %v157
  %7423 = vmatprep.subr.mxu0 0.0
  %7424 = vmatpush1.msra.mxu0 %v158
  %7425 = vmatprep.subr.mxu0 0.0
  %7426 = vmatpush1.msra.mxu0 %v159
  %7427 = vmatprep.subr.mxu0 0.0
  %7428 = vmatpush1.msra.mxu0 %v160
  %7429 = vmatprep.subr.mxu0 0.0
  %7430 = vmatpush1.msra.mxu0 %v161
  %7431 = vmatprep.subr.mxu0 0.0
  %7432 = vmatpush1.msra.mxu0 %v162
  %7433 = vmatprep.subr.mxu0 0.0
  %7434 = vmatpush1.msra.mxu0 %v163
  %7435 = vmatprep.subr.mxu0 0.0
  %7436 = vmatpush1.msra.mxu0 %v164
  %7437 = vmatprep.subr.mxu0 0.0
  %7438 = vmatpush1.msra.mxu0 %v165
  %7439 = vmatprep.subr.mxu0 0.0
  %7440 = vmatpush1.msra.mxu0 %v166
  %7441 = vmatprep.subr.mxu0 0.0
  %7442 = vmatpush1.msra.mxu0 0.0
  %7443 = vmatprep.subr.mxu0 0.0
  %7444 = vmatpush1.msra.mxu0 0.0
  %7445 = vmatprep.subr.mxu0 0.0
  %7446 = vmatpush1.msra.mxu0 0.0
  %7447 = vmatprep.subr.mxu0 0.0
  %7448 = vmatpush1.msra.mxu0 0.0
  %7449 = vmatprep.subr.mxu0 0.0
  %7450 = vmatpush1.msra.mxu0 0.0
  %7451 = vmatprep.subr.mxu0 0.0
  %7452 = vmatpush1.msra.mxu0 0.0
  %7453 = vmatprep.subr.mxu0 0.0
  %7454 = vmatpush1.msra.mxu0 0.0
  %7455 = vmatprep.subr.mxu0 0.0
  %7456 = vmatpush1.msra.mxu0 0.0
  %7457 = vmatprep.subr.mxu0 0.0
  %7458 = vmatpush1.msra.mxu0 0.0
  %7459 = vmatprep.subr.mxu0 0.0
  %7460 = vmatpush1.msra.mxu0 0.0
  %7461 = vmatprep.subr.mxu0 0.0
  %7462 = vmatpush1.msra.mxu0 0.0
  %7463 = vmatprep.subr.mxu0 0.0
  %7464 = vmatpush1.msra.mxu0 0.0
  %7465 = vmatprep.subr.mxu0 0.0
  %7466 = vmatpush1.msra.mxu0 0.0
  %7467 = vmatprep.subr.mxu0 0.0
  %7468 = vmatpush1.msra.mxu0 0.0
  %7469 = vmatprep.subr.mxu0 0.0
  %7470 = vmatpush1.msra.mxu0 0.0
  %7471 = vmatprep.subr.mxu0 0.0
  %7472 = vmatpush1.msra.mxu0 0.0
  %7473 = vmatprep.mubr.f32.mxu0 0.0
  %7474 = vmatmul.mubr.f32.gmra.mrb[0].mxu0 %v7390
  %v7475 = vpop.f32.mrb[0].mxu0
  %v7476 = vadd.f32 %v7407, %v7475
  %v7477 = vpop.f32.mrb[0].mxu0
  %7478 = vmatprep.mubr.f32.mxu0 0.0
  %7479 = vmatmul.mubr.f32.gmra.mrb[0].mxu0 %v7395
  %v7480 = vpop.f32.mrb[0].mxu0
  %v7481 = vadd.f32 %v7407, %v7480
  %v7482 = vpop.f32.mrb[0].mxu0
  %7483 = vmatprep.mubr.f32.mxu0 0.0
  %7484 = vmatmul.mubr.f32.gmra.mrb[0].mxu0 %v7400
  %v7485 = vpop.f32.mrb[0].mxu0
  %v7486 = vadd.f32 %v7407, %v7485
  %v7487 = vpop.f32.mrb[0].mxu0
  %7488 = vdwg.mxu0
  %v7489 = vxor.u32 %v7476, 2147483648
  %v7490 = vxor.u32 %v7481, 2147483648
  %v7491 = vxor.u32 %v7486, 2147483648
  %v7492 = vmul.f32 %v7489, 1.442695
  %v7493 = vpow.pop %v7492
  %v7494 = vmul.f32 %v7490, 1.442695
  %v7495 = vpow.pop %v7494
  %v7496 = vmul.f32 %v7491, 1.442695
  %v7497 = vpow.pop %v7496
  %v7498 = vadd.f32 %v7493, 1.0
  %v7499 = vadd.f32 %v7495, 1.0
  %v7500 = vadd.f32 %v7497, 1.0
  %v7501 = vrcp.pop %v7498
  %v7502 = vmul.f32 1.0, %v7501
  %v7503 = vrcp.pop %v7499
  %v7504 = vmul.f32 1.0, %v7503
  %v7505 = vrcp.pop %v7500
  %v7506 = vmul.f32 1.0, %v7505
  %v7507 = vmul.f32 %v7502, 0.5
  %v7508 = vmul.f32 %v7504, 0.5
  %v7509 = vmul.f32 %v7506, 0.5
  %v7510 = vmul.f32 %v7507, 2.0
  %v7511 = vmul.f32 %v7508, 2.0
  %v7512 = vmul.f32 %v7509, 2.0
  %v7513 = vadd.f32 %v7510, 0.5
  %v7514 = vadd.f32 %v7511, 0.5
  %v7515 = vadd.f32 %v7512, 0.5
  %7519 = vrot.lane.b32.xlu0 %v7513, 4
  %v7520 = vpop.permute.xlu0 %7519
  %7521 = vrot.lane.b32.xlu0 %v7514, 4
  %v7522 = vpop.permute.xlu0 %7521
  %7523 = vrot.lane.b32.xlu0 %v7515, 4
  %v7524 = vpop.permute.xlu0 %7523
  %v7528 = vmul.f32 %v489, %v7520
  %v7529 = vmul.f32 %v491, %v7522
  %v7530 = vmul.f32 %v493, %v7524
  %v7531 = vsel %vm253, 0.0, 1.0
  %v7532 = vsel %vm254, 0.0, 1.0
  %v7533 = vsel %vm255, 0.0, 1.0
  %7535 = vset.pattern.permute.xlu0 4
  %7536 = vperm.xlu0 %7535, %v7528
  %v7537 = vpop.permute.xlu0 %7536
  %7540 = vset.pattern.permute.xlu0 4
  %7541 = vperm.xlu0 %7540, %v7529
  %v7542 = vpop.permute.xlu0 %7541
  %7545 = vset.pattern.permute.xlu0 4
  %7546 = vperm.xlu0 %7545, %v7530
  %v7547 = vpop.permute.xlu0 %7546
  %v7549 = vmul.f32 %v7537, %v7531
  %v7550 = vmul.f32 %v7542, %v7532
  %v7551 = vmul.f32 %v7547, %v7533
  %v7552 = vsel %vm436, %v7549, 0.0
  %v7553 = vsel %vm436, %v7550, 0.0
  %v7554 = vadd.f32 %v7552, %v7553
  %v7555 = vsel %vm436, %v7551, 0.0
  %v7556 = vadd.f32 %v7554, %v7555
  %v7557 = vrot.slane %v7556, 4
  %v7558 = vadd.f32 %v7556, %v7557
  %v7559 = vrot.slane %v7558, 2
  %v7560 = vadd.f32 %v7558, %v7559
  %v7561 = vrot.slane %v7560, 1
  %v7562 = vadd.f32 %v7560, %v7561
  %v7563 = vmul.f32 %v7537, %v7562
  %v7564 = vmul.f32 %v7542, %v7562
  %v7565 = vmul.f32 %v7547, %v7562
  %v7566 = vsub.f32 0.0, %v244
  %v7567 = vsub.f32 0.0, %v245
  %v7568 = vsub.f32 0.0, %v246
  %v7569 = vmul.f32 %v7563, 4.0
  %v7570 = vmul.f32 %v7564, 4.0
  %v7571 = vmul.f32 %v7565, 4.0
  %v7572 = vrcp.pop %v7569
  %v7573 = vmul.f32 %v7566, %v7572
  %v7574 = vrcp.pop %v7570
  %v7575 = vmul.f32 %v7567, %v7574
  %v7576 = vrcp.pop %v7571
  %v7577 = vmul.f32 %v7568, %v7576
  %v7578 = vmul.f32 %v7573, 1.442695
  %v7579 = vpow.pop %v7578
  %v7580 = vmul.f32 %v7575, 1.442695
  %v7581 = vpow.pop %v7580
  %v7582 = vmul.f32 %v7577, 1.442695
  %v7583 = vpow.pop %v7582
  %v7584 = vmul.f32 %v7563, %v7579
  %v7585 = vmul.f32 %v7564, %v7581
  %v7586 = vmul.f32 %v7565, %v7583
  %v7587 = vadd.f32 %v244, %v7584
  %v7588 = vadd.f32 %v245, %v7585
  %v7589 = vadd.f32 %v246, %v7586
  %v7590 = vrsqrt.pop %v7587
  %v7591 = vmul.f32 %v7587, %v7590
  %vm7592 = vcmp.eq.f32.partialorder %v7587, inf
  %v7593 = vsel %vm7592, %v7587, %v7591
  %vm7594 = vcmp.eq.f32.partialorder %v7587, 0.0
  %v7595 = vand.u32 %v7587, 2147483648
  %v7596 = vsel %vm7594, %v7595, %v7593
  %v7597 = vrsqrt.pop %v7588
  %v7598 = vmul.f32 %v7588, %v7597
  %vm7599 = vcmp.eq.f32.partialorder %v7588, inf
  %v7600 = vsel %vm7599, %v7588, %v7598
  %vm7601 = vcmp.eq.f32.partialorder %v7588, 0.0
  %v7602 = vand.u32 %v7588, 2147483648
  %v7603 = vsel %vm7601, %v7602, %v7600
  %v7604 = vrsqrt.pop %v7589
  %v7605 = vmul.f32 %v7589, %v7604
  %vm7606 = vcmp.eq.f32.partialorder %v7589, inf
  %v7607 = vsel %vm7606, %v7589, %v7605
  %vm7608 = vcmp.eq.f32.partialorder %v7589, 0.0
  %v7609 = vand.u32 %v7589, 2147483648
  %v7610 = vsel %vm7608, %v7609, %v7607
  %v7611 = vlaneseq
  %v7612 = vshrl.u32 %v7611, 7
  %v7613 = vsub.s32 3, %v7612
  %v7614 = vrot.slane %v171, %v7613
  %v7615 = vmul.f32 %v1690, %v7614
  %v7616 = vmul.f32 %v1694, %v7614
  %v7617 = vmul.f32 %v1698, %v7614
  %v7618 = vrcp.pop %v7596
  %v7619 = vmul.f32 %v7615, %v7618
  %v7620 = vrcp.pop %v7603
  %v7621 = vmul.f32 %v7616, %v7620
  %v7622 = vrcp.pop %v7610
  %v7623 = vmul.f32 %v7617, %v7622
  %v7624 = vmul.f32 %v7619, %v286
  %v7625 = vmul.f32 %v7621, %v287
  %v7626 = vmul.f32 %v7623, %v288
  %v7627 = vsel %vm436, %v7624, 0.0
  %v7628 = vsel %vm436, %v7625, 0.0
  %v7629 = vadd.f32 %v7627, %v7628
  %v7630 = vsel %vm436, %v7626, 0.0
  %v7631 = vadd.f32 %v7629, %v7630
  %v7632 = vrot.slane %v7631, 4
  %v7633 = vadd.f32 %v7631, %v7632
  %v7634 = vrot.slane %v7633, 2
  %v7635 = vadd.f32 %v7633, %v7634
  %v7636 = vrot.slane %v7635, 1
  %v7637 = vadd.f32 %v7635, %v7636
  %v7638 = vrcp.pop %v7562
  %v7639 = vmul.f32 %v353, %v7638
  %v7640 = vadd.f32 %v7639, %v7637
  %v7641 = vmul.f32 %v7640, -68.5828
  %vm7642 = vcmask 191491
  %7643 = vst.msk [vmem:[%s14 - $0x3] sm:$0x8] %vm7642, %v7641
  // Predicated region
  $region58: #{jvp__.1} parent=0 // pred_check
    _
  $region59: #{jvp__.1} parent=0 // pred_check_branch
    %7645 = sbr.rel (0) target = $region61
  $region60: #{jvp__.1} parent=0 // pred_region
    _
  $region61: #{jvp__.1} parent=0 // pred_fallthru
    _
  // Predicated region
  $region62: #{jvp__.1} parent=0 // pred_check
    _
  $region63: #{jvp__.1} parent=0 // pred_check_branch
    %7647 = sbr.rel (0) target = $region65
  $region64: #{jvp__.1} parent=0 // pred_region
    _
  $region65: #{jvp__.1} parent=0 // pred_fallthru
    _

</llo_original>
